<compile_context>
chip_gen: v6e
topology: v6e:2x2x1
jax: 0.10.0
libtpu: 0.0.40
codegen_flags: <defaults>
</compile_context>

<pallas_src>
import functools

import jax
import jax.numpy as jnp
from jax.experimental import pallas as pl
from jax.experimental.pallas import tpu as pltpu

LANE = 128


def _round_up(x, m):
    return ((x + m - 1) // m) * m


# ----------------------------------------------------------------------------
# Kernel
# ----------------------------------------------------------------------------
def _critic_kernel(sa_ref, wsa_ref, whh_ref, wqkv_ref, blk_ref, watt_ref,
                   wfin_ref, bh_ref, bqkv_ref, bout_ref, o_ref,
                   *, hidden, num_heads):
    f32 = jnp.float32

    def mm(x, w):
        # MXU matmul; operands may be f32 or bf16, accumulation is always f32.
        return jnp.dot(x.astype(w.dtype), w, preferred_element_type=f32)

    sa = sa_ref[...]                         # (TB, SA_P)  packed [s | a]
    bh = bh_ref[...]                         # (8, H_P)    stacked f32 biases
    bqkv = bqkv_ref[...]                     # (8, AW)     stacked f32 biases

    def brow(b, i):                          # (1, width) bias row
        return b[i:i + 1, :]

    # ---- critic encoder: Linear(obs+act, H) -> ReLU -> Linear(H, H) ----
    h = jnp.maximum(mm(sa, wsa_ref[0]) + brow(bh, 0), 0.0)
    sa_hidden = mm(h, whh_ref[0]) + brow(bh, 1)

    # ---- state encoder (action rows of wsa_ref[1] are zero) ----
    g = jnp.maximum(mm(sa, wsa_ref[1]) + brow(bh, 2), 0.0)
    st_hidden = mm(g, whh_ref[1]) + brow(bh, 3)

    # ---- Q/K/V projections, pre-tiled to lane l = j*hidden + i*hd + d ----
    # (1/sqrt(head_dim) is folded into the Q weights/bias.)
    qt = mm(sa_hidden, wqkv_ref[0]) + brow(bqkv, 0)   # Q_i replicated per j
    kt = mm(st_hidden, wqkv_ref[1]) + brow(bqkv, 1)   # K_j broadcast over i
    vt = mm(st_hidden, wqkv_ref[2]) + brow(bqkv, 2)   # V_j broadcast over i

    # ---- energies: block-diag group-sum over head_dim, broadcast back ----
    e = mm(qt * kt, blk_ref[...])                     # (TB, AW) lane-dense

    # ---- softmax over key-head axis j (lane stride = hidden) via roll tree --
    def jtree(x, op):
        step = hidden
        while step < hidden * num_heads:
            x = op(x, pltpu.roll(x, step, 1))
            step *= 2
        return x

    m = jtree(e, jnp.maximum)
    p = jnp.exp(e - m)                                # one dense EUP stream
    denom = jtree(p, jnp.add)                         # >= 1 everywhere
    attn = p * pl.reciprocal(denom, approx=True)      # EUP divide

    # ---- context = sum_j attn_ij * V_j  (replicated across j-blocks) ----
    ctx = jtree(attn * vt, jnp.add)                   # (TB, AW)

    # ---- twin Q heads, layer 1 (packed s/a part + attention part) ----
    # watt rows beyond `hidden` are zero, so the replicated ctx blocks and any
    # padding contribute nothing; the head transpose permutation is folded in.
    q1 = jnp.maximum(mm(sa, wsa_ref[2]) + mm(ctx, watt_ref[0]) + brow(bh, 4), 0.0)
    q2 = jnp.maximum(mm(sa, wsa_ref[3]) + mm(ctx, watt_ref[1]) + brow(bh, 5), 0.0)

    # ---- final scalar heads: one K=256 matmul, lane-dense packed output ----
    hq = jnp.concatenate([q1, q2], axis=-1)           # (TB, 2*H_P)
    out = mm(hq, wfin_ref[...]) + bout_ref[...]       # col0 = q1, col1 = q2
    o_ref[...] = out.astype(o_ref.dtype)


# ----------------------------------------------------------------------------
# One-time weight packing (hoisted out of the per-forward path)
# ----------------------------------------------------------------------------
def pack_params(params, obs_dim, act_dim, num_heads=4, mxu_dtype=jnp.bfloat16):
    f32 = jnp.float32
    Ds, Da = obs_dim, act_dim
    hidden = params["ce2_w"].shape[0]
    assert hidden % num_heads == 0
    hd = hidden // num_heads
    assert num_heads & (num_heads - 1) == 0, "roll-tree needs power-of-2 heads"
    SA = Ds + Da
    SA_P = _round_up(SA, LANE)
    H_P = _round_up(hidden, LANE)
    AW = num_heads * hidden
    # TODO(synk): support num_heads*hidden not a multiple of 128 (needs masked
    # roll-tree); all standard configs (hidden multiple of 32, 4 heads) pass.
    assert AW % LANE == 0
    OUT_P = LANE
    scale = 1.0 / float(hd) ** 0.5

    def z(*shape):
        return jnp.zeros(shape, f32)

    # --- consumers of the packed [s | a] input: (SA_P, H_P) ---
    def pack_sa_rows(w_s, w_a):
        w = z(SA_P, H_P).at[:Ds, :hidden].set(w_s.astype(f32))
        if w_a is not None:
            w = w.at[Ds:SA, :hidden].set(w_a.astype(f32))
        return w

    w_sa = jnp.stack([
        pack_sa_rows(params["ce1_w"][:Ds], params["ce1_w"][Ds:]),
        pack_sa_rows(params["se1_w"], None),
        pack_sa_rows(params["q1l1_w"][:Ds], params["q1l1_w"][Ds:SA]),
        pack_sa_rows(params["q2l1_w"][:Ds], params["q2l1_w"][Ds:SA]),
    ])                                                           # (4, SA_P, H_P)

    def pad_hh(w):
        return z(H_P, H_P).at[:hidden, :hidden].set(w.astype(f32))

    w_hh = jnp.stack([pad_hh(params["ce2_w"]), pad_hh(params["se2_w"])])

    # --- Q/K/V projections pre-tiled to lane l = j*hidden + i*hd + d ---
    def tile_q(w, b):                  # query head i at (i,d), every j-block
        wt, bt = z(H_P, AW), z(1, AW)
        for j in range(num_heads):
            wt = wt.at[:hidden, j * hidden:(j + 1) * hidden].set(
                w.astype(f32) * scale)
            bt = bt.at[0, j * hidden:(j + 1) * hidden].set(
                b.astype(f32) * scale)
        return wt, bt

    def tile_kv(w, b):                 # key/value head j broadcast over i
        wt, bt = z(H_P, AW), z(1, AW)
        for j in range(num_heads):
            wj = w[:, j * hd:(j + 1) * hd].astype(f32)
            bj = b[j * hd:(j + 1) * hd].astype(f32)
            for i in range(num_heads):
                lo = j * hidden + i * hd
                wt = wt.at[:hidden, lo:lo + hd].set(wj)
                bt = bt.at[0, lo:lo + hd].set(bj)
        return wt, bt

    w_qt, b_qt = tile_q(params["q_w"], params["q_b"])
    w_kt, b_kt = tile_kv(params["k_w"], params["k_b"])
    w_vt, b_vt = tile_kv(params["v_w"], params["v_b"])
    w_qkv = jnp.stack([w_qt, w_kt, w_vt])                        # (3, H_P, AW)

    # --- block-diagonal group-sum/broadcast matrix (ones, exact in bf16) ---
    blk = jnp.kron(jnp.eye(AW // hd, dtype=f32), jnp.ones((hd, hd), f32))

    # --- attention -> q-net layer-1 (head transpose folded via row perm) ---
    def att_rows(w_l1):
        watt = w_l1[SA:]                         # rows indexed d*num_heads + i
        wt = z(AW, H_P)
        for i in range(num_heads):
            wt = wt.at[i * hd:(i + 1) * hd, :hidden].set(
                watt[i::num_heads].astype(f32))
        return wt

    w_att = jnp.stack([att_rows(params["q1l1_w"]), att_rows(params["q2l1_w"])])

    # --- final twin heads packed lane-dense: col 0 = q1, col 1 = q2 ---
    w_fin = (z(2 * H_P, OUT_P)
             .at[:hidden, 0].set(params["q1l2_w"][:, 0].astype(f32))
             .at[H_P:H_P + hidden, 1].set(params["q2l2_w"][:, 0].astype(f32)))
    b_out = (z(1, OUT_P)
             .at[0, 0].set(params["q1l2_b"][0].astype(f32))
             .at[0, 1].set(params["q2l2_b"][0].astype(f32)))

    # --- stacked f32 biases ---
    b_h = jnp.zeros((8, H_P), f32)
    for r, name in enumerate(["ce1_b", "ce2_b", "se1_b", "se2_b",
                              "q1l1_b", "q2l1_b"]):
        b_h = b_h.at[r, :hidden].set(params[name].astype(f32))
    b_qkv = (jnp.zeros((8, AW), f32)
             .at[0].set(b_qt[0]).at[1].set(b_kt[0]).at[2].set(b_vt[0]))

    mxu_dtype = jnp.dtype(mxu_dtype)
    cast = lambda w: w.astype(mxu_dtype)
    packed = dict(w_sa=cast(w_sa), w_hh=cast(w_hh), w_qkv=cast(w_qkv),
                  blk=cast(blk), w_att=cast(w_att), w_fin=cast(w_fin),
                  b_h=b_h, b_qkv=b_qkv, b_out=b_out)
    meta = dict(Ds=Ds, Da=Da, hidden=hidden, num_heads=num_heads,
                SA_P=SA_P, H_P=H_P, AW=AW, OUT_P=OUT_P, mxu_dtype=mxu_dtype)
    return packed, meta


# ----------------------------------------------------------------------------
# Forward wrapper
# ----------------------------------------------------------------------------
def critic_matd3_attention_forward(s_list, a_list, packed, meta, *, block_b=512):
    """Returns (q1, q2), each (B, 1) f32 — same math as the PyTorch module."""
    f32 = jnp.float32
    Ds, Da = meta["Ds"], meta["Da"]
    SA_P, OUT_P = meta["SA_P"], meta["OUT_P"]

    s_cat = jnp.concatenate([x.astype(f32) for x in s_list], axis=1)
    a_cat = jnp.concatenate([x.astype(f32) for x in a_list], axis=1)
    B = s_cat.shape[0]
    assert s_cat.shape[1] == Ds and a_cat.shape[1] == Da

    TB = max(8, (min(block_b, _round_up(B, 8)) // 8) * 8)
    B_P = _round_up(B, TB)

    sa_pad = (jnp.zeros((B_P, SA_P), f32)
              .at[:B, :Ds].set(s_cat)
              .at[:B, Ds:Ds + Da].set(a_cat)
              .astype(meta["mxu_dtype"]))

    weights = [packed["w_sa"], packed["w_hh"], packed["w_qkv"], packed["blk"],
               packed["w_att"], packed["w_fin"],
               packed["b_h"], packed["b_qkv"], packed["b_out"]]

    def resident(arr):
        nd = arr.ndim
        return pl.BlockSpec(arr.shape, lambda i, _n=nd: (0,) * _n)

    kernel = functools.partial(_critic_kernel, hidden=meta["hidden"],
                               num_heads=meta["num_heads"])

    out = pl.pallas_call(
        kernel,
        grid=(B_P // TB,),
        in_specs=[pl.BlockSpec((TB, SA_P), lambda i: (i, 0))]
                 + [resident(w) for w in weights],
        out_specs=pl.BlockSpec((TB, OUT_P), lambda i: (i, 0)),
        out_shape=jax.ShapeDtypeStruct((B_P, OUT_P), f32),
        compiler_params=pltpu.CompilerParams(
            dimension_semantics=("parallel",)),
    )(sa_pad, *weights)

    return out[:B, 0:1], out[:B, 1:2]


# ----------------------------------------------------------------------------
# Parameters + pure-JAX reference (mirrors the PyTorch forward exactly)
# ----------------------------------------------------------------------------
def make_params(key, obs_dims, act_dims, hidden):
    Ds, Da = sum(obs_dims), sum(act_dims)
    in_dim = Ds + Da

    def linear(k, fan_in, fan_out):
        kw, kb = jax.random.split(k)
        lim = 1.0 / float(fan_in) ** 0.5
        w = jax.random.uniform(kw, (fan_in, fan_out), jnp.float32, -lim, lim)
        b = jax.random.uniform(kb, (fan_out,), jnp.float32, -lim, lim)
        return w, b

    ks = jax.random.split(key, 11)
    p = {}
    p["ce1_w"], p["ce1_b"] = linear(ks[0], in_dim, hidden)
    p["ce2_w"], p["ce2_b"] = linear(ks[1], hidden, hidden)
    p["se1_w"], p["se1_b"] = linear(ks[2], Ds, hidden)
    p["se2_w"], p["se2_b"] = linear(ks[3], hidden, hidden)
    p["q_w"], p["q_b"] = linear(ks[4], hidden, hidden)
    p["k_w"], p["k_b"] = linear(ks[5], hidden, hidden)
    p["v_w"], p["v_b"] = linear(ks[6], hidden, hidden)
    p["q1l1_w"], p["q1l1_b"] = linear(ks[7], in_dim + hidden, hidden)
    p["q1l2_w"], p["q1l2_b"] = linear(ks[8], hidden, 1)
    p["q2l1_w"], p["q2l1_b"] = linear(ks[9], in_dim + hidden, hidden)
    p["q2l2_w"], p["q2l2_b"] = linear(ks[10], hidden, 1)
    return p


def reference_forward(s_list, a_list, params, num_heads):
    with jax.default_matmul_precision("float32"):
        relu = jax.nn.relu
        s_cat = jnp.concatenate(s_list, axis=1)
        a_cat = jnp.concatenate(a_list, axis=1)
        sa = jnp.concatenate([s_cat, a_cat], axis=1)
        sa_hidden = (relu(sa @ params["ce1_w"] + params["ce1_b"])
                     @ params["ce2_w"] + params["ce2_b"])
        st_hidden = (relu(s_cat @ params["se1_w"] + params["se1_b"])
                     @ params["se2_w"] + params["se2_b"])
        Q = sa_hidden @ params["q_w"] + params["q_b"]
        K = st_hidden @ params["k_w"] + params["k_b"]
        V = st_hidden @ params["v_w"] + params["v_b"]
        B, hidden = Q.shape
        hd = hidden // num_heads
        Qh = Q.reshape(B, num_heads, hd)
        Kh = K.reshape(B, num_heads, hd)
        Vh = V.reshape(B, num_heads, hd)
        energy = jnp.einsum("bhd,bjd->bhj", Qh, Kh) / float(hd) ** 0.5
        attn = jax.nn.softmax(energy, axis=-1)
        out = jnp.einsum("bhj,bjd->bhd", attn, Vh)
        attn_out = jnp.transpose(out, (0, 2, 1)).reshape(B, hidden)
        q_in = jnp.concatenate([sa, attn_out], axis=-1)
        q1 = (relu(q_in @ params["q1l1_w"] + params["q1l1_b"])
              @ params["q1l2_w"] + params["q1l2_b"])
        q2 = (relu(q_in @ params["q2l1_w"] + params["q2l1_b"])
              @ params["q2l2_w"] + params["q2l2_b"])
        return q1, q2


# ----------------------------------------------------------------------------
if __name__ == "__main__":
    N_DRONES = 3
    OBS_DIMS = [10, 10, 10]
    ACT_DIMS = [4, 4, 4]
    HIDDEN = 32
    HEADS = 4
    B = 1024          # two 512-row batch tiles -> feeds both v7x TensorCores

    key = jax.random.PRNGKey(0)
    kp, ks, ka = jax.random.split(key, 3)
    params = make_params(kp, OBS_DIMS, ACT_DIMS, HIDDEN)
    s_keys = jax.random.split(ks, N_DRONES)
    a_keys = jax.random.split(ka, N_DRONES)
    s_list = [jax.random.normal(s_keys[i], (B, OBS_DIMS[i]), jnp.float32)
              for i in range(N_DRONES)]
    a_list = [jax.random.normal(a_keys[i], (B, ACT_DIMS[i]), jnp.float32)
              for i in range(N_DRONES)]

    q1_ref, q2_ref = reference_forward(s_list, a_list, params, HEADS)

    # default path: bf16 MXU operands (native on v5e/v6e/v7x), f32 accumulation
    packed, meta = pack_params(params, obs_dim=sum(OBS_DIMS),
                               act_dim=sum(ACT_DIMS), num_heads=HEADS,
                               mxu_dtype=jnp.bfloat16)
    q1, q2 = critic_matd3_attention_forward(s_list, a_list, packed, meta,
                                            block_b=512)
    jax.block_until_ready((q1, q2))
    assert q1.shape == (B, 1) and q2.shape == (B, 1)
    assert float(jnp.max(jnp.abs(q1 - q1_ref))) < 0.15, \
        float(jnp.max(jnp.abs(q1 - q1_ref)))
    assert float(jnp.max(jnp.abs(q2 - q2_ref))) < 0.15, \
        float(jnp.max(jnp.abs(q2 - q2_ref)))

    # f32 operand path (tighter check; approx reciprocal is the only approx op)
    packed32, meta32 = pack_params(params, obs_dim=sum(OBS_DIMS),
                                   act_dim=sum(ACT_DIMS), num_heads=HEADS,
                                   mxu_dtype=jnp.float32)
    q1f, q2f = critic_matd3_attention_forward(s_list, a_list, packed32, meta32,
                                              block_b=512)
    jax.block_until_ready((q1f, q2f))
    assert jnp.allclose(q1f, q1_ref, atol=1e-2, rtol=1e-2), \
        float(jnp.max(jnp.abs(q1f - q1_ref)))
    assert jnp.allclose(q2f, q2_ref, atol=1e-2, rtol=1e-2), \
        float(jnp.max(jnp.abs(q2f - q2_ref)))

    print("KERNEL_OK")
</pallas_src>

<mosaic_0001>
module attributes {stable_mosaic.version = 11 : i64} {
  func.func @_critic_kernel(%arg0: i32, %arg1: memref<512x128xbf16, #tpu.memory_space<vmem>>, %arg2: memref<4x128x128xbf16, #tpu.memory_space<vmem>>, %arg3: memref<2x128x128xbf16, #tpu.memory_space<vmem>>, %arg4: memref<3x128x128xbf16, #tpu.memory_space<vmem>>, %arg5: memref<128x128xbf16, #tpu.memory_space<vmem>>, %arg6: memref<2x128x128xbf16, #tpu.memory_space<vmem>>, %arg7: memref<256x128xbf16, #tpu.memory_space<vmem>>, %arg8: memref<8x128xf32, #tpu.memory_space<vmem>>, %arg9: memref<8x128xf32, #tpu.memory_space<vmem>>, %arg10: memref<1x128xf32, #tpu.memory_space<vmem>>, %arg11: memref<512x128xf32, #tpu.memory_space<vmem>>) attributes {dimension_semantics = [#tpu.dimension_semantics<parallel>], iteration_bounds = array<i64: 2>, scalar_prefetch = 0 : i64, scratch_operands = 0 : i64, tpu.core_type = #tpu.core_type<tc>, window_params = [{transform_indices = @transform_0, window_bounds = array<i64: 512, 128>}, {pipeline_mode = #tpu.pipeline_mode<synchronous>, transform_indices = @transform_1, window_bounds = array<i64: 4, 128, 128>}, {pipeline_mode = #tpu.pipeline_mode<synchronous>, transform_indices = @transform_2, window_bounds = array<i64: 2, 128, 128>}, {pipeline_mode = #tpu.pipeline_mode<synchronous>, transform_indices = @transform_3, window_bounds = array<i64: 3, 128, 128>}, {pipeline_mode = #tpu.pipeline_mode<synchronous>, transform_indices = @transform_4, window_bounds = array<i64: 128, 128>}, {pipeline_mode = #tpu.pipeline_mode<synchronous>, transform_indices = @transform_5, window_bounds = array<i64: 2, 128, 128>}, {pipeline_mode = #tpu.pipeline_mode<synchronous>, transform_indices = @transform_6, window_bounds = array<i64: 256, 128>}, {pipeline_mode = #tpu.pipeline_mode<synchronous>, transform_indices = @transform_7, window_bounds = array<i64: 8, 128>}, {pipeline_mode = #tpu.pipeline_mode<synchronous>, transform_indices = @transform_8, window_bounds = array<i64: 8, 128>}, {pipeline_mode = #tpu.pipeline_mode<synchronous>, transform_indices = @transform_9, window_bounds = array<i64: 1, 128>}, {transform_indices = @transform_10, window_bounds = array<i64: 512, 128>}]} {
    %c0 = arith.constant 0 : index
    %c0_0 = arith.constant 0 : index
    %0 = vector.load %arg1[%c0, %c0_0] : memref<512x128xbf16, #tpu.memory_space<vmem>>, vector<512x128xbf16>
    %c0_1 = arith.constant 0 : index
    %c0_2 = arith.constant 0 : index
    %1 = vector.load %arg8[%c0_1, %c0_2] : memref<8x128xf32, #tpu.memory_space<vmem>>, vector<8x128xf32>
    %c0_3 = arith.constant 0 : index
    %c0_4 = arith.constant 0 : index
    %2 = vector.load %arg9[%c0_3, %c0_4] : memref<8x128xf32, #tpu.memory_space<vmem>>, vector<8x128xf32>
    %c0_5 = arith.constant 0 : index
    %c0_6 = arith.constant 0 : index
    %c0_7 = arith.constant 0 : index
    %3 = vector.load %arg2[%c0_5, %c0_6, %c0_7] : memref<4x128x128xbf16, #tpu.memory_space<vmem>>, vector<1x128x128xbf16>
    %4 = vector.shape_cast %3 : vector<1x128x128xbf16> to vector<128x128xbf16>
    %cst = arith.constant dense<0.000000e+00> : vector<512x128xf32>
    %5 = tpu.matmul %0, %4, %cst {dimension_numbers = #tpu.dot_dimension_numbers<[1], [0], [0], [1], [0, 0, 1, 1], [], []>} : vector<512x128xbf16>, vector<128x128xbf16>, vector<512x128xf32> -> vector<512x128xf32>
    %6 = vector.extract_strided_slice %1 {offsets = [0, 0], sizes = [1, 128], strides = [1, 1]} : vector<8x128xf32> to vector<1x128xf32>
    %7 = vector.broadcast %6 : vector<1x128xf32> to vector<512x128xf32>
    %8 = arith.addf %5, %7 : vector<512x128xf32>
    %cst_8 = arith.constant 0.000000e+00 : f32
    %9 = vector.broadcast %cst_8 : f32 to vector<512x128xf32>
    %10 = arith.maximumf %8, %9 : vector<512x128xf32>
    %c0_9 = arith.constant 0 : index
    %c0_10 = arith.constant 0 : index
    %c0_11 = arith.constant 0 : index
    %11 = vector.load %arg3[%c0_9, %c0_10, %c0_11] : memref<2x128x128xbf16, #tpu.memory_space<vmem>>, vector<1x128x128xbf16>
    %12 = vector.shape_cast %11 : vector<1x128x128xbf16> to vector<128x128xbf16>
    %13 = arith.truncf %10 : vector<512x128xf32> to vector<512x128xbf16>
    %cst_12 = arith.constant dense<0.000000e+00> : vector<512x128xf32>
    %14 = tpu.matmul %13, %12, %cst_12 {dimension_numbers = #tpu.dot_dimension_numbers<[1], [0], [0], [1], [0, 0, 1, 1], [], []>} : vector<512x128xbf16>, vector<128x128xbf16>, vector<512x128xf32> -> vector<512x128xf32>
    %15 = vector.extract_strided_slice %1 {offsets = [1, 0], sizes = [1, 128], strides = [1, 1]} : vector<8x128xf32> to vector<1x128xf32>
    %16 = vector.broadcast %15 : vector<1x128xf32> to vector<512x128xf32>
    %17 = arith.addf %14, %16 : vector<512x128xf32>
    %c1 = arith.constant 1 : index
    %c0_13 = arith.constant 0 : index
    %c0_14 = arith.constant 0 : index
    %18 = vector.load %arg2[%c1, %c0_13, %c0_14] : memref<4x128x128xbf16, #tpu.memory_space<vmem>>, vector<1x128x128xbf16>
    %19 = vector.shape_cast %18 : vector<1x128x128xbf16> to vector<128x128xbf16>
    %cst_15 = arith.constant dense<0.000000e+00> : vector<512x128xf32>
    %20 = tpu.matmul %0, %19, %cst_15 {dimension_numbers = #tpu.dot_dimension_numbers<[1], [0], [0], [1], [0, 0, 1, 1], [], []>} : vector<512x128xbf16>, vector<128x128xbf16>, vector<512x128xf32> -> vector<512x128xf32>
    %21 = vector.extract_strided_slice %1 {offsets = [2, 0], sizes = [1, 128], strides = [1, 1]} : vector<8x128xf32> to vector<1x128xf32>
    %22 = vector.broadcast %21 : vector<1x128xf32> to vector<512x128xf32>
    %23 = arith.addf %20, %22 : vector<512x128xf32>
    %cst_16 = arith.constant 0.000000e+00 : f32
    %24 = vector.broadcast %cst_16 : f32 to vector<512x128xf32>
    %25 = arith.maximumf %23, %24 : vector<512x128xf32>
    %c1_17 = arith.constant 1 : index
    %c0_18 = arith.constant 0 : index
    %c0_19 = arith.constant 0 : index
    %26 = vector.load %arg3[%c1_17, %c0_18, %c0_19] : memref<2x128x128xbf16, #tpu.memory_space<vmem>>, vector<1x128x128xbf16>
    %27 = vector.shape_cast %26 : vector<1x128x128xbf16> to vector<128x128xbf16>
    %28 = arith.truncf %25 : vector<512x128xf32> to vector<512x128xbf16>
    %cst_20 = arith.constant dense<0.000000e+00> : vector<512x128xf32>
    %29 = tpu.matmul %28, %27, %cst_20 {dimension_numbers = #tpu.dot_dimension_numbers<[1], [0], [0], [1], [0, 0, 1, 1], [], []>} : vector<512x128xbf16>, vector<128x128xbf16>, vector<512x128xf32> -> vector<512x128xf32>
    %30 = vector.extract_strided_slice %1 {offsets = [3, 0], sizes = [1, 128], strides = [1, 1]} : vector<8x128xf32> to vector<1x128xf32>
    %31 = vector.broadcast %30 : vector<1x128xf32> to vector<512x128xf32>
    %32 = arith.addf %29, %31 : vector<512x128xf32>
    %c0_21 = arith.constant 0 : index
    %c0_22 = arith.constant 0 : index
    %c0_23 = arith.constant 0 : index
    %33 = vector.load %arg4[%c0_21, %c0_22, %c0_23] : memref<3x128x128xbf16, #tpu.memory_space<vmem>>, vector<1x128x128xbf16>
    %34 = vector.shape_cast %33 : vector<1x128x128xbf16> to vector<128x128xbf16>
    %35 = arith.truncf %17 : vector<512x128xf32> to vector<512x128xbf16>
    %cst_24 = arith.constant dense<0.000000e+00> : vector<512x128xf32>
    %36 = tpu.matmul %35, %34, %cst_24 {dimension_numbers = #tpu.dot_dimension_numbers<[1], [0], [0], [1], [0, 0, 1, 1], [], []>} : vector<512x128xbf16>, vector<128x128xbf16>, vector<512x128xf32> -> vector<512x128xf32>
    %37 = vector.extract_strided_slice %2 {offsets = [0, 0], sizes = [1, 128], strides = [1, 1]} : vector<8x128xf32> to vector<1x128xf32>
    %38 = vector.broadcast %37 : vector<1x128xf32> to vector<512x128xf32>
    %39 = arith.addf %36, %38 : vector<512x128xf32>
    %c1_25 = arith.constant 1 : index
    %c0_26 = arith.constant 0 : index
    %c0_27 = arith.constant 0 : index
    %40 = vector.load %arg4[%c1_25, %c0_26, %c0_27] : memref<3x128x128xbf16, #tpu.memory_space<vmem>>, vector<1x128x128xbf16>
    %41 = vector.shape_cast %40 : vector<1x128x128xbf16> to vector<128x128xbf16>
    %42 = arith.truncf %32 : vector<512x128xf32> to vector<512x128xbf16>
    %cst_28 = arith.constant dense<0.000000e+00> : vector<512x128xf32>
    %43 = tpu.matmul %42, %41, %cst_28 {dimension_numbers = #tpu.dot_dimension_numbers<[1], [0], [0], [1], [0, 0, 1, 1], [], []>} : vector<512x128xbf16>, vector<128x128xbf16>, vector<512x128xf32> -> vector<512x128xf32>
    %44 = vector.extract_strided_slice %2 {offsets = [1, 0], sizes = [1, 128], strides = [1, 1]} : vector<8x128xf32> to vector<1x128xf32>
    %45 = vector.broadcast %44 : vector<1x128xf32> to vector<512x128xf32>
    %46 = arith.addf %43, %45 : vector<512x128xf32>
    %c2 = arith.constant 2 : index
    %c0_29 = arith.constant 0 : index
    %c0_30 = arith.constant 0 : index
    %47 = vector.load %arg4[%c2, %c0_29, %c0_30] : memref<3x128x128xbf16, #tpu.memory_space<vmem>>, vector<1x128x128xbf16>
    %48 = vector.shape_cast %47 : vector<1x128x128xbf16> to vector<128x128xbf16>
    %49 = arith.truncf %32 : vector<512x128xf32> to vector<512x128xbf16>
    %cst_31 = arith.constant dense<0.000000e+00> : vector<512x128xf32>
    %50 = tpu.matmul %49, %48, %cst_31 {dimension_numbers = #tpu.dot_dimension_numbers<[1], [0], [0], [1], [0, 0, 1, 1], [], []>} : vector<512x128xbf16>, vector<128x128xbf16>, vector<512x128xf32> -> vector<512x128xf32>
    %51 = vector.extract_strided_slice %2 {offsets = [2, 0], sizes = [1, 128], strides = [1, 1]} : vector<8x128xf32> to vector<1x128xf32>
    %52 = vector.broadcast %51 : vector<1x128xf32> to vector<512x128xf32>
    %53 = arith.addf %50, %52 : vector<512x128xf32>
    %54 = arith.mulf %39, %46 : vector<512x128xf32>
    %c0_32 = arith.constant 0 : index
    %c0_33 = arith.constant 0 : index
    %55 = vector.load %arg5[%c0_32, %c0_33] : memref<128x128xbf16, #tpu.memory_space<vmem>>, vector<128x128xbf16>
    %56 = arith.truncf %54 : vector<512x128xf32> to vector<512x128xbf16>
    %cst_34 = arith.constant dense<0.000000e+00> : vector<512x128xf32>
    %57 = tpu.matmul %56, %55, %cst_34 {dimension_numbers = #tpu.dot_dimension_numbers<[1], [0], [0], [1], [0, 0, 1, 1], [], []>} : vector<512x128xbf16>, vector<128x128xbf16>, vector<512x128xf32> -> vector<512x128xf32>
    %c32_i32 = arith.constant 32 : i32
    %58 = tpu.dynamic_rotate %57 by %c32_i32 dim 1 : vector<512x128xf32>, i32 -> vector<512x128xf32>
    %59 = arith.maximumf %57, %58 : vector<512x128xf32>
    %c64_i32 = arith.constant 64 : i32
    %60 = tpu.dynamic_rotate %59 by %c64_i32 dim 1 : vector<512x128xf32>, i32 -> vector<512x128xf32>
    %61 = arith.maximumf %59, %60 : vector<512x128xf32>
    %62 = arith.subf %57, %61 : vector<512x128xf32>
    %63 = math.exp %62 : vector<512x128xf32>
    %c32_i32_35 = arith.constant 32 : i32
    %64 = tpu.dynamic_rotate %63 by %c32_i32_35 dim 1 : vector<512x128xf32>, i32 -> vector<512x128xf32>
    %65 = arith.addf %63, %64 : vector<512x128xf32>
    %c64_i32_36 = arith.constant 64 : i32
    %66 = tpu.dynamic_rotate %65 by %c64_i32_36 dim 1 : vector<512x128xf32>, i32 -> vector<512x128xf32>
    %67 = arith.addf %65, %66 : vector<512x128xf32>
    %68 = tpu.reciprocal %67 {approx = true} : vector<512x128xf32> -> vector<512x128xf32>
    %69 = arith.mulf %63, %68 : vector<512x128xf32>
    %70 = arith.mulf %69, %53 : vector<512x128xf32>
    %c32_i32_37 = arith.constant 32 : i32
    %71 = tpu.dynamic_rotate %70 by %c32_i32_37 dim 1 : vector<512x128xf32>, i32 -> vector<512x128xf32>
    %72 = arith.addf %70, %71 : vector<512x128xf32>
    %c64_i32_38 = arith.constant 64 : i32
    %73 = tpu.dynamic_rotate %72 by %c64_i32_38 dim 1 : vector<512x128xf32>, i32 -> vector<512x128xf32>
    %74 = arith.addf %72, %73 : vector<512x128xf32>
    %c2_39 = arith.constant 2 : index
    %c0_40 = arith.constant 0 : index
    %c0_41 = arith.constant 0 : index
    %75 = vector.load %arg2[%c2_39, %c0_40, %c0_41] : memref<4x128x128xbf16, #tpu.memory_space<vmem>>, vector<1x128x128xbf16>
    %76 = vector.shape_cast %75 : vector<1x128x128xbf16> to vector<128x128xbf16>
    %cst_42 = arith.constant dense<0.000000e+00> : vector<512x128xf32>
    %77 = tpu.matmul %0, %76, %cst_42 {dimension_numbers = #tpu.dot_dimension_numbers<[1], [0], [0], [1], [0, 0, 1, 1], [], []>} : vector<512x128xbf16>, vector<128x128xbf16>, vector<512x128xf32> -> vector<512x128xf32>
    %c0_43 = arith.constant 0 : index
    %c0_44 = arith.constant 0 : index
    %c0_45 = arith.constant 0 : index
    %78 = vector.load %arg6[%c0_43, %c0_44, %c0_45] : memref<2x128x128xbf16, #tpu.memory_space<vmem>>, vector<1x128x128xbf16>
    %79 = vector.shape_cast %78 : vector<1x128x128xbf16> to vector<128x128xbf16>
    %80 = arith.truncf %74 : vector<512x128xf32> to vector<512x128xbf16>
    %cst_46 = arith.constant dense<0.000000e+00> : vector<512x128xf32>
    %81 = tpu.matmul %80, %79, %cst_46 {dimension_numbers = #tpu.dot_dimension_numbers<[1], [0], [0], [1], [0, 0, 1, 1], [], []>} : vector<512x128xbf16>, vector<128x128xbf16>, vector<512x128xf32> -> vector<512x128xf32>
    %82 = arith.addf %77, %81 : vector<512x128xf32>
    %83 = vector.extract_strided_slice %1 {offsets = [4, 0], sizes = [1, 128], strides = [1, 1]} : vector<8x128xf32> to vector<1x128xf32>
    %84 = vector.broadcast %83 : vector<1x128xf32> to vector<512x128xf32>
    %85 = arith.addf %82, %84 : vector<512x128xf32>
    %cst_47 = arith.constant 0.000000e+00 : f32
    %86 = vector.broadcast %cst_47 : f32 to vector<512x128xf32>
    %87 = arith.maximumf %85, %86 : vector<512x128xf32>
    %c3 = arith.constant 3 : index
    %c0_48 = arith.constant 0 : index
    %c0_49 = arith.constant 0 : index
    %88 = vector.load %arg2[%c3, %c0_48, %c0_49] : memref<4x128x128xbf16, #tpu.memory_space<vmem>>, vector<1x128x128xbf16>
    %89 = vector.shape_cast %88 : vector<1x128x128xbf16> to vector<128x128xbf16>
    %cst_50 = arith.constant dense<0.000000e+00> : vector<512x128xf32>
    %90 = tpu.matmul %0, %89, %cst_50 {dimension_numbers = #tpu.dot_dimension_numbers<[1], [0], [0], [1], [0, 0, 1, 1], [], []>} : vector<512x128xbf16>, vector<128x128xbf16>, vector<512x128xf32> -> vector<512x128xf32>
    %c1_51 = arith.constant 1 : index
    %c0_52 = arith.constant 0 : index
    %c0_53 = arith.constant 0 : index
    %91 = vector.load %arg6[%c1_51, %c0_52, %c0_53] : memref<2x128x128xbf16, #tpu.memory_space<vmem>>, vector<1x128x128xbf16>
    %92 = vector.shape_cast %91 : vector<1x128x128xbf16> to vector<128x128xbf16>
    %93 = arith.truncf %74 : vector<512x128xf32> to vector<512x128xbf16>
    %cst_54 = arith.constant dense<0.000000e+00> : vector<512x128xf32>
    %94 = tpu.matmul %93, %92, %cst_54 {dimension_numbers = #tpu.dot_dimension_numbers<[1], [0], [0], [1], [0, 0, 1, 1], [], []>} : vector<512x128xbf16>, vector<128x128xbf16>, vector<512x128xf32> -> vector<512x128xf32>
    %95 = arith.addf %90, %94 : vector<512x128xf32>
    %96 = vector.extract_strided_slice %1 {offsets = [5, 0], sizes = [1, 128], strides = [1, 1]} : vector<8x128xf32> to vector<1x128xf32>
    %97 = vector.broadcast %96 : vector<1x128xf32> to vector<512x128xf32>
    %98 = arith.addf %95, %97 : vector<512x128xf32>
    %cst_55 = arith.constant 0.000000e+00 : f32
    %99 = vector.broadcast %cst_55 : f32 to vector<512x128xf32>
    %100 = arith.maximumf %98, %99 : vector<512x128xf32>
    %101 = tpu.concatenate %87, %100 in 1 : vector<512x128xf32>, vector<512x128xf32> -> vector<512x256xf32>
    %c0_56 = arith.constant 0 : index
    %c0_57 = arith.constant 0 : index
    %102 = vector.load %arg7[%c0_56, %c0_57] : memref<256x128xbf16, #tpu.memory_space<vmem>>, vector<256x128xbf16>
    %103 = arith.truncf %101 : vector<512x256xf32> to vector<512x256xbf16>
    %cst_58 = arith.constant dense<0.000000e+00> : vector<512x128xf32>
    %104 = tpu.matmul %103, %102, %cst_58 {dimension_numbers = #tpu.dot_dimension_numbers<[1], [0], [0], [1], [0, 0, 1, 1], [], []>} : vector<512x256xbf16>, vector<256x128xbf16>, vector<512x128xf32> -> vector<512x128xf32>
    %c0_59 = arith.constant 0 : index
    %c0_60 = arith.constant 0 : index
    %105 = vector.load %arg10[%c0_59, %c0_60] : memref<1x128xf32, #tpu.memory_space<vmem>>, vector<1x128xf32>
    %106 = vector.broadcast %105 : vector<1x128xf32> to vector<512x128xf32>
    %107 = arith.addf %104, %106 : vector<512x128xf32>
    %c0_61 = arith.constant 0 : index
    %c0_62 = arith.constant 0 : index
    %108 = vector.load %arg11[%c0_61, %c0_62] : memref<512x128xf32, #tpu.memory_space<vmem>>, vector<512x128xf32>
    tpu.vector_store %arg11[%c0_61, %c0_62], %107 {strides = array<i32>} : memref<512x128xf32, #tpu.memory_space<vmem>>, vector<512x128xf32>,
    return
  }
  func.func @transform_0(%arg0: i32) -> (i32, i32) {
    %c0_i32 = arith.constant 0 : i32
    %c0_i32_0 = arith.constant 0 : i32
    return %arg0, %c0_i32 : i32, i32
  }
  func.func @transform_1(%arg0: i32) -> (i32, i32, i32) {
    %c0_i32 = arith.constant 0 : i32
    %c0_i32_0 = arith.constant 0 : i32
    %c0_i32_1 = arith.constant 0 : i32
    %c0_i32_2 = arith.constant 0 : i32
    return %c0_i32, %c0_i32_0, %c0_i32_1 : i32, i32, i32
  }
  func.func @transform_2(%arg0: i32) -> (i32, i32, i32) {
    %c0_i32 = arith.constant 0 : i32
    %c0_i32_0 = arith.constant 0 : i32
    %c0_i32_1 = arith.constant 0 : i32
    %c0_i32_2 = arith.constant 0 : i32
    return %c0_i32, %c0_i32_0, %c0_i32_1 : i32, i32, i32
  }
  func.func @transform_3(%arg0: i32) -> (i32, i32, i32) {
    %c0_i32 = arith.constant 0 : i32
    %c0_i32_0 = arith.constant 0 : i32
    %c0_i32_1 = arith.constant 0 : i32
    %c0_i32_2 = arith.constant 0 : i32
    return %c0_i32, %c0_i32_0, %c0_i32_1 : i32, i32, i32
  }
  func.func @transform_4(%arg0: i32) -> (i32, i32) {
    %c0_i32 = arith.constant 0 : i32
    %c0_i32_0 = arith.constant 0 : i32
    %c0_i32_1 = arith.constant 0 : i32
    return %c0_i32, %c0_i32_0 : i32, i32
  }
  func.func @transform_5(%arg0: i32) -> (i32, i32, i32) {
    %c0_i32 = arith.constant 0 : i32
    %c0_i32_0 = arith.constant 0 : i32
    %c0_i32_1 = arith.constant 0 : i32
    %c0_i32_2 = arith.constant 0 : i32
    return %c0_i32, %c0_i32_0, %c0_i32_1 : i32, i32, i32
  }
  func.func @transform_6(%arg0: i32) -> (i32, i32) {
    %c0_i32 = arith.constant 0 : i32
    %c0_i32_0 = arith.constant 0 : i32
    %c0_i32_1 = arith.constant 0 : i32
    return %c0_i32, %c0_i32_0 : i32, i32
  }
  func.func @transform_7(%arg0: i32) -> (i32, i32) {
    %c0_i32 = arith.constant 0 : i32
    %c0_i32_0 = arith.constant 0 : i32
    %c0_i32_1 = arith.constant 0 : i32
    return %c0_i32, %c0_i32_0 : i32, i32
  }
  func.func @transform_8(%arg0: i32) -> (i32, i32) {
    %c0_i32 = arith.constant 0 : i32
    %c0_i32_0 = arith.constant 0 : i32
    %c0_i32_1 = arith.constant 0 : i32
    return %c0_i32, %c0_i32_0 : i32, i32
  }
  func.func @transform_9(%arg0: i32) -> (i32, i32) {
    %c0_i32 = arith.constant 0 : i32
    %c0_i32_0 = arith.constant 0 : i32
    %c0_i32_1 = arith.constant 0 : i32
    return %c0_i32, %c0_i32_0 : i32, i32
  }
  func.func @transform_10(%arg0: i32) -> (i32, i32) {
    %c0_i32 = arith.constant 0 : i32
    %c0_i32_0 = arith.constant 0 : i32
    return %arg0, %c0_i32 : i32, i32
  }
}

</mosaic_0001>

<llo_original>
// kernel: tpu_custom_call.1
$region0: #{tpu_custom_call.1}
  #allocation0 [shape = 'u32[]', space=smem, size = 0x4, offset = 0x4, fixed_abs, tag = 'smem constant byte address 0x4 - core index']
  #allocation1 [shape = 'u32[144,128]{1,0:T(1,128)}', space=vmem, size = 0x12000, scoped, tag = 'internal scratch']
  %s0 = inlined_call_operand.hbm [shape: bf16[1024,128], index: 0, kind: input, shape index: {}]
  %s1 = inlined_call_operand.hbm [shape: bf16[4,128,128], index: 1, kind: input, shape index: {}]
  %s2 = inlined_call_operand.hbm [shape: bf16[2,128,128], index: 2, kind: input, shape index: {}]
  %s3 = inlined_call_operand.hbm [shape: bf16[3,128,128], index: 3, kind: input, shape index: {}]
  %s4 = inlined_call_operand.hbm [shape: bf16[128,128], index: 4, kind: input, shape index: {}]
  %s5 = inlined_call_operand.hbm [shape: bf16[2,128,128], index: 5, kind: input, shape index: {}]
  %s6 = inlined_call_operand.hbm [shape: bf16[256,128], index: 6, kind: input, shape index: {}]
  %s7 = inlined_call_operand.vmem [shape: f32[8,128], index: 7, kind: input, shape index: {}]
  %s8 = inlined_call_operand.hbm [shape: f32[8,128], index: 8, kind: input, shape index: {}]
  %s9 = inlined_call_operand.vmem [shape: f32[1,128], index: 9, kind: input, shape index: {}]
  %s10 = inlined_call_operand.hbm [shape: f32[1024,128], index: 10, kind: output, shape index: {}]
  %s11 = sld [smem:[#allocation0]]
  $region105: #{tpu_custom_call.1} parent=0
    _
  %s13 = ssub.s32 1, %s11
  %s14 = scalar_select 0, %s13, %s11
  $region1: #{tpu_custom_call.1} parent=0
    #allocation2 [shape = 'u8[262144]{0}', space=vmem, size = 0x40000, scoped, tag = 'input window, operand 0']
    #allocation3 [shape = 's32[2]{0}', space=sflag, size = 0x8, scoped, tag = 'scoped memory for tpu_custom_call.1']
    #allocation4 [shape = 's32[2]{0}', space=sflag, size = 0x8, scoped, tag = 'scoped memory for tpu_custom_call.1']
    #allocation5 [shape = 'u8[131072]{0}', space=vmem, size = 0x20000, scoped, tag = 'input window, operand 1, single buffered']
    #allocation6 [shape = 's32[1]{0}', space=sflag, size = 0x4, scoped, tag = 'scoped memory for tpu_custom_call.1']
    #allocation7 [shape = 'u8[65536]{0}', space=vmem, size = 0x10000, scoped, tag = 'input window, operand 2, single buffered']
    #allocation8 [shape = 'u8[98304]{0}', space=vmem, size = 0x18000, scoped, tag = 'input window, operand 3, single buffered']
    #allocation9 [shape = 's32[1]{0}', space=sflag, size = 0x4, scoped, tag = 'scoped memory for tpu_custom_call.1']
    #allocation10 [shape = 'u8[32768]{0}', space=vmem, size = 0x8000, scoped, tag = 'input window, operand 4, single buffered']
    #allocation11 [shape = 'u8[65536]{0}', space=vmem, size = 0x10000, scoped, tag = 'input window, operand 5, single buffered']
    #allocation12 [shape = 's32[1]{0}', space=sflag, size = 0x4, scoped, tag = 'scoped memory for tpu_custom_call.1']
    #allocation13 [shape = 'u8[65536]{0}', space=vmem, size = 0x10000, scoped, tag = 'input window, operand 6, single buffered']
    #allocation14 [shape = 'u8[4096]{0}', space=vmem, size = 0x1000, scoped, tag = 'input window, operand 8, single buffered']
    #allocation15 [shape = 's32[1]{0}', space=sflag, size = 0x4, scoped, tag = 'scoped memory for tpu_custom_call.1']
    #allocation16 [shape = 'u8[524288]{0}', space=vmem, size = 0x80000, scoped, tag = 'output window, operand 0']
    %15 = vsyncpa [#allocation3], 0
    %s16 = scalar_lea.sflag [#allocation3], 1
    %17 = vsyncpa %s16, 0
    %18 = vsyncpa [#allocation6], 0
    %19 = vsyncpa [#allocation9], 0
    %20 = vsyncpa [#allocation12], 0
    %21 = vsyncpa [#allocation15], 0
    %22 = vsyncpa [#allocation4], 0
    %s23 = scalar_lea.sflag [#allocation4], 1
    %24 = vsyncpa %s23, 0
    loop: start=0, step=1, limit=4
    $region2: #{tpu_custom_call.1} parent=1 // loop_pre_header
      _
    $region3: #{tpu_custom_call.1} parent=1 // loop_header
      %s26 = sphi 0, %s30
      %p27 = scmp.ge.s32.totalorder %s26, 4
      %s36 = sphi 0, %s38
      %s39 = sphi 0, %s36
      %s40 = sphi 0, %s39
      %s56 = sphi 0, %s40
      %s60 = sphi 0, %s60
      %s62 = sphi 0, %s60
      %s63 = sphi 0, %s62
      %s77 = sphi 0, %s63
      %s81 = sphi 0, %s81
      %s83 = sphi 0, %s81
      %s84 = sphi 0, %s83
      %s98 = sphi 0, %s84
      %s102 = sphi 0, %s102
      %s104 = sphi 0, %s102
      %s105 = sphi 0, %s104
      %s119 = sphi 0, %s105
      %s123 = sphi 0, %s123
      %s125 = sphi 0, %s123
      %s126 = sphi 0, %s125
      %s140 = sphi 0, %s126
      %s144 = sphi 0, %s144
      %s146 = sphi 0, %s144
      %s147 = sphi 0, %s146
      %s161 = sphi 0, %s147
      %s165 = sphi 0, %s165
      %s167 = sphi 0, %s165
      %s168 = sphi 0, %s167
      %s182 = sphi 0, %s168
      %s186 = sphi 0, %s186
      %s188 = sphi 0, %s186
      %s189 = sphi 0, %s188
      %s203 = sphi 0, %s189
      %s207 = sphi 0, %s207
      %s209 = sphi 0, %s207
      %s210 = sphi 0, %s209
      %s224 = sphi 0, %s210
      %s228 = sphi 0, %s228
      %s230 = sphi 0, %s228
      %s231 = sphi 0, %s230
      %s245 = sphi 0, %s231
      %s251 = sphi 0, %s253
      %s254 = sphi 0, %s251
      %s255 = sphi 0, %s254
      %s271 = sphi 0, %s255
    $region4: #{tpu_custom_call.1} parent=1 // loop_header_branch
      %29 = sbr.rel (%p27) target = $region8
    $region5: #{tpu_custom_call.1} parent=1 // loop_body
      %s31 = ssub.s32 %s26, 1
      %s32 = ssub.s32 %s26, 2
      %s33 = sadd.s32 %s26, 1
      %s34 = ssub.s32 %s26, %s33
      %p35 = scmp.eq.s32.totalorder %s34, 0
      %s37 = sadd.s32 %s36, 1
      %s38 = scalar_select %p35, %s36, %s37
      %p41 = pneg %p35
      %p42 = scmp.eq.s32.totalorder %s26, 1
      %p43 = por %p41, %p42
      %p44 = scmp.ne.s32.totalorder %s36, %s39
      %p45 = scmp.eq.s32.totalorder %s26, 0
      %p46 = por %p44, %p45
      %p47 = scmp.ne.s32.totalorder %s36, %s39
      %p48 = scmp.eq.s32.totalorder %s31, 1
      %p49 = por %p47, %p48
      %p50 = scmp.ne.s32.totalorder %s39, %s40
      %p51 = scmp.eq.s32.totalorder %s31, 0
      %p52 = por %p50, %p51
      %p53 = scmp.ne.s32.totalorder %s39, %s40
      %p54 = scmp.eq.s32.totalorder %s32, 1
      %p55 = por %p53, %p54
      %p57 = scmp.ne.s32.totalorder %s40, %s56
      %p58 = scmp.eq.s32.totalorder %s32, 0
      %p59 = por %p57, %p58
      %s61 = sadd.s32 %s60, 1
      %p64 = scmp.eq.s32.totalorder %s26, 1
      %p65 = scmp.ne.s32.totalorder %s60, %s62
      %p66 = scmp.eq.s32.totalorder %s26, 0
      %p67 = por %p65, %p66
      %p68 = scmp.ne.s32.totalorder %s60, %s62
      %p69 = scmp.eq.s32.totalorder %s31, 1
      %p70 = por %p68, %p69
      %p71 = scmp.ne.s32.totalorder %s62, %s63
      %p72 = scmp.eq.s32.totalorder %s31, 0
      %p73 = por %p71, %p72
      %p74 = scmp.ne.s32.totalorder %s62, %s63
      %p75 = scmp.eq.s32.totalorder %s32, 1
      %p76 = por %p74, %p75
      %p78 = scmp.ne.s32.totalorder %s63, %s77
      %p79 = scmp.eq.s32.totalorder %s32, 0
      %p80 = por %p78, %p79
      %s82 = sadd.s32 %s81, 1
      %p85 = scmp.eq.s32.totalorder %s26, 1
      %p86 = scmp.ne.s32.totalorder %s81, %s83
      %p87 = scmp.eq.s32.totalorder %s26, 0
      %p88 = por %p86, %p87
      %p89 = scmp.ne.s32.totalorder %s81, %s83
      %p90 = scmp.eq.s32.totalorder %s31, 1
      %p91 = por %p89, %p90
      %p92 = scmp.ne.s32.totalorder %s83, %s84
      %p93 = scmp.eq.s32.totalorder %s31, 0
      %p94 = por %p92, %p93
      %p95 = scmp.ne.s32.totalorder %s83, %s84
      %p96 = scmp.eq.s32.totalorder %s32, 1
      %p97 = por %p95, %p96
      %p99 = scmp.ne.s32.totalorder %s84, %s98
      %p100 = scmp.eq.s32.totalorder %s32, 0
      %p101 = por %p99, %p100
      %s103 = sadd.s32 %s102, 1
      %p106 = scmp.eq.s32.totalorder %s26, 1
      %p107 = scmp.ne.s32.totalorder %s102, %s104
      %p108 = scmp.eq.s32.totalorder %s26, 0
      %p109 = por %p107, %p108
      %p110 = scmp.ne.s32.totalorder %s102, %s104
      %p111 = scmp.eq.s32.totalorder %s31, 1
      %p112 = por %p110, %p111
      %p113 = scmp.ne.s32.totalorder %s104, %s105
      %p114 = scmp.eq.s32.totalorder %s31, 0
      %p115 = por %p113, %p114
      %p116 = scmp.ne.s32.totalorder %s104, %s105
      %p117 = scmp.eq.s32.totalorder %s32, 1
      %p118 = por %p116, %p117
      %p120 = scmp.ne.s32.totalorder %s105, %s119
      %p121 = scmp.eq.s32.totalorder %s32, 0
      %p122 = por %p120, %p121
      %s124 = sadd.s32 %s123, 1
      %p127 = scmp.eq.s32.totalorder %s26, 1
      %p128 = scmp.ne.s32.totalorder %s123, %s125
      %p129 = scmp.eq.s32.totalorder %s26, 0
      %p130 = por %p128, %p129
      %p131 = scmp.ne.s32.totalorder %s123, %s125
      %p132 = scmp.eq.s32.totalorder %s31, 1
      %p133 = por %p131, %p132
      %p134 = scmp.ne.s32.totalorder %s125, %s126
      %p135 = scmp.eq.s32.totalorder %s31, 0
      %p136 = por %p134, %p135
      %p137 = scmp.ne.s32.totalorder %s125, %s126
      %p138 = scmp.eq.s32.totalorder %s32, 1
      %p139 = por %p137, %p138
      %p141 = scmp.ne.s32.totalorder %s126, %s140
      %p142 = scmp.eq.s32.totalorder %s32, 0
      %p143 = por %p141, %p142
      %s145 = sadd.s32 %s144, 1
      %p148 = scmp.eq.s32.totalorder %s26, 1
      %p149 = scmp.ne.s32.totalorder %s144, %s146
      %p150 = scmp.eq.s32.totalorder %s26, 0
      %p151 = por %p149, %p150
      %p152 = scmp.ne.s32.totalorder %s144, %s146
      %p153 = scmp.eq.s32.totalorder %s31, 1
      %p154 = por %p152, %p153
      %p155 = scmp.ne.s32.totalorder %s146, %s147
      %p156 = scmp.eq.s32.totalorder %s31, 0
      %p157 = por %p155, %p156
      %p158 = scmp.ne.s32.totalorder %s146, %s147
      %p159 = scmp.eq.s32.totalorder %s32, 1
      %p160 = por %p158, %p159
      %p162 = scmp.ne.s32.totalorder %s147, %s161
      %p163 = scmp.eq.s32.totalorder %s32, 0
      %p164 = por %p162, %p163
      %s166 = sadd.s32 %s165, 1
      %p169 = scmp.eq.s32.totalorder %s26, 1
      %p170 = scmp.ne.s32.totalorder %s165, %s167
      %p171 = scmp.eq.s32.totalorder %s26, 0
      %p172 = por %p170, %p171
      %p173 = scmp.ne.s32.totalorder %s165, %s167
      %p174 = scmp.eq.s32.totalorder %s31, 1
      %p175 = por %p173, %p174
      %p176 = scmp.ne.s32.totalorder %s167, %s168
      %p177 = scmp.eq.s32.totalorder %s31, 0
      %p178 = por %p176, %p177
      %p179 = scmp.ne.s32.totalorder %s167, %s168
      %p180 = scmp.eq.s32.totalorder %s32, 1
      %p181 = por %p179, %p180
      %p183 = scmp.ne.s32.totalorder %s168, %s182
      %p184 = scmp.eq.s32.totalorder %s32, 0
      %p185 = por %p183, %p184
      %s187 = sadd.s32 %s186, 1
      %p190 = scmp.eq.s32.totalorder %s26, 1
      %p191 = scmp.ne.s32.totalorder %s186, %s188
      %p192 = scmp.eq.s32.totalorder %s26, 0
      %p193 = por %p191, %p192
      %p194 = scmp.ne.s32.totalorder %s186, %s188
      %p195 = scmp.eq.s32.totalorder %s31, 1
      %p196 = por %p194, %p195
      %p197 = scmp.ne.s32.totalorder %s188, %s189
      %p198 = scmp.eq.s32.totalorder %s31, 0
      %p199 = por %p197, %p198
      %p200 = scmp.ne.s32.totalorder %s188, %s189
      %p201 = scmp.eq.s32.totalorder %s32, 1
      %p202 = por %p200, %p201
      %p204 = scmp.ne.s32.totalorder %s189, %s203
      %p205 = scmp.eq.s32.totalorder %s32, 0
      %p206 = por %p204, %p205
      %s208 = sadd.s32 %s207, 1
      %p211 = scmp.eq.s32.totalorder %s26, 1
      %p212 = scmp.ne.s32.totalorder %s207, %s209
      %p213 = scmp.eq.s32.totalorder %s26, 0
      %p214 = por %p212, %p213
      %p215 = scmp.ne.s32.totalorder %s207, %s209
      %p216 = scmp.eq.s32.totalorder %s31, 1
      %p217 = por %p215, %p216
      %p218 = scmp.ne.s32.totalorder %s209, %s210
      %p219 = scmp.eq.s32.totalorder %s31, 0
      %p220 = por %p218, %p219
      %p221 = scmp.ne.s32.totalorder %s209, %s210
      %p222 = scmp.eq.s32.totalorder %s32, 1
      %p223 = por %p221, %p222
      %p225 = scmp.ne.s32.totalorder %s210, %s224
      %p226 = scmp.eq.s32.totalorder %s32, 0
      %p227 = por %p225, %p226
      %s229 = sadd.s32 %s228, 1
      %p232 = scmp.eq.s32.totalorder %s26, 1
      %p233 = scmp.ne.s32.totalorder %s228, %s230
      %p234 = scmp.eq.s32.totalorder %s26, 0
      %p235 = por %p233, %p234
      %p236 = scmp.ne.s32.totalorder %s228, %s230
      %p237 = scmp.eq.s32.totalorder %s31, 1
      %p238 = por %p236, %p237
      %p239 = scmp.ne.s32.totalorder %s230, %s231
      %p240 = scmp.eq.s32.totalorder %s31, 0
      %p241 = por %p239, %p240
      %p242 = scmp.ne.s32.totalorder %s230, %s231
      %p243 = scmp.eq.s32.totalorder %s32, 1
      %p244 = por %p242, %p243
      %p246 = scmp.ne.s32.totalorder %s231, %s245
      %p247 = scmp.eq.s32.totalorder %s32, 0
      %p248 = por %p246, %p247
      %s249 = ssub.s32 %s26, %s33
      %p250 = scmp.eq.s32.totalorder %s249, 0
      %s252 = sadd.s32 %s251, 1
      %s253 = scalar_select %p250, %s251, %s252
      %p256 = pneg %p250
      %p257 = scmp.eq.s32.totalorder %s26, 1
      %p258 = por %p256, %p257
      %p259 = scmp.ne.s32.totalorder %s251, %s254
      %p260 = scmp.eq.s32.totalorder %s26, 0
      %p261 = por %p259, %p260
      %p262 = scmp.ne.s32.totalorder %s251, %s254
      %p263 = scmp.eq.s32.totalorder %s31, 1
      %p264 = por %p262, %p263
      %p265 = scmp.ne.s32.totalorder %s254, %s255
      %p266 = scmp.eq.s32.totalorder %s31, 0
      %p267 = por %p265, %p266
      %p268 = scmp.ne.s32.totalorder %s254, %s255
      %p269 = scmp.eq.s32.totalorder %s32, 1
      %p270 = por %p268, %p269
      %p272 = scmp.ne.s32.totalorder %s255, %s271
      %p273 = scmp.eq.s32.totalorder %s32, 0
      %p274 = por %p272, %p273
      %p275 = scmp.le.s32.totalorder 1, %s26
      %p276 = scmp.lt.s32.totalorder %s26, 3
      %p277 = pnand %p275, %p276
      %p278 = pneg %p277
      // Predicated region
      $region9: #{tpu_custom_call.1} parent=5 // pred_check
        _
      $region10: #{tpu_custom_call.1} parent=5 // pred_check_branch
        %280 = sbr.rel (%p277) target = $region12
      $region11: #{tpu_custom_call.1} parent=5 // pred_region
        %s281 = ssub.s32 %s26, 1
        // Predicated region
        $region13: #{tpu_custom_call.1} parent=11 // pred_check
          %p282 = pneg %p73
        $region14: #{tpu_custom_call.1} parent=11 // pred_check_branch
          %284 = sbr.rel (%p282) target = $region16
        $region15: #{tpu_custom_call.1} parent=11 // pred_region
          %s286 = ssub.s32 4096, 4096
          %287 = vsyncadd [#allocation6], %s286
          %s288 = sshll.u32 [#allocation5], 4
          %s289 = int_to_ptr.vmem [resolvable:$true] %s288
          %294 = dma.hbm_to_vmem [thread:$0]  %s1, 4096, %s289, [#allocation6], 64, 64, 4
        $region16: #{tpu_custom_call.1} parent=11 // pred_fallthru
          _
        // Predicated region
        $region17: #{tpu_custom_call.1} parent=11 // pred_check
          %p295 = pneg %p94
        $region18: #{tpu_custom_call.1} parent=11 // pred_check_branch
          %297 = sbr.rel (%p295) target = $region20
        $region19: #{tpu_custom_call.1} parent=11 // pred_region
          %s299 = ssub.s32 2048, 2048
          %300 = vsyncadd [#allocation6], %s299
          %s301 = sshll.u32 [#allocation7], 4
          %s302 = int_to_ptr.vmem [resolvable:$true] %s301
          %307 = dma.hbm_to_vmem [thread:$0]  %s2, 2048, %s302, [#allocation6], 64, 64, 4
        $region20: #{tpu_custom_call.1} parent=11 // pred_fallthru
          _
        // Predicated region
        $region21: #{tpu_custom_call.1} parent=11 // pred_check
          %p308 = pneg %p115
        $region22: #{tpu_custom_call.1} parent=11 // pred_check_branch
          %310 = sbr.rel (%p308) target = $region24
        $region23: #{tpu_custom_call.1} parent=11 // pred_region
          %s312 = ssub.s32 3072, 3072
          %313 = vsyncadd [#allocation9], %s312
          %s314 = sshll.u32 [#allocation8], 4
          %s315 = int_to_ptr.vmem [resolvable:$true] %s314
          %320 = dma.hbm_to_vmem [thread:$0]  %s3, 3072, %s315, [#allocation9], 64, 64, 4
        $region24: #{tpu_custom_call.1} parent=11 // pred_fallthru
          _
        // Predicated region
        $region25: #{tpu_custom_call.1} parent=11 // pred_check
          %p321 = pneg %p136
        $region26: #{tpu_custom_call.1} parent=11 // pred_check_branch
          %323 = sbr.rel (%p321) target = $region28
        $region27: #{tpu_custom_call.1} parent=11 // pred_region
          %s325 = ssub.s32 1024, 1024
          %326 = vsyncadd [#allocation9], %s325
          %s327 = sshll.u32 [#allocation10], 4
          %s328 = int_to_ptr.vmem [resolvable:$true] %s327
          %333 = dma.hbm_to_vmem [thread:$0]  %s4, 1024, %s328, [#allocation9], 64, 64, 4
        $region28: #{tpu_custom_call.1} parent=11 // pred_fallthru
          _
        // Predicated region
        $region29: #{tpu_custom_call.1} parent=11 // pred_check
          %p334 = pneg %p157
        $region30: #{tpu_custom_call.1} parent=11 // pred_check_branch
          %336 = sbr.rel (%p334) target = $region32
        $region31: #{tpu_custom_call.1} parent=11 // pred_region
          %s338 = ssub.s32 2048, 2048
          %339 = vsyncadd [#allocation12], %s338
          %s340 = sshll.u32 [#allocation11], 4
          %s341 = int_to_ptr.vmem [resolvable:$true] %s340
          %346 = dma.hbm_to_vmem [thread:$0]  %s5, 2048, %s341, [#allocation12], 64, 64, 4
        $region32: #{tpu_custom_call.1} parent=11 // pred_fallthru
          _
        // Predicated region
        $region33: #{tpu_custom_call.1} parent=11 // pred_check
          %p347 = pneg %p178
        $region34: #{tpu_custom_call.1} parent=11 // pred_check_branch
          %349 = sbr.rel (%p347) target = $region36
        $region35: #{tpu_custom_call.1} parent=11 // pred_region
          %s351 = ssub.s32 2048, 2048
          %352 = vsyncadd [#allocation12], %s351
          %s353 = sshll.u32 [#allocation13], 4
          %s354 = int_to_ptr.vmem [resolvable:$true] %s353
          %359 = dma.hbm_to_vmem [thread:$0]  %s6, 2048, %s354, [#allocation12], 64, 64, 4
        $region36: #{tpu_custom_call.1} parent=11 // pred_fallthru
          _
        // Predicated region
        $region37: #{tpu_custom_call.1} parent=11 // pred_check
          %p360 = pneg %p199
        $region38: #{tpu_custom_call.1} parent=11 // pred_check_branch
          %362 = sbr.rel (%p360) target = $region40
        $region39: #{tpu_custom_call.1} parent=11 // pred_region
          _
        $region40: #{tpu_custom_call.1} parent=11 // pred_fallthru
          _
        // Predicated region
        $region41: #{tpu_custom_call.1} parent=11 // pred_check
          %p363 = pneg %p220
        $region42: #{tpu_custom_call.1} parent=11 // pred_check_branch
          %365 = sbr.rel (%p363) target = $region44
        $region43: #{tpu_custom_call.1} parent=11 // pred_region
          %s367 = ssub.s32 128, 128
          %368 = vsyncadd [#allocation15], %s367
          %s370 = sshll.u32 [#allocation14], 4
          %s371 = int_to_ptr.vmem [resolvable:$true] %s370
          %373 = dma.hbm_to_vmem [thread:$0]  %s8, 128, %s371, [#allocation15]
        $region44: #{tpu_custom_call.1} parent=11 // pred_fallthru
          _
        // Predicated region
        $region45: #{tpu_custom_call.1} parent=11 // pred_check
          %p374 = pneg %p241
        $region46: #{tpu_custom_call.1} parent=11 // pred_check_branch
          %376 = sbr.rel (%p374) target = $region48
        $region47: #{tpu_custom_call.1} parent=11 // pred_region
          _
        $region48: #{tpu_custom_call.1} parent=11 // pred_fallthru
          _
      $region12: #{tpu_custom_call.1} parent=5 // pred_fallthru
        _
      %p377 = scmp.lt.s32.totalorder %s26, 2
      // Predicated region
      $region49: #{tpu_custom_call.1} parent=5 // pred_check
        %p378 = pneg %p377
      $region50: #{tpu_custom_call.1} parent=5 // pred_check_branch
        %380 = sbr.rel (%p378) target = $region52
      $region51: #{tpu_custom_call.1} parent=5 // pred_region
        // Predicated region
        $region53: #{tpu_custom_call.1} parent=51 // pred_check
          %p381 = pneg %p46
        $region54: #{tpu_custom_call.1} parent=51 // pred_check_branch
          %383 = sbr.rel (%p381) target = $region56
        $region55: #{tpu_custom_call.1} parent=51 // pred_region
          %s384 = sand.u32 %s36, 1
          %s385 = scalar_lea.sflag [#allocation3], %s384
          %s386 = sand.u32 %s36, 1
          %s387 = smul.addr %s386, 256
          %s388 = scalar_lea.vmem [#allocation2], %s387
          %s389 = smul.u32 64, %s26
          %s391 = ssub.s32 4096, 4096
          %392 = vsyncadd %s385, %s391
          %s393 = smul.addr %s389, 64
          %s394 = scalar_lea.hbm %s0, %s393
          %s395 = sshll.u32 %s388, 4
          %s396 = int_to_ptr.vmem [resolvable:$true] %s395
          %401 = dma.hbm_to_vmem [thread:$0]  %s394, 4096, %s396, %s385, 64, 64, 4
        $region56: #{tpu_custom_call.1} parent=51 // pred_fallthru
          _
      $region52: #{tpu_custom_call.1} parent=5 // pred_fallthru
        _
      %p402 = scmp.le.s32.totalorder 1, %s26
      %p403 = scmp.lt.s32.totalorder %s26, 3
      %p404 = pnand %p402, %p403
      %p405 = pneg %p404
      // Predicated region
      $region57: #{tpu_custom_call.1} parent=5 // pred_check
        _
      $region58: #{tpu_custom_call.1} parent=5 // pred_check_branch
        %407 = sbr.rel (%p404) target = $region60
      $region59: #{tpu_custom_call.1} parent=5 // pred_region
        %s408 = ssub.s32 %s26, 1
        %s409 = sand.u32 %s39, 1
        %s410 = scalar_lea.sflag [#allocation3], %s409
        %s411 = sand.u32 %s39, 1
        %s412 = smul.addr %s411, 256
        %s413 = scalar_lea.vmem [#allocation2], %s412
        // Predicated region
        $region61: #{tpu_custom_call.1} parent=59 // pred_check
          %p414 = pneg %p52
        $region62: #{tpu_custom_call.1} parent=59 // pred_check_branch
          %416 = sbr.rel (%p414) target = $region64
        $region63: #{tpu_custom_call.1} parent=59 // pred_region
          %417 = dma.done %s410, 4096
        $region64: #{tpu_custom_call.1} parent=59 // pred_fallthru
          _
        // Predicated region
        $region65: #{tpu_custom_call.1} parent=59 // pred_check
          %p418 = pneg %p73
        $region66: #{tpu_custom_call.1} parent=59 // pred_check_branch
          %420 = sbr.rel (%p418) target = $region68
        $region67: #{tpu_custom_call.1} parent=59 // pred_region
          %421 = dma.done [#allocation6], 4096
        $region68: #{tpu_custom_call.1} parent=59 // pred_fallthru
          _
        // Predicated region
        $region69: #{tpu_custom_call.1} parent=59 // pred_check
          %p422 = pneg %p94
        $region70: #{tpu_custom_call.1} parent=59 // pred_check_branch
          %424 = sbr.rel (%p422) target = $region72
        $region71: #{tpu_custom_call.1} parent=59 // pred_region
          %425 = dma.done [#allocation6], 2048
        $region72: #{tpu_custom_call.1} parent=59 // pred_fallthru
          _
        // Predicated region
        $region73: #{tpu_custom_call.1} parent=59 // pred_check
          %p426 = pneg %p115
        $region74: #{tpu_custom_call.1} parent=59 // pred_check_branch
          %428 = sbr.rel (%p426) target = $region76
        $region75: #{tpu_custom_call.1} parent=59 // pred_region
          %429 = dma.done [#allocation9], 3072
        $region76: #{tpu_custom_call.1} parent=59 // pred_fallthru
          _
        // Predicated region
        $region77: #{tpu_custom_call.1} parent=59 // pred_check
          %p430 = pneg %p136
        $region78: #{tpu_custom_call.1} parent=59 // pred_check_branch
          %432 = sbr.rel (%p430) target = $region80
        $region79: #{tpu_custom_call.1} parent=59 // pred_region
          %433 = dma.done [#allocation9], 1024
        $region80: #{tpu_custom_call.1} parent=59 // pred_fallthru
          _
        // Predicated region
        $region81: #{tpu_custom_call.1} parent=59 // pred_check
          %p434 = pneg %p157
        $region82: #{tpu_custom_call.1} parent=59 // pred_check_branch
          %436 = sbr.rel (%p434) target = $region84
        $region83: #{tpu_custom_call.1} parent=59 // pred_region
          %437 = dma.done [#allocation12], 2048
        $region84: #{tpu_custom_call.1} parent=59 // pred_fallthru
          _
        // Predicated region
        $region85: #{tpu_custom_call.1} parent=59 // pred_check
          %p438 = pneg %p178
        $region86: #{tpu_custom_call.1} parent=59 // pred_check_branch
          %440 = sbr.rel (%p438) target = $region88
        $region87: #{tpu_custom_call.1} parent=59 // pred_region
          %441 = dma.done [#allocation12], 2048
        $region88: #{tpu_custom_call.1} parent=59 // pred_fallthru
          _
        // Predicated region
        $region89: #{tpu_custom_call.1} parent=59 // pred_check
          %p442 = pneg %p220
        $region90: #{tpu_custom_call.1} parent=59 // pred_check_branch
          %444 = sbr.rel (%p442) target = $region92
        $region91: #{tpu_custom_call.1} parent=59 // pred_region
          %445 = dma.done [#allocation15], 128
        $region92: #{tpu_custom_call.1} parent=59 // pred_fallthru
          _
        %s446 = sand.u32 %s39, 1
        %s447 = scalar_lea.sflag [#allocation3], %s446
        %s448 = sand.u32 %s39, 1
        %s449 = smul.addr %s448, 256
        %s450 = scalar_lea.vmem [#allocation2], %s449
        %p451 = pneg %p52
        %p452 = pneg %p49
        %p453 = pneg %p73
        %p454 = pneg %p70
        %p455 = pneg %p94
        %p456 = pneg %p91
        %p457 = pneg %p115
        %p458 = pneg %p112
        %p459 = pneg %p136
        %p460 = pneg %p133
        %p461 = pneg %p157
        %p462 = pneg %p154
        %p463 = pneg %p178
        %p464 = pneg %p175
        %p465 = pneg %p199
        %p466 = pneg %p196
        %p467 = pneg %p220
        %p468 = pneg %p217
        %p469 = pneg %p241
        %p470 = pneg %p238
        %p471 = pneg %p267
        %p472 = pneg %p264
        %s473 = sand.u32 %s254, 1
        %s474 = scalar_lea.sflag [#allocation4], %s473
        %s475 = sand.u32 %s254, 1
        %s476 = smul.addr %s475, 512
        %s477 = scalar_lea.vmem [#allocation16], %s476
        %s478 = smul.u32 64, %s31
        %s479 = smul.u32 64, %s31
        %v481 = vld [vmem:[%s413] sm:$0xf]
        %v482 = vld [vmem:[%s413 + $0x4] sm:$0xf]
        %v483 = vld [vmem:[%s413 + $0x8] sm:$0xf]
        %v484 = vld [vmem:[%s413 + $0xc] sm:$0xf]
        %v485 = vld [vmem:[%s413 + $0x10] sm:$0xf]
        %v486 = vld [vmem:[%s413 + $0x14] sm:$0xf]
        %v487 = vld [vmem:[%s413 + $0x18] sm:$0xf]
        %v488 = vld [vmem:[%s413 + $0x1c] sm:$0xf]
        %v489 = vld [vmem:[%s413 + $0x20] sm:$0xf]
        %v490 = vld [vmem:[%s413 + $0x24] sm:$0xf]
        %v491 = vld [vmem:[%s413 + $0x28] sm:$0xf]
        %v492 = vld [vmem:[%s413 + $0x2c] sm:$0xf]
        %v493 = vld [vmem:[%s413 + $0x30] sm:$0xf]
        %v494 = vld [vmem:[%s413 + $0x34] sm:$0xf]
        %v495 = vld [vmem:[%s413 + $0x38] sm:$0xf]
        %v496 = vld [vmem:[%s413 + $0x3c] sm:$0xf]
        %v497 = vld [vmem:[%s413 + $0x40] sm:$0xf]
        %v498 = vld [vmem:[%s413 + $0x44] sm:$0xf]
        %v499 = vld [vmem:[%s413 + $0x48] sm:$0xf]
        %v500 = vld [vmem:[%s413 + $0x4c] sm:$0xf]
        %v501 = vld [vmem:[%s413 + $0x50] sm:$0xf]
        %v502 = vld [vmem:[%s413 + $0x54] sm:$0xf]
        %v503 = vld [vmem:[%s413 + $0x58] sm:$0xf]
        %v504 = vld [vmem:[%s413 + $0x5c] sm:$0xf]
        %v505 = vld [vmem:[%s413 + $0x60] sm:$0xf]
        %v506 = vld [vmem:[%s413 + $0x64] sm:$0xf]
        %v507 = vld [vmem:[%s413 + $0x68] sm:$0xf]
        %v508 = vld [vmem:[%s413 + $0x6c] sm:$0xf]
        %v509 = vld [vmem:[%s413 + $0x70] sm:$0xf]
        %v510 = vld [vmem:[%s413 + $0x74] sm:$0xf]
        %v511 = vld [vmem:[%s413 + $0x78] sm:$0xf]
        %v512 = vld [vmem:[%s413 + $0x7c] sm:$0xf]
        %v513 = vld [vmem:[%s413 + $0x80] sm:$0xf]
        %v514 = vld [vmem:[%s413 + $0x84] sm:$0xf]
        %v515 = vld [vmem:[%s413 + $0x88] sm:$0xf]
        %v516 = vld [vmem:[%s413 + $0x8c] sm:$0xf]
        %v517 = vld [vmem:[%s413 + $0x90] sm:$0xf]
        %v518 = vld [vmem:[%s413 + $0x94] sm:$0xf]
        %v519 = vld [vmem:[%s413 + $0x98] sm:$0xf]
        %v520 = vld [vmem:[%s413 + $0x9c] sm:$0xf]
        %v521 = vld [vmem:[%s413 + $0xa0] sm:$0xf]
        %v522 = vld [vmem:[%s413 + $0xa4] sm:$0xf]
        %v523 = vld [vmem:[%s413 + $0xa8] sm:$0xf]
        %v524 = vld [vmem:[%s413 + $0xac] sm:$0xf]
        %v525 = vld [vmem:[%s413 + $0xb0] sm:$0xf]
        %v526 = vld [vmem:[%s413 + $0xb4] sm:$0xf]
        %v527 = vld [vmem:[%s413 + $0xb8] sm:$0xf]
        %v528 = vld [vmem:[%s413 + $0xbc] sm:$0xf]
        %v529 = vld [vmem:[%s413 + $0xc0] sm:$0xf]
        %v530 = vld [vmem:[%s413 + $0xc4] sm:$0xf]
        %v531 = vld [vmem:[%s413 + $0xc8] sm:$0xf]
        %v532 = vld [vmem:[%s413 + $0xcc] sm:$0xf]
        %v533 = vld [vmem:[%s413 + $0xd0] sm:$0xf]
        %v534 = vld [vmem:[%s413 + $0xd4] sm:$0xf]
        %v535 = vld [vmem:[%s413 + $0xd8] sm:$0xf]
        %v536 = vld [vmem:[%s413 + $0xdc] sm:$0xf]
        %v537 = vld [vmem:[%s413 + $0xe0] sm:$0xf]
        %v538 = vld [vmem:[%s413 + $0xe4] sm:$0xf]
        %v539 = vld [vmem:[%s413 + $0xe8] sm:$0xf]
        %v540 = vld [vmem:[%s413 + $0xec] sm:$0xf]
        %v541 = vld [vmem:[%s413 + $0xf0] sm:$0xf]
        %v542 = vld [vmem:[%s413 + $0xf4] sm:$0xf]
        %v543 = vld [vmem:[%s413 + $0xf8] sm:$0xf]
        %v544 = vld [vmem:[%s413 + $0xfc] sm:$0xf]
        %v545 = vld [vmem:[%s7] sm:$0xff]
        %v546 = vld [vmem:[#allocation14] sm:$0xff]
        %v547 = vld [vmem:[#allocation5] sm:$0xf]
        %v548 = vld [vmem:[#allocation5 + $0x4] sm:$0xf]
        %v549 = vld [vmem:[#allocation5 + $0x8] sm:$0xf]
        %v550 = vld [vmem:[#allocation5 + $0xc] sm:$0xf]
        %v551 = vld [vmem:[#allocation5 + $0x10] sm:$0xf]
        %v552 = vld [vmem:[#allocation5 + $0x14] sm:$0xf]
        %v553 = vld [vmem:[#allocation5 + $0x18] sm:$0xf]
        %v554 = vld [vmem:[#allocation5 + $0x1c] sm:$0xf]
        %v555 = vld [vmem:[#allocation5 + $0x20] sm:$0xf]
        %v556 = vld [vmem:[#allocation5 + $0x24] sm:$0xf]
        %v557 = vld [vmem:[#allocation5 + $0x28] sm:$0xf]
        %v558 = vld [vmem:[#allocation5 + $0x2c] sm:$0xf]
        %v559 = vld [vmem:[#allocation5 + $0x30] sm:$0xf]
        %v560 = vld [vmem:[#allocation5 + $0x34] sm:$0xf]
        %v561 = vld [vmem:[#allocation5 + $0x38] sm:$0xf]
        %v562 = vld [vmem:[#allocation5 + $0x3c] sm:$0xf]
        %v563 = vlaneseq
        %v564 = vshrl.u32 %v563, 7
        %v565 = vsub.s32 0, %v564
        %v566 = vrot.slane %v545, %v565
        %v631 = vunpack.c.l.b16 %v481
        %v632 = vunpack.c.l.b16 %v482
        %v633 = vunpack.c.l.b16 %v483
        %v634 = vunpack.c.l.b16 %v484
        %v635 = vunpack.c.l.b16 %v485
        %v636 = vunpack.c.l.b16 %v486
        %v637 = vunpack.c.l.b16 %v487
        %v638 = vunpack.c.l.b16 %v488
        %v639 = vunpack.c.l.b16 %v489
        %v640 = vunpack.c.l.b16 %v490
        %v641 = vunpack.c.l.b16 %v491
        %v642 = vunpack.c.l.b16 %v492
        %v643 = vunpack.c.l.b16 %v493
        %v644 = vunpack.c.l.b16 %v494
        %v645 = vunpack.c.l.b16 %v495
        %v646 = vunpack.c.l.b16 %v496
        %v647 = vunpack.c.l.b16 %v497
        %v648 = vunpack.c.l.b16 %v498
        %v649 = vunpack.c.l.b16 %v499
        %v650 = vunpack.c.l.b16 %v500
        %v651 = vunpack.c.l.b16 %v501
        %v652 = vunpack.c.l.b16 %v502
        %v653 = vunpack.c.l.b16 %v503
        %v654 = vunpack.c.l.b16 %v504
        %v655 = vunpack.c.l.b16 %v505
        %v656 = vunpack.c.l.b16 %v506
        %v657 = vunpack.c.l.b16 %v507
        %v658 = vunpack.c.l.b16 %v508
        %v659 = vunpack.c.l.b16 %v509
        %v660 = vunpack.c.l.b16 %v510
        %v661 = vunpack.c.l.b16 %v511
        %v662 = vunpack.c.l.b16 %v512
        %v663 = vunpack.c.l.b16 %v513
        %v664 = vunpack.c.l.b16 %v514
        %v665 = vunpack.c.l.b16 %v515
        %v666 = vunpack.c.l.b16 %v516
        %v667 = vunpack.c.l.b16 %v517
        %v668 = vunpack.c.l.b16 %v518
        %v669 = vunpack.c.l.b16 %v519
        %v670 = vunpack.c.l.b16 %v520
        %v671 = vunpack.c.l.b16 %v521
        %v672 = vunpack.c.l.b16 %v522
        %v673 = vunpack.c.l.b16 %v523
        %v674 = vunpack.c.l.b16 %v524
        %v675 = vunpack.c.l.b16 %v525
        %v676 = vunpack.c.l.b16 %v526
        %v677 = vunpack.c.l.b16 %v527
        %v678 = vunpack.c.l.b16 %v528
        %v679 = vunpack.c.l.b16 %v529
        %v680 = vunpack.c.l.b16 %v530
        %v681 = vunpack.c.l.b16 %v531
        %v682 = vunpack.c.l.b16 %v532
        %v683 = vunpack.c.l.b16 %v533
        %v684 = vunpack.c.l.b16 %v534
        %v685 = vunpack.c.l.b16 %v535
        %v686 = vunpack.c.l.b16 %v536
        %v687 = vunpack.c.l.b16 %v537
        %v688 = vunpack.c.l.b16 %v538
        %v689 = vunpack.c.l.b16 %v539
        %v690 = vunpack.c.l.b16 %v540
        %v691 = vunpack.c.l.b16 %v541
        %v692 = vunpack.c.l.b16 %v542
        %v693 = vunpack.c.l.b16 %v543
        %v694 = vunpack.c.l.b16 %v544
        %v695 = vpack.c.b16 %v632, %v631
        %v696 = vpack.c.b16 %v634, %v633
        %v697 = vpack.c.b16 %v636, %v635
        %v698 = vpack.c.b16 %v638, %v637
        %v699 = vpack.c.b16 %v640, %v639
        %v700 = vpack.c.b16 %v642, %v641
        %v701 = vpack.c.b16 %v644, %v643
        %v702 = vpack.c.b16 %v646, %v645
        %v703 = vpack.c.b16 %v648, %v647
        %v704 = vpack.c.b16 %v650, %v649
        %v705 = vpack.c.b16 %v652, %v651
        %v706 = vpack.c.b16 %v654, %v653
        %v707 = vpack.c.b16 %v656, %v655
        %v708 = vpack.c.b16 %v658, %v657
        %v709 = vpack.c.b16 %v660, %v659
        %v710 = vpack.c.b16 %v662, %v661
        %v711 = vpack.c.b16 %v664, %v663
        %v712 = vpack.c.b16 %v666, %v665
        %v713 = vpack.c.b16 %v668, %v667
        %v714 = vpack.c.b16 %v670, %v669
        %v715 = vpack.c.b16 %v672, %v671
        %v716 = vpack.c.b16 %v674, %v673
        %v717 = vpack.c.b16 %v676, %v675
        %v718 = vpack.c.b16 %v678, %v677
        %v719 = vpack.c.b16 %v680, %v679
        %v720 = vpack.c.b16 %v682, %v681
        %v721 = vpack.c.b16 %v684, %v683
        %v722 = vpack.c.b16 %v686, %v685
        %v723 = vpack.c.b16 %v688, %v687
        %v724 = vpack.c.b16 %v690, %v689
        %v725 = vpack.c.b16 %v692, %v691
        %v726 = vpack.c.b16 %v694, %v693
        %v775 = vunpack.c.l.b16 %v547
        %v776 = vunpack.c.l.b16 %v548
        %v777 = vunpack.c.l.b16 %v549
        %v778 = vunpack.c.l.b16 %v550
        %v779 = vunpack.c.l.b16 %v551
        %v780 = vunpack.c.l.b16 %v552
        %v781 = vunpack.c.l.b16 %v553
        %v782 = vunpack.c.l.b16 %v554
        %v783 = vunpack.c.l.b16 %v555
        %v784 = vunpack.c.l.b16 %v556
        %v785 = vunpack.c.l.b16 %v557
        %v786 = vunpack.c.l.b16 %v558
        %v787 = vunpack.c.l.b16 %v559
        %v788 = vunpack.c.l.b16 %v560
        %v789 = vunpack.c.l.b16 %v561
        %v790 = vunpack.c.l.b16 %v562
        %v791 = vpack.c.b16 %v776, %v775
        %v792 = vpack.c.b16 %v778, %v777
        %v793 = vpack.c.b16 %v780, %v779
        %v794 = vpack.c.b16 %v782, %v781
        %v795 = vpack.c.b16 %v784, %v783
        %v796 = vpack.c.b16 %v786, %v785
        %v797 = vpack.c.b16 %v788, %v787
        %v798 = vpack.c.b16 %v790, %v789
        %807 = vmatprep.subr.bf16.mxu0 0
        %808 = vmatpush1.bf16.msra.mxu0 %v798
        %809 = vmatprep.subr.bf16.mxu0 0
        %810 = vmatpush1.bf16.msra.mxu0 %v797
        %811 = vmatprep.subr.bf16.mxu0 0
        %812 = vmatpush1.bf16.msra.mxu0 %v796
        %813 = vmatprep.subr.bf16.mxu0 0
        %814 = vmatpush1.bf16.msra.mxu0 %v795
        %815 = vmatprep.subr.bf16.mxu0 0
        %816 = vmatpush1.bf16.msra.mxu0 %v794
        %817 = vmatprep.subr.bf16.mxu0 0
        %818 = vmatpush1.bf16.msra.mxu0 %v793
        %819 = vmatprep.subr.bf16.mxu0 0
        %820 = vmatpush1.bf16.msra.mxu0 %v792
        %821 = vmatprep.subr.bf16.mxu0 0
        %822 = vmatpush1.bf16.msra.mxu0 %v791
        %823 = vmatprep.subr.bf16.mxu0 0
        %824 = vmatpush2.bf16.msra.mxu0 0
        %825 = vmatprep.subr.bf16.mxu0 0
        %826 = vmatpush2.bf16.msra.mxu0 0
        %827 = vmatprep.subr.bf16.mxu0 0
        %828 = vmatpush2.bf16.msra.mxu0 0
        %829 = vmatprep.subr.bf16.mxu0 0
        %830 = vmatpush2.bf16.msra.mxu0 0
        %831 = vmatprep.subr.bf16.mxu0 0
        %832 = vmatpush2.bf16.msra.mxu0 0
        %833 = vmatprep.subr.bf16.mxu0 0
        %834 = vmatpush2.bf16.msra.mxu0 0
        %835 = vmatprep.subr.bf16.mxu0 0
        %836 = vmatpush2.bf16.msra.mxu0 0
        %837 = vmatprep.subr.bf16.mxu0 0
        %838 = vmatpush2.bf16.msra.mxu0 0
        %839 = vmatprep.mubr.bf16.mxu0 0
        %840 = vmatmul.mubr.bf16.gmra.mxu0 %v695
        %v841 = vpop.f32.mrf.mxu0
        %v842 = vadd.f32 %v566, %v841
        %v843 = vpop.f32.mrf.mxu0
        %v844 = vpop.f32.mrf.mxu0
        %v845 = vadd.f32 %v566, %v844
        %v846 = vpop.f32.mrf.mxu0
        %847 = vmatprep.mubr.bf16.mxu0 0
        %848 = vmatmul.mubr.bf16.gmra.mxu0 %v696
        %v849 = vpop.f32.mrf.mxu0
        %v850 = vadd.f32 %v566, %v849
        %v851 = vpop.f32.mrf.mxu0
        %v852 = vpop.f32.mrf.mxu0
        %v853 = vadd.f32 %v566, %v852
        %v854 = vpop.f32.mrf.mxu0
        %855 = vmatprep.mubr.bf16.mxu0 0
        %856 = vmatmul.mubr.bf16.gmra.mxu0 %v697
        %v857 = vpop.f32.mrf.mxu0
        %v858 = vadd.f32 %v566, %v857
        %v859 = vpop.f32.mrf.mxu0
        %v860 = vpop.f32.mrf.mxu0
        %v861 = vadd.f32 %v566, %v860
        %v862 = vpop.f32.mrf.mxu0
        %863 = vmatprep.mubr.bf16.mxu0 0
        %864 = vmatmul.mubr.bf16.gmra.mxu0 %v698
        %v865 = vpop.f32.mrf.mxu0
        %v866 = vadd.f32 %v566, %v865
        %v867 = vpop.f32.mrf.mxu0
        %v868 = vpop.f32.mrf.mxu0
        %v869 = vadd.f32 %v566, %v868
        %v870 = vpop.f32.mrf.mxu0
        %871 = vmatprep.mubr.bf16.mxu0 0
        %872 = vmatmul.mubr.bf16.gmra.mxu0 %v699
        %v873 = vpop.f32.mrf.mxu0
        %v874 = vadd.f32 %v566, %v873
        %v875 = vpop.f32.mrf.mxu0
        %v876 = vpop.f32.mrf.mxu0
        %v877 = vadd.f32 %v566, %v876
        %v878 = vpop.f32.mrf.mxu0
        %879 = vmatprep.mubr.bf16.mxu0 0
        %880 = vmatmul.mubr.bf16.gmra.mxu0 %v700
        %v881 = vpop.f32.mrf.mxu0
        %v882 = vadd.f32 %v566, %v881
        %v883 = vpop.f32.mrf.mxu0
        %v884 = vpop.f32.mrf.mxu0
        %v885 = vadd.f32 %v566, %v884
        %v886 = vpop.f32.mrf.mxu0
        %887 = vmatprep.mubr.bf16.mxu0 0
        %888 = vmatmul.mubr.bf16.gmra.mxu0 %v701
        %v889 = vpop.f32.mrf.mxu0
        %v890 = vadd.f32 %v566, %v889
        %v891 = vpop.f32.mrf.mxu0
        %v892 = vpop.f32.mrf.mxu0
        %v893 = vadd.f32 %v566, %v892
        %v894 = vpop.f32.mrf.mxu0
        %895 = vmatprep.mubr.bf16.mxu0 0
        %896 = vmatmul.mubr.bf16.gmra.mxu0 %v702
        %v897 = vpop.f32.mrf.mxu0
        %v898 = vadd.f32 %v566, %v897
        %v899 = vpop.f32.mrf.mxu0
        %v900 = vpop.f32.mrf.mxu0
        %v901 = vadd.f32 %v566, %v900
        %v902 = vpop.f32.mrf.mxu0
        %903 = vmatprep.mubr.bf16.mxu0 0
        %904 = vmatmul.mubr.bf16.gmra.mxu0 %v703
        %v905 = vpop.f32.mrf.mxu0
        %v906 = vadd.f32 %v566, %v905
        %v907 = vpop.f32.mrf.mxu0
        %v908 = vpop.f32.mrf.mxu0
        %v909 = vadd.f32 %v566, %v908
        %v910 = vpop.f32.mrf.mxu0
        %911 = vmatprep.mubr.bf16.mxu0 0
        %912 = vmatmul.mubr.bf16.gmra.mxu0 %v704
        %v913 = vpop.f32.mrf.mxu0
        %v914 = vadd.f32 %v566, %v913
        %v915 = vpop.f32.mrf.mxu0
        %v916 = vpop.f32.mrf.mxu0
        %v917 = vadd.f32 %v566, %v916
        %v918 = vpop.f32.mrf.mxu0
        %919 = vmatprep.mubr.bf16.mxu0 0
        %920 = vmatmul.mubr.bf16.gmra.mxu0 %v705
        %v921 = vpop.f32.mrf.mxu0
        %v922 = vadd.f32 %v566, %v921
        %v923 = vpop.f32.mrf.mxu0
        %v924 = vpop.f32.mrf.mxu0
        %v925 = vadd.f32 %v566, %v924
        %v926 = vpop.f32.mrf.mxu0
        %927 = vmatprep.mubr.bf16.mxu0 0
        %928 = vmatmul.mubr.bf16.gmra.mxu0 %v706
        %v929 = vpop.f32.mrf.mxu0
        %v930 = vadd.f32 %v566, %v929
        %v931 = vpop.f32.mrf.mxu0
        %v932 = vpop.f32.mrf.mxu0
        %v933 = vadd.f32 %v566, %v932
        %v934 = vpop.f32.mrf.mxu0
        %935 = vmatprep.mubr.bf16.mxu0 0
        %936 = vmatmul.mubr.bf16.gmra.mxu0 %v707
        %v937 = vpop.f32.mrf.mxu0
        %v938 = vadd.f32 %v566, %v937
        %v939 = vpop.f32.mrf.mxu0
        %v940 = vpop.f32.mrf.mxu0
        %v941 = vadd.f32 %v566, %v940
        %v942 = vpop.f32.mrf.mxu0
        %943 = vmatprep.mubr.bf16.mxu0 0
        %944 = vmatmul.mubr.bf16.gmra.mxu0 %v708
        %v945 = vpop.f32.mrf.mxu0
        %v946 = vadd.f32 %v566, %v945
        %v947 = vpop.f32.mrf.mxu0
        %v948 = vpop.f32.mrf.mxu0
        %v949 = vadd.f32 %v566, %v948
        %v950 = vpop.f32.mrf.mxu0
        %951 = vmatprep.mubr.bf16.mxu0 0
        %952 = vmatmul.mubr.bf16.gmra.mxu0 %v709
        %v953 = vpop.f32.mrf.mxu0
        %v954 = vadd.f32 %v566, %v953
        %v955 = vpop.f32.mrf.mxu0
        %v956 = vpop.f32.mrf.mxu0
        %v957 = vadd.f32 %v566, %v956
        %v958 = vpop.f32.mrf.mxu0
        %959 = vmatprep.mubr.bf16.mxu0 0
        %960 = vmatmul.mubr.bf16.gmra.mxu0 %v710
        %v961 = vpop.f32.mrf.mxu0
        %v962 = vadd.f32 %v566, %v961
        %v963 = vpop.f32.mrf.mxu0
        %v964 = vpop.f32.mrf.mxu0
        %v965 = vadd.f32 %v566, %v964
        %v966 = vpop.f32.mrf.mxu0
        %967 = vmatprep.mubr.bf16.mxu0 0
        %968 = vmatmul.mubr.bf16.gmra.mxu0 %v711
        %v969 = vpop.f32.mrf.mxu0
        %v970 = vadd.f32 %v566, %v969
        %v971 = vpop.f32.mrf.mxu0
        %v972 = vpop.f32.mrf.mxu0
        %v973 = vadd.f32 %v566, %v972
        %v974 = vpop.f32.mrf.mxu0
        %975 = vmatprep.mubr.bf16.mxu0 0
        %976 = vmatmul.mubr.bf16.gmra.mxu0 %v712
        %v977 = vpop.f32.mrf.mxu0
        %v978 = vadd.f32 %v566, %v977
        %v979 = vpop.f32.mrf.mxu0
        %v980 = vpop.f32.mrf.mxu0
        %v981 = vadd.f32 %v566, %v980
        %v982 = vpop.f32.mrf.mxu0
        %983 = vmatprep.mubr.bf16.mxu0 0
        %984 = vmatmul.mubr.bf16.gmra.mxu0 %v713
        %v985 = vpop.f32.mrf.mxu0
        %v986 = vadd.f32 %v566, %v985
        %v987 = vpop.f32.mrf.mxu0
        %v988 = vpop.f32.mrf.mxu0
        %v989 = vadd.f32 %v566, %v988
        %v990 = vpop.f32.mrf.mxu0
        %991 = vmatprep.mubr.bf16.mxu0 0
        %992 = vmatmul.mubr.bf16.gmra.mxu0 %v714
        %v993 = vpop.f32.mrf.mxu0
        %v994 = vadd.f32 %v566, %v993
        %v995 = vpop.f32.mrf.mxu0
        %v996 = vpop.f32.mrf.mxu0
        %v997 = vadd.f32 %v566, %v996
        %v998 = vpop.f32.mrf.mxu0
        %999 = vmatprep.mubr.bf16.mxu0 0
        %1000 = vmatmul.mubr.bf16.gmra.mxu0 %v715
        %v1001 = vpop.f32.mrf.mxu0
        %v1002 = vadd.f32 %v566, %v1001
        %v1003 = vpop.f32.mrf.mxu0
        %v1004 = vpop.f32.mrf.mxu0
        %v1005 = vadd.f32 %v566, %v1004
        %v1006 = vpop.f32.mrf.mxu0
        %1007 = vmatprep.mubr.bf16.mxu0 0
        %1008 = vmatmul.mubr.bf16.gmra.mxu0 %v716
        %v1009 = vpop.f32.mrf.mxu0
        %v1010 = vadd.f32 %v566, %v1009
        %v1011 = vpop.f32.mrf.mxu0
        %v1012 = vpop.f32.mrf.mxu0
        %v1013 = vadd.f32 %v566, %v1012
        %v1014 = vpop.f32.mrf.mxu0
        %1015 = vmatprep.mubr.bf16.mxu0 0
        %1016 = vmatmul.mubr.bf16.gmra.mxu0 %v717
        %v1017 = vpop.f32.mrf.mxu0
        %v1018 = vadd.f32 %v566, %v1017
        %v1019 = vpop.f32.mrf.mxu0
        %v1020 = vpop.f32.mrf.mxu0
        %v1021 = vadd.f32 %v566, %v1020
        %v1022 = vpop.f32.mrf.mxu0
        %1023 = vmatprep.mubr.bf16.mxu0 0
        %1024 = vmatmul.mubr.bf16.gmra.mxu0 %v718
        %v1025 = vpop.f32.mrf.mxu0
        %v1026 = vadd.f32 %v566, %v1025
        %v1027 = vpop.f32.mrf.mxu0
        %v1028 = vpop.f32.mrf.mxu0
        %v1029 = vadd.f32 %v566, %v1028
        %v1030 = vpop.f32.mrf.mxu0
        %1031 = vmatprep.mubr.bf16.mxu0 0
        %1032 = vmatmul.mubr.bf16.gmra.mxu0 %v719
        %v1033 = vpop.f32.mrf.mxu0
        %v1034 = vadd.f32 %v566, %v1033
        %v1035 = vpop.f32.mrf.mxu0
        %v1036 = vpop.f32.mrf.mxu0
        %v1037 = vadd.f32 %v566, %v1036
        %v1038 = vpop.f32.mrf.mxu0
        %1039 = vmatprep.mubr.bf16.mxu0 0
        %1040 = vmatmul.mubr.bf16.gmra.mxu0 %v720
        %v1041 = vpop.f32.mrf.mxu0
        %v1042 = vadd.f32 %v566, %v1041
        %v1043 = vpop.f32.mrf.mxu0
        %v1044 = vpop.f32.mrf.mxu0
        %v1045 = vadd.f32 %v566, %v1044
        %v1046 = vpop.f32.mrf.mxu0
        %1047 = vmatprep.mubr.bf16.mxu0 0
        %1048 = vmatmul.mubr.bf16.gmra.mxu0 %v721
        %v1049 = vpop.f32.mrf.mxu0
        %v1050 = vadd.f32 %v566, %v1049
        %v1051 = vpop.f32.mrf.mxu0
        %v1052 = vpop.f32.mrf.mxu0
        %v1053 = vadd.f32 %v566, %v1052
        %v1054 = vpop.f32.mrf.mxu0
        %1055 = vmatprep.mubr.bf16.mxu0 0
        %1056 = vmatmul.mubr.bf16.gmra.mxu0 %v722
        %v1057 = vpop.f32.mrf.mxu0
        %v1058 = vadd.f32 %v566, %v1057
        %v1059 = vpop.f32.mrf.mxu0
        %v1060 = vpop.f32.mrf.mxu0
        %v1061 = vadd.f32 %v566, %v1060
        %v1062 = vpop.f32.mrf.mxu0
        %1063 = vmatprep.mubr.bf16.mxu0 0
        %1064 = vmatmul.mubr.bf16.gmra.mxu0 %v723
        %v1065 = vpop.f32.mrf.mxu0
        %v1066 = vadd.f32 %v566, %v1065
        %v1067 = vpop.f32.mrf.mxu0
        %v1068 = vpop.f32.mrf.mxu0
        %v1069 = vadd.f32 %v566, %v1068
        %v1070 = vpop.f32.mrf.mxu0
        %1071 = vmatprep.mubr.bf16.mxu0 0
        %1072 = vmatmul.mubr.bf16.gmra.mxu0 %v724
        %v1073 = vpop.f32.mrf.mxu0
        %v1074 = vadd.f32 %v566, %v1073
        %v1075 = vpop.f32.mrf.mxu0
        %v1076 = vpop.f32.mrf.mxu0
        %v1077 = vadd.f32 %v566, %v1076
        %v1078 = vpop.f32.mrf.mxu0
        %1079 = vmatprep.mubr.bf16.mxu0 0
        %1080 = vmatmul.mubr.bf16.gmra.mxu0 %v725
        %v1081 = vpop.f32.mrf.mxu0
        %v1082 = vadd.f32 %v566, %v1081
        %v1083 = vpop.f32.mrf.mxu0
        %v1084 = vpop.f32.mrf.mxu0
        %v1085 = vadd.f32 %v566, %v1084
        %v1086 = vpop.f32.mrf.mxu0
        %1087 = vmatprep.mubr.bf16.mxu0 0
        %1088 = vmatmul.mubr.bf16.gmra.mxu0 %v726
        %v1089 = vpop.f32.mrf.mxu0
        %v1090 = vadd.f32 %v566, %v1089
        %v1091 = vpop.f32.mrf.mxu0
        %v1092 = vpop.f32.mrf.mxu0
        %v1093 = vadd.f32 %v566, %v1092
        %v1094 = vpop.f32.mrf.mxu0
        %1095 = vdwg.mxu0
        %v1096 = vmax.f32 %v842, 0.0
        %v1097 = vmax.f32 %v845, 0.0
        %v1098 = vmax.f32 %v850, 0.0
        %v1099 = vmax.f32 %v853, 0.0
        %v1100 = vmax.f32 %v858, 0.0
        %v1101 = vmax.f32 %v861, 0.0
        %v1102 = vmax.f32 %v866, 0.0
        %v1103 = vmax.f32 %v869, 0.0
        %v1104 = vmax.f32 %v874, 0.0
        %v1105 = vmax.f32 %v877, 0.0
        %v1106 = vmax.f32 %v882, 0.0
        %v1107 = vmax.f32 %v885, 0.0
        %v1108 = vmax.f32 %v890, 0.0
        %v1109 = vmax.f32 %v893, 0.0
        %v1110 = vmax.f32 %v898, 0.0
        %v1111 = vmax.f32 %v901, 0.0
        %v1112 = vmax.f32 %v906, 0.0
        %v1113 = vmax.f32 %v909, 0.0
        %v1114 = vmax.f32 %v914, 0.0
        %v1115 = vmax.f32 %v917, 0.0
        %v1116 = vmax.f32 %v922, 0.0
        %v1117 = vmax.f32 %v925, 0.0
        %v1118 = vmax.f32 %v930, 0.0
        %v1119 = vmax.f32 %v933, 0.0
        %v1120 = vmax.f32 %v938, 0.0
        %v1121 = vmax.f32 %v941, 0.0
        %v1122 = vmax.f32 %v946, 0.0
        %v1123 = vmax.f32 %v949, 0.0
        %v1124 = vmax.f32 %v954, 0.0
        %v1125 = vmax.f32 %v957, 0.0
        %v1126 = vmax.f32 %v962, 0.0
        %v1127 = vmax.f32 %v965, 0.0
        %v1128 = vmax.f32 %v970, 0.0
        %v1129 = vmax.f32 %v973, 0.0
        %v1130 = vmax.f32 %v978, 0.0
        %v1131 = vmax.f32 %v981, 0.0
        %v1132 = vmax.f32 %v986, 0.0
        %v1133 = vmax.f32 %v989, 0.0
        %v1134 = vmax.f32 %v994, 0.0
        %v1135 = vmax.f32 %v997, 0.0
        %v1136 = vmax.f32 %v1002, 0.0
        %v1137 = vmax.f32 %v1005, 0.0
        %v1138 = vmax.f32 %v1010, 0.0
        %v1139 = vmax.f32 %v1013, 0.0
        %v1140 = vmax.f32 %v1018, 0.0
        %v1141 = vmax.f32 %v1021, 0.0
        %v1142 = vmax.f32 %v1026, 0.0
        %v1143 = vmax.f32 %v1029, 0.0
        %v1144 = vmax.f32 %v1034, 0.0
        %v1145 = vmax.f32 %v1037, 0.0
        %v1146 = vmax.f32 %v1042, 0.0
        %v1147 = vmax.f32 %v1045, 0.0
        %v1148 = vmax.f32 %v1050, 0.0
        %v1149 = vmax.f32 %v1053, 0.0
        %v1150 = vmax.f32 %v1058, 0.0
        %v1151 = vmax.f32 %v1061, 0.0
        %v1152 = vmax.f32 %v1066, 0.0
        %v1153 = vmax.f32 %v1069, 0.0
        %v1154 = vmax.f32 %v1074, 0.0
        %v1155 = vmax.f32 %v1077, 0.0
        %v1156 = vmax.f32 %v1082, 0.0
        %v1157 = vmax.f32 %v1085, 0.0
        %v1158 = vmax.f32 %v1090, 0.0
        %v1159 = vmax.f32 %v1093, 0.0
        %v1160 = vld [vmem:[#allocation7] sm:$0xf]
        %v1161 = vld [vmem:[#allocation7 + $0x4] sm:$0xf]
        %v1162 = vld [vmem:[#allocation7 + $0x8] sm:$0xf]
        %v1163 = vld [vmem:[#allocation7 + $0xc] sm:$0xf]
        %v1164 = vld [vmem:[#allocation7 + $0x10] sm:$0xf]
        %v1165 = vld [vmem:[#allocation7 + $0x14] sm:$0xf]
        %v1166 = vld [vmem:[#allocation7 + $0x18] sm:$0xf]
        %v1167 = vld [vmem:[#allocation7 + $0x1c] sm:$0xf]
        %v1168 = vld [vmem:[#allocation7 + $0x20] sm:$0xf]
        %v1169 = vld [vmem:[#allocation7 + $0x24] sm:$0xf]
        %v1170 = vld [vmem:[#allocation7 + $0x28] sm:$0xf]
        %v1171 = vld [vmem:[#allocation7 + $0x2c] sm:$0xf]
        %v1172 = vld [vmem:[#allocation7 + $0x30] sm:$0xf]
        %v1173 = vld [vmem:[#allocation7 + $0x34] sm:$0xf]
        %v1174 = vld [vmem:[#allocation7 + $0x38] sm:$0xf]
        %v1175 = vld [vmem:[#allocation7 + $0x3c] sm:$0xf]
        %v1176 = vpack.c.bf16 %v1097, %v1096
        %v1177 = vpack.c.bf16 %v1099, %v1098
        %v1178 = vpack.c.bf16 %v1101, %v1100
        %v1179 = vpack.c.bf16 %v1103, %v1102
        %v1180 = vpack.c.bf16 %v1105, %v1104
        %v1181 = vpack.c.bf16 %v1107, %v1106
        %v1182 = vpack.c.bf16 %v1109, %v1108
        %v1183 = vpack.c.bf16 %v1111, %v1110
        %v1184 = vpack.c.bf16 %v1113, %v1112
        %v1185 = vpack.c.bf16 %v1115, %v1114
        %v1186 = vpack.c.bf16 %v1117, %v1116
        %v1187 = vpack.c.bf16 %v1119, %v1118
        %v1188 = vpack.c.bf16 %v1121, %v1120
        %v1189 = vpack.c.bf16 %v1123, %v1122
        %v1190 = vpack.c.bf16 %v1125, %v1124
        %v1191 = vpack.c.bf16 %v1127, %v1126
        %v1192 = vpack.c.bf16 %v1129, %v1128
        %v1193 = vpack.c.bf16 %v1131, %v1130
        %v1194 = vpack.c.bf16 %v1133, %v1132
        %v1195 = vpack.c.bf16 %v1135, %v1134
        %v1196 = vpack.c.bf16 %v1137, %v1136
        %v1197 = vpack.c.bf16 %v1139, %v1138
        %v1198 = vpack.c.bf16 %v1141, %v1140
        %v1199 = vpack.c.bf16 %v1143, %v1142
        %v1200 = vpack.c.bf16 %v1145, %v1144
        %v1201 = vpack.c.bf16 %v1147, %v1146
        %v1202 = vpack.c.bf16 %v1149, %v1148
        %v1203 = vpack.c.bf16 %v1151, %v1150
        %v1204 = vpack.c.bf16 %v1153, %v1152
        %v1205 = vpack.c.bf16 %v1155, %v1154
        %v1206 = vpack.c.bf16 %v1157, %v1156
        %v1207 = vpack.c.bf16 %v1159, %v1158
        %v1208 = vlaneseq
        %v1209 = vshrl.u32 %v1208, 7
        %v1210 = vsub.s32 1, %v1209
        %v1211 = vrot.slane %v545, %v1210
        %v1228 = vunpack.c.l.b16 %v1160
        %v1229 = vunpack.c.l.b16 %v1161
        %v1230 = vunpack.c.l.b16 %v1162
        %v1231 = vunpack.c.l.b16 %v1163
        %v1232 = vunpack.c.l.b16 %v1164
        %v1233 = vunpack.c.l.b16 %v1165
        %v1234 = vunpack.c.l.b16 %v1166
        %v1235 = vunpack.c.l.b16 %v1167
        %v1236 = vunpack.c.l.b16 %v1168
        %v1237 = vunpack.c.l.b16 %v1169
        %v1238 = vunpack.c.l.b16 %v1170
        %v1239 = vunpack.c.l.b16 %v1171
        %v1240 = vunpack.c.l.b16 %v1172
        %v1241 = vunpack.c.l.b16 %v1173
        %v1242 = vunpack.c.l.b16 %v1174
        %v1243 = vunpack.c.l.b16 %v1175
        %v1244 = vpack.c.b16 %v1229, %v1228
        %v1245 = vpack.c.b16 %v1231, %v1230
        %v1246 = vpack.c.b16 %v1233, %v1232
        %v1247 = vpack.c.b16 %v1235, %v1234
        %v1248 = vpack.c.b16 %v1237, %v1236
        %v1249 = vpack.c.b16 %v1239, %v1238
        %v1250 = vpack.c.b16 %v1241, %v1240
        %v1251 = vpack.c.b16 %v1243, %v1242
        %1260 = vmatprep.subr.bf16.mxu0 0
        %1261 = vmatpush1.bf16.msra.mxu0 %v1251
        %1262 = vmatprep.subr.bf16.mxu0 0
        %1263 = vmatpush1.bf16.msra.mxu0 %v1250
        %1264 = vmatprep.subr.bf16.mxu0 0
        %1265 = vmatpush1.bf16.msra.mxu0 %v1249
        %1266 = vmatprep.subr.bf16.mxu0 0
        %1267 = vmatpush1.bf16.msra.mxu0 %v1248
        %1268 = vmatprep.subr.bf16.mxu0 0
        %1269 = vmatpush1.bf16.msra.mxu0 %v1247
        %1270 = vmatprep.subr.bf16.mxu0 0
        %1271 = vmatpush1.bf16.msra.mxu0 %v1246
        %1272 = vmatprep.subr.bf16.mxu0 0
        %1273 = vmatpush1.bf16.msra.mxu0 %v1245
        %1274 = vmatprep.subr.bf16.mxu0 0
        %1275 = vmatpush1.bf16.msra.mxu0 %v1244
        %1276 = vmatprep.subr.bf16.mxu0 0
        %1277 = vmatpush2.bf16.msra.mxu0 0
        %1278 = vmatprep.subr.bf16.mxu0 0
        %1279 = vmatpush2.bf16.msra.mxu0 0
        %1280 = vmatprep.subr.bf16.mxu0 0
        %1281 = vmatpush2.bf16.msra.mxu0 0
        %1282 = vmatprep.subr.bf16.mxu0 0
        %1283 = vmatpush2.bf16.msra.mxu0 0
        %1284 = vmatprep.subr.bf16.mxu0 0
        %1285 = vmatpush2.bf16.msra.mxu0 0
        %1286 = vmatprep.subr.bf16.mxu0 0
        %1287 = vmatpush2.bf16.msra.mxu0 0
        %1288 = vmatprep.subr.bf16.mxu0 0
        %1289 = vmatpush2.bf16.msra.mxu0 0
        %1290 = vmatprep.subr.bf16.mxu0 0
        %1291 = vmatpush2.bf16.msra.mxu0 0
        %1292 = vmatprep.mubr.bf16.mxu0 0
        %1293 = vmatmul.mubr.bf16.gmra.mxu0 %v1176
        %v1294 = vpop.f32.mrf.mxu0
        %v1295 = vadd.f32 %v1211, %v1294
        %v1296 = vpop.f32.mrf.mxu0
        %v1297 = vpop.f32.mrf.mxu0
        %v1298 = vadd.f32 %v1211, %v1297
        %v1299 = vpop.f32.mrf.mxu0
        %1300 = vmatprep.mubr.bf16.mxu0 0
        %1301 = vmatmul.mubr.bf16.gmra.mxu0 %v1177
        %v1302 = vpop.f32.mrf.mxu0
        %v1303 = vadd.f32 %v1211, %v1302
        %v1304 = vpop.f32.mrf.mxu0
        %v1305 = vpop.f32.mrf.mxu0
        %v1306 = vadd.f32 %v1211, %v1305
        %v1307 = vpop.f32.mrf.mxu0
        %1308 = vmatprep.mubr.bf16.mxu0 0
        %1309 = vmatmul.mubr.bf16.gmra.mxu0 %v1178
        %v1310 = vpop.f32.mrf.mxu0
        %v1311 = vadd.f32 %v1211, %v1310
        %v1312 = vpop.f32.mrf.mxu0
        %v1313 = vpop.f32.mrf.mxu0
        %v1314 = vadd.f32 %v1211, %v1313
        %v1315 = vpop.f32.mrf.mxu0
        %1316 = vmatprep.mubr.bf16.mxu0 0
        %1317 = vmatmul.mubr.bf16.gmra.mxu0 %v1179
        %v1318 = vpop.f32.mrf.mxu0
        %v1319 = vadd.f32 %v1211, %v1318
        %v1320 = vpop.f32.mrf.mxu0
        %v1321 = vpop.f32.mrf.mxu0
        %v1322 = vadd.f32 %v1211, %v1321
        %v1323 = vpop.f32.mrf.mxu0
        %1324 = vmatprep.mubr.bf16.mxu0 0
        %1325 = vmatmul.mubr.bf16.gmra.mxu0 %v1180
        %v1326 = vpop.f32.mrf.mxu0
        %v1327 = vadd.f32 %v1211, %v1326
        %v1328 = vpop.f32.mrf.mxu0
        %v1329 = vpop.f32.mrf.mxu0
        %v1330 = vadd.f32 %v1211, %v1329
        %v1331 = vpop.f32.mrf.mxu0
        %1332 = vmatprep.mubr.bf16.mxu0 0
        %1333 = vmatmul.mubr.bf16.gmra.mxu0 %v1181
        %v1334 = vpop.f32.mrf.mxu0
        %v1335 = vadd.f32 %v1211, %v1334
        %v1336 = vpop.f32.mrf.mxu0
        %v1337 = vpop.f32.mrf.mxu0
        %v1338 = vadd.f32 %v1211, %v1337
        %v1339 = vpop.f32.mrf.mxu0
        %1340 = vmatprep.mubr.bf16.mxu0 0
        %1341 = vmatmul.mubr.bf16.gmra.mxu0 %v1182
        %v1342 = vpop.f32.mrf.mxu0
        %v1343 = vadd.f32 %v1211, %v1342
        %v1344 = vpop.f32.mrf.mxu0
        %v1345 = vpop.f32.mrf.mxu0
        %v1346 = vadd.f32 %v1211, %v1345
        %v1347 = vpop.f32.mrf.mxu0
        %1348 = vmatprep.mubr.bf16.mxu0 0
        %1349 = vmatmul.mubr.bf16.gmra.mxu0 %v1183
        %v1350 = vpop.f32.mrf.mxu0
        %v1351 = vadd.f32 %v1211, %v1350
        %v1352 = vpop.f32.mrf.mxu0
        %v1353 = vpop.f32.mrf.mxu0
        %v1354 = vadd.f32 %v1211, %v1353
        %v1355 = vpop.f32.mrf.mxu0
        %1356 = vmatprep.mubr.bf16.mxu0 0
        %1357 = vmatmul.mubr.bf16.gmra.mxu0 %v1184
        %v1358 = vpop.f32.mrf.mxu0
        %v1359 = vadd.f32 %v1211, %v1358
        %v1360 = vpop.f32.mrf.mxu0
        %v1361 = vpop.f32.mrf.mxu0
        %v1362 = vadd.f32 %v1211, %v1361
        %v1363 = vpop.f32.mrf.mxu0
        %1364 = vmatprep.mubr.bf16.mxu0 0
        %1365 = vmatmul.mubr.bf16.gmra.mxu0 %v1185
        %v1366 = vpop.f32.mrf.mxu0
        %v1367 = vadd.f32 %v1211, %v1366
        %v1368 = vpop.f32.mrf.mxu0
        %v1369 = vpop.f32.mrf.mxu0
        %v1370 = vadd.f32 %v1211, %v1369
        %v1371 = vpop.f32.mrf.mxu0
        %1372 = vmatprep.mubr.bf16.mxu0 0
        %1373 = vmatmul.mubr.bf16.gmra.mxu0 %v1186
        %v1374 = vpop.f32.mrf.mxu0
        %v1375 = vadd.f32 %v1211, %v1374
        %v1376 = vpop.f32.mrf.mxu0
        %v1377 = vpop.f32.mrf.mxu0
        %v1378 = vadd.f32 %v1211, %v1377
        %v1379 = vpop.f32.mrf.mxu0
        %1380 = vmatprep.mubr.bf16.mxu0 0
        %1381 = vmatmul.mubr.bf16.gmra.mxu0 %v1187
        %v1382 = vpop.f32.mrf.mxu0
        %v1383 = vadd.f32 %v1211, %v1382
        %v1384 = vpop.f32.mrf.mxu0
        %v1385 = vpop.f32.mrf.mxu0
        %v1386 = vadd.f32 %v1211, %v1385
        %v1387 = vpop.f32.mrf.mxu0
        %1388 = vmatprep.mubr.bf16.mxu0 0
        %1389 = vmatmul.mubr.bf16.gmra.mxu0 %v1188
        %v1390 = vpop.f32.mrf.mxu0
        %v1391 = vadd.f32 %v1211, %v1390
        %v1392 = vpop.f32.mrf.mxu0
        %v1393 = vpop.f32.mrf.mxu0
        %v1394 = vadd.f32 %v1211, %v1393
        %v1395 = vpop.f32.mrf.mxu0
        %1396 = vmatprep.mubr.bf16.mxu0 0
        %1397 = vmatmul.mubr.bf16.gmra.mxu0 %v1189
        %v1398 = vpop.f32.mrf.mxu0
        %v1399 = vadd.f32 %v1211, %v1398
        %v1400 = vpop.f32.mrf.mxu0
        %v1401 = vpop.f32.mrf.mxu0
        %v1402 = vadd.f32 %v1211, %v1401
        %v1403 = vpop.f32.mrf.mxu0
        %1404 = vmatprep.mubr.bf16.mxu0 0
        %1405 = vmatmul.mubr.bf16.gmra.mxu0 %v1190
        %v1406 = vpop.f32.mrf.mxu0
        %v1407 = vadd.f32 %v1211, %v1406
        %v1408 = vpop.f32.mrf.mxu0
        %v1409 = vpop.f32.mrf.mxu0
        %v1410 = vadd.f32 %v1211, %v1409
        %v1411 = vpop.f32.mrf.mxu0
        %1412 = vmatprep.mubr.bf16.mxu0 0
        %1413 = vmatmul.mubr.bf16.gmra.mxu0 %v1191
        %v1414 = vpop.f32.mrf.mxu0
        %v1415 = vadd.f32 %v1211, %v1414
        %v1416 = vpop.f32.mrf.mxu0
        %v1417 = vpop.f32.mrf.mxu0
        %v1418 = vadd.f32 %v1211, %v1417
        %v1419 = vpop.f32.mrf.mxu0
        %1420 = vmatprep.mubr.bf16.mxu0 0
        %1421 = vmatmul.mubr.bf16.gmra.mxu0 %v1192
        %v1422 = vpop.f32.mrf.mxu0
        %v1423 = vadd.f32 %v1211, %v1422
        %v1424 = vpop.f32.mrf.mxu0
        %v1425 = vpop.f32.mrf.mxu0
        %v1426 = vadd.f32 %v1211, %v1425
        %v1427 = vpop.f32.mrf.mxu0
        %1428 = vmatprep.mubr.bf16.mxu0 0
        %1429 = vmatmul.mubr.bf16.gmra.mxu0 %v1193
        %v1430 = vpop.f32.mrf.mxu0
        %v1431 = vadd.f32 %v1211, %v1430
        %v1432 = vpop.f32.mrf.mxu0
        %v1433 = vpop.f32.mrf.mxu0
        %v1434 = vadd.f32 %v1211, %v1433
        %v1435 = vpop.f32.mrf.mxu0
        %1436 = vmatprep.mubr.bf16.mxu0 0
        %1437 = vmatmul.mubr.bf16.gmra.mxu0 %v1194
        %v1438 = vpop.f32.mrf.mxu0
        %v1439 = vadd.f32 %v1211, %v1438
        %v1440 = vpop.f32.mrf.mxu0
        %v1441 = vpop.f32.mrf.mxu0
        %v1442 = vadd.f32 %v1211, %v1441
        %v1443 = vpop.f32.mrf.mxu0
        %1444 = vmatprep.mubr.bf16.mxu0 0
        %1445 = vmatmul.mubr.bf16.gmra.mxu0 %v1195
        %v1446 = vpop.f32.mrf.mxu0
        %v1447 = vadd.f32 %v1211, %v1446
        %v1448 = vpop.f32.mrf.mxu0
        %v1449 = vpop.f32.mrf.mxu0
        %v1450 = vadd.f32 %v1211, %v1449
        %v1451 = vpop.f32.mrf.mxu0
        %1452 = vmatprep.mubr.bf16.mxu0 0
        %1453 = vmatmul.mubr.bf16.gmra.mxu0 %v1196
        %v1454 = vpop.f32.mrf.mxu0
        %v1455 = vadd.f32 %v1211, %v1454
        %v1456 = vpop.f32.mrf.mxu0
        %v1457 = vpop.f32.mrf.mxu0
        %v1458 = vadd.f32 %v1211, %v1457
        %v1459 = vpop.f32.mrf.mxu0
        %1460 = vmatprep.mubr.bf16.mxu0 0
        %1461 = vmatmul.mubr.bf16.gmra.mxu0 %v1197
        %v1462 = vpop.f32.mrf.mxu0
        %v1463 = vadd.f32 %v1211, %v1462
        %v1464 = vpop.f32.mrf.mxu0
        %v1465 = vpop.f32.mrf.mxu0
        %v1466 = vadd.f32 %v1211, %v1465
        %v1467 = vpop.f32.mrf.mxu0
        %1468 = vmatprep.mubr.bf16.mxu0 0
        %1469 = vmatmul.mubr.bf16.gmra.mxu0 %v1198
        %v1470 = vpop.f32.mrf.mxu0
        %v1471 = vadd.f32 %v1211, %v1470
        %v1472 = vpop.f32.mrf.mxu0
        %v1473 = vpop.f32.mrf.mxu0
        %v1474 = vadd.f32 %v1211, %v1473
        %v1475 = vpop.f32.mrf.mxu0
        %1476 = vmatprep.mubr.bf16.mxu0 0
        %1477 = vmatmul.mubr.bf16.gmra.mxu0 %v1199
        %v1478 = vpop.f32.mrf.mxu0
        %v1479 = vadd.f32 %v1211, %v1478
        %v1480 = vpop.f32.mrf.mxu0
        %v1481 = vpop.f32.mrf.mxu0
        %v1482 = vadd.f32 %v1211, %v1481
        %v1483 = vpop.f32.mrf.mxu0
        %1484 = vmatprep.mubr.bf16.mxu0 0
        %1485 = vmatmul.mubr.bf16.gmra.mxu0 %v1200
        %v1486 = vpop.f32.mrf.mxu0
        %v1487 = vadd.f32 %v1211, %v1486
        %v1488 = vpop.f32.mrf.mxu0
        %v1489 = vpop.f32.mrf.mxu0
        %v1490 = vadd.f32 %v1211, %v1489
        %v1491 = vpop.f32.mrf.mxu0
        %1492 = vmatprep.mubr.bf16.mxu0 0
        %1493 = vmatmul.mubr.bf16.gmra.mxu0 %v1201
        %v1494 = vpop.f32.mrf.mxu0
        %v1495 = vadd.f32 %v1211, %v1494
        %v1496 = vpop.f32.mrf.mxu0
        %v1497 = vpop.f32.mrf.mxu0
        %v1498 = vadd.f32 %v1211, %v1497
        %v1499 = vpop.f32.mrf.mxu0
        %1500 = vmatprep.mubr.bf16.mxu0 0
        %1501 = vmatmul.mubr.bf16.gmra.mxu0 %v1202
        %v1502 = vpop.f32.mrf.mxu0
        %v1503 = vadd.f32 %v1211, %v1502
        %v1504 = vpop.f32.mrf.mxu0
        %v1505 = vpop.f32.mrf.mxu0
        %v1506 = vadd.f32 %v1211, %v1505
        %v1507 = vpop.f32.mrf.mxu0
        %1508 = vmatprep.mubr.bf16.mxu0 0
        %1509 = vmatmul.mubr.bf16.gmra.mxu0 %v1203
        %v1510 = vpop.f32.mrf.mxu0
        %v1511 = vadd.f32 %v1211, %v1510
        %v1512 = vpop.f32.mrf.mxu0
        %v1513 = vpop.f32.mrf.mxu0
        %v1514 = vadd.f32 %v1211, %v1513
        %v1515 = vpop.f32.mrf.mxu0
        %1516 = vmatprep.mubr.bf16.mxu0 0
        %1517 = vmatmul.mubr.bf16.gmra.mxu0 %v1204
        %v1518 = vpop.f32.mrf.mxu0
        %v1519 = vadd.f32 %v1211, %v1518
        %v1520 = vpop.f32.mrf.mxu0
        %v1521 = vpop.f32.mrf.mxu0
        %v1522 = vadd.f32 %v1211, %v1521
        %v1523 = vpop.f32.mrf.mxu0
        %1524 = vmatprep.mubr.bf16.mxu0 0
        %1525 = vmatmul.mubr.bf16.gmra.mxu0 %v1205
        %v1526 = vpop.f32.mrf.mxu0
        %v1527 = vadd.f32 %v1211, %v1526
        %v1528 = vpop.f32.mrf.mxu0
        %v1529 = vpop.f32.mrf.mxu0
        %v1530 = vadd.f32 %v1211, %v1529
        %v1531 = vpop.f32.mrf.mxu0
        %1532 = vmatprep.mubr.bf16.mxu0 0
        %1533 = vmatmul.mubr.bf16.gmra.mxu0 %v1206
        %v1534 = vpop.f32.mrf.mxu0
        %v1535 = vadd.f32 %v1211, %v1534
        %v1536 = vpop.f32.mrf.mxu0
        %v1537 = vpop.f32.mrf.mxu0
        %v1538 = vadd.f32 %v1211, %v1537
        %v1539 = vpop.f32.mrf.mxu0
        %1540 = vmatprep.mubr.bf16.mxu0 0
        %1541 = vmatmul.mubr.bf16.gmra.mxu0 %v1207
        %v1542 = vpop.f32.mrf.mxu0
        %v1543 = vadd.f32 %v1211, %v1542
        %v1544 = vpop.f32.mrf.mxu0
        %v1545 = vpop.f32.mrf.mxu0
        %v1546 = vadd.f32 %v1211, %v1545
        %v1547 = vpop.f32.mrf.mxu0
        %1548 = vdwg.mxu0
        %s1549 = scalar_lea.vmem [#allocation5], 64
        %v1550 = vld [vmem:[%s1549] sm:$0xf]
        %v1551 = vld [vmem:[%s1549 + $0x4] sm:$0xf]
        %v1552 = vld [vmem:[%s1549 + $0x8] sm:$0xf]
        %v1553 = vld [vmem:[%s1549 + $0xc] sm:$0xf]
        %v1554 = vld [vmem:[%s1549 + $0x10] sm:$0xf]
        %v1555 = vld [vmem:[%s1549 + $0x14] sm:$0xf]
        %v1556 = vld [vmem:[%s1549 + $0x18] sm:$0xf]
        %v1557 = vld [vmem:[%s1549 + $0x1c] sm:$0xf]
        %v1558 = vld [vmem:[%s1549 + $0x20] sm:$0xf]
        %v1559 = vld [vmem:[%s1549 + $0x24] sm:$0xf]
        %v1560 = vld [vmem:[%s1549 + $0x28] sm:$0xf]
        %v1561 = vld [vmem:[%s1549 + $0x2c] sm:$0xf]
        %v1562 = vld [vmem:[%s1549 + $0x30] sm:$0xf]
        %v1563 = vld [vmem:[%s1549 + $0x34] sm:$0xf]
        %v1564 = vld [vmem:[%s1549 + $0x38] sm:$0xf]
        %v1565 = vld [vmem:[%s1549 + $0x3c] sm:$0xf]
        %v1566 = vlaneseq
        %v1567 = vshrl.u32 %v1566, 7
        %v1568 = vsub.s32 2, %v1567
        %v1569 = vrot.slane %v545, %v1568
        %v1586 = vunpack.c.l.b16 %v1550
        %v1587 = vunpack.c.l.b16 %v1551
        %v1588 = vunpack.c.l.b16 %v1552
        %v1589 = vunpack.c.l.b16 %v1553
        %v1590 = vunpack.c.l.b16 %v1554
        %v1591 = vunpack.c.l.b16 %v1555
        %v1592 = vunpack.c.l.b16 %v1556
        %v1593 = vunpack.c.l.b16 %v1557
        %v1594 = vunpack.c.l.b16 %v1558
        %v1595 = vunpack.c.l.b16 %v1559
        %v1596 = vunpack.c.l.b16 %v1560
        %v1597 = vunpack.c.l.b16 %v1561
        %v1598 = vunpack.c.l.b16 %v1562
        %v1599 = vunpack.c.l.b16 %v1563
        %v1600 = vunpack.c.l.b16 %v1564
        %v1601 = vunpack.c.l.b16 %v1565
        %v1602 = vpack.c.b16 %v1587, %v1586
        %v1603 = vpack.c.b16 %v1589, %v1588
        %v1604 = vpack.c.b16 %v1591, %v1590
        %v1605 = vpack.c.b16 %v1593, %v1592
        %v1606 = vpack.c.b16 %v1595, %v1594
        %v1607 = vpack.c.b16 %v1597, %v1596
        %v1608 = vpack.c.b16 %v1599, %v1598
        %v1609 = vpack.c.b16 %v1601, %v1600
        %1618 = vmatprep.subr.bf16.mxu0 0
        %1619 = vmatpush1.bf16.msra.mxu0 %v1609
        %1620 = vmatprep.subr.bf16.mxu0 0
        %1621 = vmatpush1.bf16.msra.mxu0 %v1608
        %1622 = vmatprep.subr.bf16.mxu0 0
        %1623 = vmatpush1.bf16.msra.mxu0 %v1607
        %1624 = vmatprep.subr.bf16.mxu0 0
        %1625 = vmatpush1.bf16.msra.mxu0 %v1606
        %1626 = vmatprep.subr.bf16.mxu0 0
        %1627 = vmatpush1.bf16.msra.mxu0 %v1605
        %1628 = vmatprep.subr.bf16.mxu0 0
        %1629 = vmatpush1.bf16.msra.mxu0 %v1604
        %1630 = vmatprep.subr.bf16.mxu0 0
        %1631 = vmatpush1.bf16.msra.mxu0 %v1603
        %1632 = vmatprep.subr.bf16.mxu0 0
        %1633 = vmatpush1.bf16.msra.mxu0 %v1602
        %1634 = vmatprep.subr.bf16.mxu0 0
        %1635 = vmatpush2.bf16.msra.mxu0 0
        %1636 = vmatprep.subr.bf16.mxu0 0
        %1637 = vmatpush2.bf16.msra.mxu0 0
        %1638 = vmatprep.subr.bf16.mxu0 0
        %1639 = vmatpush2.bf16.msra.mxu0 0
        %1640 = vmatprep.subr.bf16.mxu0 0
        %1641 = vmatpush2.bf16.msra.mxu0 0
        %1642 = vmatprep.subr.bf16.mxu0 0
        %1643 = vmatpush2.bf16.msra.mxu0 0
        %1644 = vmatprep.subr.bf16.mxu0 0
        %1645 = vmatpush2.bf16.msra.mxu0 0
        %1646 = vmatprep.subr.bf16.mxu0 0
        %1647 = vmatpush2.bf16.msra.mxu0 0
        %1648 = vmatprep.subr.bf16.mxu0 0
        %1649 = vmatpush2.bf16.msra.mxu0 0
        %1650 = vmatprep.mubr.bf16.mxu0 0
        %1651 = vmatmul.mubr.bf16.gmra.mxu0 %v695
        %v1652 = vpop.f32.mrf.mxu0
        %v1653 = vadd.f32 %v1569, %v1652
        %v1654 = vpop.f32.mrf.mxu0
        %v1655 = vpop.f32.mrf.mxu0
        %v1656 = vadd.f32 %v1569, %v1655
        %v1657 = vpop.f32.mrf.mxu0
        %1658 = vmatprep.mubr.bf16.mxu0 0
        %1659 = vmatmul.mubr.bf16.gmra.mxu0 %v696
        %v1660 = vpop.f32.mrf.mxu0
        %v1661 = vadd.f32 %v1569, %v1660
        %v1662 = vpop.f32.mrf.mxu0
        %v1663 = vpop.f32.mrf.mxu0
        %v1664 = vadd.f32 %v1569, %v1663
        %v1665 = vpop.f32.mrf.mxu0
        %1666 = vmatprep.mubr.bf16.mxu0 0
        %1667 = vmatmul.mubr.bf16.gmra.mxu0 %v697
        %v1668 = vpop.f32.mrf.mxu0
        %v1669 = vadd.f32 %v1569, %v1668
        %v1670 = vpop.f32.mrf.mxu0
        %v1671 = vpop.f32.mrf.mxu0
        %v1672 = vadd.f32 %v1569, %v1671
        %v1673 = vpop.f32.mrf.mxu0
        %1674 = vmatprep.mubr.bf16.mxu0 0
        %1675 = vmatmul.mubr.bf16.gmra.mxu0 %v698
        %v1676 = vpop.f32.mrf.mxu0
        %v1677 = vadd.f32 %v1569, %v1676
        %v1678 = vpop.f32.mrf.mxu0
        %v1679 = vpop.f32.mrf.mxu0
        %v1680 = vadd.f32 %v1569, %v1679
        %v1681 = vpop.f32.mrf.mxu0
        %1682 = vmatprep.mubr.bf16.mxu0 0
        %1683 = vmatmul.mubr.bf16.gmra.mxu0 %v699
        %v1684 = vpop.f32.mrf.mxu0
        %v1685 = vadd.f32 %v1569, %v1684
        %v1686 = vpop.f32.mrf.mxu0
        %v1687 = vpop.f32.mrf.mxu0
        %v1688 = vadd.f32 %v1569, %v1687
        %v1689 = vpop.f32.mrf.mxu0
        %1690 = vmatprep.mubr.bf16.mxu0 0
        %1691 = vmatmul.mubr.bf16.gmra.mxu0 %v700
        %v1692 = vpop.f32.mrf.mxu0
        %v1693 = vadd.f32 %v1569, %v1692
        %v1694 = vpop.f32.mrf.mxu0
        %v1695 = vpop.f32.mrf.mxu0
        %v1696 = vadd.f32 %v1569, %v1695
        %v1697 = vpop.f32.mrf.mxu0
        %1698 = vmatprep.mubr.bf16.mxu0 0
        %1699 = vmatmul.mubr.bf16.gmra.mxu0 %v701
        %v1700 = vpop.f32.mrf.mxu0
        %v1701 = vadd.f32 %v1569, %v1700
        %v1702 = vpop.f32.mrf.mxu0
        %v1703 = vpop.f32.mrf.mxu0
        %v1704 = vadd.f32 %v1569, %v1703
        %v1705 = vpop.f32.mrf.mxu0
        %1706 = vmatprep.mubr.bf16.mxu0 0
        %1707 = vmatmul.mubr.bf16.gmra.mxu0 %v702
        %v1708 = vpop.f32.mrf.mxu0
        %v1709 = vadd.f32 %v1569, %v1708
        %v1710 = vpop.f32.mrf.mxu0
        %v1711 = vpop.f32.mrf.mxu0
        %v1712 = vadd.f32 %v1569, %v1711
        %v1713 = vpop.f32.mrf.mxu0
        %1714 = vmatprep.mubr.bf16.mxu0 0
        %1715 = vmatmul.mubr.bf16.gmra.mxu0 %v703
        %v1716 = vpop.f32.mrf.mxu0
        %v1717 = vadd.f32 %v1569, %v1716
        %v1718 = vpop.f32.mrf.mxu0
        %v1719 = vpop.f32.mrf.mxu0
        %v1720 = vadd.f32 %v1569, %v1719
        %v1721 = vpop.f32.mrf.mxu0
        %1722 = vmatprep.mubr.bf16.mxu0 0
        %1723 = vmatmul.mubr.bf16.gmra.mxu0 %v704
        %v1724 = vpop.f32.mrf.mxu0
        %v1725 = vadd.f32 %v1569, %v1724
        %v1726 = vpop.f32.mrf.mxu0
        %v1727 = vpop.f32.mrf.mxu0
        %v1728 = vadd.f32 %v1569, %v1727
        %v1729 = vpop.f32.mrf.mxu0
        %1730 = vmatprep.mubr.bf16.mxu0 0
        %1731 = vmatmul.mubr.bf16.gmra.mxu0 %v705
        %v1732 = vpop.f32.mrf.mxu0
        %v1733 = vadd.f32 %v1569, %v1732
        %v1734 = vpop.f32.mrf.mxu0
        %v1735 = vpop.f32.mrf.mxu0
        %v1736 = vadd.f32 %v1569, %v1735
        %v1737 = vpop.f32.mrf.mxu0
        %1738 = vmatprep.mubr.bf16.mxu0 0
        %1739 = vmatmul.mubr.bf16.gmra.mxu0 %v706
        %v1740 = vpop.f32.mrf.mxu0
        %v1741 = vadd.f32 %v1569, %v1740
        %v1742 = vpop.f32.mrf.mxu0
        %v1743 = vpop.f32.mrf.mxu0
        %v1744 = vadd.f32 %v1569, %v1743
        %v1745 = vpop.f32.mrf.mxu0
        %1746 = vmatprep.mubr.bf16.mxu0 0
        %1747 = vmatmul.mubr.bf16.gmra.mxu0 %v707
        %v1748 = vpop.f32.mrf.mxu0
        %v1749 = vadd.f32 %v1569, %v1748
        %v1750 = vpop.f32.mrf.mxu0
        %v1751 = vpop.f32.mrf.mxu0
        %v1752 = vadd.f32 %v1569, %v1751
        %v1753 = vpop.f32.mrf.mxu0
        %1754 = vmatprep.mubr.bf16.mxu0 0
        %1755 = vmatmul.mubr.bf16.gmra.mxu0 %v708
        %v1756 = vpop.f32.mrf.mxu0
        %v1757 = vadd.f32 %v1569, %v1756
        %v1758 = vpop.f32.mrf.mxu0
        %v1759 = vpop.f32.mrf.mxu0
        %v1760 = vadd.f32 %v1569, %v1759
        %v1761 = vpop.f32.mrf.mxu0
        %1762 = vmatprep.mubr.bf16.mxu0 0
        %1763 = vmatmul.mubr.bf16.gmra.mxu0 %v709
        %v1764 = vpop.f32.mrf.mxu0
        %v1765 = vadd.f32 %v1569, %v1764
        %v1766 = vpop.f32.mrf.mxu0
        %v1767 = vpop.f32.mrf.mxu0
        %v1768 = vadd.f32 %v1569, %v1767
        %v1769 = vpop.f32.mrf.mxu0
        %1770 = vmatprep.mubr.bf16.mxu0 0
        %1771 = vmatmul.mubr.bf16.gmra.mxu0 %v710
        %v1772 = vpop.f32.mrf.mxu0
        %v1773 = vadd.f32 %v1569, %v1772
        %v1774 = vpop.f32.mrf.mxu0
        %v1775 = vpop.f32.mrf.mxu0
        %v1776 = vadd.f32 %v1569, %v1775
        %v1777 = vpop.f32.mrf.mxu0
        %1778 = vmatprep.mubr.bf16.mxu0 0
        %1779 = vmatmul.mubr.bf16.gmra.mxu0 %v711
        %v1780 = vpop.f32.mrf.mxu0
        %v1781 = vadd.f32 %v1569, %v1780
        %v1782 = vpop.f32.mrf.mxu0
        %v1783 = vpop.f32.mrf.mxu0
        %v1784 = vadd.f32 %v1569, %v1783
        %v1785 = vpop.f32.mrf.mxu0
        %1786 = vmatprep.mubr.bf16.mxu0 0
        %1787 = vmatmul.mubr.bf16.gmra.mxu0 %v712
        %v1788 = vpop.f32.mrf.mxu0
        %v1789 = vadd.f32 %v1569, %v1788
        %v1790 = vpop.f32.mrf.mxu0
        %v1791 = vpop.f32.mrf.mxu0
        %v1792 = vadd.f32 %v1569, %v1791
        %v1793 = vpop.f32.mrf.mxu0
        %1794 = vmatprep.mubr.bf16.mxu0 0
        %1795 = vmatmul.mubr.bf16.gmra.mxu0 %v713
        %v1796 = vpop.f32.mrf.mxu0
        %v1797 = vadd.f32 %v1569, %v1796
        %v1798 = vpop.f32.mrf.mxu0
        %v1799 = vpop.f32.mrf.mxu0
        %v1800 = vadd.f32 %v1569, %v1799
        %v1801 = vpop.f32.mrf.mxu0
        %1802 = vmatprep.mubr.bf16.mxu0 0
        %1803 = vmatmul.mubr.bf16.gmra.mxu0 %v714
        %v1804 = vpop.f32.mrf.mxu0
        %v1805 = vadd.f32 %v1569, %v1804
        %v1806 = vpop.f32.mrf.mxu0
        %v1807 = vpop.f32.mrf.mxu0
        %v1808 = vadd.f32 %v1569, %v1807
        %v1809 = vpop.f32.mrf.mxu0
        %1810 = vmatprep.mubr.bf16.mxu0 0
        %1811 = vmatmul.mubr.bf16.gmra.mxu0 %v715
        %v1812 = vpop.f32.mrf.mxu0
        %v1813 = vadd.f32 %v1569, %v1812
        %v1814 = vpop.f32.mrf.mxu0
        %v1815 = vpop.f32.mrf.mxu0
        %v1816 = vadd.f32 %v1569, %v1815
        %v1817 = vpop.f32.mrf.mxu0
        %1818 = vmatprep.mubr.bf16.mxu0 0
        %1819 = vmatmul.mubr.bf16.gmra.mxu0 %v716
        %v1820 = vpop.f32.mrf.mxu0
        %v1821 = vadd.f32 %v1569, %v1820
        %v1822 = vpop.f32.mrf.mxu0
        %v1823 = vpop.f32.mrf.mxu0
        %v1824 = vadd.f32 %v1569, %v1823
        %v1825 = vpop.f32.mrf.mxu0
        %1826 = vmatprep.mubr.bf16.mxu0 0
        %1827 = vmatmul.mubr.bf16.gmra.mxu0 %v717
        %v1828 = vpop.f32.mrf.mxu0
        %v1829 = vadd.f32 %v1569, %v1828
        %v1830 = vpop.f32.mrf.mxu0
        %v1831 = vpop.f32.mrf.mxu0
        %v1832 = vadd.f32 %v1569, %v1831
        %v1833 = vpop.f32.mrf.mxu0
        %1834 = vmatprep.mubr.bf16.mxu0 0
        %1835 = vmatmul.mubr.bf16.gmra.mxu0 %v718
        %v1836 = vpop.f32.mrf.mxu0
        %v1837 = vadd.f32 %v1569, %v1836
        %v1838 = vpop.f32.mrf.mxu0
        %v1839 = vpop.f32.mrf.mxu0
        %v1840 = vadd.f32 %v1569, %v1839
        %v1841 = vpop.f32.mrf.mxu0
        %1842 = vmatprep.mubr.bf16.mxu0 0
        %1843 = vmatmul.mubr.bf16.gmra.mxu0 %v719
        %v1844 = vpop.f32.mrf.mxu0
        %v1845 = vadd.f32 %v1569, %v1844
        %v1846 = vpop.f32.mrf.mxu0
        %v1847 = vpop.f32.mrf.mxu0
        %v1848 = vadd.f32 %v1569, %v1847
        %v1849 = vpop.f32.mrf.mxu0
        %1850 = vmatprep.mubr.bf16.mxu0 0
        %1851 = vmatmul.mubr.bf16.gmra.mxu0 %v720
        %v1852 = vpop.f32.mrf.mxu0
        %v1853 = vadd.f32 %v1569, %v1852
        %v1854 = vpop.f32.mrf.mxu0
        %v1855 = vpop.f32.mrf.mxu0
        %v1856 = vadd.f32 %v1569, %v1855
        %v1857 = vpop.f32.mrf.mxu0
        %1858 = vmatprep.mubr.bf16.mxu0 0
        %1859 = vmatmul.mubr.bf16.gmra.mxu0 %v721
        %v1860 = vpop.f32.mrf.mxu0
        %v1861 = vadd.f32 %v1569, %v1860
        %v1862 = vpop.f32.mrf.mxu0
        %v1863 = vpop.f32.mrf.mxu0
        %v1864 = vadd.f32 %v1569, %v1863
        %v1865 = vpop.f32.mrf.mxu0
        %1866 = vmatprep.mubr.bf16.mxu0 0
        %1867 = vmatmul.mubr.bf16.gmra.mxu0 %v722
        %v1868 = vpop.f32.mrf.mxu0
        %v1869 = vadd.f32 %v1569, %v1868
        %v1870 = vpop.f32.mrf.mxu0
        %v1871 = vpop.f32.mrf.mxu0
        %v1872 = vadd.f32 %v1569, %v1871
        %v1873 = vpop.f32.mrf.mxu0
        %1874 = vmatprep.mubr.bf16.mxu0 0
        %1875 = vmatmul.mubr.bf16.gmra.mxu0 %v723
        %v1876 = vpop.f32.mrf.mxu0
        %v1877 = vadd.f32 %v1569, %v1876
        %v1878 = vpop.f32.mrf.mxu0
        %v1879 = vpop.f32.mrf.mxu0
        %v1880 = vadd.f32 %v1569, %v1879
        %v1881 = vpop.f32.mrf.mxu0
        %1882 = vmatprep.mubr.bf16.mxu0 0
        %1883 = vmatmul.mubr.bf16.gmra.mxu0 %v724
        %v1884 = vpop.f32.mrf.mxu0
        %v1885 = vadd.f32 %v1569, %v1884
        %v1886 = vpop.f32.mrf.mxu0
        %v1887 = vpop.f32.mrf.mxu0
        %v1888 = vadd.f32 %v1569, %v1887
        %v1889 = vpop.f32.mrf.mxu0
        %1890 = vmatprep.mubr.bf16.mxu0 0
        %1891 = vmatmul.mubr.bf16.gmra.mxu0 %v725
        %v1892 = vpop.f32.mrf.mxu0
        %v1893 = vadd.f32 %v1569, %v1892
        %v1894 = vpop.f32.mrf.mxu0
        %v1895 = vpop.f32.mrf.mxu0
        %v1896 = vadd.f32 %v1569, %v1895
        %v1897 = vpop.f32.mrf.mxu0
        %1898 = vmatprep.mubr.bf16.mxu0 0
        %1899 = vmatmul.mubr.bf16.gmra.mxu0 %v726
        %v1900 = vpop.f32.mrf.mxu0
        %v1901 = vadd.f32 %v1569, %v1900
        %v1902 = vpop.f32.mrf.mxu0
        %v1903 = vpop.f32.mrf.mxu0
        %v1904 = vadd.f32 %v1569, %v1903
        %v1905 = vpop.f32.mrf.mxu0
        %1906 = vdwg.mxu0
        %v1907 = vmax.f32 %v1653, 0.0
        %v1908 = vmax.f32 %v1656, 0.0
        %v1909 = vmax.f32 %v1661, 0.0
        %v1910 = vmax.f32 %v1664, 0.0
        %v1911 = vmax.f32 %v1669, 0.0
        %v1912 = vmax.f32 %v1672, 0.0
        %v1913 = vmax.f32 %v1677, 0.0
        %v1914 = vmax.f32 %v1680, 0.0
        %v1915 = vmax.f32 %v1685, 0.0
        %v1916 = vmax.f32 %v1688, 0.0
        %v1917 = vmax.f32 %v1693, 0.0
        %v1918 = vmax.f32 %v1696, 0.0
        %v1919 = vmax.f32 %v1701, 0.0
        %v1920 = vmax.f32 %v1704, 0.0
        %v1921 = vmax.f32 %v1709, 0.0
        %v1922 = vmax.f32 %v1712, 0.0
        %v1923 = vmax.f32 %v1717, 0.0
        %v1924 = vmax.f32 %v1720, 0.0
        %v1925 = vmax.f32 %v1725, 0.0
        %v1926 = vmax.f32 %v1728, 0.0
        %v1927 = vmax.f32 %v1733, 0.0
        %v1928 = vmax.f32 %v1736, 0.0
        %v1929 = vmax.f32 %v1741, 0.0
        %v1930 = vmax.f32 %v1744, 0.0
        %v1931 = vmax.f32 %v1749, 0.0
        %v1932 = vmax.f32 %v1752, 0.0
        %v1933 = vmax.f32 %v1757, 0.0
        %v1934 = vmax.f32 %v1760, 0.0
        %v1935 = vmax.f32 %v1765, 0.0
        %v1936 = vmax.f32 %v1768, 0.0
        %v1937 = vmax.f32 %v1773, 0.0
        %v1938 = vmax.f32 %v1776, 0.0
        %v1939 = vmax.f32 %v1781, 0.0
        %v1940 = vmax.f32 %v1784, 0.0
        %v1941 = vmax.f32 %v1789, 0.0
        %v1942 = vmax.f32 %v1792, 0.0
        %v1943 = vmax.f32 %v1797, 0.0
        %v1944 = vmax.f32 %v1800, 0.0
        %v1945 = vmax.f32 %v1805, 0.0
        %v1946 = vmax.f32 %v1808, 0.0
        %v1947 = vmax.f32 %v1813, 0.0
        %v1948 = vmax.f32 %v1816, 0.0
        %v1949 = vmax.f32 %v1821, 0.0
        %v1950 = vmax.f32 %v1824, 0.0
        %v1951 = vmax.f32 %v1829, 0.0
        %v1952 = vmax.f32 %v1832, 0.0
        %v1953 = vmax.f32 %v1837, 0.0
        %v1954 = vmax.f32 %v1840, 0.0
        %v1955 = vmax.f32 %v1845, 0.0
        %v1956 = vmax.f32 %v1848, 0.0
        %v1957 = vmax.f32 %v1853, 0.0
        %v1958 = vmax.f32 %v1856, 0.0
        %v1959 = vmax.f32 %v1861, 0.0
        %v1960 = vmax.f32 %v1864, 0.0
        %v1961 = vmax.f32 %v1869, 0.0
        %v1962 = vmax.f32 %v1872, 0.0
        %v1963 = vmax.f32 %v1877, 0.0
        %v1964 = vmax.f32 %v1880, 0.0
        %v1965 = vmax.f32 %v1885, 0.0
        %v1966 = vmax.f32 %v1888, 0.0
        %v1967 = vmax.f32 %v1893, 0.0
        %v1968 = vmax.f32 %v1896, 0.0
        %v1969 = vmax.f32 %v1901, 0.0
        %v1970 = vmax.f32 %v1904, 0.0
        %s1971 = scalar_lea.vmem [#allocation7], 64
        %v1972 = vld [vmem:[%s1971] sm:$0xf]
        %v1973 = vld [vmem:[%s1971 + $0x4] sm:$0xf]
        %v1974 = vld [vmem:[%s1971 + $0x8] sm:$0xf]
        %v1975 = vld [vmem:[%s1971 + $0xc] sm:$0xf]
        %v1976 = vld [vmem:[%s1971 + $0x10] sm:$0xf]
        %v1977 = vld [vmem:[%s1971 + $0x14] sm:$0xf]
        %v1978 = vld [vmem:[%s1971 + $0x18] sm:$0xf]
        %v1979 = vld [vmem:[%s1971 + $0x1c] sm:$0xf]
        %v1980 = vld [vmem:[%s1971 + $0x20] sm:$0xf]
        %v1981 = vld [vmem:[%s1971 + $0x24] sm:$0xf]
        %v1982 = vld [vmem:[%s1971 + $0x28] sm:$0xf]
        %v1983 = vld [vmem:[%s1971 + $0x2c] sm:$0xf]
        %v1984 = vld [vmem:[%s1971 + $0x30] sm:$0xf]
        %v1985 = vld [vmem:[%s1971 + $0x34] sm:$0xf]
        %v1986 = vld [vmem:[%s1971 + $0x38] sm:$0xf]
        %v1987 = vld [vmem:[%s1971 + $0x3c] sm:$0xf]
        %v1988 = vpack.c.bf16 %v1908, %v1907
        %v1989 = vpack.c.bf16 %v1910, %v1909
        %v1990 = vpack.c.bf16 %v1912, %v1911
        %v1991 = vpack.c.bf16 %v1914, %v1913
        %v1992 = vpack.c.bf16 %v1916, %v1915
        %v1993 = vpack.c.bf16 %v1918, %v1917
        %v1994 = vpack.c.bf16 %v1920, %v1919
        %v1995 = vpack.c.bf16 %v1922, %v1921
        %v1996 = vpack.c.bf16 %v1924, %v1923
        %v1997 = vpack.c.bf16 %v1926, %v1925
        %v1998 = vpack.c.bf16 %v1928, %v1927
        %v1999 = vpack.c.bf16 %v1930, %v1929
        %v2000 = vpack.c.bf16 %v1932, %v1931
        %v2001 = vpack.c.bf16 %v1934, %v1933
        %v2002 = vpack.c.bf16 %v1936, %v1935
        %v2003 = vpack.c.bf16 %v1938, %v1937
        %v2004 = vpack.c.bf16 %v1940, %v1939
        %v2005 = vpack.c.bf16 %v1942, %v1941
        %v2006 = vpack.c.bf16 %v1944, %v1943
        %v2007 = vpack.c.bf16 %v1946, %v1945
        %v2008 = vpack.c.bf16 %v1948, %v1947
        %v2009 = vpack.c.bf16 %v1950, %v1949
        %v2010 = vpack.c.bf16 %v1952, %v1951
        %v2011 = vpack.c.bf16 %v1954, %v1953
        %v2012 = vpack.c.bf16 %v1956, %v1955
        %v2013 = vpack.c.bf16 %v1958, %v1957
        %v2014 = vpack.c.bf16 %v1960, %v1959
        %v2015 = vpack.c.bf16 %v1962, %v1961
        %v2016 = vpack.c.bf16 %v1964, %v1963
        %v2017 = vpack.c.bf16 %v1966, %v1965
        %v2018 = vpack.c.bf16 %v1968, %v1967
        %v2019 = vpack.c.bf16 %v1970, %v1969
        %v2020 = vlaneseq
        %v2021 = vshrl.u32 %v2020, 7
        %v2022 = vsub.s32 3, %v2021
        %v2023 = vrot.slane %v545, %v2022
        %v2040 = vunpack.c.l.b16 %v1972
        %v2041 = vunpack.c.l.b16 %v1973
        %v2042 = vunpack.c.l.b16 %v1974
        %v2043 = vunpack.c.l.b16 %v1975
        %v2044 = vunpack.c.l.b16 %v1976
        %v2045 = vunpack.c.l.b16 %v1977
        %v2046 = vunpack.c.l.b16 %v1978
        %v2047 = vunpack.c.l.b16 %v1979
        %v2048 = vunpack.c.l.b16 %v1980
        %v2049 = vunpack.c.l.b16 %v1981
        %v2050 = vunpack.c.l.b16 %v1982
        %v2051 = vunpack.c.l.b16 %v1983
        %v2052 = vunpack.c.l.b16 %v1984
        %v2053 = vunpack.c.l.b16 %v1985
        %v2054 = vunpack.c.l.b16 %v1986
        %v2055 = vunpack.c.l.b16 %v1987
        %v2056 = vpack.c.b16 %v2041, %v2040
        %v2057 = vpack.c.b16 %v2043, %v2042
        %v2058 = vpack.c.b16 %v2045, %v2044
        %v2059 = vpack.c.b16 %v2047, %v2046
        %v2060 = vpack.c.b16 %v2049, %v2048
        %v2061 = vpack.c.b16 %v2051, %v2050
        %v2062 = vpack.c.b16 %v2053, %v2052
        %v2063 = vpack.c.b16 %v2055, %v2054
        %2072 = vmatprep.subr.bf16.mxu0 0
        %2073 = vmatpush1.bf16.msra.mxu0 %v2063
        %2074 = vmatprep.subr.bf16.mxu0 0
        %2075 = vmatpush1.bf16.msra.mxu0 %v2062
        %2076 = vmatprep.subr.bf16.mxu0 0
        %2077 = vmatpush1.bf16.msra.mxu0 %v2061
        %2078 = vmatprep.subr.bf16.mxu0 0
        %2079 = vmatpush1.bf16.msra.mxu0 %v2060
        %2080 = vmatprep.subr.bf16.mxu0 0
        %2081 = vmatpush1.bf16.msra.mxu0 %v2059
        %2082 = vmatprep.subr.bf16.mxu0 0
        %2083 = vmatpush1.bf16.msra.mxu0 %v2058
        %2084 = vmatprep.subr.bf16.mxu0 0
        %2085 = vmatpush1.bf16.msra.mxu0 %v2057
        %2086 = vmatprep.subr.bf16.mxu0 0
        %2087 = vmatpush1.bf16.msra.mxu0 %v2056
        %2088 = vmatprep.subr.bf16.mxu0 0
        %2089 = vmatpush2.bf16.msra.mxu0 0
        %2090 = vmatprep.subr.bf16.mxu0 0
        %2091 = vmatpush2.bf16.msra.mxu0 0
        %2092 = vmatprep.subr.bf16.mxu0 0
        %2093 = vmatpush2.bf16.msra.mxu0 0
        %2094 = vmatprep.subr.bf16.mxu0 0
        %2095 = vmatpush2.bf16.msra.mxu0 0
        %2096 = vmatprep.subr.bf16.mxu0 0
        %2097 = vmatpush2.bf16.msra.mxu0 0
        %2098 = vmatprep.subr.bf16.mxu0 0
        %2099 = vmatpush2.bf16.msra.mxu0 0
        %2100 = vmatprep.subr.bf16.mxu0 0
        %2101 = vmatpush2.bf16.msra.mxu0 0
        %2102 = vmatprep.subr.bf16.mxu0 0
        %2103 = vmatpush2.bf16.msra.mxu0 0
        %2104 = vmatprep.mubr.bf16.mxu0 0
        %2105 = vmatmul.mubr.bf16.gmra.mxu0 %v1988
        %v2106 = vpop.f32.mrf.mxu0
        %v2107 = vadd.f32 %v2023, %v2106
        %v2108 = vpop.f32.mrf.mxu0
        %v2109 = vpop.f32.mrf.mxu0
        %v2110 = vadd.f32 %v2023, %v2109
        %v2111 = vpop.f32.mrf.mxu0
        %2112 = vmatprep.mubr.bf16.mxu0 0
        %2113 = vmatmul.mubr.bf16.gmra.mxu0 %v1989
        %v2114 = vpop.f32.mrf.mxu0
        %v2115 = vadd.f32 %v2023, %v2114
        %v2116 = vpop.f32.mrf.mxu0
        %v2117 = vpop.f32.mrf.mxu0
        %v2118 = vadd.f32 %v2023, %v2117
        %v2119 = vpop.f32.mrf.mxu0
        %2120 = vmatprep.mubr.bf16.mxu0 0
        %2121 = vmatmul.mubr.bf16.gmra.mxu0 %v1990
        %v2122 = vpop.f32.mrf.mxu0
        %v2123 = vadd.f32 %v2023, %v2122
        %v2124 = vpop.f32.mrf.mxu0
        %v2125 = vpop.f32.mrf.mxu0
        %v2126 = vadd.f32 %v2023, %v2125
        %v2127 = vpop.f32.mrf.mxu0
        %2128 = vmatprep.mubr.bf16.mxu0 0
        %2129 = vmatmul.mubr.bf16.gmra.mxu0 %v1991
        %v2130 = vpop.f32.mrf.mxu0
        %v2131 = vadd.f32 %v2023, %v2130
        %v2132 = vpop.f32.mrf.mxu0
        %v2133 = vpop.f32.mrf.mxu0
        %v2134 = vadd.f32 %v2023, %v2133
        %v2135 = vpop.f32.mrf.mxu0
        %2136 = vmatprep.mubr.bf16.mxu0 0
        %2137 = vmatmul.mubr.bf16.gmra.mxu0 %v1992
        %v2138 = vpop.f32.mrf.mxu0
        %v2139 = vadd.f32 %v2023, %v2138
        %v2140 = vpop.f32.mrf.mxu0
        %v2141 = vpop.f32.mrf.mxu0
        %v2142 = vadd.f32 %v2023, %v2141
        %v2143 = vpop.f32.mrf.mxu0
        %2144 = vmatprep.mubr.bf16.mxu0 0
        %2145 = vmatmul.mubr.bf16.gmra.mxu0 %v1993
        %v2146 = vpop.f32.mrf.mxu0
        %v2147 = vadd.f32 %v2023, %v2146
        %v2148 = vpop.f32.mrf.mxu0
        %v2149 = vpop.f32.mrf.mxu0
        %v2150 = vadd.f32 %v2023, %v2149
        %v2151 = vpop.f32.mrf.mxu0
        %2152 = vmatprep.mubr.bf16.mxu0 0
        %2153 = vmatmul.mubr.bf16.gmra.mxu0 %v1994
        %v2154 = vpop.f32.mrf.mxu0
        %v2155 = vadd.f32 %v2023, %v2154
        %v2156 = vpop.f32.mrf.mxu0
        %v2157 = vpop.f32.mrf.mxu0
        %v2158 = vadd.f32 %v2023, %v2157
        %v2159 = vpop.f32.mrf.mxu0
        %2160 = vmatprep.mubr.bf16.mxu0 0
        %2161 = vmatmul.mubr.bf16.gmra.mxu0 %v1995
        %v2162 = vpop.f32.mrf.mxu0
        %v2163 = vadd.f32 %v2023, %v2162
        %v2164 = vpop.f32.mrf.mxu0
        %v2165 = vpop.f32.mrf.mxu0
        %v2166 = vadd.f32 %v2023, %v2165
        %v2167 = vpop.f32.mrf.mxu0
        %2168 = vmatprep.mubr.bf16.mxu0 0
        %2169 = vmatmul.mubr.bf16.gmra.mxu0 %v1996
        %v2170 = vpop.f32.mrf.mxu0
        %v2171 = vadd.f32 %v2023, %v2170
        %v2172 = vpop.f32.mrf.mxu0
        %v2173 = vpop.f32.mrf.mxu0
        %v2174 = vadd.f32 %v2023, %v2173
        %v2175 = vpop.f32.mrf.mxu0
        %2176 = vmatprep.mubr.bf16.mxu0 0
        %2177 = vmatmul.mubr.bf16.gmra.mxu0 %v1997
        %v2178 = vpop.f32.mrf.mxu0
        %v2179 = vadd.f32 %v2023, %v2178
        %v2180 = vpop.f32.mrf.mxu0
        %v2181 = vpop.f32.mrf.mxu0
        %v2182 = vadd.f32 %v2023, %v2181
        %v2183 = vpop.f32.mrf.mxu0
        %2184 = vmatprep.mubr.bf16.mxu0 0
        %2185 = vmatmul.mubr.bf16.gmra.mxu0 %v1998
        %v2186 = vpop.f32.mrf.mxu0
        %v2187 = vadd.f32 %v2023, %v2186
        %v2188 = vpop.f32.mrf.mxu0
        %v2189 = vpop.f32.mrf.mxu0
        %v2190 = vadd.f32 %v2023, %v2189
        %v2191 = vpop.f32.mrf.mxu0
        %2192 = vmatprep.mubr.bf16.mxu0 0
        %2193 = vmatmul.mubr.bf16.gmra.mxu0 %v1999
        %v2194 = vpop.f32.mrf.mxu0
        %v2195 = vadd.f32 %v2023, %v2194
        %v2196 = vpop.f32.mrf.mxu0
        %v2197 = vpop.f32.mrf.mxu0
        %v2198 = vadd.f32 %v2023, %v2197
        %v2199 = vpop.f32.mrf.mxu0
        %2200 = vmatprep.mubr.bf16.mxu0 0
        %2201 = vmatmul.mubr.bf16.gmra.mxu0 %v2000
        %v2202 = vpop.f32.mrf.mxu0
        %v2203 = vadd.f32 %v2023, %v2202
        %v2204 = vpop.f32.mrf.mxu0
        %v2205 = vpop.f32.mrf.mxu0
        %v2206 = vadd.f32 %v2023, %v2205
        %v2207 = vpop.f32.mrf.mxu0
        %2208 = vmatprep.mubr.bf16.mxu0 0
        %2209 = vmatmul.mubr.bf16.gmra.mxu0 %v2001
        %v2210 = vpop.f32.mrf.mxu0
        %v2211 = vadd.f32 %v2023, %v2210
        %v2212 = vpop.f32.mrf.mxu0
        %v2213 = vpop.f32.mrf.mxu0
        %v2214 = vadd.f32 %v2023, %v2213
        %v2215 = vpop.f32.mrf.mxu0
        %2216 = vmatprep.mubr.bf16.mxu0 0
        %2217 = vmatmul.mubr.bf16.gmra.mxu0 %v2002
        %v2218 = vpop.f32.mrf.mxu0
        %v2219 = vadd.f32 %v2023, %v2218
        %v2220 = vpop.f32.mrf.mxu0
        %v2221 = vpop.f32.mrf.mxu0
        %v2222 = vadd.f32 %v2023, %v2221
        %v2223 = vpop.f32.mrf.mxu0
        %2224 = vmatprep.mubr.bf16.mxu0 0
        %2225 = vmatmul.mubr.bf16.gmra.mxu0 %v2003
        %v2226 = vpop.f32.mrf.mxu0
        %v2227 = vadd.f32 %v2023, %v2226
        %v2228 = vpop.f32.mrf.mxu0
        %v2229 = vpop.f32.mrf.mxu0
        %v2230 = vadd.f32 %v2023, %v2229
        %v2231 = vpop.f32.mrf.mxu0
        %2232 = vmatprep.mubr.bf16.mxu0 0
        %2233 = vmatmul.mubr.bf16.gmra.mxu0 %v2004
        %v2234 = vpop.f32.mrf.mxu0
        %v2235 = vadd.f32 %v2023, %v2234
        %v2236 = vpop.f32.mrf.mxu0
        %v2237 = vpop.f32.mrf.mxu0
        %v2238 = vadd.f32 %v2023, %v2237
        %v2239 = vpop.f32.mrf.mxu0
        %2240 = vmatprep.mubr.bf16.mxu0 0
        %2241 = vmatmul.mubr.bf16.gmra.mxu0 %v2005
        %v2242 = vpop.f32.mrf.mxu0
        %v2243 = vadd.f32 %v2023, %v2242
        %v2244 = vpop.f32.mrf.mxu0
        %v2245 = vpop.f32.mrf.mxu0
        %v2246 = vadd.f32 %v2023, %v2245
        %v2247 = vpop.f32.mrf.mxu0
        %2248 = vmatprep.mubr.bf16.mxu0 0
        %2249 = vmatmul.mubr.bf16.gmra.mxu0 %v2006
        %v2250 = vpop.f32.mrf.mxu0
        %v2251 = vadd.f32 %v2023, %v2250
        %v2252 = vpop.f32.mrf.mxu0
        %v2253 = vpop.f32.mrf.mxu0
        %v2254 = vadd.f32 %v2023, %v2253
        %v2255 = vpop.f32.mrf.mxu0
        %2256 = vmatprep.mubr.bf16.mxu0 0
        %2257 = vmatmul.mubr.bf16.gmra.mxu0 %v2007
        %v2258 = vpop.f32.mrf.mxu0
        %v2259 = vadd.f32 %v2023, %v2258
        %v2260 = vpop.f32.mrf.mxu0
        %v2261 = vpop.f32.mrf.mxu0
        %v2262 = vadd.f32 %v2023, %v2261
        %v2263 = vpop.f32.mrf.mxu0
        %2264 = vmatprep.mubr.bf16.mxu0 0
        %2265 = vmatmul.mubr.bf16.gmra.mxu0 %v2008
        %v2266 = vpop.f32.mrf.mxu0
        %v2267 = vadd.f32 %v2023, %v2266
        %v2268 = vpop.f32.mrf.mxu0
        %v2269 = vpop.f32.mrf.mxu0
        %v2270 = vadd.f32 %v2023, %v2269
        %v2271 = vpop.f32.mrf.mxu0
        %2272 = vmatprep.mubr.bf16.mxu0 0
        %2273 = vmatmul.mubr.bf16.gmra.mxu0 %v2009
        %v2274 = vpop.f32.mrf.mxu0
        %v2275 = vadd.f32 %v2023, %v2274
        %v2276 = vpop.f32.mrf.mxu0
        %v2277 = vpop.f32.mrf.mxu0
        %v2278 = vadd.f32 %v2023, %v2277
        %v2279 = vpop.f32.mrf.mxu0
        %2280 = vmatprep.mubr.bf16.mxu0 0
        %2281 = vmatmul.mubr.bf16.gmra.mxu0 %v2010
        %v2282 = vpop.f32.mrf.mxu0
        %v2283 = vadd.f32 %v2023, %v2282
        %v2284 = vpop.f32.mrf.mxu0
        %v2285 = vpop.f32.mrf.mxu0
        %v2286 = vadd.f32 %v2023, %v2285
        %v2287 = vpop.f32.mrf.mxu0
        %2288 = vmatprep.mubr.bf16.mxu0 0
        %2289 = vmatmul.mubr.bf16.gmra.mxu0 %v2011
        %v2290 = vpop.f32.mrf.mxu0
        %v2291 = vadd.f32 %v2023, %v2290
        %v2292 = vpop.f32.mrf.mxu0
        %v2293 = vpop.f32.mrf.mxu0
        %v2294 = vadd.f32 %v2023, %v2293
        %v2295 = vpop.f32.mrf.mxu0
        %2296 = vmatprep.mubr.bf16.mxu0 0
        %2297 = vmatmul.mubr.bf16.gmra.mxu0 %v2012
        %v2298 = vpop.f32.mrf.mxu0
        %v2299 = vadd.f32 %v2023, %v2298
        %v2300 = vpop.f32.mrf.mxu0
        %v2301 = vpop.f32.mrf.mxu0
        %v2302 = vadd.f32 %v2023, %v2301
        %v2303 = vpop.f32.mrf.mxu0
        %2304 = vmatprep.mubr.bf16.mxu0 0
        %2305 = vmatmul.mubr.bf16.gmra.mxu0 %v2013
        %v2306 = vpop.f32.mrf.mxu0
        %v2307 = vadd.f32 %v2023, %v2306
        %v2308 = vpop.f32.mrf.mxu0
        %v2309 = vpop.f32.mrf.mxu0
        %v2310 = vadd.f32 %v2023, %v2309
        %v2311 = vpop.f32.mrf.mxu0
        %2312 = vmatprep.mubr.bf16.mxu0 0
        %2313 = vmatmul.mubr.bf16.gmra.mxu0 %v2014
        %v2314 = vpop.f32.mrf.mxu0
        %v2315 = vadd.f32 %v2023, %v2314
        %v2316 = vpop.f32.mrf.mxu0
        %v2317 = vpop.f32.mrf.mxu0
        %v2318 = vadd.f32 %v2023, %v2317
        %v2319 = vpop.f32.mrf.mxu0
        %2320 = vmatprep.mubr.bf16.mxu0 0
        %2321 = vmatmul.mubr.bf16.gmra.mxu0 %v2015
        %v2322 = vpop.f32.mrf.mxu0
        %v2323 = vadd.f32 %v2023, %v2322
        %v2324 = vpop.f32.mrf.mxu0
        %v2325 = vpop.f32.mrf.mxu0
        %v2326 = vadd.f32 %v2023, %v2325
        %v2327 = vpop.f32.mrf.mxu0
        %2328 = vmatprep.mubr.bf16.mxu0 0
        %2329 = vmatmul.mubr.bf16.gmra.mxu0 %v2016
        %v2330 = vpop.f32.mrf.mxu0
        %v2331 = vadd.f32 %v2023, %v2330
        %v2332 = vpop.f32.mrf.mxu0
        %v2333 = vpop.f32.mrf.mxu0
        %v2334 = vadd.f32 %v2023, %v2333
        %v2335 = vpop.f32.mrf.mxu0
        %2336 = vmatprep.mubr.bf16.mxu0 0
        %2337 = vmatmul.mubr.bf16.gmra.mxu0 %v2017
        %v2338 = vpop.f32.mrf.mxu0
        %v2339 = vadd.f32 %v2023, %v2338
        %v2340 = vpop.f32.mrf.mxu0
        %v2341 = vpop.f32.mrf.mxu0
        %v2342 = vadd.f32 %v2023, %v2341
        %v2343 = vpop.f32.mrf.mxu0
        %2344 = vmatprep.mubr.bf16.mxu0 0
        %2345 = vmatmul.mubr.bf16.gmra.mxu0 %v2018
        %v2346 = vpop.f32.mrf.mxu0
        %v2347 = vadd.f32 %v2023, %v2346
        %v2348 = vpop.f32.mrf.mxu0
        %v2349 = vpop.f32.mrf.mxu0
        %v2350 = vadd.f32 %v2023, %v2349
        %v2351 = vpop.f32.mrf.mxu0
        %2352 = vmatprep.mubr.bf16.mxu0 0
        %2353 = vmatmul.mubr.bf16.gmra.mxu0 %v2019
        %v2354 = vpop.f32.mrf.mxu0
        %v2355 = vadd.f32 %v2023, %v2354
        %v2356 = vpop.f32.mrf.mxu0
        %v2357 = vpop.f32.mrf.mxu0
        %v2358 = vadd.f32 %v2023, %v2357
        %v2359 = vpop.f32.mrf.mxu0
        %2360 = vdwg.mxu0
        %v2361 = vld [vmem:[#allocation8] sm:$0xf]
        %v2362 = vld [vmem:[#allocation8 + $0x4] sm:$0xf]
        %v2363 = vld [vmem:[#allocation8 + $0x8] sm:$0xf]
        %v2364 = vld [vmem:[#allocation8 + $0xc] sm:$0xf]
        %v2365 = vld [vmem:[#allocation8 + $0x10] sm:$0xf]
        %v2366 = vld [vmem:[#allocation8 + $0x14] sm:$0xf]
        %v2367 = vld [vmem:[#allocation8 + $0x18] sm:$0xf]
        %v2368 = vld [vmem:[#allocation8 + $0x1c] sm:$0xf]
        %v2369 = vld [vmem:[#allocation8 + $0x20] sm:$0xf]
        %v2370 = vld [vmem:[#allocation8 + $0x24] sm:$0xf]
        %v2371 = vld [vmem:[#allocation8 + $0x28] sm:$0xf]
        %v2372 = vld [vmem:[#allocation8 + $0x2c] sm:$0xf]
        %v2373 = vld [vmem:[#allocation8 + $0x30] sm:$0xf]
        %v2374 = vld [vmem:[#allocation8 + $0x34] sm:$0xf]
        %v2375 = vld [vmem:[#allocation8 + $0x38] sm:$0xf]
        %v2376 = vld [vmem:[#allocation8 + $0x3c] sm:$0xf]
        %v2377 = vpack.c.bf16 %v1298, %v1295
        %v2378 = vpack.c.bf16 %v1306, %v1303
        %v2379 = vpack.c.bf16 %v1314, %v1311
        %v2380 = vpack.c.bf16 %v1322, %v1319
        %v2381 = vpack.c.bf16 %v1330, %v1327
        %v2382 = vpack.c.bf16 %v1338, %v1335
        %v2383 = vpack.c.bf16 %v1346, %v1343
        %v2384 = vpack.c.bf16 %v1354, %v1351
        %v2385 = vpack.c.bf16 %v1362, %v1359
        %v2386 = vpack.c.bf16 %v1370, %v1367
        %v2387 = vpack.c.bf16 %v1378, %v1375
        %v2388 = vpack.c.bf16 %v1386, %v1383
        %v2389 = vpack.c.bf16 %v1394, %v1391
        %v2390 = vpack.c.bf16 %v1402, %v1399
        %v2391 = vpack.c.bf16 %v1410, %v1407
        %v2392 = vpack.c.bf16 %v1418, %v1415
        %v2393 = vpack.c.bf16 %v1426, %v1423
        %v2394 = vpack.c.bf16 %v1434, %v1431
        %v2395 = vpack.c.bf16 %v1442, %v1439
        %v2396 = vpack.c.bf16 %v1450, %v1447
        %v2397 = vpack.c.bf16 %v1458, %v1455
        %v2398 = vpack.c.bf16 %v1466, %v1463
        %v2399 = vpack.c.bf16 %v1474, %v1471
        %v2400 = vpack.c.bf16 %v1482, %v1479
        %v2401 = vpack.c.bf16 %v1490, %v1487
        %v2402 = vpack.c.bf16 %v1498, %v1495
        %v2403 = vpack.c.bf16 %v1506, %v1503
        %v2404 = vpack.c.bf16 %v1514, %v1511
        %v2405 = vpack.c.bf16 %v1522, %v1519
        %v2406 = vpack.c.bf16 %v1530, %v1527
        %v2407 = vpack.c.bf16 %v1538, %v1535
        %v2408 = vpack.c.bf16 %v1546, %v1543
        %v2409 = vlaneseq
        %v2410 = vshrl.u32 %v2409, 7
        %v2411 = vsub.s32 0, %v2410
        %v2412 = vrot.slane %v546, %v2411
        %v2429 = vunpack.c.l.b16 %v2361
        %v2430 = vunpack.c.l.b16 %v2362
        %v2431 = vunpack.c.l.b16 %v2363
        %v2432 = vunpack.c.l.b16 %v2364
        %v2433 = vunpack.c.l.b16 %v2365
        %v2434 = vunpack.c.l.b16 %v2366
        %v2435 = vunpack.c.l.b16 %v2367
        %v2436 = vunpack.c.l.b16 %v2368
        %v2437 = vunpack.c.l.b16 %v2369
        %v2438 = vunpack.c.l.b16 %v2370
        %v2439 = vunpack.c.l.b16 %v2371
        %v2440 = vunpack.c.l.b16 %v2372
        %v2441 = vunpack.c.l.b16 %v2373
        %v2442 = vunpack.c.l.b16 %v2374
        %v2443 = vunpack.c.l.b16 %v2375
        %v2444 = vunpack.c.l.b16 %v2376
        %v2445 = vpack.c.b16 %v2430, %v2429
        %v2446 = vpack.c.b16 %v2432, %v2431
        %v2447 = vpack.c.b16 %v2434, %v2433
        %v2448 = vpack.c.b16 %v2436, %v2435
        %v2449 = vpack.c.b16 %v2438, %v2437
        %v2450 = vpack.c.b16 %v2440, %v2439
        %v2451 = vpack.c.b16 %v2442, %v2441
        %v2452 = vpack.c.b16 %v2444, %v2443
        %2461 = vmatprep.subr.bf16.mxu0 0
        %2462 = vmatpush1.bf16.msra.mxu0 %v2452
        %2463 = vmatprep.subr.bf16.mxu0 0
        %2464 = vmatpush1.bf16.msra.mxu0 %v2451
        %2465 = vmatprep.subr.bf16.mxu0 0
        %2466 = vmatpush1.bf16.msra.mxu0 %v2450
        %2467 = vmatprep.subr.bf16.mxu0 0
        %2468 = vmatpush1.bf16.msra.mxu0 %v2449
        %2469 = vmatprep.subr.bf16.mxu0 0
        %2470 = vmatpush1.bf16.msra.mxu0 %v2448
        %2471 = vmatprep.subr.bf16.mxu0 0
        %2472 = vmatpush1.bf16.msra.mxu0 %v2447
        %2473 = vmatprep.subr.bf16.mxu0 0
        %2474 = vmatpush1.bf16.msra.mxu0 %v2446
        %2475 = vmatprep.subr.bf16.mxu0 0
        %2476 = vmatpush1.bf16.msra.mxu0 %v2445
        %2477 = vmatprep.subr.bf16.mxu0 0
        %2478 = vmatpush2.bf16.msra.mxu0 0
        %2479 = vmatprep.subr.bf16.mxu0 0
        %2480 = vmatpush2.bf16.msra.mxu0 0
        %2481 = vmatprep.subr.bf16.mxu0 0
        %2482 = vmatpush2.bf16.msra.mxu0 0
        %2483 = vmatprep.subr.bf16.mxu0 0
        %2484 = vmatpush2.bf16.msra.mxu0 0
        %2485 = vmatprep.subr.bf16.mxu0 0
        %2486 = vmatpush2.bf16.msra.mxu0 0
        %2487 = vmatprep.subr.bf16.mxu0 0
        %2488 = vmatpush2.bf16.msra.mxu0 0
        %2489 = vmatprep.subr.bf16.mxu0 0
        %2490 = vmatpush2.bf16.msra.mxu0 0
        %2491 = vmatprep.subr.bf16.mxu0 0
        %2492 = vmatpush2.bf16.msra.mxu0 0
        %2493 = vmatprep.mubr.bf16.mxu0 0
        %2494 = vmatmul.mubr.bf16.gmra.mxu0 %v2377
        %v2495 = vpop.f32.mrf.mxu0
        %v2496 = vadd.f32 %v2412, %v2495
        %v2497 = vpop.f32.mrf.mxu0
        %v2498 = vpop.f32.mrf.mxu0
        %v2499 = vadd.f32 %v2412, %v2498
        %v2500 = vpop.f32.mrf.mxu0
        %2501 = vmatprep.mubr.bf16.mxu0 0
        %2502 = vmatmul.mubr.bf16.gmra.mxu0 %v2378
        %v2503 = vpop.f32.mrf.mxu0
        %v2504 = vadd.f32 %v2412, %v2503
        %v2505 = vpop.f32.mrf.mxu0
        %v2506 = vpop.f32.mrf.mxu0
        %v2507 = vadd.f32 %v2412, %v2506
        %v2508 = vpop.f32.mrf.mxu0
        %2509 = vmatprep.mubr.bf16.mxu0 0
        %2510 = vmatmul.mubr.bf16.gmra.mxu0 %v2379
        %v2511 = vpop.f32.mrf.mxu0
        %v2512 = vadd.f32 %v2412, %v2511
        %v2513 = vpop.f32.mrf.mxu0
        %v2514 = vpop.f32.mrf.mxu0
        %v2515 = vadd.f32 %v2412, %v2514
        %v2516 = vpop.f32.mrf.mxu0
        %2517 = vmatprep.mubr.bf16.mxu0 0
        %2518 = vmatmul.mubr.bf16.gmra.mxu0 %v2380
        %v2519 = vpop.f32.mrf.mxu0
        %v2520 = vadd.f32 %v2412, %v2519
        %v2521 = vpop.f32.mrf.mxu0
        %v2522 = vpop.f32.mrf.mxu0
        %v2523 = vadd.f32 %v2412, %v2522
        %v2524 = vpop.f32.mrf.mxu0
        %2525 = vmatprep.mubr.bf16.mxu0 0
        %2526 = vmatmul.mubr.bf16.gmra.mxu0 %v2381
        %v2527 = vpop.f32.mrf.mxu0
        %v2528 = vadd.f32 %v2412, %v2527
        %v2529 = vpop.f32.mrf.mxu0
        %v2530 = vpop.f32.mrf.mxu0
        %v2531 = vadd.f32 %v2412, %v2530
        %v2532 = vpop.f32.mrf.mxu0
        %2533 = vmatprep.mubr.bf16.mxu0 0
        %2534 = vmatmul.mubr.bf16.gmra.mxu0 %v2382
        %v2535 = vpop.f32.mrf.mxu0
        %v2536 = vadd.f32 %v2412, %v2535
        %v2537 = vpop.f32.mrf.mxu0
        %v2538 = vpop.f32.mrf.mxu0
        %v2539 = vadd.f32 %v2412, %v2538
        %v2540 = vpop.f32.mrf.mxu0
        %2541 = vmatprep.mubr.bf16.mxu0 0
        %2542 = vmatmul.mubr.bf16.gmra.mxu0 %v2383
        %v2543 = vpop.f32.mrf.mxu0
        %v2544 = vadd.f32 %v2412, %v2543
        %v2545 = vpop.f32.mrf.mxu0
        %v2546 = vpop.f32.mrf.mxu0
        %v2547 = vadd.f32 %v2412, %v2546
        %v2548 = vpop.f32.mrf.mxu0
        %2549 = vmatprep.mubr.bf16.mxu0 0
        %2550 = vmatmul.mubr.bf16.gmra.mxu0 %v2384
        %v2551 = vpop.f32.mrf.mxu0
        %v2552 = vadd.f32 %v2412, %v2551
        %v2553 = vpop.f32.mrf.mxu0
        %v2554 = vpop.f32.mrf.mxu0
        %v2555 = vadd.f32 %v2412, %v2554
        %v2556 = vpop.f32.mrf.mxu0
        %2557 = vmatprep.mubr.bf16.mxu0 0
        %2558 = vmatmul.mubr.bf16.gmra.mxu0 %v2385
        %v2559 = vpop.f32.mrf.mxu0
        %v2560 = vadd.f32 %v2412, %v2559
        %v2561 = vpop.f32.mrf.mxu0
        %v2562 = vpop.f32.mrf.mxu0
        %v2563 = vadd.f32 %v2412, %v2562
        %v2564 = vpop.f32.mrf.mxu0
        %2565 = vmatprep.mubr.bf16.mxu0 0
        %2566 = vmatmul.mubr.bf16.gmra.mxu0 %v2386
        %v2567 = vpop.f32.mrf.mxu0
        %v2568 = vadd.f32 %v2412, %v2567
        %v2569 = vpop.f32.mrf.mxu0
        %v2570 = vpop.f32.mrf.mxu0
        %v2571 = vadd.f32 %v2412, %v2570
        %v2572 = vpop.f32.mrf.mxu0
        %2573 = vmatprep.mubr.bf16.mxu0 0
        %2574 = vmatmul.mubr.bf16.gmra.mxu0 %v2387
        %v2575 = vpop.f32.mrf.mxu0
        %v2576 = vadd.f32 %v2412, %v2575
        %v2577 = vpop.f32.mrf.mxu0
        %v2578 = vpop.f32.mrf.mxu0
        %v2579 = vadd.f32 %v2412, %v2578
        %v2580 = vpop.f32.mrf.mxu0
        %2581 = vmatprep.mubr.bf16.mxu0 0
        %2582 = vmatmul.mubr.bf16.gmra.mxu0 %v2388
        %v2583 = vpop.f32.mrf.mxu0
        %v2584 = vadd.f32 %v2412, %v2583
        %v2585 = vpop.f32.mrf.mxu0
        %v2586 = vpop.f32.mrf.mxu0
        %v2587 = vadd.f32 %v2412, %v2586
        %v2588 = vpop.f32.mrf.mxu0
        %2589 = vmatprep.mubr.bf16.mxu0 0
        %2590 = vmatmul.mubr.bf16.gmra.mxu0 %v2389
        %v2591 = vpop.f32.mrf.mxu0
        %v2592 = vadd.f32 %v2412, %v2591
        %v2593 = vpop.f32.mrf.mxu0
        %v2594 = vpop.f32.mrf.mxu0
        %v2595 = vadd.f32 %v2412, %v2594
        %v2596 = vpop.f32.mrf.mxu0
        %2597 = vmatprep.mubr.bf16.mxu0 0
        %2598 = vmatmul.mubr.bf16.gmra.mxu0 %v2390
        %v2599 = vpop.f32.mrf.mxu0
        %v2600 = vadd.f32 %v2412, %v2599
        %v2601 = vpop.f32.mrf.mxu0
        %v2602 = vpop.f32.mrf.mxu0
        %v2603 = vadd.f32 %v2412, %v2602
        %v2604 = vpop.f32.mrf.mxu0
        %2605 = vmatprep.mubr.bf16.mxu0 0
        %2606 = vmatmul.mubr.bf16.gmra.mxu0 %v2391
        %v2607 = vpop.f32.mrf.mxu0
        %v2608 = vadd.f32 %v2412, %v2607
        %v2609 = vpop.f32.mrf.mxu0
        %v2610 = vpop.f32.mrf.mxu0
        %v2611 = vadd.f32 %v2412, %v2610
        %v2612 = vpop.f32.mrf.mxu0
        %2613 = vmatprep.mubr.bf16.mxu0 0
        %2614 = vmatmul.mubr.bf16.gmra.mxu0 %v2392
        %v2615 = vpop.f32.mrf.mxu0
        %v2616 = vadd.f32 %v2412, %v2615
        %v2617 = vpop.f32.mrf.mxu0
        %v2618 = vpop.f32.mrf.mxu0
        %v2619 = vadd.f32 %v2412, %v2618
        %v2620 = vpop.f32.mrf.mxu0
        %2621 = vmatprep.mubr.bf16.mxu0 0
        %2622 = vmatmul.mubr.bf16.gmra.mxu0 %v2393
        %v2623 = vpop.f32.mrf.mxu0
        %v2624 = vadd.f32 %v2412, %v2623
        %v2625 = vpop.f32.mrf.mxu0
        %v2626 = vpop.f32.mrf.mxu0
        %v2627 = vadd.f32 %v2412, %v2626
        %v2628 = vpop.f32.mrf.mxu0
        %2629 = vmatprep.mubr.bf16.mxu0 0
        %2630 = vmatmul.mubr.bf16.gmra.mxu0 %v2394
        %v2631 = vpop.f32.mrf.mxu0
        %v2632 = vadd.f32 %v2412, %v2631
        %v2633 = vpop.f32.mrf.mxu0
        %v2634 = vpop.f32.mrf.mxu0
        %v2635 = vadd.f32 %v2412, %v2634
        %v2636 = vpop.f32.mrf.mxu0
        %2637 = vmatprep.mubr.bf16.mxu0 0
        %2638 = vmatmul.mubr.bf16.gmra.mxu0 %v2395
        %v2639 = vpop.f32.mrf.mxu0
        %v2640 = vadd.f32 %v2412, %v2639
        %v2641 = vpop.f32.mrf.mxu0
        %v2642 = vpop.f32.mrf.mxu0
        %v2643 = vadd.f32 %v2412, %v2642
        %v2644 = vpop.f32.mrf.mxu0
        %2645 = vmatprep.mubr.bf16.mxu0 0
        %2646 = vmatmul.mubr.bf16.gmra.mxu0 %v2396
        %v2647 = vpop.f32.mrf.mxu0
        %v2648 = vadd.f32 %v2412, %v2647
        %v2649 = vpop.f32.mrf.mxu0
        %v2650 = vpop.f32.mrf.mxu0
        %v2651 = vadd.f32 %v2412, %v2650
        %v2652 = vpop.f32.mrf.mxu0
        %2653 = vmatprep.mubr.bf16.mxu0 0
        %2654 = vmatmul.mubr.bf16.gmra.mxu0 %v2397
        %v2655 = vpop.f32.mrf.mxu0
        %v2656 = vadd.f32 %v2412, %v2655
        %v2657 = vpop.f32.mrf.mxu0
        %v2658 = vpop.f32.mrf.mxu0
        %v2659 = vadd.f32 %v2412, %v2658
        %v2660 = vpop.f32.mrf.mxu0
        %2661 = vmatprep.mubr.bf16.mxu0 0
        %2662 = vmatmul.mubr.bf16.gmra.mxu0 %v2398
        %v2663 = vpop.f32.mrf.mxu0
        %v2664 = vadd.f32 %v2412, %v2663
        %v2665 = vpop.f32.mrf.mxu0
        %v2666 = vpop.f32.mrf.mxu0
        %v2667 = vadd.f32 %v2412, %v2666
        %v2668 = vpop.f32.mrf.mxu0
        %2669 = vmatprep.mubr.bf16.mxu0 0
        %2670 = vmatmul.mubr.bf16.gmra.mxu0 %v2399
        %v2671 = vpop.f32.mrf.mxu0
        %v2672 = vadd.f32 %v2412, %v2671
        %v2673 = vpop.f32.mrf.mxu0
        %v2674 = vpop.f32.mrf.mxu0
        %v2675 = vadd.f32 %v2412, %v2674
        %v2676 = vpop.f32.mrf.mxu0
        %2677 = vmatprep.mubr.bf16.mxu0 0
        %2678 = vmatmul.mubr.bf16.gmra.mxu0 %v2400
        %v2679 = vpop.f32.mrf.mxu0
        %v2680 = vadd.f32 %v2412, %v2679
        %v2681 = vpop.f32.mrf.mxu0
        %v2682 = vpop.f32.mrf.mxu0
        %v2683 = vadd.f32 %v2412, %v2682
        %v2684 = vpop.f32.mrf.mxu0
        %2685 = vmatprep.mubr.bf16.mxu0 0
        %2686 = vmatmul.mubr.bf16.gmra.mxu0 %v2401
        %v2687 = vpop.f32.mrf.mxu0
        %v2688 = vadd.f32 %v2412, %v2687
        %v2689 = vpop.f32.mrf.mxu0
        %v2690 = vpop.f32.mrf.mxu0
        %v2691 = vadd.f32 %v2412, %v2690
        %v2692 = vpop.f32.mrf.mxu0
        %2693 = vmatprep.mubr.bf16.mxu0 0
        %2694 = vmatmul.mubr.bf16.gmra.mxu0 %v2402
        %v2695 = vpop.f32.mrf.mxu0
        %v2696 = vadd.f32 %v2412, %v2695
        %v2697 = vpop.f32.mrf.mxu0
        %v2698 = vpop.f32.mrf.mxu0
        %v2699 = vadd.f32 %v2412, %v2698
        %v2700 = vpop.f32.mrf.mxu0
        %2701 = vmatprep.mubr.bf16.mxu0 0
        %2702 = vmatmul.mubr.bf16.gmra.mxu0 %v2403
        %v2703 = vpop.f32.mrf.mxu0
        %v2704 = vadd.f32 %v2412, %v2703
        %v2705 = vpop.f32.mrf.mxu0
        %v2706 = vpop.f32.mrf.mxu0
        %v2707 = vadd.f32 %v2412, %v2706
        %v2708 = vpop.f32.mrf.mxu0
        %2709 = vmatprep.mubr.bf16.mxu0 0
        %2710 = vmatmul.mubr.bf16.gmra.mxu0 %v2404
        %v2711 = vpop.f32.mrf.mxu0
        %v2712 = vadd.f32 %v2412, %v2711
        %v2713 = vpop.f32.mrf.mxu0
        %v2714 = vpop.f32.mrf.mxu0
        %v2715 = vadd.f32 %v2412, %v2714
        %v2716 = vpop.f32.mrf.mxu0
        %2717 = vmatprep.mubr.bf16.mxu0 0
        %2718 = vmatmul.mubr.bf16.gmra.mxu0 %v2405
        %v2719 = vpop.f32.mrf.mxu0
        %v2720 = vadd.f32 %v2412, %v2719
        %v2721 = vpop.f32.mrf.mxu0
        %v2722 = vpop.f32.mrf.mxu0
        %v2723 = vadd.f32 %v2412, %v2722
        %v2724 = vpop.f32.mrf.mxu0
        %2725 = vmatprep.mubr.bf16.mxu0 0
        %2726 = vmatmul.mubr.bf16.gmra.mxu0 %v2406
        %v2727 = vpop.f32.mrf.mxu0
        %v2728 = vadd.f32 %v2412, %v2727
        %v2729 = vpop.f32.mrf.mxu0
        %v2730 = vpop.f32.mrf.mxu0
        %v2731 = vadd.f32 %v2412, %v2730
        %v2732 = vpop.f32.mrf.mxu0
        %2733 = vmatprep.mubr.bf16.mxu0 0
        %2734 = vmatmul.mubr.bf16.gmra.mxu0 %v2407
        %v2735 = vpop.f32.mrf.mxu0
        %v2736 = vadd.f32 %v2412, %v2735
        %v2737 = vpop.f32.mrf.mxu0
        %v2738 = vpop.f32.mrf.mxu0
        %v2739 = vadd.f32 %v2412, %v2738
        %v2740 = vpop.f32.mrf.mxu0
        %2741 = vmatprep.mubr.bf16.mxu0 0
        %2742 = vmatmul.mubr.bf16.gmra.mxu0 %v2408
        %v2743 = vpop.f32.mrf.mxu0
        %v2744 = vadd.f32 %v2412, %v2743
        %v2745 = vpop.f32.mrf.mxu0
        %v2746 = vpop.f32.mrf.mxu0
        %v2747 = vadd.f32 %v2412, %v2746
        %v2748 = vpop.f32.mrf.mxu0
        %2749 = vdwg.mxu0
        %s2750 = scalar_lea.vmem [#allocation8], 64
        %v2751 = vld [vmem:[%s2750] sm:$0xf]
        %v2752 = vld [vmem:[%s2750 + $0x4] sm:$0xf]
        %v2753 = vld [vmem:[%s2750 + $0x8] sm:$0xf]
        %v2754 = vld [vmem:[%s2750 + $0xc] sm:$0xf]
        %v2755 = vld [vmem:[%s2750 + $0x10] sm:$0xf]
        %v2756 = vld [vmem:[%s2750 + $0x14] sm:$0xf]
        %v2757 = vld [vmem:[%s2750 + $0x18] sm:$0xf]
        %v2758 = vld [vmem:[%s2750 + $0x1c] sm:$0xf]
        %v2759 = vld [vmem:[%s2750 + $0x20] sm:$0xf]
        %v2760 = vld [vmem:[%s2750 + $0x24] sm:$0xf]
        %v2761 = vld [vmem:[%s2750 + $0x28] sm:$0xf]
        %v2762 = vld [vmem:[%s2750 + $0x2c] sm:$0xf]
        %v2763 = vld [vmem:[%s2750 + $0x30] sm:$0xf]
        %v2764 = vld [vmem:[%s2750 + $0x34] sm:$0xf]
        %v2765 = vld [vmem:[%s2750 + $0x38] sm:$0xf]
        %v2766 = vld [vmem:[%s2750 + $0x3c] sm:$0xf]
        %v2767 = vpack.c.bf16 %v2110, %v2107
        %v2768 = vpack.c.bf16 %v2118, %v2115
        %v2769 = vpack.c.bf16 %v2126, %v2123
        %v2770 = vpack.c.bf16 %v2134, %v2131
        %v2771 = vpack.c.bf16 %v2142, %v2139
        %v2772 = vpack.c.bf16 %v2150, %v2147
        %v2773 = vpack.c.bf16 %v2158, %v2155
        %v2774 = vpack.c.bf16 %v2166, %v2163
        %v2775 = vpack.c.bf16 %v2174, %v2171
        %v2776 = vpack.c.bf16 %v2182, %v2179
        %v2777 = vpack.c.bf16 %v2190, %v2187
        %v2778 = vpack.c.bf16 %v2198, %v2195
        %v2779 = vpack.c.bf16 %v2206, %v2203
        %v2780 = vpack.c.bf16 %v2214, %v2211
        %v2781 = vpack.c.bf16 %v2222, %v2219
        %v2782 = vpack.c.bf16 %v2230, %v2227
        %v2783 = vpack.c.bf16 %v2238, %v2235
        %v2784 = vpack.c.bf16 %v2246, %v2243
        %v2785 = vpack.c.bf16 %v2254, %v2251
        %v2786 = vpack.c.bf16 %v2262, %v2259
        %v2787 = vpack.c.bf16 %v2270, %v2267
        %v2788 = vpack.c.bf16 %v2278, %v2275
        %v2789 = vpack.c.bf16 %v2286, %v2283
        %v2790 = vpack.c.bf16 %v2294, %v2291
        %v2791 = vpack.c.bf16 %v2302, %v2299
        %v2792 = vpack.c.bf16 %v2310, %v2307
        %v2793 = vpack.c.bf16 %v2318, %v2315
        %v2794 = vpack.c.bf16 %v2326, %v2323
        %v2795 = vpack.c.bf16 %v2334, %v2331
        %v2796 = vpack.c.bf16 %v2342, %v2339
        %v2797 = vpack.c.bf16 %v2350, %v2347
        %v2798 = vpack.c.bf16 %v2358, %v2355
        %v2799 = vlaneseq
        %v2800 = vshrl.u32 %v2799, 7
        %v2801 = vsub.s32 1, %v2800
        %v2802 = vrot.slane %v546, %v2801
        %v2819 = vunpack.c.l.b16 %v2751
        %v2820 = vunpack.c.l.b16 %v2752
        %v2821 = vunpack.c.l.b16 %v2753
        %v2822 = vunpack.c.l.b16 %v2754
        %v2823 = vunpack.c.l.b16 %v2755
        %v2824 = vunpack.c.l.b16 %v2756
        %v2825 = vunpack.c.l.b16 %v2757
        %v2826 = vunpack.c.l.b16 %v2758
        %v2827 = vunpack.c.l.b16 %v2759
        %v2828 = vunpack.c.l.b16 %v2760
        %v2829 = vunpack.c.l.b16 %v2761
        %v2830 = vunpack.c.l.b16 %v2762
        %v2831 = vunpack.c.l.b16 %v2763
        %v2832 = vunpack.c.l.b16 %v2764
        %v2833 = vunpack.c.l.b16 %v2765
        %v2834 = vunpack.c.l.b16 %v2766
        %v2835 = vpack.c.b16 %v2820, %v2819
        %v2836 = vpack.c.b16 %v2822, %v2821
        %v2837 = vpack.c.b16 %v2824, %v2823
        %v2838 = vpack.c.b16 %v2826, %v2825
        %v2839 = vpack.c.b16 %v2828, %v2827
        %v2840 = vpack.c.b16 %v2830, %v2829
        %v2841 = vpack.c.b16 %v2832, %v2831
        %v2842 = vpack.c.b16 %v2834, %v2833
        %2851 = vmatprep.subr.bf16.mxu0 0
        %2852 = vmatpush1.bf16.msra.mxu0 %v2842
        %2853 = vmatprep.subr.bf16.mxu0 0
        %2854 = vmatpush1.bf16.msra.mxu0 %v2841
        %2855 = vmatprep.subr.bf16.mxu0 0
        %2856 = vmatpush1.bf16.msra.mxu0 %v2840
        %2857 = vmatprep.subr.bf16.mxu0 0
        %2858 = vmatpush1.bf16.msra.mxu0 %v2839
        %2859 = vmatprep.subr.bf16.mxu0 0
        %2860 = vmatpush1.bf16.msra.mxu0 %v2838
        %2861 = vmatprep.subr.bf16.mxu0 0
        %2862 = vmatpush1.bf16.msra.mxu0 %v2837
        %2863 = vmatprep.subr.bf16.mxu0 0
        %2864 = vmatpush1.bf16.msra.mxu0 %v2836
        %2865 = vmatprep.subr.bf16.mxu0 0
        %2866 = vmatpush1.bf16.msra.mxu0 %v2835
        %2867 = vmatprep.subr.bf16.mxu0 0
        %2868 = vmatpush2.bf16.msra.mxu0 0
        %2869 = vmatprep.subr.bf16.mxu0 0
        %2870 = vmatpush2.bf16.msra.mxu0 0
        %2871 = vmatprep.subr.bf16.mxu0 0
        %2872 = vmatpush2.bf16.msra.mxu0 0
        %2873 = vmatprep.subr.bf16.mxu0 0
        %2874 = vmatpush2.bf16.msra.mxu0 0
        %2875 = vmatprep.subr.bf16.mxu0 0
        %2876 = vmatpush2.bf16.msra.mxu0 0
        %2877 = vmatprep.subr.bf16.mxu0 0
        %2878 = vmatpush2.bf16.msra.mxu0 0
        %2879 = vmatprep.subr.bf16.mxu0 0
        %2880 = vmatpush2.bf16.msra.mxu0 0
        %2881 = vmatprep.subr.bf16.mxu0 0
        %2882 = vmatpush2.bf16.msra.mxu0 0
        %2883 = vmatprep.mubr.bf16.mxu0 0
        %2884 = vmatmul.mubr.bf16.gmra.mxu0 %v2767
        %v2885 = vpop.f32.mrf.mxu0
        %v2886 = vadd.f32 %v2802, %v2885
        %v2887 = vpop.f32.mrf.mxu0
        %v2888 = vpop.f32.mrf.mxu0
        %v2889 = vadd.f32 %v2802, %v2888
        %v2890 = vpop.f32.mrf.mxu0
        %2891 = vmatprep.mubr.bf16.mxu0 0
        %2892 = vmatmul.mubr.bf16.gmra.mxu0 %v2768
        %v2893 = vpop.f32.mrf.mxu0
        %v2894 = vadd.f32 %v2802, %v2893
        %v2895 = vpop.f32.mrf.mxu0
        %v2896 = vpop.f32.mrf.mxu0
        %v2897 = vadd.f32 %v2802, %v2896
        %v2898 = vpop.f32.mrf.mxu0
        %2899 = vmatprep.mubr.bf16.mxu0 0
        %2900 = vmatmul.mubr.bf16.gmra.mxu0 %v2769
        %v2901 = vpop.f32.mrf.mxu0
        %v2902 = vadd.f32 %v2802, %v2901
        %v2903 = vpop.f32.mrf.mxu0
        %v2904 = vpop.f32.mrf.mxu0
        %v2905 = vadd.f32 %v2802, %v2904
        %v2906 = vpop.f32.mrf.mxu0
        %2907 = vmatprep.mubr.bf16.mxu0 0
        %2908 = vmatmul.mubr.bf16.gmra.mxu0 %v2770
        %v2909 = vpop.f32.mrf.mxu0
        %v2910 = vadd.f32 %v2802, %v2909
        %v2911 = vpop.f32.mrf.mxu0
        %v2912 = vpop.f32.mrf.mxu0
        %v2913 = vadd.f32 %v2802, %v2912
        %v2914 = vpop.f32.mrf.mxu0
        %2915 = vmatprep.mubr.bf16.mxu0 0
        %2916 = vmatmul.mubr.bf16.gmra.mxu0 %v2771
        %v2917 = vpop.f32.mrf.mxu0
        %v2918 = vadd.f32 %v2802, %v2917
        %v2919 = vpop.f32.mrf.mxu0
        %v2920 = vpop.f32.mrf.mxu0
        %v2921 = vadd.f32 %v2802, %v2920
        %v2922 = vpop.f32.mrf.mxu0
        %2923 = vmatprep.mubr.bf16.mxu0 0
        %2924 = vmatmul.mubr.bf16.gmra.mxu0 %v2772
        %v2925 = vpop.f32.mrf.mxu0
        %v2926 = vadd.f32 %v2802, %v2925
        %v2927 = vpop.f32.mrf.mxu0
        %v2928 = vpop.f32.mrf.mxu0
        %v2929 = vadd.f32 %v2802, %v2928
        %v2930 = vpop.f32.mrf.mxu0
        %2931 = vmatprep.mubr.bf16.mxu0 0
        %2932 = vmatmul.mubr.bf16.gmra.mxu0 %v2773
        %v2933 = vpop.f32.mrf.mxu0
        %v2934 = vadd.f32 %v2802, %v2933
        %v2935 = vpop.f32.mrf.mxu0
        %v2936 = vpop.f32.mrf.mxu0
        %v2937 = vadd.f32 %v2802, %v2936
        %v2938 = vpop.f32.mrf.mxu0
        %2939 = vmatprep.mubr.bf16.mxu0 0
        %2940 = vmatmul.mubr.bf16.gmra.mxu0 %v2774
        %v2941 = vpop.f32.mrf.mxu0
        %v2942 = vadd.f32 %v2802, %v2941
        %v2943 = vpop.f32.mrf.mxu0
        %v2944 = vpop.f32.mrf.mxu0
        %v2945 = vadd.f32 %v2802, %v2944
        %v2946 = vpop.f32.mrf.mxu0
        %2947 = vmatprep.mubr.bf16.mxu0 0
        %2948 = vmatmul.mubr.bf16.gmra.mxu0 %v2775
        %v2949 = vpop.f32.mrf.mxu0
        %v2950 = vadd.f32 %v2802, %v2949
        %v2951 = vpop.f32.mrf.mxu0
        %v2952 = vpop.f32.mrf.mxu0
        %v2953 = vadd.f32 %v2802, %v2952
        %v2954 = vpop.f32.mrf.mxu0
        %2955 = vmatprep.mubr.bf16.mxu0 0
        %2956 = vmatmul.mubr.bf16.gmra.mxu0 %v2776
        %v2957 = vpop.f32.mrf.mxu0
        %v2958 = vadd.f32 %v2802, %v2957
        %v2959 = vpop.f32.mrf.mxu0
        %v2960 = vpop.f32.mrf.mxu0
        %v2961 = vadd.f32 %v2802, %v2960
        %v2962 = vpop.f32.mrf.mxu0
        %2963 = vmatprep.mubr.bf16.mxu0 0
        %2964 = vmatmul.mubr.bf16.gmra.mxu0 %v2777
        %v2965 = vpop.f32.mrf.mxu0
        %v2966 = vadd.f32 %v2802, %v2965
        %v2967 = vpop.f32.mrf.mxu0
        %v2968 = vpop.f32.mrf.mxu0
        %v2969 = vadd.f32 %v2802, %v2968
        %v2970 = vpop.f32.mrf.mxu0
        %2971 = vmatprep.mubr.bf16.mxu0 0
        %2972 = vmatmul.mubr.bf16.gmra.mxu0 %v2778
        %v2973 = vpop.f32.mrf.mxu0
        %v2974 = vadd.f32 %v2802, %v2973
        %v2975 = vpop.f32.mrf.mxu0
        %v2976 = vpop.f32.mrf.mxu0
        %v2977 = vadd.f32 %v2802, %v2976
        %v2978 = vpop.f32.mrf.mxu0
        %2979 = vmatprep.mubr.bf16.mxu0 0
        %2980 = vmatmul.mubr.bf16.gmra.mxu0 %v2779
        %v2981 = vpop.f32.mrf.mxu0
        %v2982 = vadd.f32 %v2802, %v2981
        %v2983 = vpop.f32.mrf.mxu0
        %v2984 = vpop.f32.mrf.mxu0
        %v2985 = vadd.f32 %v2802, %v2984
        %v2986 = vpop.f32.mrf.mxu0
        %2987 = vmatprep.mubr.bf16.mxu0 0
        %2988 = vmatmul.mubr.bf16.gmra.mxu0 %v2780
        %v2989 = vpop.f32.mrf.mxu0
        %v2990 = vadd.f32 %v2802, %v2989
        %v2991 = vpop.f32.mrf.mxu0
        %v2992 = vpop.f32.mrf.mxu0
        %v2993 = vadd.f32 %v2802, %v2992
        %v2994 = vpop.f32.mrf.mxu0
        %2995 = vmatprep.mubr.bf16.mxu0 0
        %2996 = vmatmul.mubr.bf16.gmra.mxu0 %v2781
        %v2997 = vpop.f32.mrf.mxu0
        %v2998 = vadd.f32 %v2802, %v2997
        %v2999 = vpop.f32.mrf.mxu0
        %v3000 = vpop.f32.mrf.mxu0
        %v3001 = vadd.f32 %v2802, %v3000
        %v3002 = vpop.f32.mrf.mxu0
        %3003 = vmatprep.mubr.bf16.mxu0 0
        %3004 = vmatmul.mubr.bf16.gmra.mxu0 %v2782
        %v3005 = vpop.f32.mrf.mxu0
        %v3006 = vadd.f32 %v2802, %v3005
        %v3007 = vpop.f32.mrf.mxu0
        %v3008 = vpop.f32.mrf.mxu0
        %v3009 = vadd.f32 %v2802, %v3008
        %v3010 = vpop.f32.mrf.mxu0
        %3011 = vmatprep.mubr.bf16.mxu0 0
        %3012 = vmatmul.mubr.bf16.gmra.mxu0 %v2783
        %v3013 = vpop.f32.mrf.mxu0
        %v3014 = vadd.f32 %v2802, %v3013
        %v3015 = vpop.f32.mrf.mxu0
        %v3016 = vpop.f32.mrf.mxu0
        %v3017 = vadd.f32 %v2802, %v3016
        %v3018 = vpop.f32.mrf.mxu0
        %3019 = vmatprep.mubr.bf16.mxu0 0
        %3020 = vmatmul.mubr.bf16.gmra.mxu0 %v2784
        %v3021 = vpop.f32.mrf.mxu0
        %v3022 = vadd.f32 %v2802, %v3021
        %v3023 = vpop.f32.mrf.mxu0
        %v3024 = vpop.f32.mrf.mxu0
        %v3025 = vadd.f32 %v2802, %v3024
        %v3026 = vpop.f32.mrf.mxu0
        %3027 = vmatprep.mubr.bf16.mxu0 0
        %3028 = vmatmul.mubr.bf16.gmra.mxu0 %v2785
        %v3029 = vpop.f32.mrf.mxu0
        %v3030 = vadd.f32 %v2802, %v3029
        %v3031 = vpop.f32.mrf.mxu0
        %v3032 = vpop.f32.mrf.mxu0
        %v3033 = vadd.f32 %v2802, %v3032
        %v3034 = vpop.f32.mrf.mxu0
        %3035 = vmatprep.mubr.bf16.mxu0 0
        %3036 = vmatmul.mubr.bf16.gmra.mxu0 %v2786
        %v3037 = vpop.f32.mrf.mxu0
        %v3038 = vadd.f32 %v2802, %v3037
        %v3039 = vpop.f32.mrf.mxu0
        %v3040 = vpop.f32.mrf.mxu0
        %v3041 = vadd.f32 %v2802, %v3040
        %v3042 = vpop.f32.mrf.mxu0
        %3043 = vmatprep.mubr.bf16.mxu0 0
        %3044 = vmatmul.mubr.bf16.gmra.mxu0 %v2787
        %v3045 = vpop.f32.mrf.mxu0
        %v3046 = vadd.f32 %v2802, %v3045
        %v3047 = vpop.f32.mrf.mxu0
        %v3048 = vpop.f32.mrf.mxu0
        %v3049 = vadd.f32 %v2802, %v3048
        %v3050 = vpop.f32.mrf.mxu0
        %3051 = vmatprep.mubr.bf16.mxu0 0
        %3052 = vmatmul.mubr.bf16.gmra.mxu0 %v2788
        %v3053 = vpop.f32.mrf.mxu0
        %v3054 = vadd.f32 %v2802, %v3053
        %v3055 = vpop.f32.mrf.mxu0
        %v3056 = vpop.f32.mrf.mxu0
        %v3057 = vadd.f32 %v2802, %v3056
        %v3058 = vpop.f32.mrf.mxu0
        %3059 = vmatprep.mubr.bf16.mxu0 0
        %3060 = vmatmul.mubr.bf16.gmra.mxu0 %v2789
        %v3061 = vpop.f32.mrf.mxu0
        %v3062 = vadd.f32 %v2802, %v3061
        %v3063 = vpop.f32.mrf.mxu0
        %v3064 = vpop.f32.mrf.mxu0
        %v3065 = vadd.f32 %v2802, %v3064
        %v3066 = vpop.f32.mrf.mxu0
        %3067 = vmatprep.mubr.bf16.mxu0 0
        %3068 = vmatmul.mubr.bf16.gmra.mxu0 %v2790
        %v3069 = vpop.f32.mrf.mxu0
        %v3070 = vadd.f32 %v2802, %v3069
        %v3071 = vpop.f32.mrf.mxu0
        %v3072 = vpop.f32.mrf.mxu0
        %v3073 = vadd.f32 %v2802, %v3072
        %v3074 = vpop.f32.mrf.mxu0
        %3075 = vmatprep.mubr.bf16.mxu0 0
        %3076 = vmatmul.mubr.bf16.gmra.mxu0 %v2791
        %v3077 = vpop.f32.mrf.mxu0
        %v3078 = vadd.f32 %v2802, %v3077
        %v3079 = vpop.f32.mrf.mxu0
        %v3080 = vpop.f32.mrf.mxu0
        %v3081 = vadd.f32 %v2802, %v3080
        %v3082 = vpop.f32.mrf.mxu0
        %3083 = vmatprep.mubr.bf16.mxu0 0
        %3084 = vmatmul.mubr.bf16.gmra.mxu0 %v2792
        %v3085 = vpop.f32.mrf.mxu0
        %v3086 = vadd.f32 %v2802, %v3085
        %v3087 = vpop.f32.mrf.mxu0
        %v3088 = vpop.f32.mrf.mxu0
        %v3089 = vadd.f32 %v2802, %v3088
        %v3090 = vpop.f32.mrf.mxu0
        %3091 = vmatprep.mubr.bf16.mxu0 0
        %3092 = vmatmul.mubr.bf16.gmra.mxu0 %v2793
        %v3093 = vpop.f32.mrf.mxu0
        %v3094 = vadd.f32 %v2802, %v3093
        %v3095 = vpop.f32.mrf.mxu0
        %v3096 = vpop.f32.mrf.mxu0
        %v3097 = vadd.f32 %v2802, %v3096
        %v3098 = vpop.f32.mrf.mxu0
        %3099 = vmatprep.mubr.bf16.mxu0 0
        %3100 = vmatmul.mubr.bf16.gmra.mxu0 %v2794
        %v3101 = vpop.f32.mrf.mxu0
        %v3102 = vadd.f32 %v2802, %v3101
        %v3103 = vpop.f32.mrf.mxu0
        %v3104 = vpop.f32.mrf.mxu0
        %v3105 = vadd.f32 %v2802, %v3104
        %v3106 = vpop.f32.mrf.mxu0
        %3107 = vmatprep.mubr.bf16.mxu0 0
        %3108 = vmatmul.mubr.bf16.gmra.mxu0 %v2795
        %v3109 = vpop.f32.mrf.mxu0
        %v3110 = vadd.f32 %v2802, %v3109
        %v3111 = vpop.f32.mrf.mxu0
        %v3112 = vpop.f32.mrf.mxu0
        %v3113 = vadd.f32 %v2802, %v3112
        %v3114 = vpop.f32.mrf.mxu0
        %3115 = vmatprep.mubr.bf16.mxu0 0
        %3116 = vmatmul.mubr.bf16.gmra.mxu0 %v2796
        %v3117 = vpop.f32.mrf.mxu0
        %v3118 = vadd.f32 %v2802, %v3117
        %v3119 = vpop.f32.mrf.mxu0
        %v3120 = vpop.f32.mrf.mxu0
        %v3121 = vadd.f32 %v2802, %v3120
        %v3122 = vpop.f32.mrf.mxu0
        %3123 = vmatprep.mubr.bf16.mxu0 0
        %3124 = vmatmul.mubr.bf16.gmra.mxu0 %v2797
        %v3125 = vpop.f32.mrf.mxu0
        %v3126 = vadd.f32 %v2802, %v3125
        %v3127 = vpop.f32.mrf.mxu0
        %v3128 = vpop.f32.mrf.mxu0
        %v3129 = vadd.f32 %v2802, %v3128
        %v3130 = vpop.f32.mrf.mxu0
        %3131 = vmatprep.mubr.bf16.mxu0 0
        %3132 = vmatmul.mubr.bf16.gmra.mxu0 %v2798
        %v3133 = vpop.f32.mrf.mxu0
        %v3134 = vadd.f32 %v2802, %v3133
        %v3135 = vpop.f32.mrf.mxu0
        %v3136 = vpop.f32.mrf.mxu0
        %v3137 = vadd.f32 %v2802, %v3136
        %v3138 = vpop.f32.mrf.mxu0
        %3139 = vdwg.mxu0
        %s3140 = scalar_lea.vmem [#allocation8], 128
        %v3141 = vld [vmem:[%s3140] sm:$0xf]
        %v3142 = vld [vmem:[%s3140 + $0x4] sm:$0xf]
        %v3143 = vld [vmem:[%s3140 + $0x8] sm:$0xf]
        %v3144 = vld [vmem:[%s3140 + $0xc] sm:$0xf]
        %v3145 = vld [vmem:[%s3140 + $0x10] sm:$0xf]
        %v3146 = vld [vmem:[%s3140 + $0x14] sm:$0xf]
        %v3147 = vld [vmem:[%s3140 + $0x18] sm:$0xf]
        %v3148 = vld [vmem:[%s3140 + $0x1c] sm:$0xf]
        %v3149 = vld [vmem:[%s3140 + $0x20] sm:$0xf]
        %v3150 = vld [vmem:[%s3140 + $0x24] sm:$0xf]
        %v3151 = vld [vmem:[%s3140 + $0x28] sm:$0xf]
        %v3152 = vld [vmem:[%s3140 + $0x2c] sm:$0xf]
        %v3153 = vld [vmem:[%s3140 + $0x30] sm:$0xf]
        %v3154 = vld [vmem:[%s3140 + $0x34] sm:$0xf]
        %v3155 = vld [vmem:[%s3140 + $0x38] sm:$0xf]
        %v3156 = vld [vmem:[%s3140 + $0x3c] sm:$0xf]
        %v3157 = vlaneseq
        %v3158 = vshrl.u32 %v3157, 7
        %v3159 = vsub.s32 2, %v3158
        %v3160 = vrot.slane %v546, %v3159
        %v3177 = vunpack.c.l.b16 %v3141
        %v3178 = vunpack.c.l.b16 %v3142
        %v3179 = vunpack.c.l.b16 %v3143
        %v3180 = vunpack.c.l.b16 %v3144
        %v3181 = vunpack.c.l.b16 %v3145
        %v3182 = vunpack.c.l.b16 %v3146
        %v3183 = vunpack.c.l.b16 %v3147
        %v3184 = vunpack.c.l.b16 %v3148
        %v3185 = vunpack.c.l.b16 %v3149
        %v3186 = vunpack.c.l.b16 %v3150
        %v3187 = vunpack.c.l.b16 %v3151
        %v3188 = vunpack.c.l.b16 %v3152
        %v3189 = vunpack.c.l.b16 %v3153
        %v3190 = vunpack.c.l.b16 %v3154
        %v3191 = vunpack.c.l.b16 %v3155
        %v3192 = vunpack.c.l.b16 %v3156
        %v3193 = vpack.c.b16 %v3178, %v3177
        %v3194 = vpack.c.b16 %v3180, %v3179
        %v3195 = vpack.c.b16 %v3182, %v3181
        %v3196 = vpack.c.b16 %v3184, %v3183
        %v3197 = vpack.c.b16 %v3186, %v3185
        %v3198 = vpack.c.b16 %v3188, %v3187
        %v3199 = vpack.c.b16 %v3190, %v3189
        %v3200 = vpack.c.b16 %v3192, %v3191
        %3209 = vmatprep.subr.bf16.mxu0 0
        %3210 = vmatpush1.bf16.msra.mxu0 %v3200
        %3211 = vmatprep.subr.bf16.mxu0 0
        %3212 = vmatpush1.bf16.msra.mxu0 %v3199
        %3213 = vmatprep.subr.bf16.mxu0 0
        %3214 = vmatpush1.bf16.msra.mxu0 %v3198
        %3215 = vmatprep.subr.bf16.mxu0 0
        %3216 = vmatpush1.bf16.msra.mxu0 %v3197
        %3217 = vmatprep.subr.bf16.mxu0 0
        %3218 = vmatpush1.bf16.msra.mxu0 %v3196
        %3219 = vmatprep.subr.bf16.mxu0 0
        %3220 = vmatpush1.bf16.msra.mxu0 %v3195
        %3221 = vmatprep.subr.bf16.mxu0 0
        %3222 = vmatpush1.bf16.msra.mxu0 %v3194
        %3223 = vmatprep.subr.bf16.mxu0 0
        %3224 = vmatpush1.bf16.msra.mxu0 %v3193
        %3225 = vmatprep.subr.bf16.mxu0 0
        %3226 = vmatpush2.bf16.msra.mxu0 0
        %3227 = vmatprep.subr.bf16.mxu0 0
        %3228 = vmatpush2.bf16.msra.mxu0 0
        %3229 = vmatprep.subr.bf16.mxu0 0
        %3230 = vmatpush2.bf16.msra.mxu0 0
        %3231 = vmatprep.subr.bf16.mxu0 0
        %3232 = vmatpush2.bf16.msra.mxu0 0
        %3233 = vmatprep.subr.bf16.mxu0 0
        %3234 = vmatpush2.bf16.msra.mxu0 0
        %3235 = vmatprep.subr.bf16.mxu0 0
        %3236 = vmatpush2.bf16.msra.mxu0 0
        %3237 = vmatprep.subr.bf16.mxu0 0
        %3238 = vmatpush2.bf16.msra.mxu0 0
        %3239 = vmatprep.subr.bf16.mxu0 0
        %3240 = vmatpush2.bf16.msra.mxu0 0
        %3241 = vmatprep.mubr.bf16.mxu0 0
        %3242 = vmatmul.mubr.bf16.gmra.mxu0 %v2767
        %v3243 = vpop.f32.mrf.mxu0
        %v3244 = vadd.f32 %v3160, %v3243
        %v3245 = vpop.f32.mrf.mxu0
        %v3246 = vpop.f32.mrf.mxu0
        %v3247 = vadd.f32 %v3160, %v3246
        %v3248 = vpop.f32.mrf.mxu0
        %3249 = vmatprep.mubr.bf16.mxu0 0
        %3250 = vmatmul.mubr.bf16.gmra.mxu0 %v2768
        %v3251 = vpop.f32.mrf.mxu0
        %v3252 = vadd.f32 %v3160, %v3251
        %v3253 = vpop.f32.mrf.mxu0
        %v3254 = vpop.f32.mrf.mxu0
        %v3255 = vadd.f32 %v3160, %v3254
        %v3256 = vpop.f32.mrf.mxu0
        %3257 = vmatprep.mubr.bf16.mxu0 0
        %3258 = vmatmul.mubr.bf16.gmra.mxu0 %v2769
        %v3259 = vpop.f32.mrf.mxu0
        %v3260 = vadd.f32 %v3160, %v3259
        %v3261 = vpop.f32.mrf.mxu0
        %v3262 = vpop.f32.mrf.mxu0
        %v3263 = vadd.f32 %v3160, %v3262
        %v3264 = vpop.f32.mrf.mxu0
        %3265 = vmatprep.mubr.bf16.mxu0 0
        %3266 = vmatmul.mubr.bf16.gmra.mxu0 %v2770
        %v3267 = vpop.f32.mrf.mxu0
        %v3268 = vadd.f32 %v3160, %v3267
        %v3269 = vpop.f32.mrf.mxu0
        %v3270 = vpop.f32.mrf.mxu0
        %v3271 = vadd.f32 %v3160, %v3270
        %v3272 = vpop.f32.mrf.mxu0
        %3273 = vmatprep.mubr.bf16.mxu0 0
        %3274 = vmatmul.mubr.bf16.gmra.mxu0 %v2771
        %v3275 = vpop.f32.mrf.mxu0
        %v3276 = vadd.f32 %v3160, %v3275
        %v3277 = vpop.f32.mrf.mxu0
        %v3278 = vpop.f32.mrf.mxu0
        %v3279 = vadd.f32 %v3160, %v3278
        %v3280 = vpop.f32.mrf.mxu0
        %3281 = vmatprep.mubr.bf16.mxu0 0
        %3282 = vmatmul.mubr.bf16.gmra.mxu0 %v2772
        %v3283 = vpop.f32.mrf.mxu0
        %v3284 = vadd.f32 %v3160, %v3283
        %v3285 = vpop.f32.mrf.mxu0
        %v3286 = vpop.f32.mrf.mxu0
        %v3287 = vadd.f32 %v3160, %v3286
        %v3288 = vpop.f32.mrf.mxu0
        %3289 = vmatprep.mubr.bf16.mxu0 0
        %3290 = vmatmul.mubr.bf16.gmra.mxu0 %v2773
        %v3291 = vpop.f32.mrf.mxu0
        %v3292 = vadd.f32 %v3160, %v3291
        %v3293 = vpop.f32.mrf.mxu0
        %v3294 = vpop.f32.mrf.mxu0
        %v3295 = vadd.f32 %v3160, %v3294
        %v3296 = vpop.f32.mrf.mxu0
        %3297 = vmatprep.mubr.bf16.mxu0 0
        %3298 = vmatmul.mubr.bf16.gmra.mxu0 %v2774
        %v3299 = vpop.f32.mrf.mxu0
        %v3300 = vadd.f32 %v3160, %v3299
        %v3301 = vpop.f32.mrf.mxu0
        %v3302 = vpop.f32.mrf.mxu0
        %v3303 = vadd.f32 %v3160, %v3302
        %v3304 = vpop.f32.mrf.mxu0
        %3305 = vmatprep.mubr.bf16.mxu0 0
        %3306 = vmatmul.mubr.bf16.gmra.mxu0 %v2775
        %v3307 = vpop.f32.mrf.mxu0
        %v3308 = vadd.f32 %v3160, %v3307
        %v3309 = vpop.f32.mrf.mxu0
        %v3310 = vpop.f32.mrf.mxu0
        %v3311 = vadd.f32 %v3160, %v3310
        %v3312 = vpop.f32.mrf.mxu0
        %3313 = vmatprep.mubr.bf16.mxu0 0
        %3314 = vmatmul.mubr.bf16.gmra.mxu0 %v2776
        %v3315 = vpop.f32.mrf.mxu0
        %v3316 = vadd.f32 %v3160, %v3315
        %v3317 = vpop.f32.mrf.mxu0
        %v3318 = vpop.f32.mrf.mxu0
        %v3319 = vadd.f32 %v3160, %v3318
        %v3320 = vpop.f32.mrf.mxu0
        %3321 = vmatprep.mubr.bf16.mxu0 0
        %3322 = vmatmul.mubr.bf16.gmra.mxu0 %v2777
        %v3323 = vpop.f32.mrf.mxu0
        %v3324 = vadd.f32 %v3160, %v3323
        %v3325 = vpop.f32.mrf.mxu0
        %v3326 = vpop.f32.mrf.mxu0
        %v3327 = vadd.f32 %v3160, %v3326
        %v3328 = vpop.f32.mrf.mxu0
        %3329 = vmatprep.mubr.bf16.mxu0 0
        %3330 = vmatmul.mubr.bf16.gmra.mxu0 %v2778
        %v3331 = vpop.f32.mrf.mxu0
        %v3332 = vadd.f32 %v3160, %v3331
        %v3333 = vpop.f32.mrf.mxu0
        %v3334 = vpop.f32.mrf.mxu0
        %v3335 = vadd.f32 %v3160, %v3334
        %v3336 = vpop.f32.mrf.mxu0
        %3337 = vmatprep.mubr.bf16.mxu0 0
        %3338 = vmatmul.mubr.bf16.gmra.mxu0 %v2779
        %v3339 = vpop.f32.mrf.mxu0
        %v3340 = vadd.f32 %v3160, %v3339
        %v3341 = vpop.f32.mrf.mxu0
        %v3342 = vpop.f32.mrf.mxu0
        %v3343 = vadd.f32 %v3160, %v3342
        %v3344 = vpop.f32.mrf.mxu0
        %3345 = vmatprep.mubr.bf16.mxu0 0
        %3346 = vmatmul.mubr.bf16.gmra.mxu0 %v2780
        %v3347 = vpop.f32.mrf.mxu0
        %v3348 = vadd.f32 %v3160, %v3347
        %v3349 = vpop.f32.mrf.mxu0
        %v3350 = vpop.f32.mrf.mxu0
        %v3351 = vadd.f32 %v3160, %v3350
        %v3352 = vpop.f32.mrf.mxu0
        %3353 = vmatprep.mubr.bf16.mxu0 0
        %3354 = vmatmul.mubr.bf16.gmra.mxu0 %v2781
        %v3355 = vpop.f32.mrf.mxu0
        %v3356 = vadd.f32 %v3160, %v3355
        %v3357 = vpop.f32.mrf.mxu0
        %v3358 = vpop.f32.mrf.mxu0
        %v3359 = vadd.f32 %v3160, %v3358
        %v3360 = vpop.f32.mrf.mxu0
        %3361 = vmatprep.mubr.bf16.mxu0 0
        %3362 = vmatmul.mubr.bf16.gmra.mxu0 %v2782
        %v3363 = vpop.f32.mrf.mxu0
        %v3364 = vadd.f32 %v3160, %v3363
        %v3365 = vpop.f32.mrf.mxu0
        %v3366 = vpop.f32.mrf.mxu0
        %v3367 = vadd.f32 %v3160, %v3366
        %v3368 = vpop.f32.mrf.mxu0
        %3369 = vmatprep.mubr.bf16.mxu0 0
        %3370 = vmatmul.mubr.bf16.gmra.mxu0 %v2783
        %v3371 = vpop.f32.mrf.mxu0
        %v3372 = vadd.f32 %v3160, %v3371
        %v3373 = vpop.f32.mrf.mxu0
        %v3374 = vpop.f32.mrf.mxu0
        %v3375 = vadd.f32 %v3160, %v3374
        %v3376 = vpop.f32.mrf.mxu0
        %3377 = vmatprep.mubr.bf16.mxu0 0
        %3378 = vmatmul.mubr.bf16.gmra.mxu0 %v2784
        %v3379 = vpop.f32.mrf.mxu0
        %v3380 = vadd.f32 %v3160, %v3379
        %v3381 = vpop.f32.mrf.mxu0
        %v3382 = vpop.f32.mrf.mxu0
        %v3383 = vadd.f32 %v3160, %v3382
        %v3384 = vpop.f32.mrf.mxu0
        %3385 = vmatprep.mubr.bf16.mxu0 0
        %3386 = vmatmul.mubr.bf16.gmra.mxu0 %v2785
        %v3387 = vpop.f32.mrf.mxu0
        %v3388 = vadd.f32 %v3160, %v3387
        %v3389 = vpop.f32.mrf.mxu0
        %v3390 = vpop.f32.mrf.mxu0
        %v3391 = vadd.f32 %v3160, %v3390
        %v3392 = vpop.f32.mrf.mxu0
        %3393 = vmatprep.mubr.bf16.mxu0 0
        %3394 = vmatmul.mubr.bf16.gmra.mxu0 %v2786
        %v3395 = vpop.f32.mrf.mxu0
        %v3396 = vadd.f32 %v3160, %v3395
        %v3397 = vpop.f32.mrf.mxu0
        %v3398 = vpop.f32.mrf.mxu0
        %v3399 = vadd.f32 %v3160, %v3398
        %v3400 = vpop.f32.mrf.mxu0
        %3401 = vmatprep.mubr.bf16.mxu0 0
        %3402 = vmatmul.mubr.bf16.gmra.mxu0 %v2787
        %v3403 = vpop.f32.mrf.mxu0
        %v3404 = vadd.f32 %v3160, %v3403
        %v3405 = vpop.f32.mrf.mxu0
        %v3406 = vpop.f32.mrf.mxu0
        %v3407 = vadd.f32 %v3160, %v3406
        %v3408 = vpop.f32.mrf.mxu0
        %3409 = vmatprep.mubr.bf16.mxu0 0
        %3410 = vmatmul.mubr.bf16.gmra.mxu0 %v2788
        %v3411 = vpop.f32.mrf.mxu0
        %v3412 = vadd.f32 %v3160, %v3411
        %v3413 = vpop.f32.mrf.mxu0
        %v3414 = vpop.f32.mrf.mxu0
        %v3415 = vadd.f32 %v3160, %v3414
        %v3416 = vpop.f32.mrf.mxu0
        %3417 = vmatprep.mubr.bf16.mxu0 0
        %3418 = vmatmul.mubr.bf16.gmra.mxu0 %v2789
        %v3419 = vpop.f32.mrf.mxu0
        %v3420 = vadd.f32 %v3160, %v3419
        %v3421 = vpop.f32.mrf.mxu0
        %v3422 = vpop.f32.mrf.mxu0
        %v3423 = vadd.f32 %v3160, %v3422
        %v3424 = vpop.f32.mrf.mxu0
        %3425 = vmatprep.mubr.bf16.mxu0 0
        %3426 = vmatmul.mubr.bf16.gmra.mxu0 %v2790
        %v3427 = vpop.f32.mrf.mxu0
        %v3428 = vadd.f32 %v3160, %v3427
        %v3429 = vpop.f32.mrf.mxu0
        %v3430 = vpop.f32.mrf.mxu0
        %v3431 = vadd.f32 %v3160, %v3430
        %v3432 = vpop.f32.mrf.mxu0
        %3433 = vmatprep.mubr.bf16.mxu0 0
        %3434 = vmatmul.mubr.bf16.gmra.mxu0 %v2791
        %v3435 = vpop.f32.mrf.mxu0
        %v3436 = vadd.f32 %v3160, %v3435
        %v3437 = vpop.f32.mrf.mxu0
        %v3438 = vpop.f32.mrf.mxu0
        %v3439 = vadd.f32 %v3160, %v3438
        %v3440 = vpop.f32.mrf.mxu0
        %3441 = vmatprep.mubr.bf16.mxu0 0
        %3442 = vmatmul.mubr.bf16.gmra.mxu0 %v2792
        %v3443 = vpop.f32.mrf.mxu0
        %v3444 = vadd.f32 %v3160, %v3443
        %v3445 = vpop.f32.mrf.mxu0
        %v3446 = vpop.f32.mrf.mxu0
        %v3447 = vadd.f32 %v3160, %v3446
        %v3448 = vpop.f32.mrf.mxu0
        %3449 = vmatprep.mubr.bf16.mxu0 0
        %3450 = vmatmul.mubr.bf16.gmra.mxu0 %v2793
        %v3451 = vpop.f32.mrf.mxu0
        %v3452 = vadd.f32 %v3160, %v3451
        %v3453 = vpop.f32.mrf.mxu0
        %v3454 = vpop.f32.mrf.mxu0
        %v3455 = vadd.f32 %v3160, %v3454
        %v3456 = vpop.f32.mrf.mxu0
        %3457 = vmatprep.mubr.bf16.mxu0 0
        %3458 = vmatmul.mubr.bf16.gmra.mxu0 %v2794
        %v3459 = vpop.f32.mrf.mxu0
        %v3460 = vadd.f32 %v3160, %v3459
        %v3461 = vpop.f32.mrf.mxu0
        %v3462 = vpop.f32.mrf.mxu0
        %v3463 = vadd.f32 %v3160, %v3462
        %v3464 = vpop.f32.mrf.mxu0
        %3465 = vmatprep.mubr.bf16.mxu0 0
        %3466 = vmatmul.mubr.bf16.gmra.mxu0 %v2795
        %v3467 = vpop.f32.mrf.mxu0
        %v3468 = vadd.f32 %v3160, %v3467
        %v3469 = vpop.f32.mrf.mxu0
        %v3470 = vpop.f32.mrf.mxu0
        %v3471 = vadd.f32 %v3160, %v3470
        %v3472 = vpop.f32.mrf.mxu0
        %3473 = vmatprep.mubr.bf16.mxu0 0
        %3474 = vmatmul.mubr.bf16.gmra.mxu0 %v2796
        %v3475 = vpop.f32.mrf.mxu0
        %v3476 = vadd.f32 %v3160, %v3475
        %v3477 = vpop.f32.mrf.mxu0
        %v3478 = vpop.f32.mrf.mxu0
        %v3479 = vadd.f32 %v3160, %v3478
        %v3480 = vpop.f32.mrf.mxu0
        %3481 = vmatprep.mubr.bf16.mxu0 0
        %3482 = vmatmul.mubr.bf16.gmra.mxu0 %v2797
        %v3483 = vpop.f32.mrf.mxu0
        %v3484 = vadd.f32 %v3160, %v3483
        %v3485 = vpop.f32.mrf.mxu0
        %v3486 = vpop.f32.mrf.mxu0
        %v3487 = vadd.f32 %v3160, %v3486
        %v3488 = vpop.f32.mrf.mxu0
        %3489 = vmatprep.mubr.bf16.mxu0 0
        %3490 = vmatmul.mubr.bf16.gmra.mxu0 %v2798
        %v3491 = vpop.f32.mrf.mxu0
        %v3492 = vadd.f32 %v3160, %v3491
        %v3493 = vpop.f32.mrf.mxu0
        %v3494 = vpop.f32.mrf.mxu0
        %v3495 = vadd.f32 %v3160, %v3494
        %v3496 = vpop.f32.mrf.mxu0
        %3497 = vdwg.mxu0
        %v3498 = vmul.f32 %v2496, %v2886
        %v3499 = vmul.f32 %v2499, %v2889
        %v3500 = vmul.f32 %v2504, %v2894
        %v3501 = vmul.f32 %v2507, %v2897
        %v3502 = vmul.f32 %v2512, %v2902
        %v3503 = vmul.f32 %v2515, %v2905
        %v3504 = vmul.f32 %v2520, %v2910
        %v3505 = vmul.f32 %v2523, %v2913
        %v3506 = vmul.f32 %v2528, %v2918
        %v3507 = vmul.f32 %v2531, %v2921
        %v3508 = vmul.f32 %v2536, %v2926
        %v3509 = vmul.f32 %v2539, %v2929
        %v3510 = vmul.f32 %v2544, %v2934
        %v3511 = vmul.f32 %v2547, %v2937
        %v3512 = vmul.f32 %v2552, %v2942
        %v3513 = vmul.f32 %v2555, %v2945
        %v3514 = vmul.f32 %v2560, %v2950
        %v3515 = vmul.f32 %v2563, %v2953
        %v3516 = vmul.f32 %v2568, %v2958
        %v3517 = vmul.f32 %v2571, %v2961
        %v3518 = vmul.f32 %v2576, %v2966
        %v3519 = vmul.f32 %v2579, %v2969
        %v3520 = vmul.f32 %v2584, %v2974
        %v3521 = vmul.f32 %v2587, %v2977
        %v3522 = vmul.f32 %v2592, %v2982
        %v3523 = vmul.f32 %v2595, %v2985
        %v3524 = vmul.f32 %v2600, %v2990
        %v3525 = vmul.f32 %v2603, %v2993
        %v3526 = vmul.f32 %v2608, %v2998
        %v3527 = vmul.f32 %v2611, %v3001
        %v3528 = vmul.f32 %v2616, %v3006
        %v3529 = vmul.f32 %v2619, %v3009
        %v3530 = vmul.f32 %v2624, %v3014
        %v3531 = vmul.f32 %v2627, %v3017
        %v3532 = vmul.f32 %v2632, %v3022
        %v3533 = vmul.f32 %v2635, %v3025
        %v3534 = vmul.f32 %v2640, %v3030
        %v3535 = vmul.f32 %v2643, %v3033
        %v3536 = vmul.f32 %v2648, %v3038
        %v3537 = vmul.f32 %v2651, %v3041
        %v3538 = vmul.f32 %v2656, %v3046
        %v3539 = vmul.f32 %v2659, %v3049
        %v3540 = vmul.f32 %v2664, %v3054
        %v3541 = vmul.f32 %v2667, %v3057
        %v3542 = vmul.f32 %v2672, %v3062
        %v3543 = vmul.f32 %v2675, %v3065
        %v3544 = vmul.f32 %v2680, %v3070
        %v3545 = vmul.f32 %v2683, %v3073
        %v3546 = vmul.f32 %v2688, %v3078
        %v3547 = vmul.f32 %v2691, %v3081
        %v3548 = vmul.f32 %v2696, %v3086
        %v3549 = vmul.f32 %v2699, %v3089
        %v3550 = vmul.f32 %v2704, %v3094
        %v3551 = vmul.f32 %v2707, %v3097
        %v3552 = vmul.f32 %v2712, %v3102
        %v3553 = vmul.f32 %v2715, %v3105
        %v3554 = vmul.f32 %v2720, %v3110
        %v3555 = vmul.f32 %v2723, %v3113
        %v3556 = vmul.f32 %v2728, %v3118
        %v3557 = vmul.f32 %v2731, %v3121
        %v3558 = vmul.f32 %v2736, %v3126
        %v3559 = vmul.f32 %v2739, %v3129
        %v3560 = vmul.f32 %v2744, %v3134
        %v3561 = vmul.f32 %v2747, %v3137
        %v3562 = vld [vmem:[#allocation10] sm:$0xf]
        %v3563 = vld [vmem:[#allocation10 + $0x4] sm:$0xf]
        %v3564 = vld [vmem:[#allocation10 + $0x8] sm:$0xf]
        %v3565 = vld [vmem:[#allocation10 + $0xc] sm:$0xf]
        %v3566 = vld [vmem:[#allocation10 + $0x10] sm:$0xf]
        %v3567 = vld [vmem:[#allocation10 + $0x14] sm:$0xf]
        %v3568 = vld [vmem:[#allocation10 + $0x18] sm:$0xf]
        %v3569 = vld [vmem:[#allocation10 + $0x1c] sm:$0xf]
        %v3570 = vld [vmem:[#allocation10 + $0x20] sm:$0xf]
        %v3571 = vld [vmem:[#allocation10 + $0x24] sm:$0xf]
        %v3572 = vld [vmem:[#allocation10 + $0x28] sm:$0xf]
        %v3573 = vld [vmem:[#allocation10 + $0x2c] sm:$0xf]
        %v3574 = vld [vmem:[#allocation10 + $0x30] sm:$0xf]
        %v3575 = vld [vmem:[#allocation10 + $0x34] sm:$0xf]
        %v3576 = vld [vmem:[#allocation10 + $0x38] sm:$0xf]
        %v3577 = vld [vmem:[#allocation10 + $0x3c] sm:$0xf]
        %v3578 = vpack.c.bf16 %v3499, %v3498
        %v3579 = vpack.c.bf16 %v3501, %v3500
        %v3580 = vpack.c.bf16 %v3503, %v3502
        %v3581 = vpack.c.bf16 %v3505, %v3504
        %v3582 = vpack.c.bf16 %v3507, %v3506
        %v3583 = vpack.c.bf16 %v3509, %v3508
        %v3584 = vpack.c.bf16 %v3511, %v3510
        %v3585 = vpack.c.bf16 %v3513, %v3512
        %v3586 = vpack.c.bf16 %v3515, %v3514
        %v3587 = vpack.c.bf16 %v3517, %v3516
        %v3588 = vpack.c.bf16 %v3519, %v3518
        %v3589 = vpack.c.bf16 %v3521, %v3520
        %v3590 = vpack.c.bf16 %v3523, %v3522
        %v3591 = vpack.c.bf16 %v3525, %v3524
        %v3592 = vpack.c.bf16 %v3527, %v3526
        %v3593 = vpack.c.bf16 %v3529, %v3528
        %v3594 = vpack.c.bf16 %v3531, %v3530
        %v3595 = vpack.c.bf16 %v3533, %v3532
        %v3596 = vpack.c.bf16 %v3535, %v3534
        %v3597 = vpack.c.bf16 %v3537, %v3536
        %v3598 = vpack.c.bf16 %v3539, %v3538
        %v3599 = vpack.c.bf16 %v3541, %v3540
        %v3600 = vpack.c.bf16 %v3543, %v3542
        %v3601 = vpack.c.bf16 %v3545, %v3544
        %v3602 = vpack.c.bf16 %v3547, %v3546
        %v3603 = vpack.c.bf16 %v3549, %v3548
        %v3604 = vpack.c.bf16 %v3551, %v3550
        %v3605 = vpack.c.bf16 %v3553, %v3552
        %v3606 = vpack.c.bf16 %v3555, %v3554
        %v3607 = vpack.c.bf16 %v3557, %v3556
        %v3608 = vpack.c.bf16 %v3559, %v3558
        %v3609 = vpack.c.bf16 %v3561, %v3560
        %v3626 = vunpack.c.l.b16 %v3562
        %v3627 = vunpack.c.l.b16 %v3563
        %v3628 = vunpack.c.l.b16 %v3564
        %v3629 = vunpack.c.l.b16 %v3565
        %v3630 = vunpack.c.l.b16 %v3566
        %v3631 = vunpack.c.l.b16 %v3567
        %v3632 = vunpack.c.l.b16 %v3568
        %v3633 = vunpack.c.l.b16 %v3569
        %v3634 = vunpack.c.l.b16 %v3570
        %v3635 = vunpack.c.l.b16 %v3571
        %v3636 = vunpack.c.l.b16 %v3572
        %v3637 = vunpack.c.l.b16 %v3573
        %v3638 = vunpack.c.l.b16 %v3574
        %v3639 = vunpack.c.l.b16 %v3575
        %v3640 = vunpack.c.l.b16 %v3576
        %v3641 = vunpack.c.l.b16 %v3577
        %v3642 = vpack.c.b16 %v3627, %v3626
        %v3643 = vpack.c.b16 %v3629, %v3628
        %v3644 = vpack.c.b16 %v3631, %v3630
        %v3645 = vpack.c.b16 %v3633, %v3632
        %v3646 = vpack.c.b16 %v3635, %v3634
        %v3647 = vpack.c.b16 %v3637, %v3636
        %v3648 = vpack.c.b16 %v3639, %v3638
        %v3649 = vpack.c.b16 %v3641, %v3640
        %3658 = vmatprep.subr.bf16.mxu0 0
        %3659 = vmatpush1.bf16.msra.mxu0 %v3649
        %3660 = vmatprep.subr.bf16.mxu0 0
        %3661 = vmatpush1.bf16.msra.mxu0 %v3648
        %3662 = vmatprep.subr.bf16.mxu0 0
        %3663 = vmatpush1.bf16.msra.mxu0 %v3647
        %3664 = vmatprep.subr.bf16.mxu0 0
        %3665 = vmatpush1.bf16.msra.mxu0 %v3646
        %3666 = vmatprep.subr.bf16.mxu0 0
        %3667 = vmatpush1.bf16.msra.mxu0 %v3645
        %3668 = vmatprep.subr.bf16.mxu0 0
        %3669 = vmatpush1.bf16.msra.mxu0 %v3644
        %3670 = vmatprep.subr.bf16.mxu0 0
        %3671 = vmatpush1.bf16.msra.mxu0 %v3643
        %3672 = vmatprep.subr.bf16.mxu0 0
        %3673 = vmatpush1.bf16.msra.mxu0 %v3642
        %3674 = vmatprep.subr.bf16.mxu0 0
        %3675 = vmatpush2.bf16.msra.mxu0 0
        %3676 = vmatprep.subr.bf16.mxu0 0
        %3677 = vmatpush2.bf16.msra.mxu0 0
        %3678 = vmatprep.subr.bf16.mxu0 0
        %3679 = vmatpush2.bf16.msra.mxu0 0
        %3680 = vmatprep.subr.bf16.mxu0 0
        %3681 = vmatpush2.bf16.msra.mxu0 0
        %3682 = vmatprep.subr.bf16.mxu0 0
        %3683 = vmatpush2.bf16.msra.mxu0 0
        %3684 = vmatprep.subr.bf16.mxu0 0
        %3685 = vmatpush2.bf16.msra.mxu0 0
        %3686 = vmatprep.subr.bf16.mxu0 0
        %3687 = vmatpush2.bf16.msra.mxu0 0
        %3688 = vmatprep.subr.bf16.mxu0 0
        %3689 = vmatpush2.bf16.msra.mxu0 0
        %3690 = vmatprep.mubr.bf16.mxu0 0
        %3691 = vmatmul.mubr.bf16.gmra.mxu0 %v3578
        %v3692 = vpop.f32.mrf.mxu0
        %v3693 = vadd.f32 0.0, %v3692
        %v3694 = vpop.f32.mrf.mxu0
        %v3695 = vpop.f32.mrf.mxu0
        %v3696 = vadd.f32 0.0, %v3695
        %v3697 = vpop.f32.mrf.mxu0
        %3698 = vmatprep.mubr.bf16.mxu0 0
        %3699 = vmatmul.mubr.bf16.gmra.mxu0 %v3579
        %v3700 = vpop.f32.mrf.mxu0
        %v3701 = vadd.f32 0.0, %v3700
        %v3702 = vpop.f32.mrf.mxu0
        %v3703 = vpop.f32.mrf.mxu0
        %v3704 = vadd.f32 0.0, %v3703
        %v3705 = vpop.f32.mrf.mxu0
        %3706 = vmatprep.mubr.bf16.mxu0 0
        %3707 = vmatmul.mubr.bf16.gmra.mxu0 %v3580
        %v3708 = vpop.f32.mrf.mxu0
        %v3709 = vadd.f32 0.0, %v3708
        %v3710 = vpop.f32.mrf.mxu0
        %v3711 = vpop.f32.mrf.mxu0
        %v3712 = vadd.f32 0.0, %v3711
        %v3713 = vpop.f32.mrf.mxu0
        %3714 = vmatprep.mubr.bf16.mxu0 0
        %3715 = vmatmul.mubr.bf16.gmra.mxu0 %v3581
        %v3716 = vpop.f32.mrf.mxu0
        %v3717 = vadd.f32 0.0, %v3716
        %v3718 = vpop.f32.mrf.mxu0
        %v3719 = vpop.f32.mrf.mxu0
        %v3720 = vadd.f32 0.0, %v3719
        %v3721 = vpop.f32.mrf.mxu0
        %3722 = vmatprep.mubr.bf16.mxu0 0
        %3723 = vmatmul.mubr.bf16.gmra.mxu0 %v3582
        %v3724 = vpop.f32.mrf.mxu0
        %v3725 = vadd.f32 0.0, %v3724
        %v3726 = vpop.f32.mrf.mxu0
        %v3727 = vpop.f32.mrf.mxu0
        %v3728 = vadd.f32 0.0, %v3727
        %v3729 = vpop.f32.mrf.mxu0
        %3730 = vmatprep.mubr.bf16.mxu0 0
        %3731 = vmatmul.mubr.bf16.gmra.mxu0 %v3583
        %v3732 = vpop.f32.mrf.mxu0
        %v3733 = vadd.f32 0.0, %v3732
        %v3734 = vpop.f32.mrf.mxu0
        %v3735 = vpop.f32.mrf.mxu0
        %v3736 = vadd.f32 0.0, %v3735
        %v3737 = vpop.f32.mrf.mxu0
        %3738 = vmatprep.mubr.bf16.mxu0 0
        %3739 = vmatmul.mubr.bf16.gmra.mxu0 %v3584
        %v3740 = vpop.f32.mrf.mxu0
        %v3741 = vadd.f32 0.0, %v3740
        %v3742 = vpop.f32.mrf.mxu0
        %v3743 = vpop.f32.mrf.mxu0
        %v3744 = vadd.f32 0.0, %v3743
        %v3745 = vpop.f32.mrf.mxu0
        %3746 = vmatprep.mubr.bf16.mxu0 0
        %3747 = vmatmul.mubr.bf16.gmra.mxu0 %v3585
        %v3748 = vpop.f32.mrf.mxu0
        %v3749 = vadd.f32 0.0, %v3748
        %v3750 = vpop.f32.mrf.mxu0
        %v3751 = vpop.f32.mrf.mxu0
        %v3752 = vadd.f32 0.0, %v3751
        %v3753 = vpop.f32.mrf.mxu0
        %3754 = vmatprep.mubr.bf16.mxu0 0
        %3755 = vmatmul.mubr.bf16.gmra.mxu0 %v3586
        %v3756 = vpop.f32.mrf.mxu0
        %v3757 = vadd.f32 0.0, %v3756
        %v3758 = vpop.f32.mrf.mxu0
        %v3759 = vpop.f32.mrf.mxu0
        %v3760 = vadd.f32 0.0, %v3759
        %v3761 = vpop.f32.mrf.mxu0
        %3762 = vmatprep.mubr.bf16.mxu0 0
        %3763 = vmatmul.mubr.bf16.gmra.mxu0 %v3587
        %v3764 = vpop.f32.mrf.mxu0
        %v3765 = vadd.f32 0.0, %v3764
        %v3766 = vpop.f32.mrf.mxu0
        %v3767 = vpop.f32.mrf.mxu0
        %v3768 = vadd.f32 0.0, %v3767
        %v3769 = vpop.f32.mrf.mxu0
        %3770 = vmatprep.mubr.bf16.mxu0 0
        %3771 = vmatmul.mubr.bf16.gmra.mxu0 %v3588
        %v3772 = vpop.f32.mrf.mxu0
        %v3773 = vadd.f32 0.0, %v3772
        %v3774 = vpop.f32.mrf.mxu0
        %v3775 = vpop.f32.mrf.mxu0
        %v3776 = vadd.f32 0.0, %v3775
        %v3777 = vpop.f32.mrf.mxu0
        %3778 = vmatprep.mubr.bf16.mxu0 0
        %3779 = vmatmul.mubr.bf16.gmra.mxu0 %v3589
        %v3780 = vpop.f32.mrf.mxu0
        %v3781 = vadd.f32 0.0, %v3780
        %v3782 = vpop.f32.mrf.mxu0
        %v3783 = vpop.f32.mrf.mxu0
        %v3784 = vadd.f32 0.0, %v3783
        %v3785 = vpop.f32.mrf.mxu0
        %3786 = vmatprep.mubr.bf16.mxu0 0
        %3787 = vmatmul.mubr.bf16.gmra.mxu0 %v3590
        %v3788 = vpop.f32.mrf.mxu0
        %v3789 = vadd.f32 0.0, %v3788
        %v3790 = vpop.f32.mrf.mxu0
        %v3791 = vpop.f32.mrf.mxu0
        %v3792 = vadd.f32 0.0, %v3791
        %v3793 = vpop.f32.mrf.mxu0
        %3794 = vmatprep.mubr.bf16.mxu0 0
        %3795 = vmatmul.mubr.bf16.gmra.mxu0 %v3591
        %v3796 = vpop.f32.mrf.mxu0
        %v3797 = vadd.f32 0.0, %v3796
        %v3798 = vpop.f32.mrf.mxu0
        %v3799 = vpop.f32.mrf.mxu0
        %v3800 = vadd.f32 0.0, %v3799
        %v3801 = vpop.f32.mrf.mxu0
        %3802 = vmatprep.mubr.bf16.mxu0 0
        %3803 = vmatmul.mubr.bf16.gmra.mxu0 %v3592
        %v3804 = vpop.f32.mrf.mxu0
        %v3805 = vadd.f32 0.0, %v3804
        %v3806 = vpop.f32.mrf.mxu0
        %v3807 = vpop.f32.mrf.mxu0
        %v3808 = vadd.f32 0.0, %v3807
        %v3809 = vpop.f32.mrf.mxu0
        %3810 = vmatprep.mubr.bf16.mxu0 0
        %3811 = vmatmul.mubr.bf16.gmra.mxu0 %v3593
        %v3812 = vpop.f32.mrf.mxu0
        %v3813 = vadd.f32 0.0, %v3812
        %v3814 = vpop.f32.mrf.mxu0
        %v3815 = vpop.f32.mrf.mxu0
        %v3816 = vadd.f32 0.0, %v3815
        %v3817 = vpop.f32.mrf.mxu0
        %3818 = vmatprep.mubr.bf16.mxu0 0
        %3819 = vmatmul.mubr.bf16.gmra.mxu0 %v3594
        %v3820 = vpop.f32.mrf.mxu0
        %v3821 = vadd.f32 0.0, %v3820
        %v3822 = vpop.f32.mrf.mxu0
        %v3823 = vpop.f32.mrf.mxu0
        %v3824 = vadd.f32 0.0, %v3823
        %v3825 = vpop.f32.mrf.mxu0
        %3826 = vmatprep.mubr.bf16.mxu0 0
        %3827 = vmatmul.mubr.bf16.gmra.mxu0 %v3595
        %v3828 = vpop.f32.mrf.mxu0
        %v3829 = vadd.f32 0.0, %v3828
        %v3830 = vpop.f32.mrf.mxu0
        %v3831 = vpop.f32.mrf.mxu0
        %v3832 = vadd.f32 0.0, %v3831
        %v3833 = vpop.f32.mrf.mxu0
        %3834 = vmatprep.mubr.bf16.mxu0 0
        %3835 = vmatmul.mubr.bf16.gmra.mxu0 %v3596
        %v3836 = vpop.f32.mrf.mxu0
        %v3837 = vadd.f32 0.0, %v3836
        %v3838 = vpop.f32.mrf.mxu0
        %v3839 = vpop.f32.mrf.mxu0
        %v3840 = vadd.f32 0.0, %v3839
        %v3841 = vpop.f32.mrf.mxu0
        %3842 = vmatprep.mubr.bf16.mxu0 0
        %3843 = vmatmul.mubr.bf16.gmra.mxu0 %v3597
        %v3844 = vpop.f32.mrf.mxu0
        %v3845 = vadd.f32 0.0, %v3844
        %v3846 = vpop.f32.mrf.mxu0
        %v3847 = vpop.f32.mrf.mxu0
        %v3848 = vadd.f32 0.0, %v3847
        %v3849 = vpop.f32.mrf.mxu0
        %3850 = vmatprep.mubr.bf16.mxu0 0
        %3851 = vmatmul.mubr.bf16.gmra.mxu0 %v3598
        %v3852 = vpop.f32.mrf.mxu0
        %v3853 = vadd.f32 0.0, %v3852
        %v3854 = vpop.f32.mrf.mxu0
        %v3855 = vpop.f32.mrf.mxu0
        %v3856 = vadd.f32 0.0, %v3855
        %v3857 = vpop.f32.mrf.mxu0
        %3858 = vmatprep.mubr.bf16.mxu0 0
        %3859 = vmatmul.mubr.bf16.gmra.mxu0 %v3599
        %v3860 = vpop.f32.mrf.mxu0
        %v3861 = vadd.f32 0.0, %v3860
        %v3862 = vpop.f32.mrf.mxu0
        %v3863 = vpop.f32.mrf.mxu0
        %v3864 = vadd.f32 0.0, %v3863
        %v3865 = vpop.f32.mrf.mxu0
        %3866 = vmatprep.mubr.bf16.mxu0 0
        %3867 = vmatmul.mubr.bf16.gmra.mxu0 %v3600
        %v3868 = vpop.f32.mrf.mxu0
        %v3869 = vadd.f32 0.0, %v3868
        %v3870 = vpop.f32.mrf.mxu0
        %v3871 = vpop.f32.mrf.mxu0
        %v3872 = vadd.f32 0.0, %v3871
        %v3873 = vpop.f32.mrf.mxu0
        %3874 = vmatprep.mubr.bf16.mxu0 0
        %3875 = vmatmul.mubr.bf16.gmra.mxu0 %v3601
        %v3876 = vpop.f32.mrf.mxu0
        %v3877 = vadd.f32 0.0, %v3876
        %v3878 = vpop.f32.mrf.mxu0
        %v3879 = vpop.f32.mrf.mxu0
        %v3880 = vadd.f32 0.0, %v3879
        %v3881 = vpop.f32.mrf.mxu0
        %3882 = vmatprep.mubr.bf16.mxu0 0
        %3883 = vmatmul.mubr.bf16.gmra.mxu0 %v3602
        %v3884 = vpop.f32.mrf.mxu0
        %v3885 = vadd.f32 0.0, %v3884
        %v3886 = vpop.f32.mrf.mxu0
        %v3887 = vpop.f32.mrf.mxu0
        %v3888 = vadd.f32 0.0, %v3887
        %v3889 = vpop.f32.mrf.mxu0
        %3890 = vmatprep.mubr.bf16.mxu0 0
        %3891 = vmatmul.mubr.bf16.gmra.mxu0 %v3603
        %v3892 = vpop.f32.mrf.mxu0
        %v3893 = vadd.f32 0.0, %v3892
        %v3894 = vpop.f32.mrf.mxu0
        %v3895 = vpop.f32.mrf.mxu0
        %v3896 = vadd.f32 0.0, %v3895
        %v3897 = vpop.f32.mrf.mxu0
        %3898 = vmatprep.mubr.bf16.mxu0 0
        %3899 = vmatmul.mubr.bf16.gmra.mxu0 %v3604
        %v3900 = vpop.f32.mrf.mxu0
        %v3901 = vadd.f32 0.0, %v3900
        %v3902 = vpop.f32.mrf.mxu0
        %v3903 = vpop.f32.mrf.mxu0
        %v3904 = vadd.f32 0.0, %v3903
        %v3905 = vpop.f32.mrf.mxu0
        %3906 = vmatprep.mubr.bf16.mxu0 0
        %3907 = vmatmul.mubr.bf16.gmra.mxu0 %v3605
        %v3908 = vpop.f32.mrf.mxu0
        %v3909 = vadd.f32 0.0, %v3908
        %v3910 = vpop.f32.mrf.mxu0
        %v3911 = vpop.f32.mrf.mxu0
        %v3912 = vadd.f32 0.0, %v3911
        %v3913 = vpop.f32.mrf.mxu0
        %3914 = vmatprep.mubr.bf16.mxu0 0
        %3915 = vmatmul.mubr.bf16.gmra.mxu0 %v3606
        %v3916 = vpop.f32.mrf.mxu0
        %v3917 = vadd.f32 0.0, %v3916
        %v3918 = vpop.f32.mrf.mxu0
        %v3919 = vpop.f32.mrf.mxu0
        %v3920 = vadd.f32 0.0, %v3919
        %v3921 = vpop.f32.mrf.mxu0
        %3922 = vmatprep.mubr.bf16.mxu0 0
        %3923 = vmatmul.mubr.bf16.gmra.mxu0 %v3607
        %v3924 = vpop.f32.mrf.mxu0
        %v3925 = vadd.f32 0.0, %v3924
        %v3926 = vpop.f32.mrf.mxu0
        %v3927 = vpop.f32.mrf.mxu0
        %v3928 = vadd.f32 0.0, %v3927
        %v3929 = vpop.f32.mrf.mxu0
        %3930 = vmatprep.mubr.bf16.mxu0 0
        %3931 = vmatmul.mubr.bf16.gmra.mxu0 %v3608
        %v3932 = vpop.f32.mrf.mxu0
        %v3933 = vadd.f32 0.0, %v3932
        %v3934 = vpop.f32.mrf.mxu0
        %v3935 = vpop.f32.mrf.mxu0
        %v3936 = vadd.f32 0.0, %v3935
        %v3937 = vpop.f32.mrf.mxu0
        %3938 = vmatprep.mubr.bf16.mxu0 0
        %3939 = vmatmul.mubr.bf16.gmra.mxu0 %v3609
        %v3940 = vpop.f32.mrf.mxu0
        %v3941 = vadd.f32 0.0, %v3940
        %v3942 = vpop.f32.mrf.mxu0
        %v3943 = vpop.f32.mrf.mxu0
        %v3944 = vadd.f32 0.0, %v3943
        %v3945 = vpop.f32.mrf.mxu0
        %3946 = vdwg.mxu0
        %3947 = vrot.lane.b32.xlu0 %v3693, 32
        %v3948 = vpop.permute.xlu0 %3947
        %3949 = vrot.lane.b32.xlu0 %v3696, 32
        %v3950 = vpop.permute.xlu0 %3949
        %3951 = vrot.lane.b32.xlu0 %v3701, 32
        %v3952 = vpop.permute.xlu0 %3951
        %3953 = vrot.lane.b32.xlu0 %v3704, 32
        %v3954 = vpop.permute.xlu0 %3953
        %3955 = vrot.lane.b32.xlu0 %v3709, 32
        %v3956 = vpop.permute.xlu0 %3955
        %3957 = vrot.lane.b32.xlu0 %v3712, 32
        %v3958 = vpop.permute.xlu0 %3957
        %3959 = vrot.lane.b32.xlu0 %v3717, 32
        %v3960 = vpop.permute.xlu0 %3959
        %3961 = vrot.lane.b32.xlu0 %v3720, 32
        %v3962 = vpop.permute.xlu0 %3961
        %3963 = vrot.lane.b32.xlu0 %v3725, 32
        %v3964 = vpop.permute.xlu0 %3963
        %3965 = vrot.lane.b32.xlu0 %v3728, 32
        %v3966 = vpop.permute.xlu0 %3965
        %3967 = vrot.lane.b32.xlu0 %v3733, 32
        %v3968 = vpop.permute.xlu0 %3967
        %3969 = vrot.lane.b32.xlu0 %v3736, 32
        %v3970 = vpop.permute.xlu0 %3969
        %3971 = vrot.lane.b32.xlu0 %v3741, 32
        %v3972 = vpop.permute.xlu0 %3971
        %3973 = vrot.lane.b32.xlu0 %v3744, 32
        %v3974 = vpop.permute.xlu0 %3973
        %3975 = vrot.lane.b32.xlu0 %v3749, 32
        %v3976 = vpop.permute.xlu0 %3975
        %3977 = vrot.lane.b32.xlu0 %v3752, 32
        %v3978 = vpop.permute.xlu0 %3977
        %3979 = vrot.lane.b32.xlu0 %v3757, 32
        %v3980 = vpop.permute.xlu0 %3979
        %3981 = vrot.lane.b32.xlu0 %v3760, 32
        %v3982 = vpop.permute.xlu0 %3981
        %3983 = vrot.lane.b32.xlu0 %v3765, 32
        %v3984 = vpop.permute.xlu0 %3983
        %3985 = vrot.lane.b32.xlu0 %v3768, 32
        %v3986 = vpop.permute.xlu0 %3985
        %3987 = vrot.lane.b32.xlu0 %v3773, 32
        %v3988 = vpop.permute.xlu0 %3987
        %3989 = vrot.lane.b32.xlu0 %v3776, 32
        %v3990 = vpop.permute.xlu0 %3989
        %3991 = vrot.lane.b32.xlu0 %v3781, 32
        %v3992 = vpop.permute.xlu0 %3991
        %3993 = vrot.lane.b32.xlu0 %v3784, 32
        %v3994 = vpop.permute.xlu0 %3993
        %3995 = vrot.lane.b32.xlu0 %v3789, 32
        %v3996 = vpop.permute.xlu0 %3995
        %3997 = vrot.lane.b32.xlu0 %v3792, 32
        %v3998 = vpop.permute.xlu0 %3997
        %3999 = vrot.lane.b32.xlu0 %v3797, 32
        %v4000 = vpop.permute.xlu0 %3999
        %4001 = vrot.lane.b32.xlu0 %v3800, 32
        %v4002 = vpop.permute.xlu0 %4001
        %4003 = vrot.lane.b32.xlu0 %v3805, 32
        %v4004 = vpop.permute.xlu0 %4003
        %4005 = vrot.lane.b32.xlu0 %v3808, 32
        %v4006 = vpop.permute.xlu0 %4005
        %4007 = vrot.lane.b32.xlu0 %v3813, 32
        %v4008 = vpop.permute.xlu0 %4007
        %4009 = vrot.lane.b32.xlu0 %v3816, 32
        %v4010 = vpop.permute.xlu0 %4009
        %4011 = vrot.lane.b32.xlu0 %v3821, 32
        %v4012 = vpop.permute.xlu0 %4011
        %4013 = vrot.lane.b32.xlu0 %v3824, 32
        %v4014 = vpop.permute.xlu0 %4013
        %4015 = vrot.lane.b32.xlu0 %v3829, 32
        %v4016 = vpop.permute.xlu0 %4015
        %4017 = vrot.lane.b32.xlu0 %v3832, 32
        %v4018 = vpop.permute.xlu0 %4017
        %4019 = vrot.lane.b32.xlu0 %v3837, 32
        %v4020 = vpop.permute.xlu0 %4019
        %4021 = vrot.lane.b32.xlu0 %v3840, 32
        %v4022 = vpop.permute.xlu0 %4021
        %4023 = vrot.lane.b32.xlu0 %v3845, 32
        %v4024 = vpop.permute.xlu0 %4023
        %4025 = vrot.lane.b32.xlu0 %v3848, 32
        %v4026 = vpop.permute.xlu0 %4025
        %4027 = vrot.lane.b32.xlu0 %v3853, 32
        %v4028 = vpop.permute.xlu0 %4027
        %4029 = vrot.lane.b32.xlu0 %v3856, 32
        %v4030 = vpop.permute.xlu0 %4029
        %4031 = vrot.lane.b32.xlu0 %v3861, 32
        %v4032 = vpop.permute.xlu0 %4031
        %4033 = vrot.lane.b32.xlu0 %v3864, 32
        %v4034 = vpop.permute.xlu0 %4033
        %4035 = vrot.lane.b32.xlu0 %v3869, 32
        %v4036 = vpop.permute.xlu0 %4035
        %4037 = vrot.lane.b32.xlu0 %v3872, 32
        %v4038 = vpop.permute.xlu0 %4037
        %4039 = vrot.lane.b32.xlu0 %v3877, 32
        %v4040 = vpop.permute.xlu0 %4039
        %4041 = vrot.lane.b32.xlu0 %v3880, 32
        %v4042 = vpop.permute.xlu0 %4041
        %4043 = vrot.lane.b32.xlu0 %v3885, 32
        %v4044 = vpop.permute.xlu0 %4043
        %4045 = vrot.lane.b32.xlu0 %v3888, 32
        %v4046 = vpop.permute.xlu0 %4045
        %4047 = vrot.lane.b32.xlu0 %v3893, 32
        %v4048 = vpop.permute.xlu0 %4047
        %4049 = vrot.lane.b32.xlu0 %v3896, 32
        %v4050 = vpop.permute.xlu0 %4049
        %4051 = vrot.lane.b32.xlu0 %v3901, 32
        %v4052 = vpop.permute.xlu0 %4051
        %4053 = vrot.lane.b32.xlu0 %v3904, 32
        %v4054 = vpop.permute.xlu0 %4053
        %4055 = vrot.lane.b32.xlu0 %v3909, 32
        %v4056 = vpop.permute.xlu0 %4055
        %4057 = vrot.lane.b32.xlu0 %v3912, 32
        %v4058 = vpop.permute.xlu0 %4057
        %4059 = vrot.lane.b32.xlu0 %v3917, 32
        %v4060 = vpop.permute.xlu0 %4059
        %4061 = vrot.lane.b32.xlu0 %v3920, 32
        %v4062 = vpop.permute.xlu0 %4061
        %4063 = vrot.lane.b32.xlu0 %v3925, 32
        %v4064 = vpop.permute.xlu0 %4063
        %4065 = vrot.lane.b32.xlu0 %v3928, 32
        %v4066 = vpop.permute.xlu0 %4065
        %4067 = vrot.lane.b32.xlu0 %v3933, 32
        %v4068 = vpop.permute.xlu0 %4067
        %4069 = vrot.lane.b32.xlu0 %v3936, 32
        %v4070 = vpop.permute.xlu0 %4069
        %4071 = vrot.lane.b32.xlu0 %v3941, 32
        %v4072 = vpop.permute.xlu0 %4071
        %4073 = vrot.lane.b32.xlu0 %v3944, 32
        %v4074 = vpop.permute.xlu0 %4073
        %v4075 = vmax.f32 %v3693, %v3948
        %v4076 = vmax.f32 %v3696, %v3950
        %v4077 = vmax.f32 %v3701, %v3952
        %v4078 = vmax.f32 %v3704, %v3954
        %v4079 = vmax.f32 %v3709, %v3956
        %v4080 = vmax.f32 %v3712, %v3958
        %v4081 = vmax.f32 %v3717, %v3960
        %v4082 = vmax.f32 %v3720, %v3962
        %v4083 = vmax.f32 %v3725, %v3964
        %v4084 = vmax.f32 %v3728, %v3966
        %v4085 = vmax.f32 %v3733, %v3968
        %v4086 = vmax.f32 %v3736, %v3970
        %v4087 = vmax.f32 %v3741, %v3972
        %v4088 = vmax.f32 %v3744, %v3974
        %v4089 = vmax.f32 %v3749, %v3976
        %v4090 = vmax.f32 %v3752, %v3978
        %v4091 = vmax.f32 %v3757, %v3980
        %v4092 = vmax.f32 %v3760, %v3982
        %v4093 = vmax.f32 %v3765, %v3984
        %v4094 = vmax.f32 %v3768, %v3986
        %v4095 = vmax.f32 %v3773, %v3988
        %v4096 = vmax.f32 %v3776, %v3990
        %v4097 = vmax.f32 %v3781, %v3992
        %v4098 = vmax.f32 %v3784, %v3994
        %v4099 = vmax.f32 %v3789, %v3996
        %v4100 = vmax.f32 %v3792, %v3998
        %v4101 = vmax.f32 %v3797, %v4000
        %v4102 = vmax.f32 %v3800, %v4002
        %v4103 = vmax.f32 %v3805, %v4004
        %v4104 = vmax.f32 %v3808, %v4006
        %v4105 = vmax.f32 %v3813, %v4008
        %v4106 = vmax.f32 %v3816, %v4010
        %v4107 = vmax.f32 %v3821, %v4012
        %v4108 = vmax.f32 %v3824, %v4014
        %v4109 = vmax.f32 %v3829, %v4016
        %v4110 = vmax.f32 %v3832, %v4018
        %v4111 = vmax.f32 %v3837, %v4020
        %v4112 = vmax.f32 %v3840, %v4022
        %v4113 = vmax.f32 %v3845, %v4024
        %v4114 = vmax.f32 %v3848, %v4026
        %v4115 = vmax.f32 %v3853, %v4028
        %v4116 = vmax.f32 %v3856, %v4030
        %v4117 = vmax.f32 %v3861, %v4032
        %v4118 = vmax.f32 %v3864, %v4034
        %v4119 = vmax.f32 %v3869, %v4036
        %v4120 = vmax.f32 %v3872, %v4038
        %v4121 = vmax.f32 %v3877, %v4040
        %v4122 = vmax.f32 %v3880, %v4042
        %v4123 = vmax.f32 %v3885, %v4044
        %v4124 = vmax.f32 %v3888, %v4046
        %v4125 = vmax.f32 %v3893, %v4048
        %v4126 = vmax.f32 %v3896, %v4050
        %v4127 = vmax.f32 %v3901, %v4052
        %v4128 = vmax.f32 %v3904, %v4054
        %v4129 = vmax.f32 %v3909, %v4056
        %v4130 = vmax.f32 %v3912, %v4058
        %v4131 = vmax.f32 %v3917, %v4060
        %v4132 = vmax.f32 %v3920, %v4062
        %v4133 = vmax.f32 %v3925, %v4064
        %v4134 = vmax.f32 %v3928, %v4066
        %v4135 = vmax.f32 %v3933, %v4068
        %v4136 = vmax.f32 %v3936, %v4070
        %v4137 = vmax.f32 %v3941, %v4072
        %v4138 = vmax.f32 %v3944, %v4074
        %4139 = vrot.lane.b32.xlu0 %v4075, 64
        %v4140 = vpop.permute.xlu0 %4139
        %4141 = vrot.lane.b32.xlu0 %v4076, 64
        %v4142 = vpop.permute.xlu0 %4141
        %4143 = vrot.lane.b32.xlu0 %v4077, 64
        %v4144 = vpop.permute.xlu0 %4143
        %4145 = vrot.lane.b32.xlu0 %v4078, 64
        %v4146 = vpop.permute.xlu0 %4145
        %4147 = vrot.lane.b32.xlu0 %v4079, 64
        %v4148 = vpop.permute.xlu0 %4147
        %4149 = vrot.lane.b32.xlu0 %v4080, 64
        %v4150 = vpop.permute.xlu0 %4149
        %4151 = vrot.lane.b32.xlu0 %v4081, 64
        %v4152 = vpop.permute.xlu0 %4151
        %4153 = vrot.lane.b32.xlu0 %v4082, 64
        %v4154 = vpop.permute.xlu0 %4153
        %4155 = vrot.lane.b32.xlu0 %v4083, 64
        %v4156 = vpop.permute.xlu0 %4155
        %4157 = vrot.lane.b32.xlu0 %v4084, 64
        %v4158 = vpop.permute.xlu0 %4157
        %4159 = vrot.lane.b32.xlu0 %v4085, 64
        %v4160 = vpop.permute.xlu0 %4159
        %4161 = vrot.lane.b32.xlu0 %v4086, 64
        %v4162 = vpop.permute.xlu0 %4161
        %4163 = vrot.lane.b32.xlu0 %v4087, 64
        %v4164 = vpop.permute.xlu0 %4163
        %4165 = vrot.lane.b32.xlu0 %v4088, 64
        %v4166 = vpop.permute.xlu0 %4165
        %4167 = vrot.lane.b32.xlu0 %v4089, 64
        %v4168 = vpop.permute.xlu0 %4167
        %4169 = vrot.lane.b32.xlu0 %v4090, 64
        %v4170 = vpop.permute.xlu0 %4169
        %4171 = vrot.lane.b32.xlu0 %v4091, 64
        %v4172 = vpop.permute.xlu0 %4171
        %4173 = vrot.lane.b32.xlu0 %v4092, 64
        %v4174 = vpop.permute.xlu0 %4173
        %4175 = vrot.lane.b32.xlu0 %v4093, 64
        %v4176 = vpop.permute.xlu0 %4175
        %4177 = vrot.lane.b32.xlu0 %v4094, 64
        %v4178 = vpop.permute.xlu0 %4177
        %4179 = vrot.lane.b32.xlu0 %v4095, 64
        %v4180 = vpop.permute.xlu0 %4179
        %4181 = vrot.lane.b32.xlu0 %v4096, 64
        %v4182 = vpop.permute.xlu0 %4181
        %4183 = vrot.lane.b32.xlu0 %v4097, 64
        %v4184 = vpop.permute.xlu0 %4183
        %4185 = vrot.lane.b32.xlu0 %v4098, 64
        %v4186 = vpop.permute.xlu0 %4185
        %4187 = vrot.lane.b32.xlu0 %v4099, 64
        %v4188 = vpop.permute.xlu0 %4187
        %4189 = vrot.lane.b32.xlu0 %v4100, 64
        %v4190 = vpop.permute.xlu0 %4189
        %4191 = vrot.lane.b32.xlu0 %v4101, 64
        %v4192 = vpop.permute.xlu0 %4191
        %4193 = vrot.lane.b32.xlu0 %v4102, 64
        %v4194 = vpop.permute.xlu0 %4193
        %4195 = vrot.lane.b32.xlu0 %v4103, 64
        %v4196 = vpop.permute.xlu0 %4195
        %4197 = vrot.lane.b32.xlu0 %v4104, 64
        %v4198 = vpop.permute.xlu0 %4197
        %4199 = vrot.lane.b32.xlu0 %v4105, 64
        %v4200 = vpop.permute.xlu0 %4199
        %4201 = vrot.lane.b32.xlu0 %v4106, 64
        %v4202 = vpop.permute.xlu0 %4201
        %4203 = vrot.lane.b32.xlu0 %v4107, 64
        %v4204 = vpop.permute.xlu0 %4203
        %4205 = vrot.lane.b32.xlu0 %v4108, 64
        %v4206 = vpop.permute.xlu0 %4205
        %4207 = vrot.lane.b32.xlu0 %v4109, 64
        %v4208 = vpop.permute.xlu0 %4207
        %4209 = vrot.lane.b32.xlu0 %v4110, 64
        %v4210 = vpop.permute.xlu0 %4209
        %4211 = vrot.lane.b32.xlu0 %v4111, 64
        %v4212 = vpop.permute.xlu0 %4211
        %4213 = vrot.lane.b32.xlu0 %v4112, 64
        %v4214 = vpop.permute.xlu0 %4213
        %4215 = vrot.lane.b32.xlu0 %v4113, 64
        %v4216 = vpop.permute.xlu0 %4215
        %4217 = vrot.lane.b32.xlu0 %v4114, 64
        %v4218 = vpop.permute.xlu0 %4217
        %4219 = vrot.lane.b32.xlu0 %v4115, 64
        %v4220 = vpop.permute.xlu0 %4219
        %4221 = vrot.lane.b32.xlu0 %v4116, 64
        %v4222 = vpop.permute.xlu0 %4221
        %4223 = vrot.lane.b32.xlu0 %v4117, 64
        %v4224 = vpop.permute.xlu0 %4223
        %4225 = vrot.lane.b32.xlu0 %v4118, 64
        %v4226 = vpop.permute.xlu0 %4225
        %4227 = vrot.lane.b32.xlu0 %v4119, 64
        %v4228 = vpop.permute.xlu0 %4227
        %4229 = vrot.lane.b32.xlu0 %v4120, 64
        %v4230 = vpop.permute.xlu0 %4229
        %4231 = vrot.lane.b32.xlu0 %v4121, 64
        %v4232 = vpop.permute.xlu0 %4231
        %4233 = vrot.lane.b32.xlu0 %v4122, 64
        %v4234 = vpop.permute.xlu0 %4233
        %4235 = vrot.lane.b32.xlu0 %v4123, 64
        %v4236 = vpop.permute.xlu0 %4235
        %4237 = vrot.lane.b32.xlu0 %v4124, 64
        %v4238 = vpop.permute.xlu0 %4237
        %4239 = vrot.lane.b32.xlu0 %v4125, 64
        %v4240 = vpop.permute.xlu0 %4239
        %4241 = vrot.lane.b32.xlu0 %v4126, 64
        %v4242 = vpop.permute.xlu0 %4241
        %4243 = vrot.lane.b32.xlu0 %v4127, 64
        %v4244 = vpop.permute.xlu0 %4243
        %4245 = vrot.lane.b32.xlu0 %v4128, 64
        %v4246 = vpop.permute.xlu0 %4245
        %4247 = vrot.lane.b32.xlu0 %v4129, 64
        %v4248 = vpop.permute.xlu0 %4247
        %4249 = vrot.lane.b32.xlu0 %v4130, 64
        %v4250 = vpop.permute.xlu0 %4249
        %4251 = vrot.lane.b32.xlu0 %v4131, 64
        %v4252 = vpop.permute.xlu0 %4251
        %4253 = vrot.lane.b32.xlu0 %v4132, 64
        %v4254 = vpop.permute.xlu0 %4253
        %4255 = vrot.lane.b32.xlu0 %v4133, 64
        %v4256 = vpop.permute.xlu0 %4255
        %4257 = vrot.lane.b32.xlu0 %v4134, 64
        %v4258 = vpop.permute.xlu0 %4257
        %4259 = vrot.lane.b32.xlu0 %v4135, 64
        %v4260 = vpop.permute.xlu0 %4259
        %4261 = vrot.lane.b32.xlu0 %v4136, 64
        %v4262 = vpop.permute.xlu0 %4261
        %4263 = vrot.lane.b32.xlu0 %v4137, 64
        %v4264 = vpop.permute.xlu0 %4263
        %4265 = vrot.lane.b32.xlu0 %v4138, 64
        %v4266 = vpop.permute.xlu0 %4265
        %v4267 = vmax.f32 %v4075, %v4140
        %v4268 = vmax.f32 %v4076, %v4142
        %v4269 = vmax.f32 %v4077, %v4144
        %v4270 = vmax.f32 %v4078, %v4146
        %v4271 = vmax.f32 %v4079, %v4148
        %v4272 = vmax.f32 %v4080, %v4150
        %v4273 = vmax.f32 %v4081, %v4152
        %v4274 = vmax.f32 %v4082, %v4154
        %v4275 = vmax.f32 %v4083, %v4156
        %v4276 = vmax.f32 %v4084, %v4158
        %v4277 = vmax.f32 %v4085, %v4160
        %v4278 = vmax.f32 %v4086, %v4162
        %v4279 = vmax.f32 %v4087, %v4164
        %v4280 = vmax.f32 %v4088, %v4166
        %v4281 = vmax.f32 %v4089, %v4168
        %v4282 = vmax.f32 %v4090, %v4170
        %v4283 = vmax.f32 %v4091, %v4172
        %v4284 = vmax.f32 %v4092, %v4174
        %v4285 = vmax.f32 %v4093, %v4176
        %v4286 = vmax.f32 %v4094, %v4178
        %v4287 = vmax.f32 %v4095, %v4180
        %v4288 = vmax.f32 %v4096, %v4182
        %v4289 = vmax.f32 %v4097, %v4184
        %v4290 = vmax.f32 %v4098, %v4186
        %v4291 = vmax.f32 %v4099, %v4188
        %v4292 = vmax.f32 %v4100, %v4190
        %v4293 = vmax.f32 %v4101, %v4192
        %v4294 = vmax.f32 %v4102, %v4194
        %v4295 = vmax.f32 %v4103, %v4196
        %v4296 = vmax.f32 %v4104, %v4198
        %v4297 = vmax.f32 %v4105, %v4200
        %v4298 = vmax.f32 %v4106, %v4202
        %v4299 = vmax.f32 %v4107, %v4204
        %v4300 = vmax.f32 %v4108, %v4206
        %v4301 = vmax.f32 %v4109, %v4208
        %v4302 = vmax.f32 %v4110, %v4210
        %v4303 = vmax.f32 %v4111, %v4212
        %v4304 = vmax.f32 %v4112, %v4214
        %v4305 = vmax.f32 %v4113, %v4216
        %v4306 = vmax.f32 %v4114, %v4218
        %v4307 = vmax.f32 %v4115, %v4220
        %v4308 = vmax.f32 %v4116, %v4222
        %v4309 = vmax.f32 %v4117, %v4224
        %v4310 = vmax.f32 %v4118, %v4226
        %v4311 = vmax.f32 %v4119, %v4228
        %v4312 = vmax.f32 %v4120, %v4230
        %v4313 = vmax.f32 %v4121, %v4232
        %v4314 = vmax.f32 %v4122, %v4234
        %v4315 = vmax.f32 %v4123, %v4236
        %v4316 = vmax.f32 %v4124, %v4238
        %v4317 = vmax.f32 %v4125, %v4240
        %v4318 = vmax.f32 %v4126, %v4242
        %v4319 = vmax.f32 %v4127, %v4244
        %v4320 = vmax.f32 %v4128, %v4246
        %v4321 = vmax.f32 %v4129, %v4248
        %v4322 = vmax.f32 %v4130, %v4250
        %v4323 = vmax.f32 %v4131, %v4252
        %v4324 = vmax.f32 %v4132, %v4254
        %v4325 = vmax.f32 %v4133, %v4256
        %v4326 = vmax.f32 %v4134, %v4258
        %v4327 = vmax.f32 %v4135, %v4260
        %v4328 = vmax.f32 %v4136, %v4262
        %v4329 = vmax.f32 %v4137, %v4264
        %v4330 = vmax.f32 %v4138, %v4266
        %v4331 = vsub.f32 %v3693, %v4267
        %v4332 = vsub.f32 %v3696, %v4268
        %v4333 = vsub.f32 %v3701, %v4269
        %v4334 = vsub.f32 %v3704, %v4270
        %v4335 = vsub.f32 %v3709, %v4271
        %v4336 = vsub.f32 %v3712, %v4272
        %v4337 = vsub.f32 %v3717, %v4273
        %v4338 = vsub.f32 %v3720, %v4274
        %v4339 = vsub.f32 %v3725, %v4275
        %v4340 = vsub.f32 %v3728, %v4276
        %v4341 = vsub.f32 %v3733, %v4277
        %v4342 = vsub.f32 %v3736, %v4278
        %v4343 = vsub.f32 %v3741, %v4279
        %v4344 = vsub.f32 %v3744, %v4280
        %v4345 = vsub.f32 %v3749, %v4281
        %v4346 = vsub.f32 %v3752, %v4282
        %v4347 = vsub.f32 %v3757, %v4283
        %v4348 = vsub.f32 %v3760, %v4284
        %v4349 = vsub.f32 %v3765, %v4285
        %v4350 = vsub.f32 %v3768, %v4286
        %v4351 = vsub.f32 %v3773, %v4287
        %v4352 = vsub.f32 %v3776, %v4288
        %v4353 = vsub.f32 %v3781, %v4289
        %v4354 = vsub.f32 %v3784, %v4290
        %v4355 = vsub.f32 %v3789, %v4291
        %v4356 = vsub.f32 %v3792, %v4292
        %v4357 = vsub.f32 %v3797, %v4293
        %v4358 = vsub.f32 %v3800, %v4294
        %v4359 = vsub.f32 %v3805, %v4295
        %v4360 = vsub.f32 %v3808, %v4296
        %v4361 = vsub.f32 %v3813, %v4297
        %v4362 = vsub.f32 %v3816, %v4298
        %v4363 = vsub.f32 %v3821, %v4299
        %v4364 = vsub.f32 %v3824, %v4300
        %v4365 = vsub.f32 %v3829, %v4301
        %v4366 = vsub.f32 %v3832, %v4302
        %v4367 = vsub.f32 %v3837, %v4303
        %v4368 = vsub.f32 %v3840, %v4304
        %v4369 = vsub.f32 %v3845, %v4305
        %v4370 = vsub.f32 %v3848, %v4306
        %v4371 = vsub.f32 %v3853, %v4307
        %v4372 = vsub.f32 %v3856, %v4308
        %v4373 = vsub.f32 %v3861, %v4309
        %v4374 = vsub.f32 %v3864, %v4310
        %v4375 = vsub.f32 %v3869, %v4311
        %v4376 = vsub.f32 %v3872, %v4312
        %v4377 = vsub.f32 %v3877, %v4313
        %v4378 = vsub.f32 %v3880, %v4314
        %v4379 = vsub.f32 %v3885, %v4315
        %v4380 = vsub.f32 %v3888, %v4316
        %v4381 = vsub.f32 %v3893, %v4317
        %v4382 = vsub.f32 %v3896, %v4318
        %v4383 = vsub.f32 %v3901, %v4319
        %v4384 = vsub.f32 %v3904, %v4320
        %v4385 = vsub.f32 %v3909, %v4321
        %v4386 = vsub.f32 %v3912, %v4322
        %v4387 = vsub.f32 %v3917, %v4323
        %v4388 = vsub.f32 %v3920, %v4324
        %v4389 = vsub.f32 %v3925, %v4325
        %v4390 = vsub.f32 %v3928, %v4326
        %v4391 = vsub.f32 %v3933, %v4327
        %v4392 = vsub.f32 %v3936, %v4328
        %v4393 = vsub.f32 %v3941, %v4329
        %v4394 = vsub.f32 %v3944, %v4330
        %v4395 = vmul.f32 %v4331, 1.442695
        %v4396 = vpow.pop %v4395
        %v4397 = vmul.f32 %v4332, 1.442695
        %v4398 = vpow.pop %v4397
        %v4399 = vmul.f32 %v4333, 1.442695
        %v4400 = vpow.pop %v4399
        %v4401 = vmul.f32 %v4334, 1.442695
        %v4402 = vpow.pop %v4401
        %v4403 = vmul.f32 %v4335, 1.442695
        %v4404 = vpow.pop %v4403
        %v4405 = vmul.f32 %v4336, 1.442695
        %v4406 = vpow.pop %v4405
        %v4407 = vmul.f32 %v4337, 1.442695
        %v4408 = vpow.pop %v4407
        %v4409 = vmul.f32 %v4338, 1.442695
        %v4410 = vpow.pop %v4409
        %v4411 = vmul.f32 %v4339, 1.442695
        %v4412 = vpow.pop %v4411
        %v4413 = vmul.f32 %v4340, 1.442695
        %v4414 = vpow.pop %v4413
        %v4415 = vmul.f32 %v4341, 1.442695
        %v4416 = vpow.pop %v4415
        %v4417 = vmul.f32 %v4342, 1.442695
        %v4418 = vpow.pop %v4417
        %v4419 = vmul.f32 %v4343, 1.442695
        %v4420 = vpow.pop %v4419
        %v4421 = vmul.f32 %v4344, 1.442695
        %v4422 = vpow.pop %v4421
        %v4423 = vmul.f32 %v4345, 1.442695
        %v4424 = vpow.pop %v4423
        %v4425 = vmul.f32 %v4346, 1.442695
        %v4426 = vpow.pop %v4425
        %v4427 = vmul.f32 %v4347, 1.442695
        %v4428 = vpow.pop %v4427
        %v4429 = vmul.f32 %v4348, 1.442695
        %v4430 = vpow.pop %v4429
        %v4431 = vmul.f32 %v4349, 1.442695
        %v4432 = vpow.pop %v4431
        %v4433 = vmul.f32 %v4350, 1.442695
        %v4434 = vpow.pop %v4433
        %v4435 = vmul.f32 %v4351, 1.442695
        %v4436 = vpow.pop %v4435
        %v4437 = vmul.f32 %v4352, 1.442695
        %v4438 = vpow.pop %v4437
        %v4439 = vmul.f32 %v4353, 1.442695
        %v4440 = vpow.pop %v4439
        %v4441 = vmul.f32 %v4354, 1.442695
        %v4442 = vpow.pop %v4441
        %v4443 = vmul.f32 %v4355, 1.442695
        %v4444 = vpow.pop %v4443
        %v4445 = vmul.f32 %v4356, 1.442695
        %v4446 = vpow.pop %v4445
        %v4447 = vmul.f32 %v4357, 1.442695
        %v4448 = vpow.pop %v4447
        %v4449 = vmul.f32 %v4358, 1.442695
        %v4450 = vpow.pop %v4449
        %v4451 = vmul.f32 %v4359, 1.442695
        %v4452 = vpow.pop %v4451
        %v4453 = vmul.f32 %v4360, 1.442695
        %v4454 = vpow.pop %v4453
        %v4455 = vmul.f32 %v4361, 1.442695
        %v4456 = vpow.pop %v4455
        %v4457 = vmul.f32 %v4362, 1.442695
        %v4458 = vpow.pop %v4457
        %v4459 = vmul.f32 %v4363, 1.442695
        %v4460 = vpow.pop %v4459
        %v4461 = vmul.f32 %v4364, 1.442695
        %v4462 = vpow.pop %v4461
        %v4463 = vmul.f32 %v4365, 1.442695
        %v4464 = vpow.pop %v4463
        %v4465 = vmul.f32 %v4366, 1.442695
        %v4466 = vpow.pop %v4465
        %v4467 = vmul.f32 %v4367, 1.442695
        %v4468 = vpow.pop %v4467
        %v4469 = vmul.f32 %v4368, 1.442695
        %v4470 = vpow.pop %v4469
        %v4471 = vmul.f32 %v4369, 1.442695
        %v4472 = vpow.pop %v4471
        %v4473 = vmul.f32 %v4370, 1.442695
        %v4474 = vpow.pop %v4473
        %v4475 = vmul.f32 %v4371, 1.442695
        %v4476 = vpow.pop %v4475
        %v4477 = vmul.f32 %v4372, 1.442695
        %v4478 = vpow.pop %v4477
        %v4479 = vmul.f32 %v4373, 1.442695
        %v4480 = vpow.pop %v4479
        %v4481 = vmul.f32 %v4374, 1.442695
        %v4482 = vpow.pop %v4481
        %v4483 = vmul.f32 %v4375, 1.442695
        %v4484 = vpow.pop %v4483
        %v4485 = vmul.f32 %v4376, 1.442695
        %v4486 = vpow.pop %v4485
        %v4487 = vmul.f32 %v4377, 1.442695
        %v4488 = vpow.pop %v4487
        %v4489 = vmul.f32 %v4378, 1.442695
        %v4490 = vpow.pop %v4489
        %v4491 = vmul.f32 %v4379, 1.442695
        %v4492 = vpow.pop %v4491
        %v4493 = vmul.f32 %v4380, 1.442695
        %v4494 = vpow.pop %v4493
        %v4495 = vmul.f32 %v4381, 1.442695
        %v4496 = vpow.pop %v4495
        %v4497 = vmul.f32 %v4382, 1.442695
        %v4498 = vpow.pop %v4497
        %v4499 = vmul.f32 %v4383, 1.442695
        %v4500 = vpow.pop %v4499
        %v4501 = vmul.f32 %v4384, 1.442695
        %v4502 = vpow.pop %v4501
        %v4503 = vmul.f32 %v4385, 1.442695
        %v4504 = vpow.pop %v4503
        %v4505 = vmul.f32 %v4386, 1.442695
        %v4506 = vpow.pop %v4505
        %v4507 = vmul.f32 %v4387, 1.442695
        %v4508 = vpow.pop %v4507
        %v4509 = vmul.f32 %v4388, 1.442695
        %v4510 = vpow.pop %v4509
        %v4511 = vmul.f32 %v4389, 1.442695
        %v4512 = vpow.pop %v4511
        %v4513 = vmul.f32 %v4390, 1.442695
        %v4514 = vpow.pop %v4513
        %v4515 = vmul.f32 %v4391, 1.442695
        %v4516 = vpow.pop %v4515
        %v4517 = vmul.f32 %v4392, 1.442695
        %v4518 = vpow.pop %v4517
        %v4519 = vmul.f32 %v4393, 1.442695
        %v4520 = vpow.pop %v4519
        %v4521 = vmul.f32 %v4394, 1.442695
        %v4522 = vpow.pop %v4521
        %4523 = vrot.lane.b32.xlu0 %v4396, 32
        %v4524 = vpop.permute.xlu0 %4523
        %4525 = vrot.lane.b32.xlu0 %v4398, 32
        %v4526 = vpop.permute.xlu0 %4525
        %4527 = vrot.lane.b32.xlu0 %v4400, 32
        %v4528 = vpop.permute.xlu0 %4527
        %4529 = vrot.lane.b32.xlu0 %v4402, 32
        %v4530 = vpop.permute.xlu0 %4529
        %4531 = vrot.lane.b32.xlu0 %v4404, 32
        %v4532 = vpop.permute.xlu0 %4531
        %4533 = vrot.lane.b32.xlu0 %v4406, 32
        %v4534 = vpop.permute.xlu0 %4533
        %4535 = vrot.lane.b32.xlu0 %v4408, 32
        %v4536 = vpop.permute.xlu0 %4535
        %4537 = vrot.lane.b32.xlu0 %v4410, 32
        %v4538 = vpop.permute.xlu0 %4537
        %4539 = vrot.lane.b32.xlu0 %v4412, 32
        %v4540 = vpop.permute.xlu0 %4539
        %4541 = vrot.lane.b32.xlu0 %v4414, 32
        %v4542 = vpop.permute.xlu0 %4541
        %4543 = vrot.lane.b32.xlu0 %v4416, 32
        %v4544 = vpop.permute.xlu0 %4543
        %4545 = vrot.lane.b32.xlu0 %v4418, 32
        %v4546 = vpop.permute.xlu0 %4545
        %4547 = vrot.lane.b32.xlu0 %v4420, 32
        %v4548 = vpop.permute.xlu0 %4547
        %4549 = vrot.lane.b32.xlu0 %v4422, 32
        %v4550 = vpop.permute.xlu0 %4549
        %4551 = vrot.lane.b32.xlu0 %v4424, 32
        %v4552 = vpop.permute.xlu0 %4551
        %4553 = vrot.lane.b32.xlu0 %v4426, 32
        %v4554 = vpop.permute.xlu0 %4553
        %4555 = vrot.lane.b32.xlu0 %v4428, 32
        %v4556 = vpop.permute.xlu0 %4555
        %4557 = vrot.lane.b32.xlu0 %v4430, 32
        %v4558 = vpop.permute.xlu0 %4557
        %4559 = vrot.lane.b32.xlu0 %v4432, 32
        %v4560 = vpop.permute.xlu0 %4559
        %4561 = vrot.lane.b32.xlu0 %v4434, 32
        %v4562 = vpop.permute.xlu0 %4561
        %4563 = vrot.lane.b32.xlu0 %v4436, 32
        %v4564 = vpop.permute.xlu0 %4563
        %4565 = vrot.lane.b32.xlu0 %v4438, 32
        %v4566 = vpop.permute.xlu0 %4565
        %4567 = vrot.lane.b32.xlu0 %v4440, 32
        %v4568 = vpop.permute.xlu0 %4567
        %4569 = vrot.lane.b32.xlu0 %v4442, 32
        %v4570 = vpop.permute.xlu0 %4569
        %4571 = vrot.lane.b32.xlu0 %v4444, 32
        %v4572 = vpop.permute.xlu0 %4571
        %4573 = vrot.lane.b32.xlu0 %v4446, 32
        %v4574 = vpop.permute.xlu0 %4573
        %4575 = vrot.lane.b32.xlu0 %v4448, 32
        %v4576 = vpop.permute.xlu0 %4575
        %4577 = vrot.lane.b32.xlu0 %v4450, 32
        %v4578 = vpop.permute.xlu0 %4577
        %4579 = vrot.lane.b32.xlu0 %v4452, 32
        %v4580 = vpop.permute.xlu0 %4579
        %4581 = vrot.lane.b32.xlu0 %v4454, 32
        %v4582 = vpop.permute.xlu0 %4581
        %4583 = vrot.lane.b32.xlu0 %v4456, 32
        %v4584 = vpop.permute.xlu0 %4583
        %4585 = vrot.lane.b32.xlu0 %v4458, 32
        %v4586 = vpop.permute.xlu0 %4585
        %4587 = vrot.lane.b32.xlu0 %v4460, 32
        %v4588 = vpop.permute.xlu0 %4587
        %4589 = vrot.lane.b32.xlu0 %v4462, 32
        %v4590 = vpop.permute.xlu0 %4589
        %4591 = vrot.lane.b32.xlu0 %v4464, 32
        %v4592 = vpop.permute.xlu0 %4591
        %4593 = vrot.lane.b32.xlu0 %v4466, 32
        %v4594 = vpop.permute.xlu0 %4593
        %4595 = vrot.lane.b32.xlu0 %v4468, 32
        %v4596 = vpop.permute.xlu0 %4595
        %4597 = vrot.lane.b32.xlu0 %v4470, 32
        %v4598 = vpop.permute.xlu0 %4597
        %4599 = vrot.lane.b32.xlu0 %v4472, 32
        %v4600 = vpop.permute.xlu0 %4599
        %4601 = vrot.lane.b32.xlu0 %v4474, 32
        %v4602 = vpop.permute.xlu0 %4601
        %4603 = vrot.lane.b32.xlu0 %v4476, 32
        %v4604 = vpop.permute.xlu0 %4603
        %4605 = vrot.lane.b32.xlu0 %v4478, 32
        %v4606 = vpop.permute.xlu0 %4605
        %4607 = vrot.lane.b32.xlu0 %v4480, 32
        %v4608 = vpop.permute.xlu0 %4607
        %4609 = vrot.lane.b32.xlu0 %v4482, 32
        %v4610 = vpop.permute.xlu0 %4609
        %4611 = vrot.lane.b32.xlu0 %v4484, 32
        %v4612 = vpop.permute.xlu0 %4611
        %4613 = vrot.lane.b32.xlu0 %v4486, 32
        %v4614 = vpop.permute.xlu0 %4613
        %4615 = vrot.lane.b32.xlu0 %v4488, 32
        %v4616 = vpop.permute.xlu0 %4615
        %4617 = vrot.lane.b32.xlu0 %v4490, 32
        %v4618 = vpop.permute.xlu0 %4617
        %4619 = vrot.lane.b32.xlu0 %v4492, 32
        %v4620 = vpop.permute.xlu0 %4619
        %4621 = vrot.lane.b32.xlu0 %v4494, 32
        %v4622 = vpop.permute.xlu0 %4621
        %4623 = vrot.lane.b32.xlu0 %v4496, 32
        %v4624 = vpop.permute.xlu0 %4623
        %4625 = vrot.lane.b32.xlu0 %v4498, 32
        %v4626 = vpop.permute.xlu0 %4625
        %4627 = vrot.lane.b32.xlu0 %v4500, 32
        %v4628 = vpop.permute.xlu0 %4627
        %4629 = vrot.lane.b32.xlu0 %v4502, 32
        %v4630 = vpop.permute.xlu0 %4629
        %4631 = vrot.lane.b32.xlu0 %v4504, 32
        %v4632 = vpop.permute.xlu0 %4631
        %4633 = vrot.lane.b32.xlu0 %v4506, 32
        %v4634 = vpop.permute.xlu0 %4633
        %4635 = vrot.lane.b32.xlu0 %v4508, 32
        %v4636 = vpop.permute.xlu0 %4635
        %4637 = vrot.lane.b32.xlu0 %v4510, 32
        %v4638 = vpop.permute.xlu0 %4637
        %4639 = vrot.lane.b32.xlu0 %v4512, 32
        %v4640 = vpop.permute.xlu0 %4639
        %4641 = vrot.lane.b32.xlu0 %v4514, 32
        %v4642 = vpop.permute.xlu0 %4641
        %4643 = vrot.lane.b32.xlu0 %v4516, 32
        %v4644 = vpop.permute.xlu0 %4643
        %4645 = vrot.lane.b32.xlu0 %v4518, 32
        %v4646 = vpop.permute.xlu0 %4645
        %4647 = vrot.lane.b32.xlu0 %v4520, 32
        %v4648 = vpop.permute.xlu0 %4647
        %4649 = vrot.lane.b32.xlu0 %v4522, 32
        %v4650 = vpop.permute.xlu0 %4649
        %v4651 = vadd.f32 %v4396, %v4524
        %v4652 = vadd.f32 %v4398, %v4526
        %v4653 = vadd.f32 %v4400, %v4528
        %v4654 = vadd.f32 %v4402, %v4530
        %v4655 = vadd.f32 %v4404, %v4532
        %v4656 = vadd.f32 %v4406, %v4534
        %v4657 = vadd.f32 %v4408, %v4536
        %v4658 = vadd.f32 %v4410, %v4538
        %v4659 = vadd.f32 %v4412, %v4540
        %v4660 = vadd.f32 %v4414, %v4542
        %v4661 = vadd.f32 %v4416, %v4544
        %v4662 = vadd.f32 %v4418, %v4546
        %v4663 = vadd.f32 %v4420, %v4548
        %v4664 = vadd.f32 %v4422, %v4550
        %v4665 = vadd.f32 %v4424, %v4552
        %v4666 = vadd.f32 %v4426, %v4554
        %v4667 = vadd.f32 %v4428, %v4556
        %v4668 = vadd.f32 %v4430, %v4558
        %v4669 = vadd.f32 %v4432, %v4560
        %v4670 = vadd.f32 %v4434, %v4562
        %v4671 = vadd.f32 %v4436, %v4564
        %v4672 = vadd.f32 %v4438, %v4566
        %v4673 = vadd.f32 %v4440, %v4568
        %v4674 = vadd.f32 %v4442, %v4570
        %v4675 = vadd.f32 %v4444, %v4572
        %v4676 = vadd.f32 %v4446, %v4574
        %v4677 = vadd.f32 %v4448, %v4576
        %v4678 = vadd.f32 %v4450, %v4578
        %v4679 = vadd.f32 %v4452, %v4580
        %v4680 = vadd.f32 %v4454, %v4582
        %v4681 = vadd.f32 %v4456, %v4584
        %v4682 = vadd.f32 %v4458, %v4586
        %v4683 = vadd.f32 %v4460, %v4588
        %v4684 = vadd.f32 %v4462, %v4590
        %v4685 = vadd.f32 %v4464, %v4592
        %v4686 = vadd.f32 %v4466, %v4594
        %v4687 = vadd.f32 %v4468, %v4596
        %v4688 = vadd.f32 %v4470, %v4598
        %v4689 = vadd.f32 %v4472, %v4600
        %v4690 = vadd.f32 %v4474, %v4602
        %v4691 = vadd.f32 %v4476, %v4604
        %v4692 = vadd.f32 %v4478, %v4606
        %v4693 = vadd.f32 %v4480, %v4608
        %v4694 = vadd.f32 %v4482, %v4610
        %v4695 = vadd.f32 %v4484, %v4612
        %v4696 = vadd.f32 %v4486, %v4614
        %v4697 = vadd.f32 %v4488, %v4616
        %v4698 = vadd.f32 %v4490, %v4618
        %v4699 = vadd.f32 %v4492, %v4620
        %v4700 = vadd.f32 %v4494, %v4622
        %v4701 = vadd.f32 %v4496, %v4624
        %v4702 = vadd.f32 %v4498, %v4626
        %v4703 = vadd.f32 %v4500, %v4628
        %v4704 = vadd.f32 %v4502, %v4630
        %v4705 = vadd.f32 %v4504, %v4632
        %v4706 = vadd.f32 %v4506, %v4634
        %v4707 = vadd.f32 %v4508, %v4636
        %v4708 = vadd.f32 %v4510, %v4638
        %v4709 = vadd.f32 %v4512, %v4640
        %v4710 = vadd.f32 %v4514, %v4642
        %v4711 = vadd.f32 %v4516, %v4644
        %v4712 = vadd.f32 %v4518, %v4646
        %v4713 = vadd.f32 %v4520, %v4648
        %v4714 = vadd.f32 %v4522, %v4650
        %4715 = vrot.lane.b32.xlu0 %v4651, 64
        %v4716 = vpop.permute.xlu0 %4715
        %4717 = vrot.lane.b32.xlu0 %v4652, 64
        %v4718 = vpop.permute.xlu0 %4717
        %4719 = vrot.lane.b32.xlu0 %v4653, 64
        %v4720 = vpop.permute.xlu0 %4719
        %4721 = vrot.lane.b32.xlu0 %v4654, 64
        %v4722 = vpop.permute.xlu0 %4721
        %4723 = vrot.lane.b32.xlu0 %v4655, 64
        %v4724 = vpop.permute.xlu0 %4723
        %4725 = vrot.lane.b32.xlu0 %v4656, 64
        %v4726 = vpop.permute.xlu0 %4725
        %4727 = vrot.lane.b32.xlu0 %v4657, 64
        %v4728 = vpop.permute.xlu0 %4727
        %4729 = vrot.lane.b32.xlu0 %v4658, 64
        %v4730 = vpop.permute.xlu0 %4729
        %4731 = vrot.lane.b32.xlu0 %v4659, 64
        %v4732 = vpop.permute.xlu0 %4731
        %4733 = vrot.lane.b32.xlu0 %v4660, 64
        %v4734 = vpop.permute.xlu0 %4733
        %4735 = vrot.lane.b32.xlu0 %v4661, 64
        %v4736 = vpop.permute.xlu0 %4735
        %4737 = vrot.lane.b32.xlu0 %v4662, 64
        %v4738 = vpop.permute.xlu0 %4737
        %4739 = vrot.lane.b32.xlu0 %v4663, 64
        %v4740 = vpop.permute.xlu0 %4739
        %4741 = vrot.lane.b32.xlu0 %v4664, 64
        %v4742 = vpop.permute.xlu0 %4741
        %4743 = vrot.lane.b32.xlu0 %v4665, 64
        %v4744 = vpop.permute.xlu0 %4743
        %4745 = vrot.lane.b32.xlu0 %v4666, 64
        %v4746 = vpop.permute.xlu0 %4745
        %4747 = vrot.lane.b32.xlu0 %v4667, 64
        %v4748 = vpop.permute.xlu0 %4747
        %4749 = vrot.lane.b32.xlu0 %v4668, 64
        %v4750 = vpop.permute.xlu0 %4749
        %4751 = vrot.lane.b32.xlu0 %v4669, 64
        %v4752 = vpop.permute.xlu0 %4751
        %4753 = vrot.lane.b32.xlu0 %v4670, 64
        %v4754 = vpop.permute.xlu0 %4753
        %4755 = vrot.lane.b32.xlu0 %v4671, 64
        %v4756 = vpop.permute.xlu0 %4755
        %4757 = vrot.lane.b32.xlu0 %v4672, 64
        %v4758 = vpop.permute.xlu0 %4757
        %4759 = vrot.lane.b32.xlu0 %v4673, 64
        %v4760 = vpop.permute.xlu0 %4759
        %4761 = vrot.lane.b32.xlu0 %v4674, 64
        %v4762 = vpop.permute.xlu0 %4761
        %4763 = vrot.lane.b32.xlu0 %v4675, 64
        %v4764 = vpop.permute.xlu0 %4763
        %4765 = vrot.lane.b32.xlu0 %v4676, 64
        %v4766 = vpop.permute.xlu0 %4765
        %4767 = vrot.lane.b32.xlu0 %v4677, 64
        %v4768 = vpop.permute.xlu0 %4767
        %4769 = vrot.lane.b32.xlu0 %v4678, 64
        %v4770 = vpop.permute.xlu0 %4769
        %4771 = vrot.lane.b32.xlu0 %v4679, 64
        %v4772 = vpop.permute.xlu0 %4771
        %4773 = vrot.lane.b32.xlu0 %v4680, 64
        %v4774 = vpop.permute.xlu0 %4773
        %4775 = vrot.lane.b32.xlu0 %v4681, 64
        %v4776 = vpop.permute.xlu0 %4775
        %4777 = vrot.lane.b32.xlu0 %v4682, 64
        %v4778 = vpop.permute.xlu0 %4777
        %4779 = vrot.lane.b32.xlu0 %v4683, 64
        %v4780 = vpop.permute.xlu0 %4779
        %4781 = vrot.lane.b32.xlu0 %v4684, 64
        %v4782 = vpop.permute.xlu0 %4781
        %4783 = vrot.lane.b32.xlu0 %v4685, 64
        %v4784 = vpop.permute.xlu0 %4783
        %4785 = vrot.lane.b32.xlu0 %v4686, 64
        %v4786 = vpop.permute.xlu0 %4785
        %4787 = vrot.lane.b32.xlu0 %v4687, 64
        %v4788 = vpop.permute.xlu0 %4787
        %4789 = vrot.lane.b32.xlu0 %v4688, 64
        %v4790 = vpop.permute.xlu0 %4789
        %4791 = vrot.lane.b32.xlu0 %v4689, 64
        %v4792 = vpop.permute.xlu0 %4791
        %4793 = vrot.lane.b32.xlu0 %v4690, 64
        %v4794 = vpop.permute.xlu0 %4793
        %4795 = vrot.lane.b32.xlu0 %v4691, 64
        %v4796 = vpop.permute.xlu0 %4795
        %4797 = vrot.lane.b32.xlu0 %v4692, 64
        %v4798 = vpop.permute.xlu0 %4797
        %4799 = vrot.lane.b32.xlu0 %v4693, 64
        %v4800 = vpop.permute.xlu0 %4799
        %4801 = vrot.lane.b32.xlu0 %v4694, 64
        %v4802 = vpop.permute.xlu0 %4801
        %4803 = vrot.lane.b32.xlu0 %v4695, 64
        %v4804 = vpop.permute.xlu0 %4803
        %4805 = vrot.lane.b32.xlu0 %v4696, 64
        %v4806 = vpop.permute.xlu0 %4805
        %4807 = vrot.lane.b32.xlu0 %v4697, 64
        %v4808 = vpop.permute.xlu0 %4807
        %4809 = vrot.lane.b32.xlu0 %v4698, 64
        %v4810 = vpop.permute.xlu0 %4809
        %4811 = vrot.lane.b32.xlu0 %v4699, 64
        %v4812 = vpop.permute.xlu0 %4811
        %4813 = vrot.lane.b32.xlu0 %v4700, 64
        %v4814 = vpop.permute.xlu0 %4813
        %4815 = vrot.lane.b32.xlu0 %v4701, 64
        %v4816 = vpop.permute.xlu0 %4815
        %4817 = vrot.lane.b32.xlu0 %v4702, 64
        %v4818 = vpop.permute.xlu0 %4817
        %4819 = vrot.lane.b32.xlu0 %v4703, 64
        %v4820 = vpop.permute.xlu0 %4819
        %4821 = vrot.lane.b32.xlu0 %v4704, 64
        %v4822 = vpop.permute.xlu0 %4821
        %4823 = vrot.lane.b32.xlu0 %v4705, 64
        %v4824 = vpop.permute.xlu0 %4823
        %4825 = vrot.lane.b32.xlu0 %v4706, 64
        %v4826 = vpop.permute.xlu0 %4825
        %4827 = vrot.lane.b32.xlu0 %v4707, 64
        %v4828 = vpop.permute.xlu0 %4827
        %4829 = vrot.lane.b32.xlu0 %v4708, 64
        %v4830 = vpop.permute.xlu0 %4829
        %4831 = vrot.lane.b32.xlu0 %v4709, 64
        %v4832 = vpop.permute.xlu0 %4831
        %4833 = vrot.lane.b32.xlu0 %v4710, 64
        %v4834 = vpop.permute.xlu0 %4833
        %4835 = vrot.lane.b32.xlu0 %v4711, 64
        %v4836 = vpop.permute.xlu0 %4835
        %4837 = vrot.lane.b32.xlu0 %v4712, 64
        %v4838 = vpop.permute.xlu0 %4837
        %4839 = vrot.lane.b32.xlu0 %v4713, 64
        %v4840 = vpop.permute.xlu0 %4839
        %4841 = vrot.lane.b32.xlu0 %v4714, 64
        %v4842 = vpop.permute.xlu0 %4841
        %v4843 = vadd.f32 %v4651, %v4716
        %v4844 = vadd.f32 %v4652, %v4718
        %v4845 = vadd.f32 %v4653, %v4720
        %v4846 = vadd.f32 %v4654, %v4722
        %v4847 = vadd.f32 %v4655, %v4724
        %v4848 = vadd.f32 %v4656, %v4726
        %v4849 = vadd.f32 %v4657, %v4728
        %v4850 = vadd.f32 %v4658, %v4730
        %v4851 = vadd.f32 %v4659, %v4732
        %v4852 = vadd.f32 %v4660, %v4734
        %v4853 = vadd.f32 %v4661, %v4736
        %v4854 = vadd.f32 %v4662, %v4738
        %v4855 = vadd.f32 %v4663, %v4740
        %v4856 = vadd.f32 %v4664, %v4742
        %v4857 = vadd.f32 %v4665, %v4744
        %v4858 = vadd.f32 %v4666, %v4746
        %v4859 = vadd.f32 %v4667, %v4748
        %v4860 = vadd.f32 %v4668, %v4750
        %v4861 = vadd.f32 %v4669, %v4752
        %v4862 = vadd.f32 %v4670, %v4754
        %v4863 = vadd.f32 %v4671, %v4756
        %v4864 = vadd.f32 %v4672, %v4758
        %v4865 = vadd.f32 %v4673, %v4760
        %v4866 = vadd.f32 %v4674, %v4762
        %v4867 = vadd.f32 %v4675, %v4764
        %v4868 = vadd.f32 %v4676, %v4766
        %v4869 = vadd.f32 %v4677, %v4768
        %v4870 = vadd.f32 %v4678, %v4770
        %v4871 = vadd.f32 %v4679, %v4772
        %v4872 = vadd.f32 %v4680, %v4774
        %v4873 = vadd.f32 %v4681, %v4776
        %v4874 = vadd.f32 %v4682, %v4778
        %v4875 = vadd.f32 %v4683, %v4780
        %v4876 = vadd.f32 %v4684, %v4782
        %v4877 = vadd.f32 %v4685, %v4784
        %v4878 = vadd.f32 %v4686, %v4786
        %v4879 = vadd.f32 %v4687, %v4788
        %v4880 = vadd.f32 %v4688, %v4790
        %v4881 = vadd.f32 %v4689, %v4792
        %v4882 = vadd.f32 %v4690, %v4794
        %v4883 = vadd.f32 %v4691, %v4796
        %v4884 = vadd.f32 %v4692, %v4798
        %v4885 = vadd.f32 %v4693, %v4800
        %v4886 = vadd.f32 %v4694, %v4802
        %v4887 = vadd.f32 %v4695, %v4804
        %v4888 = vadd.f32 %v4696, %v4806
        %v4889 = vadd.f32 %v4697, %v4808
        %v4890 = vadd.f32 %v4698, %v4810
        %v4891 = vadd.f32 %v4699, %v4812
        %v4892 = vadd.f32 %v4700, %v4814
        %v4893 = vadd.f32 %v4701, %v4816
        %v4894 = vadd.f32 %v4702, %v4818
        %v4895 = vadd.f32 %v4703, %v4820
        %v4896 = vadd.f32 %v4704, %v4822
        %v4897 = vadd.f32 %v4705, %v4824
        %v4898 = vadd.f32 %v4706, %v4826
        %v4899 = vadd.f32 %v4707, %v4828
        %v4900 = vadd.f32 %v4708, %v4830
        %v4901 = vadd.f32 %v4709, %v4832
        %v4902 = vadd.f32 %v4710, %v4834
        %v4903 = vadd.f32 %v4711, %v4836
        %v4904 = vadd.f32 %v4712, %v4838
        %v4905 = vadd.f32 %v4713, %v4840
        %v4906 = vadd.f32 %v4714, %v4842
        %v4907 = vrcp.pop %v4843
        %v4908 = vrcp.pop %v4844
        %v4909 = vrcp.pop %v4845
        %v4910 = vrcp.pop %v4846
        %v4911 = vrcp.pop %v4847
        %v4912 = vrcp.pop %v4848
        %v4913 = vrcp.pop %v4849
        %v4914 = vrcp.pop %v4850
        %v4915 = vrcp.pop %v4851
        %v4916 = vrcp.pop %v4852
        %v4917 = vrcp.pop %v4853
        %v4918 = vrcp.pop %v4854
        %v4919 = vrcp.pop %v4855
        %v4920 = vrcp.pop %v4856
        %v4921 = vrcp.pop %v4857
        %v4922 = vrcp.pop %v4858
        %v4923 = vrcp.pop %v4859
        %v4924 = vrcp.pop %v4860
        %v4925 = vrcp.pop %v4861
        %v4926 = vrcp.pop %v4862
        %v4927 = vrcp.pop %v4863
        %v4928 = vrcp.pop %v4864
        %v4929 = vrcp.pop %v4865
        %v4930 = vrcp.pop %v4866
        %v4931 = vrcp.pop %v4867
        %v4932 = vrcp.pop %v4868
        %v4933 = vrcp.pop %v4869
        %v4934 = vrcp.pop %v4870
        %v4935 = vrcp.pop %v4871
        %v4936 = vrcp.pop %v4872
        %v4937 = vrcp.pop %v4873
        %v4938 = vrcp.pop %v4874
        %v4939 = vrcp.pop %v4875
        %v4940 = vrcp.pop %v4876
        %v4941 = vrcp.pop %v4877
        %v4942 = vrcp.pop %v4878
        %v4943 = vrcp.pop %v4879
        %v4944 = vrcp.pop %v4880
        %v4945 = vrcp.pop %v4881
        %v4946 = vrcp.pop %v4882
        %v4947 = vrcp.pop %v4883
        %v4948 = vrcp.pop %v4884
        %v4949 = vrcp.pop %v4885
        %v4950 = vrcp.pop %v4886
        %v4951 = vrcp.pop %v4887
        %v4952 = vrcp.pop %v4888
        %v4953 = vrcp.pop %v4889
        %v4954 = vrcp.pop %v4890
        %v4955 = vrcp.pop %v4891
        %v4956 = vrcp.pop %v4892
        %v4957 = vrcp.pop %v4893
        %v4958 = vrcp.pop %v4894
        %v4959 = vrcp.pop %v4895
        %v4960 = vrcp.pop %v4896
        %v4961 = vrcp.pop %v4897
        %v4962 = vrcp.pop %v4898
        %v4963 = vrcp.pop %v4899
        %v4964 = vrcp.pop %v4900
        %v4965 = vrcp.pop %v4901
        %v4966 = vrcp.pop %v4902
        %v4967 = vrcp.pop %v4903
        %v4968 = vrcp.pop %v4904
        %v4969 = vrcp.pop %v4905
        %v4970 = vrcp.pop %v4906
        %v4971 = vmul.f32 %v4396, %v4907
        %v4972 = vmul.f32 %v4398, %v4908
        %v4973 = vmul.f32 %v4400, %v4909
        %v4974 = vmul.f32 %v4402, %v4910
        %v4975 = vmul.f32 %v4404, %v4911
        %v4976 = vmul.f32 %v4406, %v4912
        %v4977 = vmul.f32 %v4408, %v4913
        %v4978 = vmul.f32 %v4410, %v4914
        %v4979 = vmul.f32 %v4412, %v4915
        %v4980 = vmul.f32 %v4414, %v4916
        %v4981 = vmul.f32 %v4416, %v4917
        %v4982 = vmul.f32 %v4418, %v4918
        %v4983 = vmul.f32 %v4420, %v4919
        %v4984 = vmul.f32 %v4422, %v4920
        %v4985 = vmul.f32 %v4424, %v4921
        %v4986 = vmul.f32 %v4426, %v4922
        %v4987 = vmul.f32 %v4428, %v4923
        %v4988 = vmul.f32 %v4430, %v4924
        %v4989 = vmul.f32 %v4432, %v4925
        %v4990 = vmul.f32 %v4434, %v4926
        %v4991 = vmul.f32 %v4436, %v4927
        %v4992 = vmul.f32 %v4438, %v4928
        %v4993 = vmul.f32 %v4440, %v4929
        %v4994 = vmul.f32 %v4442, %v4930
        %v4995 = vmul.f32 %v4444, %v4931
        %v4996 = vmul.f32 %v4446, %v4932
        %v4997 = vmul.f32 %v4448, %v4933
        %v4998 = vmul.f32 %v4450, %v4934
        %v4999 = vmul.f32 %v4452, %v4935
        %v5000 = vmul.f32 %v4454, %v4936
        %v5001 = vmul.f32 %v4456, %v4937
        %v5002 = vmul.f32 %v4458, %v4938
        %v5003 = vmul.f32 %v4460, %v4939
        %v5004 = vmul.f32 %v4462, %v4940
        %v5005 = vmul.f32 %v4464, %v4941
        %v5006 = vmul.f32 %v4466, %v4942
        %v5007 = vmul.f32 %v4468, %v4943
        %v5008 = vmul.f32 %v4470, %v4944
        %v5009 = vmul.f32 %v4472, %v4945
        %v5010 = vmul.f32 %v4474, %v4946
        %v5011 = vmul.f32 %v4476, %v4947
        %v5012 = vmul.f32 %v4478, %v4948
        %v5013 = vmul.f32 %v4480, %v4949
        %v5014 = vmul.f32 %v4482, %v4950
        %v5015 = vmul.f32 %v4484, %v4951
        %v5016 = vmul.f32 %v4486, %v4952
        %v5017 = vmul.f32 %v4488, %v4953
        %v5018 = vmul.f32 %v4490, %v4954
        %v5019 = vmul.f32 %v4492, %v4955
        %v5020 = vmul.f32 %v4494, %v4956
        %v5021 = vmul.f32 %v4496, %v4957
        %v5022 = vmul.f32 %v4498, %v4958
        %v5023 = vmul.f32 %v4500, %v4959
        %v5024 = vmul.f32 %v4502, %v4960
        %v5025 = vmul.f32 %v4504, %v4961
        %v5026 = vmul.f32 %v4506, %v4962
        %v5027 = vmul.f32 %v4508, %v4963
        %v5028 = vmul.f32 %v4510, %v4964
        %v5029 = vmul.f32 %v4512, %v4965
        %v5030 = vmul.f32 %v4514, %v4966
        %v5031 = vmul.f32 %v4516, %v4967
        %v5032 = vmul.f32 %v4518, %v4968
        %v5033 = vmul.f32 %v4520, %v4969
        %v5034 = vmul.f32 %v4522, %v4970
        %v5035 = vmul.f32 %v4971, %v3244
        %v5036 = vmul.f32 %v4972, %v3247
        %v5037 = vmul.f32 %v4973, %v3252
        %v5038 = vmul.f32 %v4974, %v3255
        %v5039 = vmul.f32 %v4975, %v3260
        %v5040 = vmul.f32 %v4976, %v3263
        %v5041 = vmul.f32 %v4977, %v3268
        %v5042 = vmul.f32 %v4978, %v3271
        %v5043 = vmul.f32 %v4979, %v3276
        %v5044 = vmul.f32 %v4980, %v3279
        %v5045 = vmul.f32 %v4981, %v3284
        %v5046 = vmul.f32 %v4982, %v3287
        %v5047 = vmul.f32 %v4983, %v3292
        %v5048 = vmul.f32 %v4984, %v3295
        %v5049 = vmul.f32 %v4985, %v3300
        %v5050 = vmul.f32 %v4986, %v3303
        %v5051 = vmul.f32 %v4987, %v3308
        %v5052 = vmul.f32 %v4988, %v3311
        %v5053 = vmul.f32 %v4989, %v3316
        %v5054 = vmul.f32 %v4990, %v3319
        %v5055 = vmul.f32 %v4991, %v3324
        %v5056 = vmul.f32 %v4992, %v3327
        %v5057 = vmul.f32 %v4993, %v3332
        %v5058 = vmul.f32 %v4994, %v3335
        %v5059 = vmul.f32 %v4995, %v3340
        %v5060 = vmul.f32 %v4996, %v3343
        %v5061 = vmul.f32 %v4997, %v3348
        %v5062 = vmul.f32 %v4998, %v3351
        %v5063 = vmul.f32 %v4999, %v3356
        %v5064 = vmul.f32 %v5000, %v3359
        %v5065 = vmul.f32 %v5001, %v3364
        %v5066 = vmul.f32 %v5002, %v3367
        %v5067 = vmul.f32 %v5003, %v3372
        %v5068 = vmul.f32 %v5004, %v3375
        %v5069 = vmul.f32 %v5005, %v3380
        %v5070 = vmul.f32 %v5006, %v3383
        %v5071 = vmul.f32 %v5007, %v3388
        %v5072 = vmul.f32 %v5008, %v3391
        %v5073 = vmul.f32 %v5009, %v3396
        %v5074 = vmul.f32 %v5010, %v3399
        %v5075 = vmul.f32 %v5011, %v3404
        %v5076 = vmul.f32 %v5012, %v3407
        %v5077 = vmul.f32 %v5013, %v3412
        %v5078 = vmul.f32 %v5014, %v3415
        %v5079 = vmul.f32 %v5015, %v3420
        %v5080 = vmul.f32 %v5016, %v3423
        %v5081 = vmul.f32 %v5017, %v3428
        %v5082 = vmul.f32 %v5018, %v3431
        %v5083 = vmul.f32 %v5019, %v3436
        %v5084 = vmul.f32 %v5020, %v3439
        %v5085 = vmul.f32 %v5021, %v3444
        %v5086 = vmul.f32 %v5022, %v3447
        %v5087 = vmul.f32 %v5023, %v3452
        %v5088 = vmul.f32 %v5024, %v3455
        %v5089 = vmul.f32 %v5025, %v3460
        %v5090 = vmul.f32 %v5026, %v3463
        %v5091 = vmul.f32 %v5027, %v3468
        %v5092 = vmul.f32 %v5028, %v3471
        %v5093 = vmul.f32 %v5029, %v3476
        %v5094 = vmul.f32 %v5030, %v3479
        %v5095 = vmul.f32 %v5031, %v3484
        %v5096 = vmul.f32 %v5032, %v3487
        %v5097 = vmul.f32 %v5033, %v3492
        %v5098 = vmul.f32 %v5034, %v3495
        %5099 = vrot.lane.b32.xlu0 %v5035, 32
        %v5100 = vpop.permute.xlu0 %5099
        %5101 = vrot.lane.b32.xlu0 %v5036, 32
        %v5102 = vpop.permute.xlu0 %5101
        %5103 = vrot.lane.b32.xlu0 %v5037, 32
        %v5104 = vpop.permute.xlu0 %5103
        %5105 = vrot.lane.b32.xlu0 %v5038, 32
        %v5106 = vpop.permute.xlu0 %5105
        %5107 = vrot.lane.b32.xlu0 %v5039, 32
        %v5108 = vpop.permute.xlu0 %5107
        %5109 = vrot.lane.b32.xlu0 %v5040, 32
        %v5110 = vpop.permute.xlu0 %5109
        %5111 = vrot.lane.b32.xlu0 %v5041, 32
        %v5112 = vpop.permute.xlu0 %5111
        %5113 = vrot.lane.b32.xlu0 %v5042, 32
        %v5114 = vpop.permute.xlu0 %5113
        %5115 = vrot.lane.b32.xlu0 %v5043, 32
        %v5116 = vpop.permute.xlu0 %5115
        %5117 = vrot.lane.b32.xlu0 %v5044, 32
        %v5118 = vpop.permute.xlu0 %5117
        %5119 = vrot.lane.b32.xlu0 %v5045, 32
        %v5120 = vpop.permute.xlu0 %5119
        %5121 = vrot.lane.b32.xlu0 %v5046, 32
        %v5122 = vpop.permute.xlu0 %5121
        %5123 = vrot.lane.b32.xlu0 %v5047, 32
        %v5124 = vpop.permute.xlu0 %5123
        %5125 = vrot.lane.b32.xlu0 %v5048, 32
        %v5126 = vpop.permute.xlu0 %5125
        %5127 = vrot.lane.b32.xlu0 %v5049, 32
        %v5128 = vpop.permute.xlu0 %5127
        %5129 = vrot.lane.b32.xlu0 %v5050, 32
        %v5130 = vpop.permute.xlu0 %5129
        %5131 = vrot.lane.b32.xlu0 %v5051, 32
        %v5132 = vpop.permute.xlu0 %5131
        %5133 = vrot.lane.b32.xlu0 %v5052, 32
        %v5134 = vpop.permute.xlu0 %5133
        %5135 = vrot.lane.b32.xlu0 %v5053, 32
        %v5136 = vpop.permute.xlu0 %5135
        %5137 = vrot.lane.b32.xlu0 %v5054, 32
        %v5138 = vpop.permute.xlu0 %5137
        %5139 = vrot.lane.b32.xlu0 %v5055, 32
        %v5140 = vpop.permute.xlu0 %5139
        %5141 = vrot.lane.b32.xlu0 %v5056, 32
        %v5142 = vpop.permute.xlu0 %5141
        %5143 = vrot.lane.b32.xlu0 %v5057, 32
        %v5144 = vpop.permute.xlu0 %5143
        %5145 = vrot.lane.b32.xlu0 %v5058, 32
        %v5146 = vpop.permute.xlu0 %5145
        %5147 = vrot.lane.b32.xlu0 %v5059, 32
        %v5148 = vpop.permute.xlu0 %5147
        %5149 = vrot.lane.b32.xlu0 %v5060, 32
        %v5150 = vpop.permute.xlu0 %5149
        %5151 = vrot.lane.b32.xlu0 %v5061, 32
        %v5152 = vpop.permute.xlu0 %5151
        %5153 = vrot.lane.b32.xlu0 %v5062, 32
        %v5154 = vpop.permute.xlu0 %5153
        %5155 = vrot.lane.b32.xlu0 %v5063, 32
        %v5156 = vpop.permute.xlu0 %5155
        %5157 = vrot.lane.b32.xlu0 %v5064, 32
        %v5158 = vpop.permute.xlu0 %5157
        %5159 = vrot.lane.b32.xlu0 %v5065, 32
        %v5160 = vpop.permute.xlu0 %5159
        %5161 = vrot.lane.b32.xlu0 %v5066, 32
        %v5162 = vpop.permute.xlu0 %5161
        %5163 = vrot.lane.b32.xlu0 %v5067, 32
        %v5164 = vpop.permute.xlu0 %5163
        %5165 = vrot.lane.b32.xlu0 %v5068, 32
        %v5166 = vpop.permute.xlu0 %5165
        %5167 = vrot.lane.b32.xlu0 %v5069, 32
        %v5168 = vpop.permute.xlu0 %5167
        %5169 = vrot.lane.b32.xlu0 %v5070, 32
        %v5170 = vpop.permute.xlu0 %5169
        %5171 = vrot.lane.b32.xlu0 %v5071, 32
        %v5172 = vpop.permute.xlu0 %5171
        %5173 = vrot.lane.b32.xlu0 %v5072, 32
        %v5174 = vpop.permute.xlu0 %5173
        %5175 = vrot.lane.b32.xlu0 %v5073, 32
        %v5176 = vpop.permute.xlu0 %5175
        %5177 = vrot.lane.b32.xlu0 %v5074, 32
        %v5178 = vpop.permute.xlu0 %5177
        %5179 = vrot.lane.b32.xlu0 %v5075, 32
        %v5180 = vpop.permute.xlu0 %5179
        %5181 = vrot.lane.b32.xlu0 %v5076, 32
        %v5182 = vpop.permute.xlu0 %5181
        %5183 = vrot.lane.b32.xlu0 %v5077, 32
        %v5184 = vpop.permute.xlu0 %5183
        %5185 = vrot.lane.b32.xlu0 %v5078, 32
        %v5186 = vpop.permute.xlu0 %5185
        %5187 = vrot.lane.b32.xlu0 %v5079, 32
        %v5188 = vpop.permute.xlu0 %5187
        %5189 = vrot.lane.b32.xlu0 %v5080, 32
        %v5190 = vpop.permute.xlu0 %5189
        %5191 = vrot.lane.b32.xlu0 %v5081, 32
        %v5192 = vpop.permute.xlu0 %5191
        %5193 = vrot.lane.b32.xlu0 %v5082, 32
        %v5194 = vpop.permute.xlu0 %5193
        %5195 = vrot.lane.b32.xlu0 %v5083, 32
        %v5196 = vpop.permute.xlu0 %5195
        %5197 = vrot.lane.b32.xlu0 %v5084, 32
        %v5198 = vpop.permute.xlu0 %5197
        %5199 = vrot.lane.b32.xlu0 %v5085, 32
        %v5200 = vpop.permute.xlu0 %5199
        %5201 = vrot.lane.b32.xlu0 %v5086, 32
        %v5202 = vpop.permute.xlu0 %5201
        %5203 = vrot.lane.b32.xlu0 %v5087, 32
        %v5204 = vpop.permute.xlu0 %5203
        %5205 = vrot.lane.b32.xlu0 %v5088, 32
        %v5206 = vpop.permute.xlu0 %5205
        %5207 = vrot.lane.b32.xlu0 %v5089, 32
        %v5208 = vpop.permute.xlu0 %5207
        %5209 = vrot.lane.b32.xlu0 %v5090, 32
        %v5210 = vpop.permute.xlu0 %5209
        %5211 = vrot.lane.b32.xlu0 %v5091, 32
        %v5212 = vpop.permute.xlu0 %5211
        %5213 = vrot.lane.b32.xlu0 %v5092, 32
        %v5214 = vpop.permute.xlu0 %5213
        %5215 = vrot.lane.b32.xlu0 %v5093, 32
        %v5216 = vpop.permute.xlu0 %5215
        %5217 = vrot.lane.b32.xlu0 %v5094, 32
        %v5218 = vpop.permute.xlu0 %5217
        %5219 = vrot.lane.b32.xlu0 %v5095, 32
        %v5220 = vpop.permute.xlu0 %5219
        %5221 = vrot.lane.b32.xlu0 %v5096, 32
        %v5222 = vpop.permute.xlu0 %5221
        %5223 = vrot.lane.b32.xlu0 %v5097, 32
        %v5224 = vpop.permute.xlu0 %5223
        %5225 = vrot.lane.b32.xlu0 %v5098, 32
        %v5226 = vpop.permute.xlu0 %5225
        %v5227 = vadd.f32 %v5035, %v5100
        %v5228 = vadd.f32 %v5036, %v5102
        %v5229 = vadd.f32 %v5037, %v5104
        %v5230 = vadd.f32 %v5038, %v5106
        %v5231 = vadd.f32 %v5039, %v5108
        %v5232 = vadd.f32 %v5040, %v5110
        %v5233 = vadd.f32 %v5041, %v5112
        %v5234 = vadd.f32 %v5042, %v5114
        %v5235 = vadd.f32 %v5043, %v5116
        %v5236 = vadd.f32 %v5044, %v5118
        %v5237 = vadd.f32 %v5045, %v5120
        %v5238 = vadd.f32 %v5046, %v5122
        %v5239 = vadd.f32 %v5047, %v5124
        %v5240 = vadd.f32 %v5048, %v5126
        %v5241 = vadd.f32 %v5049, %v5128
        %v5242 = vadd.f32 %v5050, %v5130
        %v5243 = vadd.f32 %v5051, %v5132
        %v5244 = vadd.f32 %v5052, %v5134
        %v5245 = vadd.f32 %v5053, %v5136
        %v5246 = vadd.f32 %v5054, %v5138
        %v5247 = vadd.f32 %v5055, %v5140
        %v5248 = vadd.f32 %v5056, %v5142
        %v5249 = vadd.f32 %v5057, %v5144
        %v5250 = vadd.f32 %v5058, %v5146
        %v5251 = vadd.f32 %v5059, %v5148
        %v5252 = vadd.f32 %v5060, %v5150
        %v5253 = vadd.f32 %v5061, %v5152
        %v5254 = vadd.f32 %v5062, %v5154
        %v5255 = vadd.f32 %v5063, %v5156
        %v5256 = vadd.f32 %v5064, %v5158
        %v5257 = vadd.f32 %v5065, %v5160
        %v5258 = vadd.f32 %v5066, %v5162
        %v5259 = vadd.f32 %v5067, %v5164
        %v5260 = vadd.f32 %v5068, %v5166
        %v5261 = vadd.f32 %v5069, %v5168
        %v5262 = vadd.f32 %v5070, %v5170
        %v5263 = vadd.f32 %v5071, %v5172
        %v5264 = vadd.f32 %v5072, %v5174
        %v5265 = vadd.f32 %v5073, %v5176
        %v5266 = vadd.f32 %v5074, %v5178
        %v5267 = vadd.f32 %v5075, %v5180
        %v5268 = vadd.f32 %v5076, %v5182
        %v5269 = vadd.f32 %v5077, %v5184
        %v5270 = vadd.f32 %v5078, %v5186
        %v5271 = vadd.f32 %v5079, %v5188
        %v5272 = vadd.f32 %v5080, %v5190
        %v5273 = vadd.f32 %v5081, %v5192
        %v5274 = vadd.f32 %v5082, %v5194
        %v5275 = vadd.f32 %v5083, %v5196
        %v5276 = vadd.f32 %v5084, %v5198
        %v5277 = vadd.f32 %v5085, %v5200
        %v5278 = vadd.f32 %v5086, %v5202
        %v5279 = vadd.f32 %v5087, %v5204
        %v5280 = vadd.f32 %v5088, %v5206
        %v5281 = vadd.f32 %v5089, %v5208
        %v5282 = vadd.f32 %v5090, %v5210
        %v5283 = vadd.f32 %v5091, %v5212
        %v5284 = vadd.f32 %v5092, %v5214
        %v5285 = vadd.f32 %v5093, %v5216
        %v5286 = vadd.f32 %v5094, %v5218
        %v5287 = vadd.f32 %v5095, %v5220
        %v5288 = vadd.f32 %v5096, %v5222
        %v5289 = vadd.f32 %v5097, %v5224
        %v5290 = vadd.f32 %v5098, %v5226
        %5291 = vrot.lane.b32.xlu0 %v5227, 64
        %v5292 = vpop.permute.xlu0 %5291
        %5293 = vrot.lane.b32.xlu0 %v5228, 64
        %v5294 = vpop.permute.xlu0 %5293
        %5295 = vrot.lane.b32.xlu0 %v5229, 64
        %v5296 = vpop.permute.xlu0 %5295
        %5297 = vrot.lane.b32.xlu0 %v5230, 64
        %v5298 = vpop.permute.xlu0 %5297
        %5299 = vrot.lane.b32.xlu0 %v5231, 64
        %v5300 = vpop.permute.xlu0 %5299
        %5301 = vrot.lane.b32.xlu0 %v5232, 64
        %v5302 = vpop.permute.xlu0 %5301
        %5303 = vrot.lane.b32.xlu0 %v5233, 64
        %v5304 = vpop.permute.xlu0 %5303
        %5305 = vrot.lane.b32.xlu0 %v5234, 64
        %v5306 = vpop.permute.xlu0 %5305
        %5307 = vrot.lane.b32.xlu0 %v5235, 64
        %v5308 = vpop.permute.xlu0 %5307
        %5309 = vrot.lane.b32.xlu0 %v5236, 64
        %v5310 = vpop.permute.xlu0 %5309
        %5311 = vrot.lane.b32.xlu0 %v5237, 64
        %v5312 = vpop.permute.xlu0 %5311
        %5313 = vrot.lane.b32.xlu0 %v5238, 64
        %v5314 = vpop.permute.xlu0 %5313
        %5315 = vrot.lane.b32.xlu0 %v5239, 64
        %v5316 = vpop.permute.xlu0 %5315
        %5317 = vrot.lane.b32.xlu0 %v5240, 64
        %v5318 = vpop.permute.xlu0 %5317
        %5319 = vrot.lane.b32.xlu0 %v5241, 64
        %v5320 = vpop.permute.xlu0 %5319
        %5321 = vrot.lane.b32.xlu0 %v5242, 64
        %v5322 = vpop.permute.xlu0 %5321
        %5323 = vrot.lane.b32.xlu0 %v5243, 64
        %v5324 = vpop.permute.xlu0 %5323
        %5325 = vrot.lane.b32.xlu0 %v5244, 64
        %v5326 = vpop.permute.xlu0 %5325
        %5327 = vrot.lane.b32.xlu0 %v5245, 64
        %v5328 = vpop.permute.xlu0 %5327
        %5329 = vrot.lane.b32.xlu0 %v5246, 64
        %v5330 = vpop.permute.xlu0 %5329
        %5331 = vrot.lane.b32.xlu0 %v5247, 64
        %v5332 = vpop.permute.xlu0 %5331
        %5333 = vrot.lane.b32.xlu0 %v5248, 64
        %v5334 = vpop.permute.xlu0 %5333
        %5335 = vrot.lane.b32.xlu0 %v5249, 64
        %v5336 = vpop.permute.xlu0 %5335
        %5337 = vrot.lane.b32.xlu0 %v5250, 64
        %v5338 = vpop.permute.xlu0 %5337
        %5339 = vrot.lane.b32.xlu0 %v5251, 64
        %v5340 = vpop.permute.xlu0 %5339
        %5341 = vrot.lane.b32.xlu0 %v5252, 64
        %v5342 = vpop.permute.xlu0 %5341
        %5343 = vrot.lane.b32.xlu0 %v5253, 64
        %v5344 = vpop.permute.xlu0 %5343
        %5345 = vrot.lane.b32.xlu0 %v5254, 64
        %v5346 = vpop.permute.xlu0 %5345
        %5347 = vrot.lane.b32.xlu0 %v5255, 64
        %v5348 = vpop.permute.xlu0 %5347
        %5349 = vrot.lane.b32.xlu0 %v5256, 64
        %v5350 = vpop.permute.xlu0 %5349
        %5351 = vrot.lane.b32.xlu0 %v5257, 64
        %v5352 = vpop.permute.xlu0 %5351
        %5353 = vrot.lane.b32.xlu0 %v5258, 64
        %v5354 = vpop.permute.xlu0 %5353
        %5355 = vrot.lane.b32.xlu0 %v5259, 64
        %v5356 = vpop.permute.xlu0 %5355
        %5357 = vrot.lane.b32.xlu0 %v5260, 64
        %v5358 = vpop.permute.xlu0 %5357
        %5359 = vrot.lane.b32.xlu0 %v5261, 64
        %v5360 = vpop.permute.xlu0 %5359
        %5361 = vrot.lane.b32.xlu0 %v5262, 64
        %v5362 = vpop.permute.xlu0 %5361
        %5363 = vrot.lane.b32.xlu0 %v5263, 64
        %v5364 = vpop.permute.xlu0 %5363
        %5365 = vrot.lane.b32.xlu0 %v5264, 64
        %v5366 = vpop.permute.xlu0 %5365
        %5367 = vrot.lane.b32.xlu0 %v5265, 64
        %v5368 = vpop.permute.xlu0 %5367
        %5369 = vrot.lane.b32.xlu0 %v5266, 64
        %v5370 = vpop.permute.xlu0 %5369
        %5371 = vrot.lane.b32.xlu0 %v5267, 64
        %v5372 = vpop.permute.xlu0 %5371
        %5373 = vrot.lane.b32.xlu0 %v5268, 64
        %v5374 = vpop.permute.xlu0 %5373
        %5375 = vrot.lane.b32.xlu0 %v5269, 64
        %v5376 = vpop.permute.xlu0 %5375
        %5377 = vrot.lane.b32.xlu0 %v5270, 64
        %v5378 = vpop.permute.xlu0 %5377
        %5379 = vrot.lane.b32.xlu0 %v5271, 64
        %v5380 = vpop.permute.xlu0 %5379
        %5381 = vrot.lane.b32.xlu0 %v5272, 64
        %v5382 = vpop.permute.xlu0 %5381
        %5383 = vrot.lane.b32.xlu0 %v5273, 64
        %v5384 = vpop.permute.xlu0 %5383
        %5385 = vrot.lane.b32.xlu0 %v5274, 64
        %v5386 = vpop.permute.xlu0 %5385
        %5387 = vrot.lane.b32.xlu0 %v5275, 64
        %v5388 = vpop.permute.xlu0 %5387
        %5389 = vrot.lane.b32.xlu0 %v5276, 64
        %v5390 = vpop.permute.xlu0 %5389
        %5391 = vrot.lane.b32.xlu0 %v5277, 64
        %v5392 = vpop.permute.xlu0 %5391
        %5393 = vrot.lane.b32.xlu0 %v5278, 64
        %v5394 = vpop.permute.xlu0 %5393
        %5395 = vrot.lane.b32.xlu0 %v5279, 64
        %v5396 = vpop.permute.xlu0 %5395
        %5397 = vrot.lane.b32.xlu0 %v5280, 64
        %v5398 = vpop.permute.xlu0 %5397
        %5399 = vrot.lane.b32.xlu0 %v5281, 64
        %v5400 = vpop.permute.xlu0 %5399
        %5401 = vrot.lane.b32.xlu0 %v5282, 64
        %v5402 = vpop.permute.xlu0 %5401
        %5403 = vrot.lane.b32.xlu0 %v5283, 64
        %v5404 = vpop.permute.xlu0 %5403
        %5405 = vrot.lane.b32.xlu0 %v5284, 64
        %v5406 = vpop.permute.xlu0 %5405
        %5407 = vrot.lane.b32.xlu0 %v5285, 64
        %v5408 = vpop.permute.xlu0 %5407
        %5409 = vrot.lane.b32.xlu0 %v5286, 64
        %v5410 = vpop.permute.xlu0 %5409
        %5411 = vrot.lane.b32.xlu0 %v5287, 64
        %v5412 = vpop.permute.xlu0 %5411
        %5413 = vrot.lane.b32.xlu0 %v5288, 64
        %v5414 = vpop.permute.xlu0 %5413
        %5415 = vrot.lane.b32.xlu0 %v5289, 64
        %v5416 = vpop.permute.xlu0 %5415
        %5417 = vrot.lane.b32.xlu0 %v5290, 64
        %v5418 = vpop.permute.xlu0 %5417
        %v5419 = vadd.f32 %v5227, %v5292
        %v5420 = vadd.f32 %v5228, %v5294
        %v5421 = vadd.f32 %v5229, %v5296
        %v5422 = vadd.f32 %v5230, %v5298
        %v5423 = vadd.f32 %v5231, %v5300
        %v5424 = vadd.f32 %v5232, %v5302
        %v5425 = vadd.f32 %v5233, %v5304
        %v5426 = vadd.f32 %v5234, %v5306
        %v5427 = vadd.f32 %v5235, %v5308
        %v5428 = vadd.f32 %v5236, %v5310
        %v5429 = vadd.f32 %v5237, %v5312
        %v5430 = vadd.f32 %v5238, %v5314
        %v5431 = vadd.f32 %v5239, %v5316
        %v5432 = vadd.f32 %v5240, %v5318
        %v5433 = vadd.f32 %v5241, %v5320
        %v5434 = vadd.f32 %v5242, %v5322
        %v5435 = vadd.f32 %v5243, %v5324
        %v5436 = vadd.f32 %v5244, %v5326
        %v5437 = vadd.f32 %v5245, %v5328
        %v5438 = vadd.f32 %v5246, %v5330
        %v5439 = vadd.f32 %v5247, %v5332
        %v5440 = vadd.f32 %v5248, %v5334
        %v5441 = vadd.f32 %v5249, %v5336
        %v5442 = vadd.f32 %v5250, %v5338
        %v5443 = vadd.f32 %v5251, %v5340
        %v5444 = vadd.f32 %v5252, %v5342
        %v5445 = vadd.f32 %v5253, %v5344
        %v5446 = vadd.f32 %v5254, %v5346
        %v5447 = vadd.f32 %v5255, %v5348
        %v5448 = vadd.f32 %v5256, %v5350
        %v5449 = vadd.f32 %v5257, %v5352
        %v5450 = vadd.f32 %v5258, %v5354
        %v5451 = vadd.f32 %v5259, %v5356
        %v5452 = vadd.f32 %v5260, %v5358
        %v5453 = vadd.f32 %v5261, %v5360
        %v5454 = vadd.f32 %v5262, %v5362
        %v5455 = vadd.f32 %v5263, %v5364
        %v5456 = vadd.f32 %v5264, %v5366
        %v5457 = vadd.f32 %v5265, %v5368
        %v5458 = vadd.f32 %v5266, %v5370
        %v5459 = vadd.f32 %v5267, %v5372
        %v5460 = vadd.f32 %v5268, %v5374
        %v5461 = vadd.f32 %v5269, %v5376
        %v5462 = vadd.f32 %v5270, %v5378
        %v5463 = vadd.f32 %v5271, %v5380
        %v5464 = vadd.f32 %v5272, %v5382
        %v5465 = vadd.f32 %v5273, %v5384
        %v5466 = vadd.f32 %v5274, %v5386
        %v5467 = vadd.f32 %v5275, %v5388
        %v5468 = vadd.f32 %v5276, %v5390
        %v5469 = vadd.f32 %v5277, %v5392
        %v5470 = vadd.f32 %v5278, %v5394
        %v5471 = vadd.f32 %v5279, %v5396
        %v5472 = vadd.f32 %v5280, %v5398
        %v5473 = vadd.f32 %v5281, %v5400
        %v5474 = vadd.f32 %v5282, %v5402
        %v5475 = vadd.f32 %v5283, %v5404
        %v5476 = vadd.f32 %v5284, %v5406
        %v5477 = vadd.f32 %v5285, %v5408
        %v5478 = vadd.f32 %v5286, %v5410
        %v5479 = vadd.f32 %v5287, %v5412
        %v5480 = vadd.f32 %v5288, %v5414
        %v5481 = vadd.f32 %v5289, %v5416
        %v5482 = vadd.f32 %v5290, %v5418
        %s5483 = scalar_lea.vmem [#allocation5], 128
        %v5484 = vld [vmem:[%s5483] sm:$0xf]
        %v5485 = vld [vmem:[%s5483 + $0x4] sm:$0xf]
        %v5486 = vld [vmem:[%s5483 + $0x8] sm:$0xf]
        %v5487 = vld [vmem:[%s5483 + $0xc] sm:$0xf]
        %v5488 = vld [vmem:[%s5483 + $0x10] sm:$0xf]
        %v5489 = vld [vmem:[%s5483 + $0x14] sm:$0xf]
        %v5490 = vld [vmem:[%s5483 + $0x18] sm:$0xf]
        %v5491 = vld [vmem:[%s5483 + $0x1c] sm:$0xf]
        %v5492 = vld [vmem:[%s5483 + $0x20] sm:$0xf]
        %v5493 = vld [vmem:[%s5483 + $0x24] sm:$0xf]
        %v5494 = vld [vmem:[%s5483 + $0x28] sm:$0xf]
        %v5495 = vld [vmem:[%s5483 + $0x2c] sm:$0xf]
        %v5496 = vld [vmem:[%s5483 + $0x30] sm:$0xf]
        %v5497 = vld [vmem:[%s5483 + $0x34] sm:$0xf]
        %v5498 = vld [vmem:[%s5483 + $0x38] sm:$0xf]
        %v5499 = vld [vmem:[%s5483 + $0x3c] sm:$0xf]
        %v5500 = vld [vmem:[#allocation11] sm:$0xf]
        %v5501 = vld [vmem:[#allocation11 + $0x4] sm:$0xf]
        %v5502 = vld [vmem:[#allocation11 + $0x8] sm:$0xf]
        %v5503 = vld [vmem:[#allocation11 + $0xc] sm:$0xf]
        %v5504 = vld [vmem:[#allocation11 + $0x10] sm:$0xf]
        %v5505 = vld [vmem:[#allocation11 + $0x14] sm:$0xf]
        %v5506 = vld [vmem:[#allocation11 + $0x18] sm:$0xf]
        %v5507 = vld [vmem:[#allocation11 + $0x1c] sm:$0xf]
        %v5508 = vld [vmem:[#allocation11 + $0x20] sm:$0xf]
        %v5509 = vld [vmem:[#allocation11 + $0x24] sm:$0xf]
        %v5510 = vld [vmem:[#allocation11 + $0x28] sm:$0xf]
        %v5511 = vld [vmem:[#allocation11 + $0x2c] sm:$0xf]
        %v5512 = vld [vmem:[#allocation11 + $0x30] sm:$0xf]
        %v5513 = vld [vmem:[#allocation11 + $0x34] sm:$0xf]
        %v5514 = vld [vmem:[#allocation11 + $0x38] sm:$0xf]
        %v5515 = vld [vmem:[#allocation11 + $0x3c] sm:$0xf]
        %v5516 = vpack.c.bf16 %v5420, %v5419
        %v5517 = vpack.c.bf16 %v5422, %v5421
        %v5518 = vpack.c.bf16 %v5424, %v5423
        %v5519 = vpack.c.bf16 %v5426, %v5425
        %v5520 = vpack.c.bf16 %v5428, %v5427
        %v5521 = vpack.c.bf16 %v5430, %v5429
        %v5522 = vpack.c.bf16 %v5432, %v5431
        %v5523 = vpack.c.bf16 %v5434, %v5433
        %v5524 = vpack.c.bf16 %v5436, %v5435
        %v5525 = vpack.c.bf16 %v5438, %v5437
        %v5526 = vpack.c.bf16 %v5440, %v5439
        %v5527 = vpack.c.bf16 %v5442, %v5441
        %v5528 = vpack.c.bf16 %v5444, %v5443
        %v5529 = vpack.c.bf16 %v5446, %v5445
        %v5530 = vpack.c.bf16 %v5448, %v5447
        %v5531 = vpack.c.bf16 %v5450, %v5449
        %v5532 = vpack.c.bf16 %v5452, %v5451
        %v5533 = vpack.c.bf16 %v5454, %v5453
        %v5534 = vpack.c.bf16 %v5456, %v5455
        %v5535 = vpack.c.bf16 %v5458, %v5457
        %v5536 = vpack.c.bf16 %v5460, %v5459
        %v5537 = vpack.c.bf16 %v5462, %v5461
        %v5538 = vpack.c.bf16 %v5464, %v5463
        %v5539 = vpack.c.bf16 %v5466, %v5465
        %v5540 = vpack.c.bf16 %v5468, %v5467
        %v5541 = vpack.c.bf16 %v5470, %v5469
        %v5542 = vpack.c.bf16 %v5472, %v5471
        %v5543 = vpack.c.bf16 %v5474, %v5473
        %v5544 = vpack.c.bf16 %v5476, %v5475
        %v5545 = vpack.c.bf16 %v5478, %v5477
        %v5546 = vpack.c.bf16 %v5480, %v5479
        %v5547 = vpack.c.bf16 %v5482, %v5481
        %v5564 = vunpack.c.l.b16 %v5500
        %v5565 = vunpack.c.l.b16 %v5501
        %v5566 = vunpack.c.l.b16 %v5502
        %v5567 = vunpack.c.l.b16 %v5503
        %v5568 = vunpack.c.l.b16 %v5504
        %v5569 = vunpack.c.l.b16 %v5505
        %v5570 = vunpack.c.l.b16 %v5506
        %v5571 = vunpack.c.l.b16 %v5507
        %v5572 = vunpack.c.l.b16 %v5508
        %v5573 = vunpack.c.l.b16 %v5509
        %v5574 = vunpack.c.l.b16 %v5510
        %v5575 = vunpack.c.l.b16 %v5511
        %v5576 = vunpack.c.l.b16 %v5512
        %v5577 = vunpack.c.l.b16 %v5513
        %v5578 = vunpack.c.l.b16 %v5514
        %v5579 = vunpack.c.l.b16 %v5515
        %v5580 = vpack.c.b16 %v5565, %v5564
        %v5581 = vpack.c.b16 %v5567, %v5566
        %v5582 = vpack.c.b16 %v5569, %v5568
        %v5583 = vpack.c.b16 %v5571, %v5570
        %v5584 = vpack.c.b16 %v5573, %v5572
        %v5585 = vpack.c.b16 %v5575, %v5574
        %v5586 = vpack.c.b16 %v5577, %v5576
        %v5587 = vpack.c.b16 %v5579, %v5578
        %5596 = vmatprep.subr.bf16.mxu0 0
        %5597 = vmatpush1.bf16.msra.mxu0 %v5587
        %5598 = vmatprep.subr.bf16.mxu0 0
        %5599 = vmatpush1.bf16.msra.mxu0 %v5586
        %5600 = vmatprep.subr.bf16.mxu0 0
        %5601 = vmatpush1.bf16.msra.mxu0 %v5585
        %5602 = vmatprep.subr.bf16.mxu0 0
        %5603 = vmatpush1.bf16.msra.mxu0 %v5584
        %5604 = vmatprep.subr.bf16.mxu0 0
        %5605 = vmatpush1.bf16.msra.mxu0 %v5583
        %5606 = vmatprep.subr.bf16.mxu0 0
        %5607 = vmatpush1.bf16.msra.mxu0 %v5582
        %5608 = vmatprep.subr.bf16.mxu0 0
        %5609 = vmatpush1.bf16.msra.mxu0 %v5581
        %5610 = vmatprep.subr.bf16.mxu0 0
        %5611 = vmatpush1.bf16.msra.mxu0 %v5580
        %5612 = vmatprep.subr.bf16.mxu0 0
        %5613 = vmatpush2.bf16.msra.mxu0 0
        %5614 = vmatprep.subr.bf16.mxu0 0
        %5615 = vmatpush2.bf16.msra.mxu0 0
        %5616 = vmatprep.subr.bf16.mxu0 0
        %5617 = vmatpush2.bf16.msra.mxu0 0
        %5618 = vmatprep.subr.bf16.mxu0 0
        %5619 = vmatpush2.bf16.msra.mxu0 0
        %5620 = vmatprep.subr.bf16.mxu0 0
        %5621 = vmatpush2.bf16.msra.mxu0 0
        %5622 = vmatprep.subr.bf16.mxu0 0
        %5623 = vmatpush2.bf16.msra.mxu0 0
        %5624 = vmatprep.subr.bf16.mxu0 0
        %5625 = vmatpush2.bf16.msra.mxu0 0
        %5626 = vmatprep.subr.bf16.mxu0 0
        %5627 = vmatpush2.bf16.msra.mxu0 0
        %5628 = vmatprep.mubr.bf16.mxu0 0
        %5629 = vmatmul.mubr.bf16.gmra.mxu0 %v5516
        %v5630 = vpop.f32.mrf.mxu0
        %v5631 = vadd.f32 0.0, %v5630
        %v5632 = vpop.f32.mrf.mxu0
        %v5633 = vpop.f32.mrf.mxu0
        %v5634 = vadd.f32 0.0, %v5633
        %v5635 = vpop.f32.mrf.mxu0
        %5636 = vmatprep.mubr.bf16.mxu0 0
        %5637 = vmatmul.mubr.bf16.gmra.mxu0 %v5517
        %v5638 = vpop.f32.mrf.mxu0
        %v5639 = vadd.f32 0.0, %v5638
        %v5640 = vpop.f32.mrf.mxu0
        %v5641 = vpop.f32.mrf.mxu0
        %v5642 = vadd.f32 0.0, %v5641
        %v5643 = vpop.f32.mrf.mxu0
        %5644 = vmatprep.mubr.bf16.mxu0 0
        %5645 = vmatmul.mubr.bf16.gmra.mxu0 %v5518
        %v5646 = vpop.f32.mrf.mxu0
        %v5647 = vadd.f32 0.0, %v5646
        %v5648 = vpop.f32.mrf.mxu0
        %v5649 = vpop.f32.mrf.mxu0
        %v5650 = vadd.f32 0.0, %v5649
        %v5651 = vpop.f32.mrf.mxu0
        %5652 = vmatprep.mubr.bf16.mxu0 0
        %5653 = vmatmul.mubr.bf16.gmra.mxu0 %v5519
        %v5654 = vpop.f32.mrf.mxu0
        %v5655 = vadd.f32 0.0, %v5654
        %v5656 = vpop.f32.mrf.mxu0
        %v5657 = vpop.f32.mrf.mxu0
        %v5658 = vadd.f32 0.0, %v5657
        %v5659 = vpop.f32.mrf.mxu0
        %5660 = vmatprep.mubr.bf16.mxu0 0
        %5661 = vmatmul.mubr.bf16.gmra.mxu0 %v5520
        %v5662 = vpop.f32.mrf.mxu0
        %v5663 = vadd.f32 0.0, %v5662
        %v5664 = vpop.f32.mrf.mxu0
        %v5665 = vpop.f32.mrf.mxu0
        %v5666 = vadd.f32 0.0, %v5665
        %v5667 = vpop.f32.mrf.mxu0
        %5668 = vmatprep.mubr.bf16.mxu0 0
        %5669 = vmatmul.mubr.bf16.gmra.mxu0 %v5521
        %v5670 = vpop.f32.mrf.mxu0
        %v5671 = vadd.f32 0.0, %v5670
        %v5672 = vpop.f32.mrf.mxu0
        %v5673 = vpop.f32.mrf.mxu0
        %v5674 = vadd.f32 0.0, %v5673
        %v5675 = vpop.f32.mrf.mxu0
        %5676 = vmatprep.mubr.bf16.mxu0 0
        %5677 = vmatmul.mubr.bf16.gmra.mxu0 %v5522
        %v5678 = vpop.f32.mrf.mxu0
        %v5679 = vadd.f32 0.0, %v5678
        %v5680 = vpop.f32.mrf.mxu0
        %v5681 = vpop.f32.mrf.mxu0
        %v5682 = vadd.f32 0.0, %v5681
        %v5683 = vpop.f32.mrf.mxu0
        %5684 = vmatprep.mubr.bf16.mxu0 0
        %5685 = vmatmul.mubr.bf16.gmra.mxu0 %v5523
        %v5686 = vpop.f32.mrf.mxu0
        %v5687 = vadd.f32 0.0, %v5686
        %v5688 = vpop.f32.mrf.mxu0
        %v5689 = vpop.f32.mrf.mxu0
        %v5690 = vadd.f32 0.0, %v5689
        %v5691 = vpop.f32.mrf.mxu0
        %5692 = vmatprep.mubr.bf16.mxu0 0
        %5693 = vmatmul.mubr.bf16.gmra.mxu0 %v5524
        %v5694 = vpop.f32.mrf.mxu0
        %v5695 = vadd.f32 0.0, %v5694
        %v5696 = vpop.f32.mrf.mxu0
        %v5697 = vpop.f32.mrf.mxu0
        %v5698 = vadd.f32 0.0, %v5697
        %v5699 = vpop.f32.mrf.mxu0
        %5700 = vmatprep.mubr.bf16.mxu0 0
        %5701 = vmatmul.mubr.bf16.gmra.mxu0 %v5525
        %v5702 = vpop.f32.mrf.mxu0
        %v5703 = vadd.f32 0.0, %v5702
        %v5704 = vpop.f32.mrf.mxu0
        %v5705 = vpop.f32.mrf.mxu0
        %v5706 = vadd.f32 0.0, %v5705
        %v5707 = vpop.f32.mrf.mxu0
        %5708 = vmatprep.mubr.bf16.mxu0 0
        %5709 = vmatmul.mubr.bf16.gmra.mxu0 %v5526
        %v5710 = vpop.f32.mrf.mxu0
        %v5711 = vadd.f32 0.0, %v5710
        %v5712 = vpop.f32.mrf.mxu0
        %v5713 = vpop.f32.mrf.mxu0
        %v5714 = vadd.f32 0.0, %v5713
        %v5715 = vpop.f32.mrf.mxu0
        %5716 = vmatprep.mubr.bf16.mxu0 0
        %5717 = vmatmul.mubr.bf16.gmra.mxu0 %v5527
        %v5718 = vpop.f32.mrf.mxu0
        %v5719 = vadd.f32 0.0, %v5718
        %v5720 = vpop.f32.mrf.mxu0
        %v5721 = vpop.f32.mrf.mxu0
        %v5722 = vadd.f32 0.0, %v5721
        %v5723 = vpop.f32.mrf.mxu0
        %5724 = vmatprep.mubr.bf16.mxu0 0
        %5725 = vmatmul.mubr.bf16.gmra.mxu0 %v5528
        %v5726 = vpop.f32.mrf.mxu0
        %v5727 = vadd.f32 0.0, %v5726
        %v5728 = vpop.f32.mrf.mxu0
        %v5729 = vpop.f32.mrf.mxu0
        %v5730 = vadd.f32 0.0, %v5729
        %v5731 = vpop.f32.mrf.mxu0
        %5732 = vmatprep.mubr.bf16.mxu0 0
        %5733 = vmatmul.mubr.bf16.gmra.mxu0 %v5529
        %v5734 = vpop.f32.mrf.mxu0
        %v5735 = vadd.f32 0.0, %v5734
        %v5736 = vpop.f32.mrf.mxu0
        %v5737 = vpop.f32.mrf.mxu0
        %v5738 = vadd.f32 0.0, %v5737
        %v5739 = vpop.f32.mrf.mxu0
        %5740 = vmatprep.mubr.bf16.mxu0 0
        %5741 = vmatmul.mubr.bf16.gmra.mxu0 %v5530
        %v5742 = vpop.f32.mrf.mxu0
        %v5743 = vadd.f32 0.0, %v5742
        %v5744 = vpop.f32.mrf.mxu0
        %v5745 = vpop.f32.mrf.mxu0
        %v5746 = vadd.f32 0.0, %v5745
        %v5747 = vpop.f32.mrf.mxu0
        %5748 = vmatprep.mubr.bf16.mxu0 0
        %5749 = vmatmul.mubr.bf16.gmra.mxu0 %v5531
        %v5750 = vpop.f32.mrf.mxu0
        %v5751 = vadd.f32 0.0, %v5750
        %v5752 = vpop.f32.mrf.mxu0
        %v5753 = vpop.f32.mrf.mxu0
        %v5754 = vadd.f32 0.0, %v5753
        %v5755 = vpop.f32.mrf.mxu0
        %5756 = vmatprep.mubr.bf16.mxu0 0
        %5757 = vmatmul.mubr.bf16.gmra.mxu0 %v5532
        %v5758 = vpop.f32.mrf.mxu0
        %v5759 = vadd.f32 0.0, %v5758
        %v5760 = vpop.f32.mrf.mxu0
        %v5761 = vpop.f32.mrf.mxu0
        %v5762 = vadd.f32 0.0, %v5761
        %v5763 = vpop.f32.mrf.mxu0
        %5764 = vmatprep.mubr.bf16.mxu0 0
        %5765 = vmatmul.mubr.bf16.gmra.mxu0 %v5533
        %v5766 = vpop.f32.mrf.mxu0
        %v5767 = vadd.f32 0.0, %v5766
        %v5768 = vpop.f32.mrf.mxu0
        %v5769 = vpop.f32.mrf.mxu0
        %v5770 = vadd.f32 0.0, %v5769
        %v5771 = vpop.f32.mrf.mxu0
        %5772 = vmatprep.mubr.bf16.mxu0 0
        %5773 = vmatmul.mubr.bf16.gmra.mxu0 %v5534
        %v5774 = vpop.f32.mrf.mxu0
        %v5775 = vadd.f32 0.0, %v5774
        %v5776 = vpop.f32.mrf.mxu0
        %v5777 = vpop.f32.mrf.mxu0
        %v5778 = vadd.f32 0.0, %v5777
        %v5779 = vpop.f32.mrf.mxu0
        %5780 = vmatprep.mubr.bf16.mxu0 0
        %5781 = vmatmul.mubr.bf16.gmra.mxu0 %v5535
        %v5782 = vpop.f32.mrf.mxu0
        %v5783 = vadd.f32 0.0, %v5782
        %v5784 = vpop.f32.mrf.mxu0
        %v5785 = vpop.f32.mrf.mxu0
        %v5786 = vadd.f32 0.0, %v5785
        %v5787 = vpop.f32.mrf.mxu0
        %5788 = vmatprep.mubr.bf16.mxu0 0
        %5789 = vmatmul.mubr.bf16.gmra.mxu0 %v5536
        %v5790 = vpop.f32.mrf.mxu0
        %v5791 = vadd.f32 0.0, %v5790
        %v5792 = vpop.f32.mrf.mxu0
        %v5793 = vpop.f32.mrf.mxu0
        %v5794 = vadd.f32 0.0, %v5793
        %v5795 = vpop.f32.mrf.mxu0
        %5796 = vmatprep.mubr.bf16.mxu0 0
        %5797 = vmatmul.mubr.bf16.gmra.mxu0 %v5537
        %v5798 = vpop.f32.mrf.mxu0
        %v5799 = vadd.f32 0.0, %v5798
        %v5800 = vpop.f32.mrf.mxu0
        %v5801 = vpop.f32.mrf.mxu0
        %v5802 = vadd.f32 0.0, %v5801
        %v5803 = vpop.f32.mrf.mxu0
        %5804 = vmatprep.mubr.bf16.mxu0 0
        %5805 = vmatmul.mubr.bf16.gmra.mxu0 %v5538
        %v5806 = vpop.f32.mrf.mxu0
        %v5807 = vadd.f32 0.0, %v5806
        %v5808 = vpop.f32.mrf.mxu0
        %v5809 = vpop.f32.mrf.mxu0
        %v5810 = vadd.f32 0.0, %v5809
        %v5811 = vpop.f32.mrf.mxu0
        %5812 = vmatprep.mubr.bf16.mxu0 0
        %5813 = vmatmul.mubr.bf16.gmra.mxu0 %v5539
        %v5814 = vpop.f32.mrf.mxu0
        %v5815 = vadd.f32 0.0, %v5814
        %v5816 = vpop.f32.mrf.mxu0
        %v5817 = vpop.f32.mrf.mxu0
        %v5818 = vadd.f32 0.0, %v5817
        %v5819 = vpop.f32.mrf.mxu0
        %5820 = vmatprep.mubr.bf16.mxu0 0
        %5821 = vmatmul.mubr.bf16.gmra.mxu0 %v5540
        %v5822 = vpop.f32.mrf.mxu0
        %v5823 = vadd.f32 0.0, %v5822
        %v5824 = vpop.f32.mrf.mxu0
        %v5825 = vpop.f32.mrf.mxu0
        %v5826 = vadd.f32 0.0, %v5825
        %v5827 = vpop.f32.mrf.mxu0
        %5828 = vmatprep.mubr.bf16.mxu0 0
        %5829 = vmatmul.mubr.bf16.gmra.mxu0 %v5541
        %v5830 = vpop.f32.mrf.mxu0
        %v5831 = vadd.f32 0.0, %v5830
        %v5832 = vpop.f32.mrf.mxu0
        %v5833 = vpop.f32.mrf.mxu0
        %v5834 = vadd.f32 0.0, %v5833
        %v5835 = vpop.f32.mrf.mxu0
        %5836 = vmatprep.mubr.bf16.mxu0 0
        %5837 = vmatmul.mubr.bf16.gmra.mxu0 %v5542
        %v5838 = vpop.f32.mrf.mxu0
        %v5839 = vadd.f32 0.0, %v5838
        %v5840 = vpop.f32.mrf.mxu0
        %v5841 = vpop.f32.mrf.mxu0
        %v5842 = vadd.f32 0.0, %v5841
        %v5843 = vpop.f32.mrf.mxu0
        %5844 = vmatprep.mubr.bf16.mxu0 0
        %5845 = vmatmul.mubr.bf16.gmra.mxu0 %v5543
        %v5846 = vpop.f32.mrf.mxu0
        %v5847 = vadd.f32 0.0, %v5846
        %v5848 = vpop.f32.mrf.mxu0
        %v5849 = vpop.f32.mrf.mxu0
        %v5850 = vadd.f32 0.0, %v5849
        %v5851 = vpop.f32.mrf.mxu0
        %5852 = vmatprep.mubr.bf16.mxu0 0
        %5853 = vmatmul.mubr.bf16.gmra.mxu0 %v5544
        %v5854 = vpop.f32.mrf.mxu0
        %v5855 = vadd.f32 0.0, %v5854
        %v5856 = vpop.f32.mrf.mxu0
        %v5857 = vpop.f32.mrf.mxu0
        %v5858 = vadd.f32 0.0, %v5857
        %v5859 = vpop.f32.mrf.mxu0
        %5860 = vmatprep.mubr.bf16.mxu0 0
        %5861 = vmatmul.mubr.bf16.gmra.mxu0 %v5545
        %v5862 = vpop.f32.mrf.mxu0
        %v5863 = vadd.f32 0.0, %v5862
        %v5864 = vpop.f32.mrf.mxu0
        %v5865 = vpop.f32.mrf.mxu0
        %v5866 = vadd.f32 0.0, %v5865
        %v5867 = vpop.f32.mrf.mxu0
        %5868 = vmatprep.mubr.bf16.mxu0 0
        %5869 = vmatmul.mubr.bf16.gmra.mxu0 %v5546
        %v5870 = vpop.f32.mrf.mxu0
        %v5871 = vadd.f32 0.0, %v5870
        %v5872 = vpop.f32.mrf.mxu0
        %v5873 = vpop.f32.mrf.mxu0
        %v5874 = vadd.f32 0.0, %v5873
        %v5875 = vpop.f32.mrf.mxu0
        %5876 = vmatprep.mubr.bf16.mxu0 0
        %5877 = vmatmul.mubr.bf16.gmra.mxu0 %v5547
        %v5878 = vpop.f32.mrf.mxu0
        %v5879 = vadd.f32 0.0, %v5878
        %v5880 = vpop.f32.mrf.mxu0
        %v5881 = vpop.f32.mrf.mxu0
        %v5882 = vadd.f32 0.0, %v5881
        %v5883 = vpop.f32.mrf.mxu0
        %5884 = vdwg.mxu0
        %v5901 = vunpack.c.l.b16 %v5484
        %v5902 = vunpack.c.l.b16 %v5485
        %v5903 = vunpack.c.l.b16 %v5486
        %v5904 = vunpack.c.l.b16 %v5487
        %v5905 = vunpack.c.l.b16 %v5488
        %v5906 = vunpack.c.l.b16 %v5489
        %v5907 = vunpack.c.l.b16 %v5490
        %v5908 = vunpack.c.l.b16 %v5491
        %v5909 = vunpack.c.l.b16 %v5492
        %v5910 = vunpack.c.l.b16 %v5493
        %v5911 = vunpack.c.l.b16 %v5494
        %v5912 = vunpack.c.l.b16 %v5495
        %v5913 = vunpack.c.l.b16 %v5496
        %v5914 = vunpack.c.l.b16 %v5497
        %v5915 = vunpack.c.l.b16 %v5498
        %v5916 = vunpack.c.l.b16 %v5499
        %v5917 = vpack.c.b16 %v5902, %v5901
        %v5918 = vpack.c.b16 %v5904, %v5903
        %v5919 = vpack.c.b16 %v5906, %v5905
        %v5920 = vpack.c.b16 %v5908, %v5907
        %v5921 = vpack.c.b16 %v5910, %v5909
        %v5922 = vpack.c.b16 %v5912, %v5911
        %v5923 = vpack.c.b16 %v5914, %v5913
        %v5924 = vpack.c.b16 %v5916, %v5915
        %5933 = vmatprep.subr.bf16.mxu0 0
        %5934 = vmatpush1.bf16.msra.mxu0 %v5924
        %5935 = vmatprep.subr.bf16.mxu0 0
        %5936 = vmatpush1.bf16.msra.mxu0 %v5923
        %5937 = vmatprep.subr.bf16.mxu0 0
        %5938 = vmatpush1.bf16.msra.mxu0 %v5922
        %5939 = vmatprep.subr.bf16.mxu0 0
        %5940 = vmatpush1.bf16.msra.mxu0 %v5921
        %5941 = vmatprep.subr.bf16.mxu0 0
        %5942 = vmatpush1.bf16.msra.mxu0 %v5920
        %5943 = vmatprep.subr.bf16.mxu0 0
        %5944 = vmatpush1.bf16.msra.mxu0 %v5919
        %5945 = vmatprep.subr.bf16.mxu0 0
        %5946 = vmatpush1.bf16.msra.mxu0 %v5918
        %5947 = vmatprep.subr.bf16.mxu0 0
        %5948 = vmatpush1.bf16.msra.mxu0 %v5917
        %5949 = vmatprep.subr.bf16.mxu0 0
        %5950 = vmatpush2.bf16.msra.mxu0 0
        %5951 = vmatprep.subr.bf16.mxu0 0
        %5952 = vmatpush2.bf16.msra.mxu0 0
        %5953 = vmatprep.subr.bf16.mxu0 0
        %5954 = vmatpush2.bf16.msra.mxu0 0
        %5955 = vmatprep.subr.bf16.mxu0 0
        %5956 = vmatpush2.bf16.msra.mxu0 0
        %5957 = vmatprep.subr.bf16.mxu0 0
        %5958 = vmatpush2.bf16.msra.mxu0 0
        %5959 = vmatprep.subr.bf16.mxu0 0
        %5960 = vmatpush2.bf16.msra.mxu0 0
        %5961 = vmatprep.subr.bf16.mxu0 0
        %5962 = vmatpush2.bf16.msra.mxu0 0
        %5963 = vmatprep.subr.bf16.mxu0 0
        %5964 = vmatpush2.bf16.msra.mxu0 0
        %5965 = vmatprep.mubr.bf16.mxu0 0
        %5966 = vmatmul.mubr.bf16.gmra.mxu0 %v695
        %v5967 = vpop.f32.mrf.mxu0
        %v5968 = vadd.f32 %v5631, %v5967
        %v5969 = vpop.f32.mrf.mxu0
        %v5970 = vpop.f32.mrf.mxu0
        %v5971 = vadd.f32 %v5634, %v5970
        %v5972 = vpop.f32.mrf.mxu0
        %5973 = vmatprep.mubr.bf16.mxu0 0
        %5974 = vmatmul.mubr.bf16.gmra.mxu0 %v696
        %v5975 = vpop.f32.mrf.mxu0
        %v5976 = vadd.f32 %v5639, %v5975
        %v5977 = vpop.f32.mrf.mxu0
        %v5978 = vpop.f32.mrf.mxu0
        %v5979 = vadd.f32 %v5642, %v5978
        %v5980 = vpop.f32.mrf.mxu0
        %5981 = vmatprep.mubr.bf16.mxu0 0
        %5982 = vmatmul.mubr.bf16.gmra.mxu0 %v697
        %v5983 = vpop.f32.mrf.mxu0
        %v5984 = vadd.f32 %v5647, %v5983
        %v5985 = vpop.f32.mrf.mxu0
        %v5986 = vpop.f32.mrf.mxu0
        %v5987 = vadd.f32 %v5650, %v5986
        %v5988 = vpop.f32.mrf.mxu0
        %5989 = vmatprep.mubr.bf16.mxu0 0
        %5990 = vmatmul.mubr.bf16.gmra.mxu0 %v698
        %v5991 = vpop.f32.mrf.mxu0
        %v5992 = vadd.f32 %v5655, %v5991
        %v5993 = vpop.f32.mrf.mxu0
        %v5994 = vpop.f32.mrf.mxu0
        %v5995 = vadd.f32 %v5658, %v5994
        %v5996 = vpop.f32.mrf.mxu0
        %5997 = vmatprep.mubr.bf16.mxu0 0
        %5998 = vmatmul.mubr.bf16.gmra.mxu0 %v699
        %v5999 = vpop.f32.mrf.mxu0
        %v6000 = vadd.f32 %v5663, %v5999
        %v6001 = vpop.f32.mrf.mxu0
        %v6002 = vpop.f32.mrf.mxu0
        %v6003 = vadd.f32 %v5666, %v6002
        %v6004 = vpop.f32.mrf.mxu0
        %6005 = vmatprep.mubr.bf16.mxu0 0
        %6006 = vmatmul.mubr.bf16.gmra.mxu0 %v700
        %v6007 = vpop.f32.mrf.mxu0
        %v6008 = vadd.f32 %v5671, %v6007
        %v6009 = vpop.f32.mrf.mxu0
        %v6010 = vpop.f32.mrf.mxu0
        %v6011 = vadd.f32 %v5674, %v6010
        %v6012 = vpop.f32.mrf.mxu0
        %6013 = vmatprep.mubr.bf16.mxu0 0
        %6014 = vmatmul.mubr.bf16.gmra.mxu0 %v701
        %v6015 = vpop.f32.mrf.mxu0
        %v6016 = vadd.f32 %v5679, %v6015
        %v6017 = vpop.f32.mrf.mxu0
        %v6018 = vpop.f32.mrf.mxu0
        %v6019 = vadd.f32 %v5682, %v6018
        %v6020 = vpop.f32.mrf.mxu0
        %6021 = vmatprep.mubr.bf16.mxu0 0
        %6022 = vmatmul.mubr.bf16.gmra.mxu0 %v702
        %v6023 = vpop.f32.mrf.mxu0
        %v6024 = vadd.f32 %v5687, %v6023
        %v6025 = vpop.f32.mrf.mxu0
        %v6026 = vpop.f32.mrf.mxu0
        %v6027 = vadd.f32 %v5690, %v6026
        %v6028 = vpop.f32.mrf.mxu0
        %6029 = vmatprep.mubr.bf16.mxu0 0
        %6030 = vmatmul.mubr.bf16.gmra.mxu0 %v703
        %v6031 = vpop.f32.mrf.mxu0
        %v6032 = vadd.f32 %v5695, %v6031
        %v6033 = vpop.f32.mrf.mxu0
        %v6034 = vpop.f32.mrf.mxu0
        %v6035 = vadd.f32 %v5698, %v6034
        %v6036 = vpop.f32.mrf.mxu0
        %6037 = vmatprep.mubr.bf16.mxu0 0
        %6038 = vmatmul.mubr.bf16.gmra.mxu0 %v704
        %v6039 = vpop.f32.mrf.mxu0
        %v6040 = vadd.f32 %v5703, %v6039
        %v6041 = vpop.f32.mrf.mxu0
        %v6042 = vpop.f32.mrf.mxu0
        %v6043 = vadd.f32 %v5706, %v6042
        %v6044 = vpop.f32.mrf.mxu0
        %6045 = vmatprep.mubr.bf16.mxu0 0
        %6046 = vmatmul.mubr.bf16.gmra.mxu0 %v705
        %v6047 = vpop.f32.mrf.mxu0
        %v6048 = vadd.f32 %v5711, %v6047
        %v6049 = vpop.f32.mrf.mxu0
        %v6050 = vpop.f32.mrf.mxu0
        %v6051 = vadd.f32 %v5714, %v6050
        %v6052 = vpop.f32.mrf.mxu0
        %6053 = vmatprep.mubr.bf16.mxu0 0
        %6054 = vmatmul.mubr.bf16.gmra.mxu0 %v706
        %v6055 = vpop.f32.mrf.mxu0
        %v6056 = vadd.f32 %v5719, %v6055
        %v6057 = vpop.f32.mrf.mxu0
        %v6058 = vpop.f32.mrf.mxu0
        %v6059 = vadd.f32 %v5722, %v6058
        %v6060 = vpop.f32.mrf.mxu0
        %6061 = vmatprep.mubr.bf16.mxu0 0
        %6062 = vmatmul.mubr.bf16.gmra.mxu0 %v707
        %v6063 = vpop.f32.mrf.mxu0
        %v6064 = vadd.f32 %v5727, %v6063
        %v6065 = vpop.f32.mrf.mxu0
        %v6066 = vpop.f32.mrf.mxu0
        %v6067 = vadd.f32 %v5730, %v6066
        %v6068 = vpop.f32.mrf.mxu0
        %6069 = vmatprep.mubr.bf16.mxu0 0
        %6070 = vmatmul.mubr.bf16.gmra.mxu0 %v708
        %v6071 = vpop.f32.mrf.mxu0
        %v6072 = vadd.f32 %v5735, %v6071
        %v6073 = vpop.f32.mrf.mxu0
        %v6074 = vpop.f32.mrf.mxu0
        %v6075 = vadd.f32 %v5738, %v6074
        %v6076 = vpop.f32.mrf.mxu0
        %6077 = vmatprep.mubr.bf16.mxu0 0
        %6078 = vmatmul.mubr.bf16.gmra.mxu0 %v709
        %v6079 = vpop.f32.mrf.mxu0
        %v6080 = vadd.f32 %v5743, %v6079
        %v6081 = vpop.f32.mrf.mxu0
        %v6082 = vpop.f32.mrf.mxu0
        %v6083 = vadd.f32 %v5746, %v6082
        %v6084 = vpop.f32.mrf.mxu0
        %6085 = vmatprep.mubr.bf16.mxu0 0
        %6086 = vmatmul.mubr.bf16.gmra.mxu0 %v710
        %v6087 = vpop.f32.mrf.mxu0
        %v6088 = vadd.f32 %v5751, %v6087
        %v6089 = vpop.f32.mrf.mxu0
        %v6090 = vpop.f32.mrf.mxu0
        %v6091 = vadd.f32 %v5754, %v6090
        %v6092 = vpop.f32.mrf.mxu0
        %6093 = vmatprep.mubr.bf16.mxu0 0
        %6094 = vmatmul.mubr.bf16.gmra.mxu0 %v711
        %v6095 = vpop.f32.mrf.mxu0
        %v6096 = vadd.f32 %v5759, %v6095
        %v6097 = vpop.f32.mrf.mxu0
        %v6098 = vpop.f32.mrf.mxu0
        %v6099 = vadd.f32 %v5762, %v6098
        %v6100 = vpop.f32.mrf.mxu0
        %6101 = vmatprep.mubr.bf16.mxu0 0
        %6102 = vmatmul.mubr.bf16.gmra.mxu0 %v712
        %v6103 = vpop.f32.mrf.mxu0
        %v6104 = vadd.f32 %v5767, %v6103
        %v6105 = vpop.f32.mrf.mxu0
        %v6106 = vpop.f32.mrf.mxu0
        %v6107 = vadd.f32 %v5770, %v6106
        %v6108 = vpop.f32.mrf.mxu0
        %6109 = vmatprep.mubr.bf16.mxu0 0
        %6110 = vmatmul.mubr.bf16.gmra.mxu0 %v713
        %v6111 = vpop.f32.mrf.mxu0
        %v6112 = vadd.f32 %v5775, %v6111
        %v6113 = vpop.f32.mrf.mxu0
        %v6114 = vpop.f32.mrf.mxu0
        %v6115 = vadd.f32 %v5778, %v6114
        %v6116 = vpop.f32.mrf.mxu0
        %6117 = vmatprep.mubr.bf16.mxu0 0
        %6118 = vmatmul.mubr.bf16.gmra.mxu0 %v714
        %v6119 = vpop.f32.mrf.mxu0
        %v6120 = vadd.f32 %v5783, %v6119
        %v6121 = vpop.f32.mrf.mxu0
        %v6122 = vpop.f32.mrf.mxu0
        %v6123 = vadd.f32 %v5786, %v6122
        %v6124 = vpop.f32.mrf.mxu0
        %6125 = vmatprep.mubr.bf16.mxu0 0
        %6126 = vmatmul.mubr.bf16.gmra.mxu0 %v715
        %v6127 = vpop.f32.mrf.mxu0
        %v6128 = vadd.f32 %v5791, %v6127
        %v6129 = vpop.f32.mrf.mxu0
        %v6130 = vpop.f32.mrf.mxu0
        %v6131 = vadd.f32 %v5794, %v6130
        %v6132 = vpop.f32.mrf.mxu0
        %6133 = vmatprep.mubr.bf16.mxu0 0
        %6134 = vmatmul.mubr.bf16.gmra.mxu0 %v716
        %v6135 = vpop.f32.mrf.mxu0
        %v6136 = vadd.f32 %v5799, %v6135
        %v6137 = vpop.f32.mrf.mxu0
        %v6138 = vpop.f32.mrf.mxu0
        %v6139 = vadd.f32 %v5802, %v6138
        %v6140 = vpop.f32.mrf.mxu0
        %6141 = vmatprep.mubr.bf16.mxu0 0
        %6142 = vmatmul.mubr.bf16.gmra.mxu0 %v717
        %v6143 = vpop.f32.mrf.mxu0
        %v6144 = vadd.f32 %v5807, %v6143
        %v6145 = vpop.f32.mrf.mxu0
        %v6146 = vpop.f32.mrf.mxu0
        %v6147 = vadd.f32 %v5810, %v6146
        %v6148 = vpop.f32.mrf.mxu0
        %6149 = vmatprep.mubr.bf16.mxu0 0
        %6150 = vmatmul.mubr.bf16.gmra.mxu0 %v718
        %v6151 = vpop.f32.mrf.mxu0
        %v6152 = vadd.f32 %v5815, %v6151
        %v6153 = vpop.f32.mrf.mxu0
        %v6154 = vpop.f32.mrf.mxu0
        %v6155 = vadd.f32 %v5818, %v6154
        %v6156 = vpop.f32.mrf.mxu0
        %6157 = vmatprep.mubr.bf16.mxu0 0
        %6158 = vmatmul.mubr.bf16.gmra.mxu0 %v719
        %v6159 = vpop.f32.mrf.mxu0
        %v6160 = vadd.f32 %v5823, %v6159
        %v6161 = vpop.f32.mrf.mxu0
        %v6162 = vpop.f32.mrf.mxu0
        %v6163 = vadd.f32 %v5826, %v6162
        %v6164 = vpop.f32.mrf.mxu0
        %6165 = vmatprep.mubr.bf16.mxu0 0
        %6166 = vmatmul.mubr.bf16.gmra.mxu0 %v720
        %v6167 = vpop.f32.mrf.mxu0
        %v6168 = vadd.f32 %v5831, %v6167
        %v6169 = vpop.f32.mrf.mxu0
        %v6170 = vpop.f32.mrf.mxu0
        %v6171 = vadd.f32 %v5834, %v6170
        %v6172 = vpop.f32.mrf.mxu0
        %6173 = vmatprep.mubr.bf16.mxu0 0
        %6174 = vmatmul.mubr.bf16.gmra.mxu0 %v721
        %v6175 = vpop.f32.mrf.mxu0
        %v6176 = vadd.f32 %v5839, %v6175
        %v6177 = vpop.f32.mrf.mxu0
        %v6178 = vpop.f32.mrf.mxu0
        %v6179 = vadd.f32 %v5842, %v6178
        %v6180 = vpop.f32.mrf.mxu0
        %6181 = vmatprep.mubr.bf16.mxu0 0
        %6182 = vmatmul.mubr.bf16.gmra.mxu0 %v722
        %v6183 = vpop.f32.mrf.mxu0
        %v6184 = vadd.f32 %v5847, %v6183
        %v6185 = vpop.f32.mrf.mxu0
        %v6186 = vpop.f32.mrf.mxu0
        %v6187 = vadd.f32 %v5850, %v6186
        %v6188 = vpop.f32.mrf.mxu0
        %6189 = vmatprep.mubr.bf16.mxu0 0
        %6190 = vmatmul.mubr.bf16.gmra.mxu0 %v723
        %v6191 = vpop.f32.mrf.mxu0
        %v6192 = vadd.f32 %v5855, %v6191
        %v6193 = vpop.f32.mrf.mxu0
        %v6194 = vpop.f32.mrf.mxu0
        %v6195 = vadd.f32 %v5858, %v6194
        %v6196 = vpop.f32.mrf.mxu0
        %6197 = vmatprep.mubr.bf16.mxu0 0
        %6198 = vmatmul.mubr.bf16.gmra.mxu0 %v724
        %v6199 = vpop.f32.mrf.mxu0
        %v6200 = vadd.f32 %v5863, %v6199
        %v6201 = vpop.f32.mrf.mxu0
        %v6202 = vpop.f32.mrf.mxu0
        %v6203 = vadd.f32 %v5866, %v6202
        %v6204 = vpop.f32.mrf.mxu0
        %6205 = vmatprep.mubr.bf16.mxu0 0
        %6206 = vmatmul.mubr.bf16.gmra.mxu0 %v725
        %v6207 = vpop.f32.mrf.mxu0
        %v6208 = vadd.f32 %v5871, %v6207
        %v6209 = vpop.f32.mrf.mxu0
        %v6210 = vpop.f32.mrf.mxu0
        %v6211 = vadd.f32 %v5874, %v6210
        %v6212 = vpop.f32.mrf.mxu0
        %6213 = vmatprep.mubr.bf16.mxu0 0
        %6214 = vmatmul.mubr.bf16.gmra.mxu0 %v726
        %v6215 = vpop.f32.mrf.mxu0
        %v6216 = vadd.f32 %v5879, %v6215
        %v6217 = vpop.f32.mrf.mxu0
        %v6218 = vpop.f32.mrf.mxu0
        %v6219 = vadd.f32 %v5882, %v6218
        %v6220 = vpop.f32.mrf.mxu0
        %6221 = vdwg.mxu0
        %v6222 = vlaneseq
        %v6223 = vshrl.u32 %v6222, 7
        %v6224 = vsub.s32 4, %v6223
        %v6225 = vrot.slane %v545, %v6224
        %v6226 = vadd.f32 %v5968, %v6225
        %v6227 = vadd.f32 %v5971, %v6225
        %v6228 = vadd.f32 %v5976, %v6225
        %v6229 = vadd.f32 %v5979, %v6225
        %v6230 = vadd.f32 %v5984, %v6225
        %v6231 = vadd.f32 %v5987, %v6225
        %v6232 = vadd.f32 %v5992, %v6225
        %v6233 = vadd.f32 %v5995, %v6225
        %v6234 = vadd.f32 %v6000, %v6225
        %v6235 = vadd.f32 %v6003, %v6225
        %v6236 = vadd.f32 %v6008, %v6225
        %v6237 = vadd.f32 %v6011, %v6225
        %v6238 = vadd.f32 %v6016, %v6225
        %v6239 = vadd.f32 %v6019, %v6225
        %v6240 = vadd.f32 %v6024, %v6225
        %v6241 = vadd.f32 %v6027, %v6225
        %v6242 = vadd.f32 %v6032, %v6225
        %v6243 = vadd.f32 %v6035, %v6225
        %v6244 = vadd.f32 %v6040, %v6225
        %v6245 = vadd.f32 %v6043, %v6225
        %v6246 = vadd.f32 %v6048, %v6225
        %v6247 = vadd.f32 %v6051, %v6225
        %v6248 = vadd.f32 %v6056, %v6225
        %v6249 = vadd.f32 %v6059, %v6225
        %v6250 = vadd.f32 %v6064, %v6225
        %v6251 = vadd.f32 %v6067, %v6225
        %v6252 = vadd.f32 %v6072, %v6225
        %v6253 = vadd.f32 %v6075, %v6225
        %v6254 = vadd.f32 %v6080, %v6225
        %v6255 = vadd.f32 %v6083, %v6225
        %v6256 = vadd.f32 %v6088, %v6225
        %v6257 = vadd.f32 %v6091, %v6225
        %v6258 = vadd.f32 %v6096, %v6225
        %v6259 = vadd.f32 %v6099, %v6225
        %v6260 = vadd.f32 %v6104, %v6225
        %v6261 = vadd.f32 %v6107, %v6225
        %v6262 = vadd.f32 %v6112, %v6225
        %v6263 = vadd.f32 %v6115, %v6225
        %v6264 = vadd.f32 %v6120, %v6225
        %v6265 = vadd.f32 %v6123, %v6225
        %v6266 = vadd.f32 %v6128, %v6225
        %v6267 = vadd.f32 %v6131, %v6225
        %v6268 = vadd.f32 %v6136, %v6225
        %v6269 = vadd.f32 %v6139, %v6225
        %v6270 = vadd.f32 %v6144, %v6225
        %v6271 = vadd.f32 %v6147, %v6225
        %v6272 = vadd.f32 %v6152, %v6225
        %v6273 = vadd.f32 %v6155, %v6225
        %v6274 = vadd.f32 %v6160, %v6225
        %v6275 = vadd.f32 %v6163, %v6225
        %v6276 = vadd.f32 %v6168, %v6225
        %v6277 = vadd.f32 %v6171, %v6225
        %v6278 = vadd.f32 %v6176, %v6225
        %v6279 = vadd.f32 %v6179, %v6225
        %v6280 = vadd.f32 %v6184, %v6225
        %v6281 = vadd.f32 %v6187, %v6225
        %v6282 = vadd.f32 %v6192, %v6225
        %v6283 = vadd.f32 %v6195, %v6225
        %v6284 = vadd.f32 %v6200, %v6225
        %v6285 = vadd.f32 %v6203, %v6225
        %v6286 = vadd.f32 %v6208, %v6225
        %v6287 = vadd.f32 %v6211, %v6225
        %v6288 = vadd.f32 %v6216, %v6225
        %v6289 = vadd.f32 %v6219, %v6225
        %v6290 = vmax.f32 %v6226, 0.0
        %v6291 = vmax.f32 %v6227, 0.0
        %v6292 = vmax.f32 %v6228, 0.0
        %v6293 = vmax.f32 %v6229, 0.0
        %v6294 = vmax.f32 %v6230, 0.0
        %v6295 = vmax.f32 %v6231, 0.0
        %v6296 = vmax.f32 %v6232, 0.0
        %v6297 = vmax.f32 %v6233, 0.0
        %v6298 = vmax.f32 %v6234, 0.0
        %v6299 = vmax.f32 %v6235, 0.0
        %v6300 = vmax.f32 %v6236, 0.0
        %v6301 = vmax.f32 %v6237, 0.0
        %v6302 = vmax.f32 %v6238, 0.0
        %v6303 = vmax.f32 %v6239, 0.0
        %v6304 = vmax.f32 %v6240, 0.0
        %v6305 = vmax.f32 %v6241, 0.0
        %v6306 = vmax.f32 %v6242, 0.0
        %v6307 = vmax.f32 %v6243, 0.0
        %v6308 = vmax.f32 %v6244, 0.0
        %v6309 = vmax.f32 %v6245, 0.0
        %v6310 = vmax.f32 %v6246, 0.0
        %v6311 = vmax.f32 %v6247, 0.0
        %v6312 = vmax.f32 %v6248, 0.0
        %v6313 = vmax.f32 %v6249, 0.0
        %v6314 = vmax.f32 %v6250, 0.0
        %v6315 = vmax.f32 %v6251, 0.0
        %v6316 = vmax.f32 %v6252, 0.0
        %v6317 = vmax.f32 %v6253, 0.0
        %v6318 = vmax.f32 %v6254, 0.0
        %v6319 = vmax.f32 %v6255, 0.0
        %v6320 = vmax.f32 %v6256, 0.0
        %v6321 = vmax.f32 %v6257, 0.0
        %v6322 = vmax.f32 %v6258, 0.0
        %v6323 = vmax.f32 %v6259, 0.0
        %v6324 = vmax.f32 %v6260, 0.0
        %v6325 = vmax.f32 %v6261, 0.0
        %v6326 = vmax.f32 %v6262, 0.0
        %v6327 = vmax.f32 %v6263, 0.0
        %v6328 = vmax.f32 %v6264, 0.0
        %v6329 = vmax.f32 %v6265, 0.0
        %v6330 = vmax.f32 %v6266, 0.0
        %v6331 = vmax.f32 %v6267, 0.0
        %v6332 = vmax.f32 %v6268, 0.0
        %v6333 = vmax.f32 %v6269, 0.0
        %v6334 = vmax.f32 %v6270, 0.0
        %v6335 = vmax.f32 %v6271, 0.0
        %v6336 = vmax.f32 %v6272, 0.0
        %v6337 = vmax.f32 %v6273, 0.0
        %v6338 = vmax.f32 %v6274, 0.0
        %v6339 = vmax.f32 %v6275, 0.0
        %v6340 = vmax.f32 %v6276, 0.0
        %v6341 = vmax.f32 %v6277, 0.0
        %v6342 = vmax.f32 %v6278, 0.0
        %v6343 = vmax.f32 %v6279, 0.0
        %v6344 = vmax.f32 %v6280, 0.0
        %v6345 = vmax.f32 %v6281, 0.0
        %v6346 = vmax.f32 %v6282, 0.0
        %v6347 = vmax.f32 %v6283, 0.0
        %v6348 = vmax.f32 %v6284, 0.0
        %v6349 = vmax.f32 %v6285, 0.0
        %v6350 = vmax.f32 %v6286, 0.0
        %v6351 = vmax.f32 %v6287, 0.0
        %v6352 = vmax.f32 %v6288, 0.0
        %v6353 = vmax.f32 %v6289, 0.0
        %s6354 = scalar_lea.vmem [#allocation5], 192
        %v6355 = vld [vmem:[%s6354] sm:$0xf]
        %v6356 = vld [vmem:[%s6354 + $0x4] sm:$0xf]
        %v6357 = vld [vmem:[%s6354 + $0x8] sm:$0xf]
        %v6358 = vld [vmem:[%s6354 + $0xc] sm:$0xf]
        %v6359 = vld [vmem:[%s6354 + $0x10] sm:$0xf]
        %v6360 = vld [vmem:[%s6354 + $0x14] sm:$0xf]
        %v6361 = vld [vmem:[%s6354 + $0x18] sm:$0xf]
        %v6362 = vld [vmem:[%s6354 + $0x1c] sm:$0xf]
        %v6363 = vld [vmem:[%s6354 + $0x20] sm:$0xf]
        %v6364 = vld [vmem:[%s6354 + $0x24] sm:$0xf]
        %v6365 = vld [vmem:[%s6354 + $0x28] sm:$0xf]
        %v6366 = vld [vmem:[%s6354 + $0x2c] sm:$0xf]
        %v6367 = vld [vmem:[%s6354 + $0x30] sm:$0xf]
        %v6368 = vld [vmem:[%s6354 + $0x34] sm:$0xf]
        %v6369 = vld [vmem:[%s6354 + $0x38] sm:$0xf]
        %v6370 = vld [vmem:[%s6354 + $0x3c] sm:$0xf]
        %s6371 = scalar_lea.vmem [#allocation11], 64
        %v6372 = vld [vmem:[%s6371] sm:$0xf]
        %v6373 = vld [vmem:[%s6371 + $0x4] sm:$0xf]
        %v6374 = vld [vmem:[%s6371 + $0x8] sm:$0xf]
        %v6375 = vld [vmem:[%s6371 + $0xc] sm:$0xf]
        %v6376 = vld [vmem:[%s6371 + $0x10] sm:$0xf]
        %v6377 = vld [vmem:[%s6371 + $0x14] sm:$0xf]
        %v6378 = vld [vmem:[%s6371 + $0x18] sm:$0xf]
        %v6379 = vld [vmem:[%s6371 + $0x1c] sm:$0xf]
        %v6380 = vld [vmem:[%s6371 + $0x20] sm:$0xf]
        %v6381 = vld [vmem:[%s6371 + $0x24] sm:$0xf]
        %v6382 = vld [vmem:[%s6371 + $0x28] sm:$0xf]
        %v6383 = vld [vmem:[%s6371 + $0x2c] sm:$0xf]
        %v6384 = vld [vmem:[%s6371 + $0x30] sm:$0xf]
        %v6385 = vld [vmem:[%s6371 + $0x34] sm:$0xf]
        %v6386 = vld [vmem:[%s6371 + $0x38] sm:$0xf]
        %v6387 = vld [vmem:[%s6371 + $0x3c] sm:$0xf]
        %v6404 = vunpack.c.l.b16 %v6372
        %v6405 = vunpack.c.l.b16 %v6373
        %v6406 = vunpack.c.l.b16 %v6374
        %v6407 = vunpack.c.l.b16 %v6375
        %v6408 = vunpack.c.l.b16 %v6376
        %v6409 = vunpack.c.l.b16 %v6377
        %v6410 = vunpack.c.l.b16 %v6378
        %v6411 = vunpack.c.l.b16 %v6379
        %v6412 = vunpack.c.l.b16 %v6380
        %v6413 = vunpack.c.l.b16 %v6381
        %v6414 = vunpack.c.l.b16 %v6382
        %v6415 = vunpack.c.l.b16 %v6383
        %v6416 = vunpack.c.l.b16 %v6384
        %v6417 = vunpack.c.l.b16 %v6385
        %v6418 = vunpack.c.l.b16 %v6386
        %v6419 = vunpack.c.l.b16 %v6387
        %v6420 = vpack.c.b16 %v6405, %v6404
        %v6421 = vpack.c.b16 %v6407, %v6406
        %v6422 = vpack.c.b16 %v6409, %v6408
        %v6423 = vpack.c.b16 %v6411, %v6410
        %v6424 = vpack.c.b16 %v6413, %v6412
        %v6425 = vpack.c.b16 %v6415, %v6414
        %v6426 = vpack.c.b16 %v6417, %v6416
        %v6427 = vpack.c.b16 %v6419, %v6418
        %6436 = vmatprep.subr.bf16.mxu0 0
        %6437 = vmatpush1.bf16.msra.mxu0 %v6427
        %6438 = vmatprep.subr.bf16.mxu0 0
        %6439 = vmatpush1.bf16.msra.mxu0 %v6426
        %6440 = vmatprep.subr.bf16.mxu0 0
        %6441 = vmatpush1.bf16.msra.mxu0 %v6425
        %6442 = vmatprep.subr.bf16.mxu0 0
        %6443 = vmatpush1.bf16.msra.mxu0 %v6424
        %6444 = vmatprep.subr.bf16.mxu0 0
        %6445 = vmatpush1.bf16.msra.mxu0 %v6423
        %6446 = vmatprep.subr.bf16.mxu0 0
        %6447 = vmatpush1.bf16.msra.mxu0 %v6422
        %6448 = vmatprep.subr.bf16.mxu0 0
        %6449 = vmatpush1.bf16.msra.mxu0 %v6421
        %6450 = vmatprep.subr.bf16.mxu0 0
        %6451 = vmatpush1.bf16.msra.mxu0 %v6420
        %6452 = vmatprep.subr.bf16.mxu0 0
        %6453 = vmatpush2.bf16.msra.mxu0 0
        %6454 = vmatprep.subr.bf16.mxu0 0
        %6455 = vmatpush2.bf16.msra.mxu0 0
        %6456 = vmatprep.subr.bf16.mxu0 0
        %6457 = vmatpush2.bf16.msra.mxu0 0
        %6458 = vmatprep.subr.bf16.mxu0 0
        %6459 = vmatpush2.bf16.msra.mxu0 0
        %6460 = vmatprep.subr.bf16.mxu0 0
        %6461 = vmatpush2.bf16.msra.mxu0 0
        %6462 = vmatprep.subr.bf16.mxu0 0
        %6463 = vmatpush2.bf16.msra.mxu0 0
        %6464 = vmatprep.subr.bf16.mxu0 0
        %6465 = vmatpush2.bf16.msra.mxu0 0
        %6466 = vmatprep.subr.bf16.mxu0 0
        %6467 = vmatpush2.bf16.msra.mxu0 0
        %6468 = vmatprep.mubr.bf16.mxu0 0
        %6469 = vmatmul.mubr.bf16.gmra.mxu0 %v5516
        %v6470 = vpop.f32.mrf.mxu0
        %v6471 = vadd.f32 0.0, %v6470
        %v6472 = vpop.f32.mrf.mxu0
        %v6473 = vpop.f32.mrf.mxu0
        %v6474 = vadd.f32 0.0, %v6473
        %v6475 = vpop.f32.mrf.mxu0
        %6476 = vmatprep.mubr.bf16.mxu0 0
        %6477 = vmatmul.mubr.bf16.gmra.mxu0 %v5517
        %v6478 = vpop.f32.mrf.mxu0
        %v6479 = vadd.f32 0.0, %v6478
        %v6480 = vpop.f32.mrf.mxu0
        %v6481 = vpop.f32.mrf.mxu0
        %v6482 = vadd.f32 0.0, %v6481
        %v6483 = vpop.f32.mrf.mxu0
        %6484 = vmatprep.mubr.bf16.mxu0 0
        %6485 = vmatmul.mubr.bf16.gmra.mxu0 %v5518
        %v6486 = vpop.f32.mrf.mxu0
        %v6487 = vadd.f32 0.0, %v6486
        %v6488 = vpop.f32.mrf.mxu0
        %v6489 = vpop.f32.mrf.mxu0
        %v6490 = vadd.f32 0.0, %v6489
        %v6491 = vpop.f32.mrf.mxu0
        %6492 = vmatprep.mubr.bf16.mxu0 0
        %6493 = vmatmul.mubr.bf16.gmra.mxu0 %v5519
        %v6494 = vpop.f32.mrf.mxu0
        %v6495 = vadd.f32 0.0, %v6494
        %v6496 = vpop.f32.mrf.mxu0
        %v6497 = vpop.f32.mrf.mxu0
        %v6498 = vadd.f32 0.0, %v6497
        %v6499 = vpop.f32.mrf.mxu0
        %6500 = vmatprep.mubr.bf16.mxu0 0
        %6501 = vmatmul.mubr.bf16.gmra.mxu0 %v5520
        %v6502 = vpop.f32.mrf.mxu0
        %v6503 = vadd.f32 0.0, %v6502
        %v6504 = vpop.f32.mrf.mxu0
        %v6505 = vpop.f32.mrf.mxu0
        %v6506 = vadd.f32 0.0, %v6505
        %v6507 = vpop.f32.mrf.mxu0
        %6508 = vmatprep.mubr.bf16.mxu0 0
        %6509 = vmatmul.mubr.bf16.gmra.mxu0 %v5521
        %v6510 = vpop.f32.mrf.mxu0
        %v6511 = vadd.f32 0.0, %v6510
        %v6512 = vpop.f32.mrf.mxu0
        %v6513 = vpop.f32.mrf.mxu0
        %v6514 = vadd.f32 0.0, %v6513
        %v6515 = vpop.f32.mrf.mxu0
        %6516 = vmatprep.mubr.bf16.mxu0 0
        %6517 = vmatmul.mubr.bf16.gmra.mxu0 %v5522
        %v6518 = vpop.f32.mrf.mxu0
        %v6519 = vadd.f32 0.0, %v6518
        %v6520 = vpop.f32.mrf.mxu0
        %v6521 = vpop.f32.mrf.mxu0
        %v6522 = vadd.f32 0.0, %v6521
        %v6523 = vpop.f32.mrf.mxu0
        %6524 = vmatprep.mubr.bf16.mxu0 0
        %6525 = vmatmul.mubr.bf16.gmra.mxu0 %v5523
        %v6526 = vpop.f32.mrf.mxu0
        %v6527 = vadd.f32 0.0, %v6526
        %v6528 = vpop.f32.mrf.mxu0
        %v6529 = vpop.f32.mrf.mxu0
        %v6530 = vadd.f32 0.0, %v6529
        %v6531 = vpop.f32.mrf.mxu0
        %6532 = vmatprep.mubr.bf16.mxu0 0
        %6533 = vmatmul.mubr.bf16.gmra.mxu0 %v5524
        %v6534 = vpop.f32.mrf.mxu0
        %v6535 = vadd.f32 0.0, %v6534
        %v6536 = vpop.f32.mrf.mxu0
        %v6537 = vpop.f32.mrf.mxu0
        %v6538 = vadd.f32 0.0, %v6537
        %v6539 = vpop.f32.mrf.mxu0
        %6540 = vmatprep.mubr.bf16.mxu0 0
        %6541 = vmatmul.mubr.bf16.gmra.mxu0 %v5525
        %v6542 = vpop.f32.mrf.mxu0
        %v6543 = vadd.f32 0.0, %v6542
        %v6544 = vpop.f32.mrf.mxu0
        %v6545 = vpop.f32.mrf.mxu0
        %v6546 = vadd.f32 0.0, %v6545
        %v6547 = vpop.f32.mrf.mxu0
        %6548 = vmatprep.mubr.bf16.mxu0 0
        %6549 = vmatmul.mubr.bf16.gmra.mxu0 %v5526
        %v6550 = vpop.f32.mrf.mxu0
        %v6551 = vadd.f32 0.0, %v6550
        %v6552 = vpop.f32.mrf.mxu0
        %v6553 = vpop.f32.mrf.mxu0
        %v6554 = vadd.f32 0.0, %v6553
        %v6555 = vpop.f32.mrf.mxu0
        %6556 = vmatprep.mubr.bf16.mxu0 0
        %6557 = vmatmul.mubr.bf16.gmra.mxu0 %v5527
        %v6558 = vpop.f32.mrf.mxu0
        %v6559 = vadd.f32 0.0, %v6558
        %v6560 = vpop.f32.mrf.mxu0
        %v6561 = vpop.f32.mrf.mxu0
        %v6562 = vadd.f32 0.0, %v6561
        %v6563 = vpop.f32.mrf.mxu0
        %6564 = vmatprep.mubr.bf16.mxu0 0
        %6565 = vmatmul.mubr.bf16.gmra.mxu0 %v5528
        %v6566 = vpop.f32.mrf.mxu0
        %v6567 = vadd.f32 0.0, %v6566
        %v6568 = vpop.f32.mrf.mxu0
        %v6569 = vpop.f32.mrf.mxu0
        %v6570 = vadd.f32 0.0, %v6569
        %v6571 = vpop.f32.mrf.mxu0
        %6572 = vmatprep.mubr.bf16.mxu0 0
        %6573 = vmatmul.mubr.bf16.gmra.mxu0 %v5529
        %v6574 = vpop.f32.mrf.mxu0
        %v6575 = vadd.f32 0.0, %v6574
        %v6576 = vpop.f32.mrf.mxu0
        %v6577 = vpop.f32.mrf.mxu0
        %v6578 = vadd.f32 0.0, %v6577
        %v6579 = vpop.f32.mrf.mxu0
        %6580 = vmatprep.mubr.bf16.mxu0 0
        %6581 = vmatmul.mubr.bf16.gmra.mxu0 %v5530
        %v6582 = vpop.f32.mrf.mxu0
        %v6583 = vadd.f32 0.0, %v6582
        %v6584 = vpop.f32.mrf.mxu0
        %v6585 = vpop.f32.mrf.mxu0
        %v6586 = vadd.f32 0.0, %v6585
        %v6587 = vpop.f32.mrf.mxu0
        %6588 = vmatprep.mubr.bf16.mxu0 0
        %6589 = vmatmul.mubr.bf16.gmra.mxu0 %v5531
        %v6590 = vpop.f32.mrf.mxu0
        %v6591 = vadd.f32 0.0, %v6590
        %v6592 = vpop.f32.mrf.mxu0
        %v6593 = vpop.f32.mrf.mxu0
        %v6594 = vadd.f32 0.0, %v6593
        %v6595 = vpop.f32.mrf.mxu0
        %6596 = vmatprep.mubr.bf16.mxu0 0
        %6597 = vmatmul.mubr.bf16.gmra.mxu0 %v5532
        %v6598 = vpop.f32.mrf.mxu0
        %v6599 = vadd.f32 0.0, %v6598
        %v6600 = vpop.f32.mrf.mxu0
        %v6601 = vpop.f32.mrf.mxu0
        %v6602 = vadd.f32 0.0, %v6601
        %v6603 = vpop.f32.mrf.mxu0
        %6604 = vmatprep.mubr.bf16.mxu0 0
        %6605 = vmatmul.mubr.bf16.gmra.mxu0 %v5533
        %v6606 = vpop.f32.mrf.mxu0
        %v6607 = vadd.f32 0.0, %v6606
        %v6608 = vpop.f32.mrf.mxu0
        %v6609 = vpop.f32.mrf.mxu0
        %v6610 = vadd.f32 0.0, %v6609
        %v6611 = vpop.f32.mrf.mxu0
        %6612 = vmatprep.mubr.bf16.mxu0 0
        %6613 = vmatmul.mubr.bf16.gmra.mxu0 %v5534
        %v6614 = vpop.f32.mrf.mxu0
        %v6615 = vadd.f32 0.0, %v6614
        %v6616 = vpop.f32.mrf.mxu0
        %v6617 = vpop.f32.mrf.mxu0
        %v6618 = vadd.f32 0.0, %v6617
        %v6619 = vpop.f32.mrf.mxu0
        %6620 = vmatprep.mubr.bf16.mxu0 0
        %6621 = vmatmul.mubr.bf16.gmra.mxu0 %v5535
        %v6622 = vpop.f32.mrf.mxu0
        %v6623 = vadd.f32 0.0, %v6622
        %v6624 = vpop.f32.mrf.mxu0
        %v6625 = vpop.f32.mrf.mxu0
        %v6626 = vadd.f32 0.0, %v6625
        %v6627 = vpop.f32.mrf.mxu0
        %6628 = vmatprep.mubr.bf16.mxu0 0
        %6629 = vmatmul.mubr.bf16.gmra.mxu0 %v5536
        %v6630 = vpop.f32.mrf.mxu0
        %v6631 = vadd.f32 0.0, %v6630
        %v6632 = vpop.f32.mrf.mxu0
        %v6633 = vpop.f32.mrf.mxu0
        %v6634 = vadd.f32 0.0, %v6633
        %v6635 = vpop.f32.mrf.mxu0
        %6636 = vmatprep.mubr.bf16.mxu0 0
        %6637 = vmatmul.mubr.bf16.gmra.mxu0 %v5537
        %v6638 = vpop.f32.mrf.mxu0
        %v6639 = vadd.f32 0.0, %v6638
        %v6640 = vpop.f32.mrf.mxu0
        %v6641 = vpop.f32.mrf.mxu0
        %v6642 = vadd.f32 0.0, %v6641
        %v6643 = vpop.f32.mrf.mxu0
        %6644 = vmatprep.mubr.bf16.mxu0 0
        %6645 = vmatmul.mubr.bf16.gmra.mxu0 %v5538
        %v6646 = vpop.f32.mrf.mxu0
        %v6647 = vadd.f32 0.0, %v6646
        %v6648 = vpop.f32.mrf.mxu0
        %v6649 = vpop.f32.mrf.mxu0
        %v6650 = vadd.f32 0.0, %v6649
        %v6651 = vpop.f32.mrf.mxu0
        %6652 = vmatprep.mubr.bf16.mxu0 0
        %6653 = vmatmul.mubr.bf16.gmra.mxu0 %v5539
        %v6654 = vpop.f32.mrf.mxu0
        %v6655 = vadd.f32 0.0, %v6654
        %v6656 = vpop.f32.mrf.mxu0
        %v6657 = vpop.f32.mrf.mxu0
        %v6658 = vadd.f32 0.0, %v6657
        %v6659 = vpop.f32.mrf.mxu0
        %6660 = vmatprep.mubr.bf16.mxu0 0
        %6661 = vmatmul.mubr.bf16.gmra.mxu0 %v5540
        %v6662 = vpop.f32.mrf.mxu0
        %v6663 = vadd.f32 0.0, %v6662
        %v6664 = vpop.f32.mrf.mxu0
        %v6665 = vpop.f32.mrf.mxu0
        %v6666 = vadd.f32 0.0, %v6665
        %v6667 = vpop.f32.mrf.mxu0
        %6668 = vmatprep.mubr.bf16.mxu0 0
        %6669 = vmatmul.mubr.bf16.gmra.mxu0 %v5541
        %v6670 = vpop.f32.mrf.mxu0
        %v6671 = vadd.f32 0.0, %v6670
        %v6672 = vpop.f32.mrf.mxu0
        %v6673 = vpop.f32.mrf.mxu0
        %v6674 = vadd.f32 0.0, %v6673
        %v6675 = vpop.f32.mrf.mxu0
        %6676 = vmatprep.mubr.bf16.mxu0 0
        %6677 = vmatmul.mubr.bf16.gmra.mxu0 %v5542
        %v6678 = vpop.f32.mrf.mxu0
        %v6679 = vadd.f32 0.0, %v6678
        %v6680 = vpop.f32.mrf.mxu0
        %v6681 = vpop.f32.mrf.mxu0
        %v6682 = vadd.f32 0.0, %v6681
        %v6683 = vpop.f32.mrf.mxu0
        %6684 = vmatprep.mubr.bf16.mxu0 0
        %6685 = vmatmul.mubr.bf16.gmra.mxu0 %v5543
        %v6686 = vpop.f32.mrf.mxu0
        %v6687 = vadd.f32 0.0, %v6686
        %v6688 = vpop.f32.mrf.mxu0
        %v6689 = vpop.f32.mrf.mxu0
        %v6690 = vadd.f32 0.0, %v6689
        %v6691 = vpop.f32.mrf.mxu0
        %6692 = vmatprep.mubr.bf16.mxu0 0
        %6693 = vmatmul.mubr.bf16.gmra.mxu0 %v5544
        %v6694 = vpop.f32.mrf.mxu0
        %v6695 = vadd.f32 0.0, %v6694
        %v6696 = vpop.f32.mrf.mxu0
        %v6697 = vpop.f32.mrf.mxu0
        %v6698 = vadd.f32 0.0, %v6697
        %v6699 = vpop.f32.mrf.mxu0
        %6700 = vmatprep.mubr.bf16.mxu0 0
        %6701 = vmatmul.mubr.bf16.gmra.mxu0 %v5545
        %v6702 = vpop.f32.mrf.mxu0
        %v6703 = vadd.f32 0.0, %v6702
        %v6704 = vpop.f32.mrf.mxu0
        %v6705 = vpop.f32.mrf.mxu0
        %v6706 = vadd.f32 0.0, %v6705
        %v6707 = vpop.f32.mrf.mxu0
        %6708 = vmatprep.mubr.bf16.mxu0 0
        %6709 = vmatmul.mubr.bf16.gmra.mxu0 %v5546
        %v6710 = vpop.f32.mrf.mxu0
        %v6711 = vadd.f32 0.0, %v6710
        %v6712 = vpop.f32.mrf.mxu0
        %v6713 = vpop.f32.mrf.mxu0
        %v6714 = vadd.f32 0.0, %v6713
        %v6715 = vpop.f32.mrf.mxu0
        %6716 = vmatprep.mubr.bf16.mxu0 0
        %6717 = vmatmul.mubr.bf16.gmra.mxu0 %v5547
        %v6718 = vpop.f32.mrf.mxu0
        %v6719 = vadd.f32 0.0, %v6718
        %v6720 = vpop.f32.mrf.mxu0
        %v6721 = vpop.f32.mrf.mxu0
        %v6722 = vadd.f32 0.0, %v6721
        %v6723 = vpop.f32.mrf.mxu0
        %6724 = vdwg.mxu0
        %v6741 = vunpack.c.l.b16 %v6355
        %v6742 = vunpack.c.l.b16 %v6356
        %v6743 = vunpack.c.l.b16 %v6357
        %v6744 = vunpack.c.l.b16 %v6358
        %v6745 = vunpack.c.l.b16 %v6359
        %v6746 = vunpack.c.l.b16 %v6360
        %v6747 = vunpack.c.l.b16 %v6361
        %v6748 = vunpack.c.l.b16 %v6362
        %v6749 = vunpack.c.l.b16 %v6363
        %v6750 = vunpack.c.l.b16 %v6364
        %v6751 = vunpack.c.l.b16 %v6365
        %v6752 = vunpack.c.l.b16 %v6366
        %v6753 = vunpack.c.l.b16 %v6367
        %v6754 = vunpack.c.l.b16 %v6368
        %v6755 = vunpack.c.l.b16 %v6369
        %v6756 = vunpack.c.l.b16 %v6370
        %v6757 = vpack.c.b16 %v6742, %v6741
        %v6758 = vpack.c.b16 %v6744, %v6743
        %v6759 = vpack.c.b16 %v6746, %v6745
        %v6760 = vpack.c.b16 %v6748, %v6747
        %v6761 = vpack.c.b16 %v6750, %v6749
        %v6762 = vpack.c.b16 %v6752, %v6751
        %v6763 = vpack.c.b16 %v6754, %v6753
        %v6764 = vpack.c.b16 %v6756, %v6755
        %6773 = vmatprep.subr.bf16.mxu0 0
        %6774 = vmatpush1.bf16.msra.mxu0 %v6764
        %6775 = vmatprep.subr.bf16.mxu0 0
        %6776 = vmatpush1.bf16.msra.mxu0 %v6763
        %6777 = vmatprep.subr.bf16.mxu0 0
        %6778 = vmatpush1.bf16.msra.mxu0 %v6762
        %6779 = vmatprep.subr.bf16.mxu0 0
        %6780 = vmatpush1.bf16.msra.mxu0 %v6761
        %6781 = vmatprep.subr.bf16.mxu0 0
        %6782 = vmatpush1.bf16.msra.mxu0 %v6760
        %6783 = vmatprep.subr.bf16.mxu0 0
        %6784 = vmatpush1.bf16.msra.mxu0 %v6759
        %6785 = vmatprep.subr.bf16.mxu0 0
        %6786 = vmatpush1.bf16.msra.mxu0 %v6758
        %6787 = vmatprep.subr.bf16.mxu0 0
        %6788 = vmatpush1.bf16.msra.mxu0 %v6757
        %6789 = vmatprep.subr.bf16.mxu0 0
        %6790 = vmatpush2.bf16.msra.mxu0 0
        %6791 = vmatprep.subr.bf16.mxu0 0
        %6792 = vmatpush2.bf16.msra.mxu0 0
        %6793 = vmatprep.subr.bf16.mxu0 0
        %6794 = vmatpush2.bf16.msra.mxu0 0
        %6795 = vmatprep.subr.bf16.mxu0 0
        %6796 = vmatpush2.bf16.msra.mxu0 0
        %6797 = vmatprep.subr.bf16.mxu0 0
        %6798 = vmatpush2.bf16.msra.mxu0 0
        %6799 = vmatprep.subr.bf16.mxu0 0
        %6800 = vmatpush2.bf16.msra.mxu0 0
        %6801 = vmatprep.subr.bf16.mxu0 0
        %6802 = vmatpush2.bf16.msra.mxu0 0
        %6803 = vmatprep.subr.bf16.mxu0 0
        %6804 = vmatpush2.bf16.msra.mxu0 0
        %6805 = vmatprep.mubr.bf16.mxu0 0
        %6806 = vmatmul.mubr.bf16.gmra.mxu0 %v695
        %v6807 = vpop.f32.mrf.mxu0
        %v6808 = vadd.f32 %v6471, %v6807
        %v6809 = vpop.f32.mrf.mxu0
        %v6810 = vpop.f32.mrf.mxu0
        %v6811 = vadd.f32 %v6474, %v6810
        %v6812 = vpop.f32.mrf.mxu0
        %6813 = vmatprep.mubr.bf16.mxu0 0
        %6814 = vmatmul.mubr.bf16.gmra.mxu0 %v696
        %v6815 = vpop.f32.mrf.mxu0
        %v6816 = vadd.f32 %v6479, %v6815
        %v6817 = vpop.f32.mrf.mxu0
        %v6818 = vpop.f32.mrf.mxu0
        %v6819 = vadd.f32 %v6482, %v6818
        %v6820 = vpop.f32.mrf.mxu0
        %6821 = vmatprep.mubr.bf16.mxu0 0
        %6822 = vmatmul.mubr.bf16.gmra.mxu0 %v697
        %v6823 = vpop.f32.mrf.mxu0
        %v6824 = vadd.f32 %v6487, %v6823
        %v6825 = vpop.f32.mrf.mxu0
        %v6826 = vpop.f32.mrf.mxu0
        %v6827 = vadd.f32 %v6490, %v6826
        %v6828 = vpop.f32.mrf.mxu0
        %6829 = vmatprep.mubr.bf16.mxu0 0
        %6830 = vmatmul.mubr.bf16.gmra.mxu0 %v698
        %v6831 = vpop.f32.mrf.mxu0
        %v6832 = vadd.f32 %v6495, %v6831
        %v6833 = vpop.f32.mrf.mxu0
        %v6834 = vpop.f32.mrf.mxu0
        %v6835 = vadd.f32 %v6498, %v6834
        %v6836 = vpop.f32.mrf.mxu0
        %6837 = vmatprep.mubr.bf16.mxu0 0
        %6838 = vmatmul.mubr.bf16.gmra.mxu0 %v699
        %v6839 = vpop.f32.mrf.mxu0
        %v6840 = vadd.f32 %v6503, %v6839
        %v6841 = vpop.f32.mrf.mxu0
        %v6842 = vpop.f32.mrf.mxu0
        %v6843 = vadd.f32 %v6506, %v6842
        %v6844 = vpop.f32.mrf.mxu0
        %6845 = vmatprep.mubr.bf16.mxu0 0
        %6846 = vmatmul.mubr.bf16.gmra.mxu0 %v700
        %v6847 = vpop.f32.mrf.mxu0
        %v6848 = vadd.f32 %v6511, %v6847
        %v6849 = vpop.f32.mrf.mxu0
        %v6850 = vpop.f32.mrf.mxu0
        %v6851 = vadd.f32 %v6514, %v6850
        %v6852 = vpop.f32.mrf.mxu0
        %6853 = vmatprep.mubr.bf16.mxu0 0
        %6854 = vmatmul.mubr.bf16.gmra.mxu0 %v701
        %v6855 = vpop.f32.mrf.mxu0
        %v6856 = vadd.f32 %v6519, %v6855
        %v6857 = vpop.f32.mrf.mxu0
        %v6858 = vpop.f32.mrf.mxu0
        %v6859 = vadd.f32 %v6522, %v6858
        %v6860 = vpop.f32.mrf.mxu0
        %6861 = vmatprep.mubr.bf16.mxu0 0
        %6862 = vmatmul.mubr.bf16.gmra.mxu0 %v702
        %v6863 = vpop.f32.mrf.mxu0
        %v6864 = vadd.f32 %v6527, %v6863
        %v6865 = vpop.f32.mrf.mxu0
        %v6866 = vpop.f32.mrf.mxu0
        %v6867 = vadd.f32 %v6530, %v6866
        %v6868 = vpop.f32.mrf.mxu0
        %6869 = vmatprep.mubr.bf16.mxu0 0
        %6870 = vmatmul.mubr.bf16.gmra.mxu0 %v703
        %v6871 = vpop.f32.mrf.mxu0
        %v6872 = vadd.f32 %v6535, %v6871
        %v6873 = vpop.f32.mrf.mxu0
        %v6874 = vpop.f32.mrf.mxu0
        %v6875 = vadd.f32 %v6538, %v6874
        %v6876 = vpop.f32.mrf.mxu0
        %6877 = vmatprep.mubr.bf16.mxu0 0
        %6878 = vmatmul.mubr.bf16.gmra.mxu0 %v704
        %v6879 = vpop.f32.mrf.mxu0
        %v6880 = vadd.f32 %v6543, %v6879
        %v6881 = vpop.f32.mrf.mxu0
        %v6882 = vpop.f32.mrf.mxu0
        %v6883 = vadd.f32 %v6546, %v6882
        %v6884 = vpop.f32.mrf.mxu0
        %6885 = vmatprep.mubr.bf16.mxu0 0
        %6886 = vmatmul.mubr.bf16.gmra.mxu0 %v705
        %v6887 = vpop.f32.mrf.mxu0
        %v6888 = vadd.f32 %v6551, %v6887
        %v6889 = vpop.f32.mrf.mxu0
        %v6890 = vpop.f32.mrf.mxu0
        %v6891 = vadd.f32 %v6554, %v6890
        %v6892 = vpop.f32.mrf.mxu0
        %6893 = vmatprep.mubr.bf16.mxu0 0
        %6894 = vmatmul.mubr.bf16.gmra.mxu0 %v706
        %v6895 = vpop.f32.mrf.mxu0
        %v6896 = vadd.f32 %v6559, %v6895
        %v6897 = vpop.f32.mrf.mxu0
        %v6898 = vpop.f32.mrf.mxu0
        %v6899 = vadd.f32 %v6562, %v6898
        %v6900 = vpop.f32.mrf.mxu0
        %6901 = vmatprep.mubr.bf16.mxu0 0
        %6902 = vmatmul.mubr.bf16.gmra.mxu0 %v707
        %v6903 = vpop.f32.mrf.mxu0
        %v6904 = vadd.f32 %v6567, %v6903
        %v6905 = vpop.f32.mrf.mxu0
        %v6906 = vpop.f32.mrf.mxu0
        %v6907 = vadd.f32 %v6570, %v6906
        %v6908 = vpop.f32.mrf.mxu0
        %6909 = vmatprep.mubr.bf16.mxu0 0
        %6910 = vmatmul.mubr.bf16.gmra.mxu0 %v708
        %v6911 = vpop.f32.mrf.mxu0
        %v6912 = vadd.f32 %v6575, %v6911
        %v6913 = vpop.f32.mrf.mxu0
        %v6914 = vpop.f32.mrf.mxu0
        %v6915 = vadd.f32 %v6578, %v6914
        %v6916 = vpop.f32.mrf.mxu0
        %6917 = vmatprep.mubr.bf16.mxu0 0
        %6918 = vmatmul.mubr.bf16.gmra.mxu0 %v709
        %v6919 = vpop.f32.mrf.mxu0
        %v6920 = vadd.f32 %v6583, %v6919
        %v6921 = vpop.f32.mrf.mxu0
        %v6922 = vpop.f32.mrf.mxu0
        %v6923 = vadd.f32 %v6586, %v6922
        %v6924 = vpop.f32.mrf.mxu0
        %6925 = vmatprep.mubr.bf16.mxu0 0
        %6926 = vmatmul.mubr.bf16.gmra.mxu0 %v710
        %v6927 = vpop.f32.mrf.mxu0
        %v6928 = vadd.f32 %v6591, %v6927
        %v6929 = vpop.f32.mrf.mxu0
        %v6930 = vpop.f32.mrf.mxu0
        %v6931 = vadd.f32 %v6594, %v6930
        %v6932 = vpop.f32.mrf.mxu0
        %6933 = vmatprep.mubr.bf16.mxu0 0
        %6934 = vmatmul.mubr.bf16.gmra.mxu0 %v711
        %v6935 = vpop.f32.mrf.mxu0
        %v6936 = vadd.f32 %v6599, %v6935
        %v6937 = vpop.f32.mrf.mxu0
        %v6938 = vpop.f32.mrf.mxu0
        %v6939 = vadd.f32 %v6602, %v6938
        %v6940 = vpop.f32.mrf.mxu0
        %6941 = vmatprep.mubr.bf16.mxu0 0
        %6942 = vmatmul.mubr.bf16.gmra.mxu0 %v712
        %v6943 = vpop.f32.mrf.mxu0
        %v6944 = vadd.f32 %v6607, %v6943
        %v6945 = vpop.f32.mrf.mxu0
        %v6946 = vpop.f32.mrf.mxu0
        %v6947 = vadd.f32 %v6610, %v6946
        %v6948 = vpop.f32.mrf.mxu0
        %6949 = vmatprep.mubr.bf16.mxu0 0
        %6950 = vmatmul.mubr.bf16.gmra.mxu0 %v713
        %v6951 = vpop.f32.mrf.mxu0
        %v6952 = vadd.f32 %v6615, %v6951
        %v6953 = vpop.f32.mrf.mxu0
        %v6954 = vpop.f32.mrf.mxu0
        %v6955 = vadd.f32 %v6618, %v6954
        %v6956 = vpop.f32.mrf.mxu0
        %6957 = vmatprep.mubr.bf16.mxu0 0
        %6958 = vmatmul.mubr.bf16.gmra.mxu0 %v714
        %v6959 = vpop.f32.mrf.mxu0
        %v6960 = vadd.f32 %v6623, %v6959
        %v6961 = vpop.f32.mrf.mxu0
        %v6962 = vpop.f32.mrf.mxu0
        %v6963 = vadd.f32 %v6626, %v6962
        %v6964 = vpop.f32.mrf.mxu0
        %6965 = vmatprep.mubr.bf16.mxu0 0
        %6966 = vmatmul.mubr.bf16.gmra.mxu0 %v715
        %v6967 = vpop.f32.mrf.mxu0
        %v6968 = vadd.f32 %v6631, %v6967
        %v6969 = vpop.f32.mrf.mxu0
        %v6970 = vpop.f32.mrf.mxu0
        %v6971 = vadd.f32 %v6634, %v6970
        %v6972 = vpop.f32.mrf.mxu0
        %6973 = vmatprep.mubr.bf16.mxu0 0
        %6974 = vmatmul.mubr.bf16.gmra.mxu0 %v716
        %v6975 = vpop.f32.mrf.mxu0
        %v6976 = vadd.f32 %v6639, %v6975
        %v6977 = vpop.f32.mrf.mxu0
        %v6978 = vpop.f32.mrf.mxu0
        %v6979 = vadd.f32 %v6642, %v6978
        %v6980 = vpop.f32.mrf.mxu0
        %6981 = vmatprep.mubr.bf16.mxu0 0
        %6982 = vmatmul.mubr.bf16.gmra.mxu0 %v717
        %v6983 = vpop.f32.mrf.mxu0
        %v6984 = vadd.f32 %v6647, %v6983
        %v6985 = vpop.f32.mrf.mxu0
        %v6986 = vpop.f32.mrf.mxu0
        %v6987 = vadd.f32 %v6650, %v6986
        %v6988 = vpop.f32.mrf.mxu0
        %6989 = vmatprep.mubr.bf16.mxu0 0
        %6990 = vmatmul.mubr.bf16.gmra.mxu0 %v718
        %v6991 = vpop.f32.mrf.mxu0
        %v6992 = vadd.f32 %v6655, %v6991
        %v6993 = vpop.f32.mrf.mxu0
        %v6994 = vpop.f32.mrf.mxu0
        %v6995 = vadd.f32 %v6658, %v6994
        %v6996 = vpop.f32.mrf.mxu0
        %6997 = vmatprep.mubr.bf16.mxu0 0
        %6998 = vmatmul.mubr.bf16.gmra.mxu0 %v719
        %v6999 = vpop.f32.mrf.mxu0
        %v7000 = vadd.f32 %v6663, %v6999
        %v7001 = vpop.f32.mrf.mxu0
        %v7002 = vpop.f32.mrf.mxu0
        %v7003 = vadd.f32 %v6666, %v7002
        %v7004 = vpop.f32.mrf.mxu0
        %7005 = vmatprep.mubr.bf16.mxu0 0
        %7006 = vmatmul.mubr.bf16.gmra.mxu0 %v720
        %v7007 = vpop.f32.mrf.mxu0
        %v7008 = vadd.f32 %v6671, %v7007
        %v7009 = vpop.f32.mrf.mxu0
        %v7010 = vpop.f32.mrf.mxu0
        %v7011 = vadd.f32 %v6674, %v7010
        %v7012 = vpop.f32.mrf.mxu0
        %7013 = vmatprep.mubr.bf16.mxu0 0
        %7014 = vmatmul.mubr.bf16.gmra.mxu0 %v721
        %v7015 = vpop.f32.mrf.mxu0
        %v7016 = vadd.f32 %v6679, %v7015
        %v7017 = vpop.f32.mrf.mxu0
        %v7018 = vpop.f32.mrf.mxu0
        %v7019 = vadd.f32 %v6682, %v7018
        %v7020 = vpop.f32.mrf.mxu0
        %7021 = vmatprep.mubr.bf16.mxu0 0
        %7022 = vmatmul.mubr.bf16.gmra.mxu0 %v722
        %v7023 = vpop.f32.mrf.mxu0
        %v7024 = vadd.f32 %v6687, %v7023
        %v7025 = vpop.f32.mrf.mxu0
        %v7026 = vpop.f32.mrf.mxu0
        %v7027 = vadd.f32 %v6690, %v7026
        %v7028 = vpop.f32.mrf.mxu0
        %7029 = vmatprep.mubr.bf16.mxu0 0
        %7030 = vmatmul.mubr.bf16.gmra.mxu0 %v723
        %v7031 = vpop.f32.mrf.mxu0
        %v7032 = vadd.f32 %v6695, %v7031
        %v7033 = vpop.f32.mrf.mxu0
        %v7034 = vpop.f32.mrf.mxu0
        %v7035 = vadd.f32 %v6698, %v7034
        %v7036 = vpop.f32.mrf.mxu0
        %7037 = vmatprep.mubr.bf16.mxu0 0
        %7038 = vmatmul.mubr.bf16.gmra.mxu0 %v724
        %v7039 = vpop.f32.mrf.mxu0
        %v7040 = vadd.f32 %v6703, %v7039
        %v7041 = vpop.f32.mrf.mxu0
        %v7042 = vpop.f32.mrf.mxu0
        %v7043 = vadd.f32 %v6706, %v7042
        %v7044 = vpop.f32.mrf.mxu0
        %7045 = vmatprep.mubr.bf16.mxu0 0
        %7046 = vmatmul.mubr.bf16.gmra.mxu0 %v725
        %v7047 = vpop.f32.mrf.mxu0
        %v7048 = vadd.f32 %v6711, %v7047
        %v7049 = vpop.f32.mrf.mxu0
        %v7050 = vpop.f32.mrf.mxu0
        %v7051 = vadd.f32 %v6714, %v7050
        %v7052 = vpop.f32.mrf.mxu0
        %7053 = vmatprep.mubr.bf16.mxu0 0
        %7054 = vmatmul.mubr.bf16.gmra.mxu0 %v726
        %v7055 = vpop.f32.mrf.mxu0
        %v7056 = vadd.f32 %v6719, %v7055
        %v7057 = vpop.f32.mrf.mxu0
        %v7058 = vpop.f32.mrf.mxu0
        %v7059 = vadd.f32 %v6722, %v7058
        %v7060 = vpop.f32.mrf.mxu0
        %7061 = vdwg.mxu0
        %v7062 = vlaneseq
        %v7063 = vshrl.u32 %v7062, 7
        %v7064 = vsub.s32 5, %v7063
        %v7065 = vrot.slane %v545, %v7064
        %v7066 = vadd.f32 %v6808, %v7065
        %v7067 = vadd.f32 %v6811, %v7065
        %v7068 = vadd.f32 %v6816, %v7065
        %v7069 = vadd.f32 %v6819, %v7065
        %v7070 = vadd.f32 %v6824, %v7065
        %v7071 = vadd.f32 %v6827, %v7065
        %v7072 = vadd.f32 %v6832, %v7065
        %v7073 = vadd.f32 %v6835, %v7065
        %v7074 = vadd.f32 %v6840, %v7065
        %v7075 = vadd.f32 %v6843, %v7065
        %v7076 = vadd.f32 %v6848, %v7065
        %v7077 = vadd.f32 %v6851, %v7065
        %v7078 = vadd.f32 %v6856, %v7065
        %v7079 = vadd.f32 %v6859, %v7065
        %v7080 = vadd.f32 %v6864, %v7065
        %v7081 = vadd.f32 %v6867, %v7065
        %v7082 = vadd.f32 %v6872, %v7065
        %v7083 = vadd.f32 %v6875, %v7065
        %v7084 = vadd.f32 %v6880, %v7065
        %v7085 = vadd.f32 %v6883, %v7065
        %v7086 = vadd.f32 %v6888, %v7065
        %v7087 = vadd.f32 %v6891, %v7065
        %v7088 = vadd.f32 %v6896, %v7065
        %v7089 = vadd.f32 %v6899, %v7065
        %v7090 = vadd.f32 %v6904, %v7065
        %v7091 = vadd.f32 %v6907, %v7065
        %v7092 = vadd.f32 %v6912, %v7065
        %v7093 = vadd.f32 %v6915, %v7065
        %v7094 = vadd.f32 %v6920, %v7065
        %v7095 = vadd.f32 %v6923, %v7065
        %v7096 = vadd.f32 %v6928, %v7065
        %v7097 = vadd.f32 %v6931, %v7065
        %v7098 = vadd.f32 %v6936, %v7065
        %v7099 = vadd.f32 %v6939, %v7065
        %v7100 = vadd.f32 %v6944, %v7065
        %v7101 = vadd.f32 %v6947, %v7065
        %v7102 = vadd.f32 %v6952, %v7065
        %v7103 = vadd.f32 %v6955, %v7065
        %v7104 = vadd.f32 %v6960, %v7065
        %v7105 = vadd.f32 %v6963, %v7065
        %v7106 = vadd.f32 %v6968, %v7065
        %v7107 = vadd.f32 %v6971, %v7065
        %v7108 = vadd.f32 %v6976, %v7065
        %v7109 = vadd.f32 %v6979, %v7065
        %v7110 = vadd.f32 %v6984, %v7065
        %v7111 = vadd.f32 %v6987, %v7065
        %v7112 = vadd.f32 %v6992, %v7065
        %v7113 = vadd.f32 %v6995, %v7065
        %v7114 = vadd.f32 %v7000, %v7065
        %v7115 = vadd.f32 %v7003, %v7065
        %v7116 = vadd.f32 %v7008, %v7065
        %v7117 = vadd.f32 %v7011, %v7065
        %v7118 = vadd.f32 %v7016, %v7065
        %v7119 = vadd.f32 %v7019, %v7065
        %v7120 = vadd.f32 %v7024, %v7065
        %v7121 = vadd.f32 %v7027, %v7065
        %v7122 = vadd.f32 %v7032, %v7065
        %v7123 = vadd.f32 %v7035, %v7065
        %v7124 = vadd.f32 %v7040, %v7065
        %v7125 = vadd.f32 %v7043, %v7065
        %v7126 = vadd.f32 %v7048, %v7065
        %v7127 = vadd.f32 %v7051, %v7065
        %v7128 = vadd.f32 %v7056, %v7065
        %v7129 = vadd.f32 %v7059, %v7065
        %v7130 = vmax.f32 %v7066, 0.0
        %v7131 = vmax.f32 %v7067, 0.0
        %v7132 = vmax.f32 %v7068, 0.0
        %v7133 = vmax.f32 %v7069, 0.0
        %v7134 = vmax.f32 %v7070, 0.0
        %v7135 = vmax.f32 %v7071, 0.0
        %v7136 = vmax.f32 %v7072, 0.0
        %v7137 = vmax.f32 %v7073, 0.0
        %v7138 = vmax.f32 %v7074, 0.0
        %v7139 = vmax.f32 %v7075, 0.0
        %v7140 = vmax.f32 %v7076, 0.0
        %v7141 = vmax.f32 %v7077, 0.0
        %v7142 = vmax.f32 %v7078, 0.0
        %v7143 = vmax.f32 %v7079, 0.0
        %v7144 = vmax.f32 %v7080, 0.0
        %v7145 = vmax.f32 %v7081, 0.0
        %v7146 = vmax.f32 %v7082, 0.0
        %v7147 = vmax.f32 %v7083, 0.0
        %v7148 = vmax.f32 %v7084, 0.0
        %v7149 = vmax.f32 %v7085, 0.0
        %v7150 = vmax.f32 %v7086, 0.0
        %v7151 = vmax.f32 %v7087, 0.0
        %v7152 = vmax.f32 %v7088, 0.0
        %v7153 = vmax.f32 %v7089, 0.0
        %v7154 = vmax.f32 %v7090, 0.0
        %v7155 = vmax.f32 %v7091, 0.0
        %v7156 = vmax.f32 %v7092, 0.0
        %v7157 = vmax.f32 %v7093, 0.0
        %v7158 = vmax.f32 %v7094, 0.0
        %v7159 = vmax.f32 %v7095, 0.0
        %v7160 = vmax.f32 %v7096, 0.0
        %v7161 = vmax.f32 %v7097, 0.0
        %v7162 = vmax.f32 %v7098, 0.0
        %v7163 = vmax.f32 %v7099, 0.0
        %v7164 = vmax.f32 %v7100, 0.0
        %v7165 = vmax.f32 %v7101, 0.0
        %v7166 = vmax.f32 %v7102, 0.0
        %v7167 = vmax.f32 %v7103, 0.0
        %v7168 = vmax.f32 %v7104, 0.0
        %v7169 = vmax.f32 %v7105, 0.0
        %v7170 = vmax.f32 %v7106, 0.0
        %v7171 = vmax.f32 %v7107, 0.0
        %v7172 = vmax.f32 %v7108, 0.0
        %v7173 = vmax.f32 %v7109, 0.0
        %v7174 = vmax.f32 %v7110, 0.0
        %v7175 = vmax.f32 %v7111, 0.0
        %v7176 = vmax.f32 %v7112, 0.0
        %v7177 = vmax.f32 %v7113, 0.0
        %v7178 = vmax.f32 %v7114, 0.0
        %v7179 = vmax.f32 %v7115, 0.0
        %v7180 = vmax.f32 %v7116, 0.0
        %v7181 = vmax.f32 %v7117, 0.0
        %v7182 = vmax.f32 %v7118, 0.0
        %v7183 = vmax.f32 %v7119, 0.0
        %v7184 = vmax.f32 %v7120, 0.0
        %v7185 = vmax.f32 %v7121, 0.0
        %v7186 = vmax.f32 %v7122, 0.0
        %v7187 = vmax.f32 %v7123, 0.0
        %v7188 = vmax.f32 %v7124, 0.0
        %v7189 = vmax.f32 %v7125, 0.0
        %v7190 = vmax.f32 %v7126, 0.0
        %v7191 = vmax.f32 %v7127, 0.0
        %v7192 = vmax.f32 %v7128, 0.0
        %v7193 = vmax.f32 %v7129, 0.0
        %v7194 = vld [vmem:[#allocation13] sm:$0xf]
        %v7195 = vld [vmem:[#allocation13 + $0x4] sm:$0xf]
        %v7196 = vld [vmem:[#allocation13 + $0x8] sm:$0xf]
        %v7197 = vld [vmem:[#allocation13 + $0xc] sm:$0xf]
        %v7198 = vld [vmem:[#allocation13 + $0x10] sm:$0xf]
        %v7199 = vld [vmem:[#allocation13 + $0x14] sm:$0xf]
        %v7200 = vld [vmem:[#allocation13 + $0x18] sm:$0xf]
        %v7201 = vld [vmem:[#allocation13 + $0x1c] sm:$0xf]
        %v7202 = vld [vmem:[#allocation13 + $0x20] sm:$0xf]
        %v7203 = vld [vmem:[#allocation13 + $0x24] sm:$0xf]
        %v7204 = vld [vmem:[#allocation13 + $0x28] sm:$0xf]
        %v7205 = vld [vmem:[#allocation13 + $0x2c] sm:$0xf]
        %v7206 = vld [vmem:[#allocation13 + $0x30] sm:$0xf]
        %v7207 = vld [vmem:[#allocation13 + $0x34] sm:$0xf]
        %v7208 = vld [vmem:[#allocation13 + $0x38] sm:$0xf]
        %v7209 = vld [vmem:[#allocation13 + $0x3c] sm:$0xf]
        %v7210 = vld [vmem:[#allocation13 + $0x40] sm:$0xf]
        %v7211 = vld [vmem:[#allocation13 + $0x44] sm:$0xf]
        %v7212 = vld [vmem:[#allocation13 + $0x48] sm:$0xf]
        %v7213 = vld [vmem:[#allocation13 + $0x4c] sm:$0xf]
        %v7214 = vld [vmem:[#allocation13 + $0x50] sm:$0xf]
        %v7215 = vld [vmem:[#allocation13 + $0x54] sm:$0xf]
        %v7216 = vld [vmem:[#allocation13 + $0x58] sm:$0xf]
        %v7217 = vld [vmem:[#allocation13 + $0x5c] sm:$0xf]
        %v7218 = vld [vmem:[#allocation13 + $0x60] sm:$0xf]
        %v7219 = vld [vmem:[#allocation13 + $0x64] sm:$0xf]
        %v7220 = vld [vmem:[#allocation13 + $0x68] sm:$0xf]
        %v7221 = vld [vmem:[#allocation13 + $0x6c] sm:$0xf]
        %v7222 = vld [vmem:[#allocation13 + $0x70] sm:$0xf]
        %v7223 = vld [vmem:[#allocation13 + $0x74] sm:$0xf]
        %v7224 = vld [vmem:[#allocation13 + $0x78] sm:$0xf]
        %v7225 = vld [vmem:[#allocation13 + $0x7c] sm:$0xf]
        %v7226 = vpack.c.bf16 %v6291, %v6290
        %v7227 = vpack.c.bf16 %v7131, %v7130
        %v7228 = vpack.c.bf16 %v6293, %v6292
        %v7229 = vpack.c.bf16 %v7133, %v7132
        %v7230 = vpack.c.bf16 %v6295, %v6294
        %v7231 = vpack.c.bf16 %v7135, %v7134
        %v7232 = vpack.c.bf16 %v6297, %v6296
        %v7233 = vpack.c.bf16 %v7137, %v7136
        %v7234 = vpack.c.bf16 %v6299, %v6298
        %v7235 = vpack.c.bf16 %v7139, %v7138
        %v7236 = vpack.c.bf16 %v6301, %v6300
        %v7237 = vpack.c.bf16 %v7141, %v7140
        %v7238 = vpack.c.bf16 %v6303, %v6302
        %v7239 = vpack.c.bf16 %v7143, %v7142
        %v7240 = vpack.c.bf16 %v6305, %v6304
        %v7241 = vpack.c.bf16 %v7145, %v7144
        %v7242 = vpack.c.bf16 %v6307, %v6306
        %v7243 = vpack.c.bf16 %v7147, %v7146
        %v7244 = vpack.c.bf16 %v6309, %v6308
        %v7245 = vpack.c.bf16 %v7149, %v7148
        %v7246 = vpack.c.bf16 %v6311, %v6310
        %v7247 = vpack.c.bf16 %v7151, %v7150
        %v7248 = vpack.c.bf16 %v6313, %v6312
        %v7249 = vpack.c.bf16 %v7153, %v7152
        %v7250 = vpack.c.bf16 %v6315, %v6314
        %v7251 = vpack.c.bf16 %v7155, %v7154
        %v7252 = vpack.c.bf16 %v6317, %v6316
        %v7253 = vpack.c.bf16 %v7157, %v7156
        %v7254 = vpack.c.bf16 %v6319, %v6318
        %v7255 = vpack.c.bf16 %v7159, %v7158
        %v7256 = vpack.c.bf16 %v6321, %v6320
        %v7257 = vpack.c.bf16 %v7161, %v7160
        %v7258 = vpack.c.bf16 %v6323, %v6322
        %v7259 = vpack.c.bf16 %v7163, %v7162
        %v7260 = vpack.c.bf16 %v6325, %v6324
        %v7261 = vpack.c.bf16 %v7165, %v7164
        %v7262 = vpack.c.bf16 %v6327, %v6326
        %v7263 = vpack.c.bf16 %v7167, %v7166
        %v7264 = vpack.c.bf16 %v6329, %v6328
        %v7265 = vpack.c.bf16 %v7169, %v7168
        %v7266 = vpack.c.bf16 %v6331, %v6330
        %v7267 = vpack.c.bf16 %v7171, %v7170
        %v7268 = vpack.c.bf16 %v6333, %v6332
        %v7269 = vpack.c.bf16 %v7173, %v7172
        %v7270 = vpack.c.bf16 %v6335, %v6334
        %v7271 = vpack.c.bf16 %v7175, %v7174
        %v7272 = vpack.c.bf16 %v6337, %v6336
        %v7273 = vpack.c.bf16 %v7177, %v7176
        %v7274 = vpack.c.bf16 %v6339, %v6338
        %v7275 = vpack.c.bf16 %v7179, %v7178
        %v7276 = vpack.c.bf16 %v6341, %v6340
        %v7277 = vpack.c.bf16 %v7181, %v7180
        %v7278 = vpack.c.bf16 %v6343, %v6342
        %v7279 = vpack.c.bf16 %v7183, %v7182
        %v7280 = vpack.c.bf16 %v6345, %v6344
        %v7281 = vpack.c.bf16 %v7185, %v7184
        %v7282 = vpack.c.bf16 %v6347, %v6346
        %v7283 = vpack.c.bf16 %v7187, %v7186
        %v7284 = vpack.c.bf16 %v6349, %v6348
        %v7285 = vpack.c.bf16 %v7189, %v7188
        %v7286 = vpack.c.bf16 %v6351, %v6350
        %v7287 = vpack.c.bf16 %v7191, %v7190
        %v7288 = vpack.c.bf16 %v6353, %v6352
        %v7289 = vpack.c.bf16 %v7193, %v7192
        %v7290 = vld [vmem:[%s9] sm:$0x1]
        %v7292 = vlaneseq
        %v7293 = vshrl.u32 %v7292, 7
        %v7294 = vsub.s32 0, %v7293
        %v7295 = vrot.slane %v7290, %v7294
        %v7329 = vunpack.c.l.b16 %v7194
        %v7330 = vunpack.c.l.b16 %v7195
        %v7331 = vunpack.c.l.b16 %v7196
        %v7332 = vunpack.c.l.b16 %v7197
        %v7333 = vunpack.c.l.b16 %v7198
        %v7334 = vunpack.c.l.b16 %v7199
        %v7335 = vunpack.c.l.b16 %v7200
        %v7336 = vunpack.c.l.b16 %v7201
        %v7337 = vunpack.c.l.b16 %v7202
        %v7338 = vunpack.c.l.b16 %v7203
        %v7339 = vunpack.c.l.b16 %v7204
        %v7340 = vunpack.c.l.b16 %v7205
        %v7341 = vunpack.c.l.b16 %v7206
        %v7342 = vunpack.c.l.b16 %v7207
        %v7343 = vunpack.c.l.b16 %v7208
        %v7344 = vunpack.c.l.b16 %v7209
        %v7345 = vunpack.c.l.b16 %v7210
        %v7346 = vunpack.c.l.b16 %v7211
        %v7347 = vunpack.c.l.b16 %v7212
        %v7348 = vunpack.c.l.b16 %v7213
        %v7349 = vunpack.c.l.b16 %v7214
        %v7350 = vunpack.c.l.b16 %v7215
        %v7351 = vunpack.c.l.b16 %v7216
        %v7352 = vunpack.c.l.b16 %v7217
        %v7353 = vunpack.c.l.b16 %v7218
        %v7354 = vunpack.c.l.b16 %v7219
        %v7355 = vunpack.c.l.b16 %v7220
        %v7356 = vunpack.c.l.b16 %v7221
        %v7357 = vunpack.c.l.b16 %v7222
        %v7358 = vunpack.c.l.b16 %v7223
        %v7359 = vunpack.c.l.b16 %v7224
        %v7360 = vunpack.c.l.b16 %v7225
        %v7361 = vpack.c.b16 %v7330, %v7329
        %v7362 = vpack.c.b16 %v7332, %v7331
        %v7363 = vpack.c.b16 %v7334, %v7333
        %v7364 = vpack.c.b16 %v7336, %v7335
        %v7365 = vpack.c.b16 %v7338, %v7337
        %v7366 = vpack.c.b16 %v7340, %v7339
        %v7367 = vpack.c.b16 %v7342, %v7341
        %v7368 = vpack.c.b16 %v7344, %v7343
        %v7369 = vpack.c.b16 %v7346, %v7345
        %v7370 = vpack.c.b16 %v7348, %v7347
        %v7371 = vpack.c.b16 %v7350, %v7349
        %v7372 = vpack.c.b16 %v7352, %v7351
        %v7373 = vpack.c.b16 %v7354, %v7353
        %v7374 = vpack.c.b16 %v7356, %v7355
        %v7375 = vpack.c.b16 %v7358, %v7357
        %v7376 = vpack.c.b16 %v7360, %v7359
        %7393 = vmatprep.subr.bf16.mxu0 0
        %7394 = vmatpush1.bf16.msra.mxu0 %v7368
        %7395 = vmatprep.subr.bf16.mxu0 0
        %7396 = vmatpush1.bf16.msra.mxu0 %v7367
        %7397 = vmatprep.subr.bf16.mxu0 0
        %7398 = vmatpush1.bf16.msra.mxu0 %v7366
        %7399 = vmatprep.subr.bf16.mxu0 0
        %7400 = vmatpush1.bf16.msra.mxu0 %v7365
        %7401 = vmatprep.subr.bf16.mxu0 0
        %7402 = vmatpush1.bf16.msra.mxu0 %v7364
        %7403 = vmatprep.subr.bf16.mxu0 0
        %7404 = vmatpush1.bf16.msra.mxu0 %v7363
        %7405 = vmatprep.subr.bf16.mxu0 0
        %7406 = vmatpush1.bf16.msra.mxu0 %v7362
        %7407 = vmatprep.subr.bf16.mxu0 0
        %7408 = vmatpush1.bf16.msra.mxu0 %v7361
        %7409 = vmatprep.subr.bf16.mxu0 0
        %7410 = vmatpush2.bf16.msra.mxu0 %v7376
        %7411 = vmatprep.subr.bf16.mxu0 0
        %7412 = vmatpush2.bf16.msra.mxu0 %v7375
        %7413 = vmatprep.subr.bf16.mxu0 0
        %7414 = vmatpush2.bf16.msra.mxu0 %v7374
        %7415 = vmatprep.subr.bf16.mxu0 0
        %7416 = vmatpush2.bf16.msra.mxu0 %v7373
        %7417 = vmatprep.subr.bf16.mxu0 0
        %7418 = vmatpush2.bf16.msra.mxu0 %v7372
        %7419 = vmatprep.subr.bf16.mxu0 0
        %7420 = vmatpush2.bf16.msra.mxu0 %v7371
        %7421 = vmatprep.subr.bf16.mxu0 0
        %7422 = vmatpush2.bf16.msra.mxu0 %v7370
        %7423 = vmatprep.subr.bf16.mxu0 0
        %7424 = vmatpush2.bf16.msra.mxu0 %v7369
        %7425 = vmatprep.mubr.bf16.mxu0 %v7227
        %7426 = vmatmul.mubr.bf16.gmra.mxu0 %v7226
        %v7427 = vpop.f32.mrf.mxu0
        %v7428 = vadd.f32 %v7295, %v7427
        %v7429 = vpop.f32.mrf.mxu0
        %v7430 = vpop.f32.mrf.mxu0
        %v7431 = vadd.f32 %v7295, %v7430
        %v7432 = vpop.f32.mrf.mxu0
        %7433 = vmatprep.mubr.bf16.mxu0 %v7229
        %7434 = vmatmul.mubr.bf16.gmra.mxu0 %v7228
        %v7435 = vpop.f32.mrf.mxu0
        %v7436 = vadd.f32 %v7295, %v7435
        %v7437 = vpop.f32.mrf.mxu0
        %v7438 = vpop.f32.mrf.mxu0
        %v7439 = vadd.f32 %v7295, %v7438
        %v7440 = vpop.f32.mrf.mxu0
        %7441 = vmatprep.mubr.bf16.mxu0 %v7231
        %7442 = vmatmul.mubr.bf16.gmra.mxu0 %v7230
        %v7443 = vpop.f32.mrf.mxu0
        %v7444 = vadd.f32 %v7295, %v7443
        %v7445 = vpop.f32.mrf.mxu0
        %v7446 = vpop.f32.mrf.mxu0
        %v7447 = vadd.f32 %v7295, %v7446
        %v7448 = vpop.f32.mrf.mxu0
        %7449 = vmatprep.mubr.bf16.mxu0 %v7233
        %7450 = vmatmul.mubr.bf16.gmra.mxu0 %v7232
        %v7451 = vpop.f32.mrf.mxu0
        %v7452 = vadd.f32 %v7295, %v7451
        %v7453 = vpop.f32.mrf.mxu0
        %v7454 = vpop.f32.mrf.mxu0
        %v7455 = vadd.f32 %v7295, %v7454
        %v7456 = vpop.f32.mrf.mxu0
        %7457 = vmatprep.mubr.bf16.mxu0 %v7235
        %7458 = vmatmul.mubr.bf16.gmra.mxu0 %v7234
        %v7459 = vpop.f32.mrf.mxu0
        %v7460 = vadd.f32 %v7295, %v7459
        %v7461 = vpop.f32.mrf.mxu0
        %v7462 = vpop.f32.mrf.mxu0
        %v7463 = vadd.f32 %v7295, %v7462
        %v7464 = vpop.f32.mrf.mxu0
        %7465 = vmatprep.mubr.bf16.mxu0 %v7237
        %7466 = vmatmul.mubr.bf16.gmra.mxu0 %v7236
        %v7467 = vpop.f32.mrf.mxu0
        %v7468 = vadd.f32 %v7295, %v7467
        %v7469 = vpop.f32.mrf.mxu0
        %v7470 = vpop.f32.mrf.mxu0
        %v7471 = vadd.f32 %v7295, %v7470
        %v7472 = vpop.f32.mrf.mxu0
        %7473 = vmatprep.mubr.bf16.mxu0 %v7239
        %7474 = vmatmul.mubr.bf16.gmra.mxu0 %v7238
        %v7475 = vpop.f32.mrf.mxu0
        %v7476 = vadd.f32 %v7295, %v7475
        %v7477 = vpop.f32.mrf.mxu0
        %v7478 = vpop.f32.mrf.mxu0
        %v7479 = vadd.f32 %v7295, %v7478
        %v7480 = vpop.f32.mrf.mxu0
        %7481 = vmatprep.mubr.bf16.mxu0 %v7241
        %7482 = vmatmul.mubr.bf16.gmra.mxu0 %v7240
        %v7483 = vpop.f32.mrf.mxu0
        %v7484 = vadd.f32 %v7295, %v7483
        %v7485 = vpop.f32.mrf.mxu0
        %v7486 = vpop.f32.mrf.mxu0
        %v7487 = vadd.f32 %v7295, %v7486
        %v7488 = vpop.f32.mrf.mxu0
        %7489 = vmatprep.mubr.bf16.mxu0 %v7243
        %7490 = vmatmul.mubr.bf16.gmra.mxu0 %v7242
        %v7491 = vpop.f32.mrf.mxu0
        %v7492 = vadd.f32 %v7295, %v7491
        %v7493 = vpop.f32.mrf.mxu0
        %v7494 = vpop.f32.mrf.mxu0
        %v7495 = vadd.f32 %v7295, %v7494
        %v7496 = vpop.f32.mrf.mxu0
        %7497 = vmatprep.mubr.bf16.mxu0 %v7245
        %7498 = vmatmul.mubr.bf16.gmra.mxu0 %v7244
        %v7499 = vpop.f32.mrf.mxu0
        %v7500 = vadd.f32 %v7295, %v7499
        %v7501 = vpop.f32.mrf.mxu0
        %v7502 = vpop.f32.mrf.mxu0
        %v7503 = vadd.f32 %v7295, %v7502
        %v7504 = vpop.f32.mrf.mxu0
        %7505 = vmatprep.mubr.bf16.mxu0 %v7247
        %7506 = vmatmul.mubr.bf16.gmra.mxu0 %v7246
        %v7507 = vpop.f32.mrf.mxu0
        %v7508 = vadd.f32 %v7295, %v7507
        %v7509 = vpop.f32.mrf.mxu0
        %v7510 = vpop.f32.mrf.mxu0
        %v7511 = vadd.f32 %v7295, %v7510
        %v7512 = vpop.f32.mrf.mxu0
        %7513 = vmatprep.mubr.bf16.mxu0 %v7249
        %7514 = vmatmul.mubr.bf16.gmra.mxu0 %v7248
        %v7515 = vpop.f32.mrf.mxu0
        %v7516 = vadd.f32 %v7295, %v7515
        %v7517 = vpop.f32.mrf.mxu0
        %v7518 = vpop.f32.mrf.mxu0
        %v7519 = vadd.f32 %v7295, %v7518
        %v7520 = vpop.f32.mrf.mxu0
        %7521 = vmatprep.mubr.bf16.mxu0 %v7251
        %7522 = vmatmul.mubr.bf16.gmra.mxu0 %v7250
        %v7523 = vpop.f32.mrf.mxu0
        %v7524 = vadd.f32 %v7295, %v7523
        %v7525 = vpop.f32.mrf.mxu0
        %v7526 = vpop.f32.mrf.mxu0
        %v7527 = vadd.f32 %v7295, %v7526
        %v7528 = vpop.f32.mrf.mxu0
        %7529 = vmatprep.mubr.bf16.mxu0 %v7253
        %7530 = vmatmul.mubr.bf16.gmra.mxu0 %v7252
        %v7531 = vpop.f32.mrf.mxu0
        %v7532 = vadd.f32 %v7295, %v7531
        %v7533 = vpop.f32.mrf.mxu0
        %v7534 = vpop.f32.mrf.mxu0
        %v7535 = vadd.f32 %v7295, %v7534
        %v7536 = vpop.f32.mrf.mxu0
        %7537 = vmatprep.mubr.bf16.mxu0 %v7255
        %7538 = vmatmul.mubr.bf16.gmra.mxu0 %v7254
        %v7539 = vpop.f32.mrf.mxu0
        %v7540 = vadd.f32 %v7295, %v7539
        %v7541 = vpop.f32.mrf.mxu0
        %v7542 = vpop.f32.mrf.mxu0
        %v7543 = vadd.f32 %v7295, %v7542
        %v7544 = vpop.f32.mrf.mxu0
        %7545 = vmatprep.mubr.bf16.mxu0 %v7257
        %7546 = vmatmul.mubr.bf16.gmra.mxu0 %v7256
        %v7547 = vpop.f32.mrf.mxu0
        %v7548 = vadd.f32 %v7295, %v7547
        %v7549 = vpop.f32.mrf.mxu0
        %v7550 = vpop.f32.mrf.mxu0
        %v7551 = vadd.f32 %v7295, %v7550
        %v7552 = vpop.f32.mrf.mxu0
        %7553 = vmatprep.mubr.bf16.mxu0 %v7259
        %7554 = vmatmul.mubr.bf16.gmra.mxu0 %v7258
        %v7555 = vpop.f32.mrf.mxu0
        %v7556 = vadd.f32 %v7295, %v7555
        %v7557 = vpop.f32.mrf.mxu0
        %v7558 = vpop.f32.mrf.mxu0
        %v7559 = vadd.f32 %v7295, %v7558
        %v7560 = vpop.f32.mrf.mxu0
        %7561 = vmatprep.mubr.bf16.mxu0 %v7261
        %7562 = vmatmul.mubr.bf16.gmra.mxu0 %v7260
        %v7563 = vpop.f32.mrf.mxu0
        %v7564 = vadd.f32 %v7295, %v7563
        %v7565 = vpop.f32.mrf.mxu0
        %v7566 = vpop.f32.mrf.mxu0
        %v7567 = vadd.f32 %v7295, %v7566
        %v7568 = vpop.f32.mrf.mxu0
        %7569 = vmatprep.mubr.bf16.mxu0 %v7263
        %7570 = vmatmul.mubr.bf16.gmra.mxu0 %v7262
        %v7571 = vpop.f32.mrf.mxu0
        %v7572 = vadd.f32 %v7295, %v7571
        %v7573 = vpop.f32.mrf.mxu0
        %v7574 = vpop.f32.mrf.mxu0
        %v7575 = vadd.f32 %v7295, %v7574
        %v7576 = vpop.f32.mrf.mxu0
        %7577 = vmatprep.mubr.bf16.mxu0 %v7265
        %7578 = vmatmul.mubr.bf16.gmra.mxu0 %v7264
        %v7579 = vpop.f32.mrf.mxu0
        %v7580 = vadd.f32 %v7295, %v7579
        %v7581 = vpop.f32.mrf.mxu0
        %v7582 = vpop.f32.mrf.mxu0
        %v7583 = vadd.f32 %v7295, %v7582
        %v7584 = vpop.f32.mrf.mxu0
        %7585 = vmatprep.mubr.bf16.mxu0 %v7267
        %7586 = vmatmul.mubr.bf16.gmra.mxu0 %v7266
        %v7587 = vpop.f32.mrf.mxu0
        %v7588 = vadd.f32 %v7295, %v7587
        %v7589 = vpop.f32.mrf.mxu0
        %v7590 = vpop.f32.mrf.mxu0
        %v7591 = vadd.f32 %v7295, %v7590
        %v7592 = vpop.f32.mrf.mxu0
        %7593 = vmatprep.mubr.bf16.mxu0 %v7269
        %7594 = vmatmul.mubr.bf16.gmra.mxu0 %v7268
        %v7595 = vpop.f32.mrf.mxu0
        %v7596 = vadd.f32 %v7295, %v7595
        %v7597 = vpop.f32.mrf.mxu0
        %v7598 = vpop.f32.mrf.mxu0
        %v7599 = vadd.f32 %v7295, %v7598
        %v7600 = vpop.f32.mrf.mxu0
        %7601 = vmatprep.mubr.bf16.mxu0 %v7271
        %7602 = vmatmul.mubr.bf16.gmra.mxu0 %v7270
        %v7603 = vpop.f32.mrf.mxu0
        %v7604 = vadd.f32 %v7295, %v7603
        %v7605 = vpop.f32.mrf.mxu0
        %v7606 = vpop.f32.mrf.mxu0
        %v7607 = vadd.f32 %v7295, %v7606
        %v7608 = vpop.f32.mrf.mxu0
        %7609 = vmatprep.mubr.bf16.mxu0 %v7273
        %7610 = vmatmul.mubr.bf16.gmra.mxu0 %v7272
        %v7611 = vpop.f32.mrf.mxu0
        %v7612 = vadd.f32 %v7295, %v7611
        %v7613 = vpop.f32.mrf.mxu0
        %v7614 = vpop.f32.mrf.mxu0
        %v7615 = vadd.f32 %v7295, %v7614
        %v7616 = vpop.f32.mrf.mxu0
        %7617 = vmatprep.mubr.bf16.mxu0 %v7275
        %7618 = vmatmul.mubr.bf16.gmra.mxu0 %v7274
        %v7619 = vpop.f32.mrf.mxu0
        %v7620 = vadd.f32 %v7295, %v7619
        %v7621 = vpop.f32.mrf.mxu0
        %v7622 = vpop.f32.mrf.mxu0
        %v7623 = vadd.f32 %v7295, %v7622
        %v7624 = vpop.f32.mrf.mxu0
        %7625 = vmatprep.mubr.bf16.mxu0 %v7277
        %7626 = vmatmul.mubr.bf16.gmra.mxu0 %v7276
        %v7627 = vpop.f32.mrf.mxu0
        %v7628 = vadd.f32 %v7295, %v7627
        %v7629 = vpop.f32.mrf.mxu0
        %v7630 = vpop.f32.mrf.mxu0
        %v7631 = vadd.f32 %v7295, %v7630
        %v7632 = vpop.f32.mrf.mxu0
        %7633 = vmatprep.mubr.bf16.mxu0 %v7279
        %7634 = vmatmul.mubr.bf16.gmra.mxu0 %v7278
        %v7635 = vpop.f32.mrf.mxu0
        %v7636 = vadd.f32 %v7295, %v7635
        %v7637 = vpop.f32.mrf.mxu0
        %v7638 = vpop.f32.mrf.mxu0
        %v7639 = vadd.f32 %v7295, %v7638
        %v7640 = vpop.f32.mrf.mxu0
        %7641 = vmatprep.mubr.bf16.mxu0 %v7281
        %7642 = vmatmul.mubr.bf16.gmra.mxu0 %v7280
        %v7643 = vpop.f32.mrf.mxu0
        %v7644 = vadd.f32 %v7295, %v7643
        %v7645 = vpop.f32.mrf.mxu0
        %v7646 = vpop.f32.mrf.mxu0
        %v7647 = vadd.f32 %v7295, %v7646
        %v7648 = vpop.f32.mrf.mxu0
        %7649 = vmatprep.mubr.bf16.mxu0 %v7283
        %7650 = vmatmul.mubr.bf16.gmra.mxu0 %v7282
        %v7651 = vpop.f32.mrf.mxu0
        %v7652 = vadd.f32 %v7295, %v7651
        %v7653 = vpop.f32.mrf.mxu0
        %v7654 = vpop.f32.mrf.mxu0
        %v7655 = vadd.f32 %v7295, %v7654
        %v7656 = vpop.f32.mrf.mxu0
        %7657 = vmatprep.mubr.bf16.mxu0 %v7285
        %7658 = vmatmul.mubr.bf16.gmra.mxu0 %v7284
        %v7659 = vpop.f32.mrf.mxu0
        %v7660 = vadd.f32 %v7295, %v7659
        %v7661 = vpop.f32.mrf.mxu0
        %v7662 = vpop.f32.mrf.mxu0
        %v7663 = vadd.f32 %v7295, %v7662
        %v7664 = vpop.f32.mrf.mxu0
        %7665 = vmatprep.mubr.bf16.mxu0 %v7287
        %7666 = vmatmul.mubr.bf16.gmra.mxu0 %v7286
        %v7667 = vpop.f32.mrf.mxu0
        %v7668 = vadd.f32 %v7295, %v7667
        %v7669 = vpop.f32.mrf.mxu0
        %v7670 = vpop.f32.mrf.mxu0
        %v7671 = vadd.f32 %v7295, %v7670
        %v7672 = vpop.f32.mrf.mxu0
        %7673 = vmatprep.mubr.bf16.mxu0 %v7289
        %7674 = vmatmul.mubr.bf16.gmra.mxu0 %v7288
        %v7675 = vpop.f32.mrf.mxu0
        %v7676 = vadd.f32 %v7295, %v7675
        %v7677 = vpop.f32.mrf.mxu0
        %v7678 = vpop.f32.mrf.mxu0
        %v7679 = vadd.f32 %v7295, %v7678
        %v7680 = vpop.f32.mrf.mxu0
        %7681 = vdwg.mxu0
        %7682 = vst [vmem:[%s477] sm:$0xff] %v7428
        %7683 = vst [vmem:[%s477 + $0x8] sm:$0xff] %v7431
        %7684 = vst [vmem:[%s477 + $0x10] sm:$0xff] %v7436
        %7685 = vst [vmem:[%s477 + $0x18] sm:$0xff] %v7439
        %7686 = vst [vmem:[%s477 + $0x20] sm:$0xff] %v7444
        %7687 = vst [vmem:[%s477 + $0x28] sm:$0xff] %v7447
        %7688 = vst [vmem:[%s477 + $0x30] sm:$0xff] %v7452
        %7689 = vst [vmem:[%s477 + $0x38] sm:$0xff] %v7455
        %7690 = vst [vmem:[%s477 + $0x40] sm:$0xff] %v7460
        %7691 = vst [vmem:[%s477 + $0x48] sm:$0xff] %v7463
        %7692 = vst [vmem:[%s477 + $0x50] sm:$0xff] %v7468
        %7693 = vst [vmem:[%s477 + $0x58] sm:$0xff] %v7471
        %7694 = vst [vmem:[%s477 + $0x60] sm:$0xff] %v7476
        %7695 = vst [vmem:[%s477 + $0x68] sm:$0xff] %v7479
        %7696 = vst [vmem:[%s477 + $0x70] sm:$0xff] %v7484
        %7697 = vst [vmem:[%s477 + $0x78] sm:$0xff] %v7487
        %7698 = vst [vmem:[%s477 + $0x80] sm:$0xff] %v7492
        %7699 = vst [vmem:[%s477 + $0x88] sm:$0xff] %v7495
        %7700 = vst [vmem:[%s477 + $0x90] sm:$0xff] %v7500
        %7701 = vst [vmem:[%s477 + $0x98] sm:$0xff] %v7503
        %7702 = vst [vmem:[%s477 + $0xa0] sm:$0xff] %v7508
        %7703 = vst [vmem:[%s477 + $0xa8] sm:$0xff] %v7511
        %7704 = vst [vmem:[%s477 + $0xb0] sm:$0xff] %v7516
        %7705 = vst [vmem:[%s477 + $0xb8] sm:$0xff] %v7519
        %7706 = vst [vmem:[%s477 + $0xc0] sm:$0xff] %v7524
        %7707 = vst [vmem:[%s477 + $0xc8] sm:$0xff] %v7527
        %7708 = vst [vmem:[%s477 + $0xd0] sm:$0xff] %v7532
        %7709 = vst [vmem:[%s477 + $0xd8] sm:$0xff] %v7535
        %7710 = vst [vmem:[%s477 + $0xe0] sm:$0xff] %v7540
        %7711 = vst [vmem:[%s477 + $0xe8] sm:$0xff] %v7543
        %7712 = vst [vmem:[%s477 + $0xf0] sm:$0xff] %v7548
        %7713 = vst [vmem:[%s477 + $0xf8] sm:$0xff] %v7551
        %7714 = vst [vmem:[%s477 + $0x100] sm:$0xff] %v7556
        %7715 = vst [vmem:[%s477 + $0x108] sm:$0xff] %v7559
        %7716 = vst [vmem:[%s477 + $0x110] sm:$0xff] %v7564
        %7717 = vst [vmem:[%s477 + $0x118] sm:$0xff] %v7567
        %7718 = vst [vmem:[%s477 + $0x120] sm:$0xff] %v7572
        %7719 = vst [vmem:[%s477 + $0x128] sm:$0xff] %v7575
        %7720 = vst [vmem:[%s477 + $0x130] sm:$0xff] %v7580
        %7721 = vst [vmem:[%s477 + $0x138] sm:$0xff] %v7583
        %7722 = vst [vmem:[%s477 + $0x140] sm:$0xff] %v7588
        %7723 = vst [vmem:[%s477 + $0x148] sm:$0xff] %v7591
        %7724 = vst [vmem:[%s477 + $0x150] sm:$0xff] %v7596
        %7725 = vst [vmem:[%s477 + $0x158] sm:$0xff] %v7599
        %7726 = vst [vmem:[%s477 + $0x160] sm:$0xff] %v7604
        %7727 = vst [vmem:[%s477 + $0x168] sm:$0xff] %v7607
        %7728 = vst [vmem:[%s477 + $0x170] sm:$0xff] %v7612
        %7729 = vst [vmem:[%s477 + $0x178] sm:$0xff] %v7615
        %7730 = vst [vmem:[%s477 + $0x180] sm:$0xff] %v7620
        %7731 = vst [vmem:[%s477 + $0x188] sm:$0xff] %v7623
        %7732 = vst [vmem:[%s477 + $0x190] sm:$0xff] %v7628
        %7733 = vst [vmem:[%s477 + $0x198] sm:$0xff] %v7631
        %7734 = vst [vmem:[%s477 + $0x1a0] sm:$0xff] %v7636
        %7735 = vst [vmem:[%s477 + $0x1a8] sm:$0xff] %v7639
        %7736 = vst [vmem:[%s477 + $0x1b0] sm:$0xff] %v7644
        %7737 = vst [vmem:[%s477 + $0x1b8] sm:$0xff] %v7647
        %7738 = vst [vmem:[%s477 + $0x1c0] sm:$0xff] %v7652
        %7739 = vst [vmem:[%s477 + $0x1c8] sm:$0xff] %v7655
        %7740 = vst [vmem:[%s477 + $0x1d0] sm:$0xff] %v7660
        %7741 = vst [vmem:[%s477 + $0x1d8] sm:$0xff] %v7663
        %7742 = vst [vmem:[%s477 + $0x1e0] sm:$0xff] %v7668
        %7743 = vst [vmem:[%s477 + $0x1e8] sm:$0xff] %v7671
        %7744 = vst [vmem:[%s477 + $0x1f0] sm:$0xff] %v7676
        %7745 = vst [vmem:[%s477 + $0x1f8] sm:$0xff] %v7679
        %s7746 = sand.u32 %s254, 1
        %s7747 = scalar_lea.sflag [#allocation4], %s7746
        %s7748 = sand.u32 %s254, 1
        %s7749 = smul.addr %s7748, 512
        %s7750 = scalar_lea.vmem [#allocation16], %s7749
        // Predicated region
        $region93: #{tpu_custom_call.1} parent=59 // pred_check
          %p7751 = pneg %p264
        $region94: #{tpu_custom_call.1} parent=59 // pred_check_branch
          %7753 = sbr.rel (%p7751) target = $region96
        $region95: #{tpu_custom_call.1} parent=59 // pred_region
          %s7754 = smul.u32 64, %s31
          %s7756 = ssub.s32 8192, 8192
          %7757 = vsyncadd %s7747, %s7756
          %s7758 = smul.addr %s7754, 128
          %s7759 = scalar_lea.hbm %s10, %s7758
          %s7760 = sshll.u32 %s7750, 4
          %s7761 = int_to_ptr.vmem [resolvable:$true] %s7760
          %7766 = dma.vmem_to_hbm [thread:$0]  %s7761, 8192, %s7759, %s7747, 128, 128, 8
        $region96: #{tpu_custom_call.1} parent=59 // pred_fallthru
          _
      $region60: #{tpu_custom_call.1} parent=5 // pred_fallthru
        _
      %p7767 = scmp.le.s32.totalorder 2, %s26
      // Predicated region
      $region97: #{tpu_custom_call.1} parent=5 // pred_check
        %p7768 = pneg %p7767
      $region98: #{tpu_custom_call.1} parent=5 // pred_check_branch
        %7770 = sbr.rel (%p7768) target = $region100
      $region99: #{tpu_custom_call.1} parent=5 // pred_region
        %s7771 = ssub.s32 %s26, 2
        // Predicated region
        $region101: #{tpu_custom_call.1} parent=99 // pred_check
          %p7772 = pneg %p270
        $region102: #{tpu_custom_call.1} parent=99 // pred_check_branch
          %7774 = sbr.rel (%p7772) target = $region104
        $region103: #{tpu_custom_call.1} parent=99 // pred_region
          %s7775 = sand.u32 %s255, 1
          %s7776 = scalar_lea.sflag [#allocation4], %s7775
          %s7777 = sand.u32 %s255, 1
          %s7778 = smul.addr %s7777, 512
          %s7779 = scalar_lea.vmem [#allocation16], %s7778
          %7780 = dma.done %s7776, 8192
        $region104: #{tpu_custom_call.1} parent=99 // pred_fallthru
          _
      $region100: #{tpu_custom_call.1} parent=5 // pred_fallthru
        _
    $region6: #{tpu_custom_call.1} parent=1 // loop_footer
      %s30 = sadd.s32 1, %s26
    $region7: #{tpu_custom_call.1} parent=1 // loop_footer_branch
      %25 = sbr.rel target = $region3
    $region8: #{tpu_custom_call.1} parent=1 // loop_exit
      _
    %7781 = vsyncpa [#allocation3], 1
    %s7782 = scalar_lea.sflag [#allocation3], 1
    %7783 = vsyncpa %s7782, 1
    %7784 = vsyncpa [#allocation6], 1
    %7785 = vsyncpa [#allocation9], 1
    %7786 = vsyncpa [#allocation12], 1
    %7787 = vsyncpa [#allocation15], 1
    %7788 = vsyncpa [#allocation4], 1
    %s7789 = scalar_lea.sflag [#allocation4], 1
    %7790 = vsyncpa %s7789, 1

</llo_original>
